<compile_context>
chip_gen: v7x
topology: tpu7x:2x2x1
jax: 0.10.0
libtpu: 0.0.40
codegen_flags: <defaults>
</compile_context>

<pallas_src>
import functools

import jax
import jax.numpy as jnp
from jax.experimental import pallas as pl
from jax.experimental.pallas import tpu as pltpu


# ----------------------------------------------------------------------------
# Kernel 1: conv1 as a single im2col matmul (+bias, +ReLU)
# ----------------------------------------------------------------------------
def _conv1_kernel(x_ref, w_ref, b_ref, o_ref):
    y = jnp.dot(x_ref[...], w_ref[...], preferred_element_type=jnp.float32)
    o_ref[...] = jnp.maximum(y + b_ref[...], 0.0).astype(o_ref.dtype)


def conv1_matmul(patches, w, b):
    """patches:[M,9] bf16, w:[9,32] bf16, b:[1,32] f32 -> [M,32] bf16."""
    M, K = patches.shape
    _, C = w.shape
    return pl.pallas_call(
        _conv1_kernel,
        out_shape=jax.ShapeDtypeStruct((M, C), jnp.bfloat16),
        grid_spec=pltpu.PrefetchScalarGridSpec(
            num_scalar_prefetch=0,
            grid=(1,),
            in_specs=[
                pl.BlockSpec((M, K), lambda i: (0, 0)),
                pl.BlockSpec((K, C), lambda i: (0, 0)),
                pl.BlockSpec((1, C), lambda i: (0, 0)),
            ],
            out_specs=pl.BlockSpec((M, C), lambda i: (0, 0)),
        ),
        compiler_params=pltpu.CompilerParams(
            dimension_semantics=("arbitrary",)),
    )(patches, w, b)


# ----------------------------------------------------------------------------
# Kernel 2: conv2 matmul with fused MaxPool2d(2) + bias + ReLU + Flatten
# ----------------------------------------------------------------------------
def _conv2_pool_kernel(x_ref, w_ref, b_ref, o_ref, acc_ref, *, hw, out_c):
    # One image per grid step.  acc rows are (h, w) with w fastest, hw x hw.
    acc_ref[...] = jnp.dot(x_ref[...], w_ref[...],
                           preferred_element_type=jnp.float32)
    bias = b_ref[...]                                   # [1, 128]
    half = hw // 2
    for ph in range(half):                              # statically unrolled
        base = ph * 2 * hw                              # row (h=2*ph, w=0)
        # Four strided sub-grids of the 2x2 pooling window (strided sublane
        # reads of the VMEM accumulator -> conv map never touches HBM).
        a = acc_ref[pl.ds(base, half, stride=2), :]            # (2ph,   even w)
        bq = acc_ref[pl.ds(base + 1, half, stride=2), :]       # (2ph,   odd  w)
        c = acc_ref[pl.ds(base + hw, half, stride=2), :]       # (2ph+1, even w)
        d = acc_ref[pl.ds(base + hw + 1, half, stride=2), :]   # (2ph+1, odd  w)
        pooled = jnp.maximum(jnp.maximum(a, bq), jnp.maximum(c, d))
        pooled = jnp.maximum(pooled + bias, 0.0)        # bias+ReLU commute w/ max
        o_ref[pl.ds(ph * half, half), :] = pooled[:, :out_c].astype(o_ref.dtype)


def conv2_maxpool_flatten(patches, w, b, *, n_images, hw=24, out_c=64):
    """patches:[N*hw*hw, K] bf16, w:[K,128] bf16 (Cout zero-padded to 128),
    b:[1,128] f32 -> pooled/flattened features [N, (hw//2)**2 * out_c] bf16."""
    M, K = patches.shape
    rows_per_img = M // n_images
    assert rows_per_img == hw * hw and M % n_images == 0
    _, C = w.shape
    half = hw // 2
    out_rows = half * half
    kernel = functools.partial(_conv2_pool_kernel, hw=hw, out_c=out_c)
    pooled = pl.pallas_call(
        kernel,
        out_shape=jax.ShapeDtypeStruct((n_images * out_rows, out_c),
                                       jnp.bfloat16),
        grid_spec=pltpu.PrefetchScalarGridSpec(
            num_scalar_prefetch=0,
            grid=(n_images,),
            in_specs=[
                pl.BlockSpec((rows_per_img, K), lambda n: (n, 0)),
                pl.BlockSpec((K, C), lambda n: (0, 0)),
                pl.BlockSpec((1, C), lambda n: (0, 0)),
            ],
            out_specs=pl.BlockSpec((out_rows, out_c), lambda n: (n, 0)),
            scratch_shapes=[pltpu.VMEM((rows_per_img, C), jnp.float32)],
        ),
        compiler_params=pltpu.CompilerParams(
            dimension_semantics=("parallel",)),
    )(patches, w, b)
    return pooled.reshape(n_images, out_rows * out_c)


# ----------------------------------------------------------------------------
# Kernel 3: fused MLP head  (fc1 -> ReLU -> fc2 ; pred1 -> ReLU -> pred2)
# ----------------------------------------------------------------------------
def _head_kernel(h_ref, w1_ref, b1_ref, w2_ref, b2_ref, w3_ref, b3_ref,
                 w4_ref, b4_ref, z_ref, p_ref, acc_ref, *, nk):
    k = pl.program_id(0)

    @pl.when(k == 0)
    def _():
        acc_ref[...] = jnp.zeros_like(acc_ref)

    # fc1: K streamed in fat bf16 tiles, f32 accumulation.
    acc_ref[...] += jnp.dot(h_ref[...], w1_ref[...],
                            preferred_element_type=jnp.float32)

    @pl.when(k == nk - 1)
    def _():
        a1 = jnp.maximum(acc_ref[...] + b1_ref[...], 0.0)          # fc1 + ReLU
        z = jnp.dot(a1.astype(jnp.bfloat16), w2_ref[...],
                    preferred_element_type=jnp.float32) + b2_ref[...]   # fc2
        z_ref[...] = z.astype(z_ref.dtype)
        a2 = jnp.maximum(
            jnp.dot(z.astype(jnp.bfloat16), w3_ref[...],
                    preferred_element_type=jnp.float32) + b3_ref[...],
            0.0)                                                   # pred1+ReLU
        p = jnp.dot(a2.astype(jnp.bfloat16), w4_ref[...],
                    preferred_element_type=jnp.float32) + b4_ref[...]   # pred2
        p_ref[...] = p.astype(p_ref.dtype)


def _pick_tk(K, H, max_bytes=4 << 20):
    """Largest 128-aligned divisor-by-halving of K keeping a W1 tile small."""
    tk = K
    while tk % 2 == 0 and (tk // 2) % 128 == 0 and tk * H * 2 > max_bytes:
        tk //= 2
    return tk


def mlp_head(h, w1, b1, w2, b2, w3, b3, w4, b4):
    """h:[M,9216] bf16 -> (z:[M,P] f32, p:[M,P] f32) in one pallas_call."""
    M, K = h.shape
    H = w1.shape[1]
    P = w2.shape[1]
    tk = _pick_tk(K, H)
    assert K % tk == 0
    nk = K // tk
    kernel = functools.partial(_head_kernel, nk=nk)
    full = lambda k: (0, 0)
    z, p = pl.pallas_call(
        kernel,
        out_shape=(jax.ShapeDtypeStruct((M, P), jnp.float32),
                   jax.ShapeDtypeStruct((M, P), jnp.float32)),
        grid_spec=pltpu.PrefetchScalarGridSpec(
            num_scalar_prefetch=0,
            grid=(nk,),
            in_specs=[
                pl.BlockSpec((M, tk), lambda k: (0, k)),   # activations
                pl.BlockSpec((tk, H), lambda k: (k, 0)),   # fc1 weight stream
                pl.BlockSpec((1, H), full),                # fc1 bias
                pl.BlockSpec((H, P), full),                # fc2 w (resident)
                pl.BlockSpec((1, P), full),
                pl.BlockSpec((P, P), full),                # pred1 w (resident)
                pl.BlockSpec((1, P), full),
                pl.BlockSpec((P, P), full),                # pred2 w (resident)
                pl.BlockSpec((1, P), full),
            ],
            out_specs=[pl.BlockSpec((M, P), full),
                       pl.BlockSpec((M, P), full)],
            scratch_shapes=[pltpu.VMEM((M, H), jnp.float32)],
        ),
        compiler_params=pltpu.CompilerParams(
            dimension_semantics=("arbitrary",)),
    )(h, w1, b1, w2, b2, w3, b3, w4, b4)
    return z, p


# ----------------------------------------------------------------------------
# Glue: NHWC im2col, parameter init, forward pass
# ----------------------------------------------------------------------------
def im2col_nhwc(x, k):
    """NHWC valid-conv patches; feature order (ki, kj, c) with c fastest.
    Built as k*k shifted slices + one lane-axis concat (no 5-D transposes)."""
    N, H, W, C = x.shape
    Ho, Wo = H - k + 1, W - k + 1
    patches = jnp.concatenate(
        [x[:, i:i + Ho, j:j + Wo, :] for i in range(k) for j in range(k)],
        axis=-1)                                        # [N, Ho, Wo, k*k*C]
    return patches.reshape(N * Ho * Wo, k * k * C), Ho, Wo


def init_params(key, hidden_size, projection_size):
    assert hidden_size % 128 == 0 and projection_size % 128 == 0

    def uniform(key, shape, fan_in, dtype):
        scale = 1.0 / jnp.sqrt(float(fan_in))
        return jax.random.uniform(
            key, shape, jnp.float32, -scale, scale).astype(dtype)

    ks = jax.random.split(key, 12)
    # conv1: weight rows in (ki, kj, cin) order (cin = 1), Cout = 32.
    conv1_w = uniform(ks[0], (9, 32), 9, jnp.bfloat16)
    conv1_b = uniform(ks[1], (1, 32), 9, jnp.float32)
    # conv2: real [3*3*32, 64]; Cout zero-padded to 128 for lane-dense MXU N.
    conv2_w = uniform(ks[2], (288, 64), 288, jnp.float32)
    conv2_w = jnp.pad(conv2_w, ((0, 0), (0, 64))).astype(jnp.bfloat16)
    conv2_b = jnp.pad(uniform(ks[3], (1, 64), 288, jnp.float32),
                      ((0, 0), (0, 64)))
    params = {
        "conv1_w": conv1_w, "conv1_b": conv1_b,
        "conv2_w": conv2_w, "conv2_b": conv2_b,
        # fc1 weight rows follow the kernel's (ph, pw, c) flatten order.
        "fc1_w": uniform(ks[4], (9216, hidden_size), 9216, jnp.bfloat16),
        "fc1_b": uniform(ks[5], (1, hidden_size), 9216, jnp.float32),
        "fc2_w": uniform(ks[6], (hidden_size, projection_size),
                         hidden_size, jnp.bfloat16),
        "fc2_b": uniform(ks[7], (1, projection_size), hidden_size, jnp.float32),
        "pred1_w": uniform(ks[8], (projection_size, projection_size),
                           projection_size, jnp.bfloat16),
        "pred1_b": uniform(ks[9], (1, projection_size),
                           projection_size, jnp.float32),
        "pred2_w": uniform(ks[10], (projection_size, projection_size),
                           projection_size, jnp.bfloat16),
        "pred2_b": uniform(ks[11], (1, projection_size),
                           projection_size, jnp.float32),
    }
    return params


def simsiam_forward(params, x):
    N = x.shape[0]
    # NCHW -> NHWC (free for C=1), bf16 activations for the HBM-bound matmuls.
    x = jnp.transpose(x, (0, 2, 3, 1)).astype(jnp.bfloat16)     # [N,28,28,1]

    # encoder
    p1, Ho1, Wo1 = im2col_nhwc(x, 3)                            # [N*676, 9]
    y1 = conv1_matmul(p1, params["conv1_w"], params["conv1_b"])  # [N*676, 32]
    y1 = y1.reshape(N, Ho1, Wo1, 32)                            # [N,26,26,32]
    p2, _, _ = im2col_nhwc(y1, 3)                               # [N*576, 288]
    h = conv2_maxpool_flatten(p2, params["conv2_w"], params["conv2_b"],
                              n_images=N)                       # [N, 9216]

    # fused MLP head: fc1 -> ReLU -> fc2 (projection z) ; predictor -> p
    z, p = mlp_head(h,
                    params["fc1_w"], params["fc1_b"],
                    params["fc2_w"], params["fc2_b"],
                    params["pred1_w"], params["pred1_b"],
                    params["pred2_w"], params["pred2_b"])
    return z, z, p, p


if __name__ == "__main__":
    hidden_size, projection_size = 256, 128   # constructor args (small demo)
    batch = 2

    key = jax.random.PRNGKey(0)
    kx, kp = jax.random.split(key)
    # Linear(9216, hidden) hard-codes a 28x28 single-channel input.
    x = jax.random.normal(kx, (batch, 1, 28, 28), jnp.float32)
    params = init_params(kp, hidden_size, projection_size)

    fwd = jax.jit(simsiam_forward)
    z1, z2, p1, p2 = jax.block_until_ready(fwd(params, x))

    assert z1.shape == (batch, projection_size)
    assert p1.shape == (batch, projection_size)
    assert jnp.array_equal(z1, z2) and jnp.array_equal(p1, p2)
    assert bool(jnp.all(jnp.isfinite(z1))) and bool(jnp.all(jnp.isfinite(p1)))
    print("KERNEL_OK")
</pallas_src>

<mosaic_0001>
module attributes {stable_mosaic.version = 11 : i64} {
  func.func @_conv1_kernel(%arg0: i32, %arg1: memref<1352x9xbf16, #tpu.memory_space<vmem>>, %arg2: memref<9x32xbf16, #tpu.memory_space<vmem>>, %arg3: memref<1x32xf32, #tpu.memory_space<vmem>>, %arg4: memref<1352x32xbf16, #tpu.memory_space<vmem>>) attributes {dimension_semantics = [#tpu.dimension_semantics<arbitrary>], iteration_bounds = array<i64: 1>, scalar_prefetch = 0 : i64, scratch_operands = 0 : i64, tpu.core_type = #tpu.core_type<tc>, window_params = [{pipeline_mode = #tpu.pipeline_mode<synchronous>, transform_indices = @transform_0, window_bounds = array<i64: 1352, 9>}, {pipeline_mode = #tpu.pipeline_mode<synchronous>, transform_indices = @transform_1, window_bounds = array<i64: 9, 32>}, {pipeline_mode = #tpu.pipeline_mode<synchronous>, transform_indices = @transform_2, window_bounds = array<i64: 1, 32>}, {pipeline_mode = #tpu.pipeline_mode<synchronous>, transform_indices = @transform_3, window_bounds = array<i64: 1352, 32>}]} {
    %c0 = arith.constant 0 : index
    %c0_0 = arith.constant 0 : index
    %0 = vector.load %arg1[%c0, %c0_0] : memref<1352x9xbf16, #tpu.memory_space<vmem>>, vector<1352x9xbf16>
    %c0_1 = arith.constant 0 : index
    %c0_2 = arith.constant 0 : index
    %1 = vector.load %arg2[%c0_1, %c0_2] : memref<9x32xbf16, #tpu.memory_space<vmem>>, vector<9x32xbf16>
    %cst = arith.constant dense<0.000000e+00> : vector<1352x32xf32>
    %2 = tpu.matmul %0, %1, %cst {dimension_numbers = #tpu.dot_dimension_numbers<[1], [0], [0], [1], [0, 0, 1, 1], [], []>} : vector<1352x9xbf16>, vector<9x32xbf16>, vector<1352x32xf32> -> vector<1352x32xf32>
    %c0_3 = arith.constant 0 : index
    %c0_4 = arith.constant 0 : index
    %3 = vector.load %arg3[%c0_3, %c0_4] : memref<1x32xf32, #tpu.memory_space<vmem>>, vector<1x32xf32>
    %4 = vector.broadcast %3 : vector<1x32xf32> to vector<1352x32xf32>
    %5 = arith.addf %2, %4 : vector<1352x32xf32>
    %cst_5 = arith.constant 0.000000e+00 : f32
    %6 = vector.broadcast %cst_5 : f32 to vector<1352x32xf32>
    %7 = arith.maximumf %5, %6 : vector<1352x32xf32>
    %8 = arith.truncf %7 : vector<1352x32xf32> to vector<1352x32xbf16>
    %c0_6 = arith.constant 0 : index
    %c0_7 = arith.constant 0 : index
    %9 = vector.load %arg4[%c0_6, %c0_7] : memref<1352x32xbf16, #tpu.memory_space<vmem>>, vector<1352x32xbf16>
    tpu.vector_store %arg4[%c0_6, %c0_7], %8 {strides = array<i32>} : memref<1352x32xbf16, #tpu.memory_space<vmem>>, vector<1352x32xbf16>,
    return
  }
  func.func @transform_0(%arg0: i32) -> (i32, i32) {
    %c0_i32 = arith.constant 0 : i32
    %c0_i32_0 = arith.constant 0 : i32
    %c0_i32_1 = arith.constant 0 : i32
    return %c0_i32, %c0_i32_0 : i32, i32
  }
  func.func @transform_1(%arg0: i32) -> (i32, i32) {
    %c0_i32 = arith.constant 0 : i32
    %c0_i32_0 = arith.constant 0 : i32
    %c0_i32_1 = arith.constant 0 : i32
    return %c0_i32, %c0_i32_0 : i32, i32
  }
  func.func @transform_2(%arg0: i32) -> (i32, i32) {
    %c0_i32 = arith.constant 0 : i32
    %c0_i32_0 = arith.constant 0 : i32
    %c0_i32_1 = arith.constant 0 : i32
    return %c0_i32, %c0_i32_0 : i32, i32
  }
  func.func @transform_3(%arg0: i32) -> (i32, i32) {
    %c0_i32 = arith.constant 0 : i32
    %c0_i32_0 = arith.constant 0 : i32
    %c0_i32_1 = arith.constant 0 : i32
    return %c0_i32, %c0_i32_0 : i32, i32
  }
}

module attributes {stable_mosaic.version = 11 : i64} {
  func.func @_conv2_pool_kernel(%arg0: i32, %arg1: memref<576x288xbf16, #tpu.memory_space<vmem>>, %arg2: memref<288x128xbf16, #tpu.memory_space<vmem>>, %arg3: memref<1x128xf32, #tpu.memory_space<vmem>>, %arg4: memref<144x64xbf16, #tpu.memory_space<vmem>>, %arg5: memref<576x128xf32, #tpu.memory_space<vmem>>) attributes {dimension_semantics = [#tpu.dimension_semantics<parallel>], iteration_bounds = array<i64: 2>, scalar_prefetch = 0 : i64, scratch_operands = 1 : i64, tpu.core_type = #tpu.core_type<tc>, window_params = [{transform_indices = @transform_0, window_bounds = array<i64: 576, 288>}, {pipeline_mode = #tpu.pipeline_mode<synchronous>, transform_indices = @transform_1, window_bounds = array<i64: 288, 128>}, {pipeline_mode = #tpu.pipeline_mode<synchronous>, transform_indices = @transform_2, window_bounds = array<i64: 1, 128>}, {transform_indices = @transform_3, window_bounds = array<i64: 144, 64>}]} {
    %c0 = arith.constant 0 : index
    %c0_0 = arith.constant 0 : index
    %0 = vector.load %arg1[%c0, %c0_0] : memref<576x288xbf16, #tpu.memory_space<vmem>>, vector<576x288xbf16>
    %c0_1 = arith.constant 0 : index
    %c0_2 = arith.constant 0 : index
    %1 = vector.load %arg2[%c0_1, %c0_2] : memref<288x128xbf16, #tpu.memory_space<vmem>>, vector<288x128xbf16>
    %cst = arith.constant dense<0.000000e+00> : vector<576x128xf32>
    %2 = tpu.matmul %0, %1, %cst {dimension_numbers = #tpu.dot_dimension_numbers<[1], [0], [0], [1], [0, 0, 1, 1], [], []>} : vector<576x288xbf16>, vector<288x128xbf16>, vector<576x128xf32> -> vector<576x128xf32>
    %c0_3 = arith.constant 0 : index
    %c0_4 = arith.constant 0 : index
    %3 = vector.load %arg5[%c0_3, %c0_4] : memref<576x128xf32, #tpu.memory_space<vmem>>, vector<576x128xf32>
    tpu.vector_store %arg5[%c0_3, %c0_4], %2 {strides = array<i32>} : memref<576x128xf32, #tpu.memory_space<vmem>>, vector<576x128xf32>,
    %c0_5 = arith.constant 0 : index
    %c0_6 = arith.constant 0 : index
    %4 = vector.load %arg3[%c0_5, %c0_6] : memref<1x128xf32, #tpu.memory_space<vmem>>, vector<1x128xf32>
    %c0_7 = arith.constant 0 : index
    %c0_8 = arith.constant 0 : index
    %5 = tpu.strided_load %arg5[%c0_7, %c0_8] {strides = array<i32: 2, 1>} : memref<576x128xf32, #tpu.memory_space<vmem>>, vector<12x128xf32>
    %c1 = arith.constant 1 : index
    %c0_9 = arith.constant 0 : index
    %6 = tpu.strided_load %arg5[%c1, %c0_9] {strides = array<i32: 2, 1>} : memref<576x128xf32, #tpu.memory_space<vmem>>, vector<12x128xf32>
    %c24 = arith.constant 24 : index
    %c0_10 = arith.constant 0 : index
    %7 = tpu.strided_load %arg5[%c24, %c0_10] {strides = array<i32: 2, 1>} : memref<576x128xf32, #tpu.memory_space<vmem>>, vector<12x128xf32>
    %c25 = arith.constant 25 : index
    %c0_11 = arith.constant 0 : index
    %8 = tpu.strided_load %arg5[%c25, %c0_11] {strides = array<i32: 2, 1>} : memref<576x128xf32, #tpu.memory_space<vmem>>, vector<12x128xf32>
    %9 = arith.maximumf %5, %6 : vector<12x128xf32>
    %10 = arith.maximumf %7, %8 : vector<12x128xf32>
    %11 = arith.maximumf %9, %10 : vector<12x128xf32>
    %12 = vector.broadcast %4 : vector<1x128xf32> to vector<12x128xf32>
    %13 = arith.addf %11, %12 : vector<12x128xf32>
    %cst_12 = arith.constant 0.000000e+00 : f32
    %14 = vector.broadcast %cst_12 : f32 to vector<12x128xf32>
    %15 = arith.maximumf %13, %14 : vector<12x128xf32>
    %16 = vector.extract_strided_slice %15 {offsets = [0, 0], sizes = [12, 64], strides = [1, 1]} : vector<12x128xf32> to vector<12x64xf32>
    %17 = arith.truncf %16 : vector<12x64xf32> to vector<12x64xbf16>
    %c0_13 = arith.constant 0 : index
    %c0_14 = arith.constant 0 : index
    %18 = vector.load %arg4[%c0_13, %c0_14] : memref<144x64xbf16, #tpu.memory_space<vmem>>, vector<12x64xbf16>
    tpu.vector_store %arg4[%c0_13, %c0_14], %17 {strides = array<i32>} : memref<144x64xbf16, #tpu.memory_space<vmem>>, vector<12x64xbf16>,
    %c48 = arith.constant 48 : index
    %c0_15 = arith.constant 0 : index
    %19 = tpu.strided_load %arg5[%c48, %c0_15] {strides = array<i32: 2, 1>} : memref<576x128xf32, #tpu.memory_space<vmem>>, vector<12x128xf32>
    %c49 = arith.constant 49 : index
    %c0_16 = arith.constant 0 : index
    %20 = tpu.strided_load %arg5[%c49, %c0_16] {strides = array<i32: 2, 1>} : memref<576x128xf32, #tpu.memory_space<vmem>>, vector<12x128xf32>
    %c72 = arith.constant 72 : index
    %c0_17 = arith.constant 0 : index
    %21 = tpu.strided_load %arg5[%c72, %c0_17] {strides = array<i32: 2, 1>} : memref<576x128xf32, #tpu.memory_space<vmem>>, vector<12x128xf32>
    %c73 = arith.constant 73 : index
    %c0_18 = arith.constant 0 : index
    %22 = tpu.strided_load %arg5[%c73, %c0_18] {strides = array<i32: 2, 1>} : memref<576x128xf32, #tpu.memory_space<vmem>>, vector<12x128xf32>
    %23 = arith.maximumf %19, %20 : vector<12x128xf32>
    %24 = arith.maximumf %21, %22 : vector<12x128xf32>
    %25 = arith.maximumf %23, %24 : vector<12x128xf32>
    %26 = vector.broadcast %4 : vector<1x128xf32> to vector<12x128xf32>
    %27 = arith.addf %25, %26 : vector<12x128xf32>
    %cst_19 = arith.constant 0.000000e+00 : f32
    %28 = vector.broadcast %cst_19 : f32 to vector<12x128xf32>
    %29 = arith.maximumf %27, %28 : vector<12x128xf32>
    %30 = vector.extract_strided_slice %29 {offsets = [0, 0], sizes = [12, 64], strides = [1, 1]} : vector<12x128xf32> to vector<12x64xf32>
    %31 = arith.truncf %30 : vector<12x64xf32> to vector<12x64xbf16>
    %c12 = arith.constant 12 : index
    %c0_20 = arith.constant 0 : index
    %32 = vector.load %arg4[%c12, %c0_20] : memref<144x64xbf16, #tpu.memory_space<vmem>>, vector<12x64xbf16>
    tpu.vector_store %arg4[%c12, %c0_20], %31 {strides = array<i32>} : memref<144x64xbf16, #tpu.memory_space<vmem>>, vector<12x64xbf16>,
    %c96 = arith.constant 96 : index
    %c0_21 = arith.constant 0 : index
    %33 = tpu.strided_load %arg5[%c96, %c0_21] {strides = array<i32: 2, 1>} : memref<576x128xf32, #tpu.memory_space<vmem>>, vector<12x128xf32>
    %c97 = arith.constant 97 : index
    %c0_22 = arith.constant 0 : index
    %34 = tpu.strided_load %arg5[%c97, %c0_22] {strides = array<i32: 2, 1>} : memref<576x128xf32, #tpu.memory_space<vmem>>, vector<12x128xf32>
    %c120 = arith.constant 120 : index
    %c0_23 = arith.constant 0 : index
    %35 = tpu.strided_load %arg5[%c120, %c0_23] {strides = array<i32: 2, 1>} : memref<576x128xf32, #tpu.memory_space<vmem>>, vector<12x128xf32>
    %c121 = arith.constant 121 : index
    %c0_24 = arith.constant 0 : index
    %36 = tpu.strided_load %arg5[%c121, %c0_24] {strides = array<i32: 2, 1>} : memref<576x128xf32, #tpu.memory_space<vmem>>, vector<12x128xf32>
    %37 = arith.maximumf %33, %34 : vector<12x128xf32>
    %38 = arith.maximumf %35, %36 : vector<12x128xf32>
    %39 = arith.maximumf %37, %38 : vector<12x128xf32>
    %40 = vector.broadcast %4 : vector<1x128xf32> to vector<12x128xf32>
    %41 = arith.addf %39, %40 : vector<12x128xf32>
    %cst_25 = arith.constant 0.000000e+00 : f32
    %42 = vector.broadcast %cst_25 : f32 to vector<12x128xf32>
    %43 = arith.maximumf %41, %42 : vector<12x128xf32>
    %44 = vector.extract_strided_slice %43 {offsets = [0, 0], sizes = [12, 64], strides = [1, 1]} : vector<12x128xf32> to vector<12x64xf32>
    %45 = arith.truncf %44 : vector<12x64xf32> to vector<12x64xbf16>
    %c24_26 = arith.constant 24 : index
    %c0_27 = arith.constant 0 : index
    %46 = vector.load %arg4[%c24_26, %c0_27] : memref<144x64xbf16, #tpu.memory_space<vmem>>, vector<12x64xbf16>
    tpu.vector_store %arg4[%c24_26, %c0_27], %45 {strides = array<i32>} : memref<144x64xbf16, #tpu.memory_space<vmem>>, vector<12x64xbf16>,
    %c144 = arith.constant 144 : index
    %c0_28 = arith.constant 0 : index
    %47 = tpu.strided_load %arg5[%c144, %c0_28] {strides = array<i32: 2, 1>} : memref<576x128xf32, #tpu.memory_space<vmem>>, vector<12x128xf32>
    %c145 = arith.constant 145 : index
    %c0_29 = arith.constant 0 : index
    %48 = tpu.strided_load %arg5[%c145, %c0_29] {strides = array<i32: 2, 1>} : memref<576x128xf32, #tpu.memory_space<vmem>>, vector<12x128xf32>
    %c168 = arith.constant 168 : index
    %c0_30 = arith.constant 0 : index
    %49 = tpu.strided_load %arg5[%c168, %c0_30] {strides = array<i32: 2, 1>} : memref<576x128xf32, #tpu.memory_space<vmem>>, vector<12x128xf32>
    %c169 = arith.constant 169 : index
    %c0_31 = arith.constant 0 : index
    %50 = tpu.strided_load %arg5[%c169, %c0_31] {strides = array<i32: 2, 1>} : memref<576x128xf32, #tpu.memory_space<vmem>>, vector<12x128xf32>
    %51 = arith.maximumf %47, %48 : vector<12x128xf32>
    %52 = arith.maximumf %49, %50 : vector<12x128xf32>
    %53 = arith.maximumf %51, %52 : vector<12x128xf32>
    %54 = vector.broadcast %4 : vector<1x128xf32> to vector<12x128xf32>
    %55 = arith.addf %53, %54 : vector<12x128xf32>
    %cst_32 = arith.constant 0.000000e+00 : f32
    %56 = vector.broadcast %cst_32 : f32 to vector<12x128xf32>
    %57 = arith.maximumf %55, %56 : vector<12x128xf32>
    %58 = vector.extract_strided_slice %57 {offsets = [0, 0], sizes = [12, 64], strides = [1, 1]} : vector<12x128xf32> to vector<12x64xf32>
    %59 = arith.truncf %58 : vector<12x64xf32> to vector<12x64xbf16>
    %c36 = arith.constant 36 : index
    %c0_33 = arith.constant 0 : index
    %60 = vector.load %arg4[%c36, %c0_33] : memref<144x64xbf16, #tpu.memory_space<vmem>>, vector<12x64xbf16>
    tpu.vector_store %arg4[%c36, %c0_33], %59 {strides = array<i32>} : memref<144x64xbf16, #tpu.memory_space<vmem>>, vector<12x64xbf16>,
    %c192 = arith.constant 192 : index
    %c0_34 = arith.constant 0 : index
    %61 = tpu.strided_load %arg5[%c192, %c0_34] {strides = array<i32: 2, 1>} : memref<576x128xf32, #tpu.memory_space<vmem>>, vector<12x128xf32>
    %c193 = arith.constant 193 : index
    %c0_35 = arith.constant 0 : index
    %62 = tpu.strided_load %arg5[%c193, %c0_35] {strides = array<i32: 2, 1>} : memref<576x128xf32, #tpu.memory_space<vmem>>, vector<12x128xf32>
    %c216 = arith.constant 216 : index
    %c0_36 = arith.constant 0 : index
    %63 = tpu.strided_load %arg5[%c216, %c0_36] {strides = array<i32: 2, 1>} : memref<576x128xf32, #tpu.memory_space<vmem>>, vector<12x128xf32>
    %c217 = arith.constant 217 : index
    %c0_37 = arith.constant 0 : index
    %64 = tpu.strided_load %arg5[%c217, %c0_37] {strides = array<i32: 2, 1>} : memref<576x128xf32, #tpu.memory_space<vmem>>, vector<12x128xf32>
    %65 = arith.maximumf %61, %62 : vector<12x128xf32>
    %66 = arith.maximumf %63, %64 : vector<12x128xf32>
    %67 = arith.maximumf %65, %66 : vector<12x128xf32>
    %68 = vector.broadcast %4 : vector<1x128xf32> to vector<12x128xf32>
    %69 = arith.addf %67, %68 : vector<12x128xf32>
    %cst_38 = arith.constant 0.000000e+00 : f32
    %70 = vector.broadcast %cst_38 : f32 to vector<12x128xf32>
    %71 = arith.maximumf %69, %70 : vector<12x128xf32>
    %72 = vector.extract_strided_slice %71 {offsets = [0, 0], sizes = [12, 64], strides = [1, 1]} : vector<12x128xf32> to vector<12x64xf32>
    %73 = arith.truncf %72 : vector<12x64xf32> to vector<12x64xbf16>
    %c48_39 = arith.constant 48 : index
    %c0_40 = arith.constant 0 : index
    %74 = vector.load %arg4[%c48_39, %c0_40] : memref<144x64xbf16, #tpu.memory_space<vmem>>, vector<12x64xbf16>
    tpu.vector_store %arg4[%c48_39, %c0_40], %73 {strides = array<i32>} : memref<144x64xbf16, #tpu.memory_space<vmem>>, vector<12x64xbf16>,
    %c240 = arith.constant 240 : index
    %c0_41 = arith.constant 0 : index
    %75 = tpu.strided_load %arg5[%c240, %c0_41] {strides = array<i32: 2, 1>} : memref<576x128xf32, #tpu.memory_space<vmem>>, vector<12x128xf32>
    %c241 = arith.constant 241 : index
    %c0_42 = arith.constant 0 : index
    %76 = tpu.strided_load %arg5[%c241, %c0_42] {strides = array<i32: 2, 1>} : memref<576x128xf32, #tpu.memory_space<vmem>>, vector<12x128xf32>
    %c264 = arith.constant 264 : index
    %c0_43 = arith.constant 0 : index
    %77 = tpu.strided_load %arg5[%c264, %c0_43] {strides = array<i32: 2, 1>} : memref<576x128xf32, #tpu.memory_space<vmem>>, vector<12x128xf32>
    %c265 = arith.constant 265 : index
    %c0_44 = arith.constant 0 : index
    %78 = tpu.strided_load %arg5[%c265, %c0_44] {strides = array<i32: 2, 1>} : memref<576x128xf32, #tpu.memory_space<vmem>>, vector<12x128xf32>
    %79 = arith.maximumf %75, %76 : vector<12x128xf32>
    %80 = arith.maximumf %77, %78 : vector<12x128xf32>
    %81 = arith.maximumf %79, %80 : vector<12x128xf32>
    %82 = vector.broadcast %4 : vector<1x128xf32> to vector<12x128xf32>
    %83 = arith.addf %81, %82 : vector<12x128xf32>
    %cst_45 = arith.constant 0.000000e+00 : f32
    %84 = vector.broadcast %cst_45 : f32 to vector<12x128xf32>
    %85 = arith.maximumf %83, %84 : vector<12x128xf32>
    %86 = vector.extract_strided_slice %85 {offsets = [0, 0], sizes = [12, 64], strides = [1, 1]} : vector<12x128xf32> to vector<12x64xf32>
    %87 = arith.truncf %86 : vector<12x64xf32> to vector<12x64xbf16>
    %c60 = arith.constant 60 : index
    %c0_46 = arith.constant 0 : index
    %88 = vector.load %arg4[%c60, %c0_46] : memref<144x64xbf16, #tpu.memory_space<vmem>>, vector<12x64xbf16>
    tpu.vector_store %arg4[%c60, %c0_46], %87 {strides = array<i32>} : memref<144x64xbf16, #tpu.memory_space<vmem>>, vector<12x64xbf16>,
    %c288 = arith.constant 288 : index
    %c0_47 = arith.constant 0 : index
    %89 = tpu.strided_load %arg5[%c288, %c0_47] {strides = array<i32: 2, 1>} : memref<576x128xf32, #tpu.memory_space<vmem>>, vector<12x128xf32>
    %c289 = arith.constant 289 : index
    %c0_48 = arith.constant 0 : index
    %90 = tpu.strided_load %arg5[%c289, %c0_48] {strides = array<i32: 2, 1>} : memref<576x128xf32, #tpu.memory_space<vmem>>, vector<12x128xf32>
    %c312 = arith.constant 312 : index
    %c0_49 = arith.constant 0 : index
    %91 = tpu.strided_load %arg5[%c312, %c0_49] {strides = array<i32: 2, 1>} : memref<576x128xf32, #tpu.memory_space<vmem>>, vector<12x128xf32>
    %c313 = arith.constant 313 : index
    %c0_50 = arith.constant 0 : index
    %92 = tpu.strided_load %arg5[%c313, %c0_50] {strides = array<i32: 2, 1>} : memref<576x128xf32, #tpu.memory_space<vmem>>, vector<12x128xf32>
    %93 = arith.maximumf %89, %90 : vector<12x128xf32>
    %94 = arith.maximumf %91, %92 : vector<12x128xf32>
    %95 = arith.maximumf %93, %94 : vector<12x128xf32>
    %96 = vector.broadcast %4 : vector<1x128xf32> to vector<12x128xf32>
    %97 = arith.addf %95, %96 : vector<12x128xf32>
    %cst_51 = arith.constant 0.000000e+00 : f32
    %98 = vector.broadcast %cst_51 : f32 to vector<12x128xf32>
    %99 = arith.maximumf %97, %98 : vector<12x128xf32>
    %100 = vector.extract_strided_slice %99 {offsets = [0, 0], sizes = [12, 64], strides = [1, 1]} : vector<12x128xf32> to vector<12x64xf32>
    %101 = arith.truncf %100 : vector<12x64xf32> to vector<12x64xbf16>
    %c72_52 = arith.constant 72 : index
    %c0_53 = arith.constant 0 : index
    %102 = vector.load %arg4[%c72_52, %c0_53] : memref<144x64xbf16, #tpu.memory_space<vmem>>, vector<12x64xbf16>
    tpu.vector_store %arg4[%c72_52, %c0_53], %101 {strides = array<i32>} : memref<144x64xbf16, #tpu.memory_space<vmem>>, vector<12x64xbf16>,
    %c336 = arith.constant 336 : index
    %c0_54 = arith.constant 0 : index
    %103 = tpu.strided_load %arg5[%c336, %c0_54] {strides = array<i32: 2, 1>} : memref<576x128xf32, #tpu.memory_space<vmem>>, vector<12x128xf32>
    %c337 = arith.constant 337 : index
    %c0_55 = arith.constant 0 : index
    %104 = tpu.strided_load %arg5[%c337, %c0_55] {strides = array<i32: 2, 1>} : memref<576x128xf32, #tpu.memory_space<vmem>>, vector<12x128xf32>
    %c360 = arith.constant 360 : index
    %c0_56 = arith.constant 0 : index
    %105 = tpu.strided_load %arg5[%c360, %c0_56] {strides = array<i32: 2, 1>} : memref<576x128xf32, #tpu.memory_space<vmem>>, vector<12x128xf32>
    %c361 = arith.constant 361 : index
    %c0_57 = arith.constant 0 : index
    %106 = tpu.strided_load %arg5[%c361, %c0_57] {strides = array<i32: 2, 1>} : memref<576x128xf32, #tpu.memory_space<vmem>>, vector<12x128xf32>
    %107 = arith.maximumf %103, %104 : vector<12x128xf32>
    %108 = arith.maximumf %105, %106 : vector<12x128xf32>
    %109 = arith.maximumf %107, %108 : vector<12x128xf32>
    %110 = vector.broadcast %4 : vector<1x128xf32> to vector<12x128xf32>
    %111 = arith.addf %109, %110 : vector<12x128xf32>
    %cst_58 = arith.constant 0.000000e+00 : f32
    %112 = vector.broadcast %cst_58 : f32 to vector<12x128xf32>
    %113 = arith.maximumf %111, %112 : vector<12x128xf32>
    %114 = vector.extract_strided_slice %113 {offsets = [0, 0], sizes = [12, 64], strides = [1, 1]} : vector<12x128xf32> to vector<12x64xf32>
    %115 = arith.truncf %114 : vector<12x64xf32> to vector<12x64xbf16>
    %c84 = arith.constant 84 : index
    %c0_59 = arith.constant 0 : index
    %116 = vector.load %arg4[%c84, %c0_59] : memref<144x64xbf16, #tpu.memory_space<vmem>>, vector<12x64xbf16>
    tpu.vector_store %arg4[%c84, %c0_59], %115 {strides = array<i32>} : memref<144x64xbf16, #tpu.memory_space<vmem>>, vector<12x64xbf16>,
    %c384 = arith.constant 384 : index
    %c0_60 = arith.constant 0 : index
    %117 = tpu.strided_load %arg5[%c384, %c0_60] {strides = array<i32: 2, 1>} : memref<576x128xf32, #tpu.memory_space<vmem>>, vector<12x128xf32>
    %c385 = arith.constant 385 : index
    %c0_61 = arith.constant 0 : index
    %118 = tpu.strided_load %arg5[%c385, %c0_61] {strides = array<i32: 2, 1>} : memref<576x128xf32, #tpu.memory_space<vmem>>, vector<12x128xf32>
    %c408 = arith.constant 408 : index
    %c0_62 = arith.constant 0 : index
    %119 = tpu.strided_load %arg5[%c408, %c0_62] {strides = array<i32: 2, 1>} : memref<576x128xf32, #tpu.memory_space<vmem>>, vector<12x128xf32>
    %c409 = arith.constant 409 : index
    %c0_63 = arith.constant 0 : index
    %120 = tpu.strided_load %arg5[%c409, %c0_63] {strides = array<i32: 2, 1>} : memref<576x128xf32, #tpu.memory_space<vmem>>, vector<12x128xf32>
    %121 = arith.maximumf %117, %118 : vector<12x128xf32>
    %122 = arith.maximumf %119, %120 : vector<12x128xf32>
    %123 = arith.maximumf %121, %122 : vector<12x128xf32>
    %124 = vector.broadcast %4 : vector<1x128xf32> to vector<12x128xf32>
    %125 = arith.addf %123, %124 : vector<12x128xf32>
    %cst_64 = arith.constant 0.000000e+00 : f32
    %126 = vector.broadcast %cst_64 : f32 to vector<12x128xf32>
    %127 = arith.maximumf %125, %126 : vector<12x128xf32>
    %128 = vector.extract_strided_slice %127 {offsets = [0, 0], sizes = [12, 64], strides = [1, 1]} : vector<12x128xf32> to vector<12x64xf32>
    %129 = arith.truncf %128 : vector<12x64xf32> to vector<12x64xbf16>
    %c96_65 = arith.constant 96 : index
    %c0_66 = arith.constant 0 : index
    %130 = vector.load %arg4[%c96_65, %c0_66] : memref<144x64xbf16, #tpu.memory_space<vmem>>, vector<12x64xbf16>
    tpu.vector_store %arg4[%c96_65, %c0_66], %129 {strides = array<i32>} : memref<144x64xbf16, #tpu.memory_space<vmem>>, vector<12x64xbf16>,
    %c432 = arith.constant 432 : index
    %c0_67 = arith.constant 0 : index
    %131 = tpu.strided_load %arg5[%c432, %c0_67] {strides = array<i32: 2, 1>} : memref<576x128xf32, #tpu.memory_space<vmem>>, vector<12x128xf32>
    %c433 = arith.constant 433 : index
    %c0_68 = arith.constant 0 : index
    %132 = tpu.strided_load %arg5[%c433, %c0_68] {strides = array<i32: 2, 1>} : memref<576x128xf32, #tpu.memory_space<vmem>>, vector<12x128xf32>
    %c456 = arith.constant 456 : index
    %c0_69 = arith.constant 0 : index
    %133 = tpu.strided_load %arg5[%c456, %c0_69] {strides = array<i32: 2, 1>} : memref<576x128xf32, #tpu.memory_space<vmem>>, vector<12x128xf32>
    %c457 = arith.constant 457 : index
    %c0_70 = arith.constant 0 : index
    %134 = tpu.strided_load %arg5[%c457, %c0_70] {strides = array<i32: 2, 1>} : memref<576x128xf32, #tpu.memory_space<vmem>>, vector<12x128xf32>
    %135 = arith.maximumf %131, %132 : vector<12x128xf32>
    %136 = arith.maximumf %133, %134 : vector<12x128xf32>
    %137 = arith.maximumf %135, %136 : vector<12x128xf32>
    %138 = vector.broadcast %4 : vector<1x128xf32> to vector<12x128xf32>
    %139 = arith.addf %137, %138 : vector<12x128xf32>
    %cst_71 = arith.constant 0.000000e+00 : f32
    %140 = vector.broadcast %cst_71 : f32 to vector<12x128xf32>
    %141 = arith.maximumf %139, %140 : vector<12x128xf32>
    %142 = vector.extract_strided_slice %141 {offsets = [0, 0], sizes = [12, 64], strides = [1, 1]} : vector<12x128xf32> to vector<12x64xf32>
    %143 = arith.truncf %142 : vector<12x64xf32> to vector<12x64xbf16>
    %c108 = arith.constant 108 : index
    %c0_72 = arith.constant 0 : index
    %144 = vector.load %arg4[%c108, %c0_72] : memref<144x64xbf16, #tpu.memory_space<vmem>>, vector<12x64xbf16>
    tpu.vector_store %arg4[%c108, %c0_72], %143 {strides = array<i32>} : memref<144x64xbf16, #tpu.memory_space<vmem>>, vector<12x64xbf16>,
    %c480 = arith.constant 480 : index
    %c0_73 = arith.constant 0 : index
    %145 = tpu.strided_load %arg5[%c480, %c0_73] {strides = array<i32: 2, 1>} : memref<576x128xf32, #tpu.memory_space<vmem>>, vector<12x128xf32>
    %c481 = arith.constant 481 : index
    %c0_74 = arith.constant 0 : index
    %146 = tpu.strided_load %arg5[%c481, %c0_74] {strides = array<i32: 2, 1>} : memref<576x128xf32, #tpu.memory_space<vmem>>, vector<12x128xf32>
    %c504 = arith.constant 504 : index
    %c0_75 = arith.constant 0 : index
    %147 = tpu.strided_load %arg5[%c504, %c0_75] {strides = array<i32: 2, 1>} : memref<576x128xf32, #tpu.memory_space<vmem>>, vector<12x128xf32>
    %c505 = arith.constant 505 : index
    %c0_76 = arith.constant 0 : index
    %148 = tpu.strided_load %arg5[%c505, %c0_76] {strides = array<i32: 2, 1>} : memref<576x128xf32, #tpu.memory_space<vmem>>, vector<12x128xf32>
    %149 = arith.maximumf %145, %146 : vector<12x128xf32>
    %150 = arith.maximumf %147, %148 : vector<12x128xf32>
    %151 = arith.maximumf %149, %150 : vector<12x128xf32>
    %152 = vector.broadcast %4 : vector<1x128xf32> to vector<12x128xf32>
    %153 = arith.addf %151, %152 : vector<12x128xf32>
    %cst_77 = arith.constant 0.000000e+00 : f32
    %154 = vector.broadcast %cst_77 : f32 to vector<12x128xf32>
    %155 = arith.maximumf %153, %154 : vector<12x128xf32>
    %156 = vector.extract_strided_slice %155 {offsets = [0, 0], sizes = [12, 64], strides = [1, 1]} : vector<12x128xf32> to vector<12x64xf32>
    %157 = arith.truncf %156 : vector<12x64xf32> to vector<12x64xbf16>
    %c120_78 = arith.constant 120 : index
    %c0_79 = arith.constant 0 : index
    %158 = vector.load %arg4[%c120_78, %c0_79] : memref<144x64xbf16, #tpu.memory_space<vmem>>, vector<12x64xbf16>
    tpu.vector_store %arg4[%c120_78, %c0_79], %157 {strides = array<i32>} : memref<144x64xbf16, #tpu.memory_space<vmem>>, vector<12x64xbf16>,
    %c528 = arith.constant 528 : index
    %c0_80 = arith.constant 0 : index
    %159 = tpu.strided_load %arg5[%c528, %c0_80] {strides = array<i32: 2, 1>} : memref<576x128xf32, #tpu.memory_space<vmem>>, vector<12x128xf32>
    %c529 = arith.constant 529 : index
    %c0_81 = arith.constant 0 : index
    %160 = tpu.strided_load %arg5[%c529, %c0_81] {strides = array<i32: 2, 1>} : memref<576x128xf32, #tpu.memory_space<vmem>>, vector<12x128xf32>
    %c552 = arith.constant 552 : index
    %c0_82 = arith.constant 0 : index
    %161 = tpu.strided_load %arg5[%c552, %c0_82] {strides = array<i32: 2, 1>} : memref<576x128xf32, #tpu.memory_space<vmem>>, vector<12x128xf32>
    %c553 = arith.constant 553 : index
    %c0_83 = arith.constant 0 : index
    %162 = tpu.strided_load %arg5[%c553, %c0_83] {strides = array<i32: 2, 1>} : memref<576x128xf32, #tpu.memory_space<vmem>>, vector<12x128xf32>
    %163 = arith.maximumf %159, %160 : vector<12x128xf32>
    %164 = arith.maximumf %161, %162 : vector<12x128xf32>
    %165 = arith.maximumf %163, %164 : vector<12x128xf32>
    %166 = vector.broadcast %4 : vector<1x128xf32> to vector<12x128xf32>
    %167 = arith.addf %165, %166 : vector<12x128xf32>
    %cst_84 = arith.constant 0.000000e+00 : f32
    %168 = vector.broadcast %cst_84 : f32 to vector<12x128xf32>
    %169 = arith.maximumf %167, %168 : vector<12x128xf32>
    %170 = vector.extract_strided_slice %169 {offsets = [0, 0], sizes = [12, 64], strides = [1, 1]} : vector<12x128xf32> to vector<12x64xf32>
    %171 = arith.truncf %170 : vector<12x64xf32> to vector<12x64xbf16>
    %c132 = arith.constant 132 : index
    %c0_85 = arith.constant 0 : index
    %172 = vector.load %arg4[%c132, %c0_85] : memref<144x64xbf16, #tpu.memory_space<vmem>>, vector<12x64xbf16>
    tpu.vector_store %arg4[%c132, %c0_85], %171 {strides = array<i32>} : memref<144x64xbf16, #tpu.memory_space<vmem>>, vector<12x64xbf16>,
    return
  }
  func.func @transform_0(%arg0: i32) -> (i32, i32) {
    %c0_i32 = arith.constant 0 : i32
    %c0_i32_0 = arith.constant 0 : i32
    return %arg0, %c0_i32 : i32, i32
  }
  func.func @transform_1(%arg0: i32) -> (i32, i32) {
    %c0_i32 = arith.constant 0 : i32
    %c0_i32_0 = arith.constant 0 : i32
    %c0_i32_1 = arith.constant 0 : i32
    return %c0_i32, %c0_i32_0 : i32, i32
  }
  func.func @transform_2(%arg0: i32) -> (i32, i32) {
    %c0_i32 = arith.constant 0 : i32
    %c0_i32_0 = arith.constant 0 : i32
    %c0_i32_1 = arith.constant 0 : i32
    return %c0_i32, %c0_i32_0 : i32, i32
  }
  func.func @transform_3(%arg0: i32) -> (i32, i32) {
    %c0_i32 = arith.constant 0 : i32
    %c0_i32_0 = arith.constant 0 : i32
    return %arg0, %c0_i32 : i32, i32
  }
}

module attributes {stable_mosaic.version = 11 : i64} {
  func.func @_head_kernel(%arg0: i32, %arg1: memref<2x4608xbf16, #tpu.memory_space<vmem>>, %arg2: memref<4608x256xbf16, #tpu.memory_space<vmem>>, %arg3: memref<1x256xf32, #tpu.memory_space<vmem>>, %arg4: memref<256x128xbf16, #tpu.memory_space<vmem>>, %arg5: memref<1x128xf32, #tpu.memory_space<vmem>>, %arg6: memref<128x128xbf16, #tpu.memory_space<vmem>>, %arg7: memref<1x128xf32, #tpu.memory_space<vmem>>, %arg8: memref<128x128xbf16, #tpu.memory_space<vmem>>, %arg9: memref<1x128xf32, #tpu.memory_space<vmem>>, %arg10: memref<2x128xf32, #tpu.memory_space<vmem>>, %arg11: memref<2x128xf32, #tpu.memory_space<vmem>>, %arg12: memref<2x256xf32, #tpu.memory_space<vmem>>) attributes {dimension_semantics = [#tpu.dimension_semantics<arbitrary>], iteration_bounds = array<i64: 2>, scalar_prefetch = 0 : i64, scratch_operands = 1 : i64, tpu.core_type = #tpu.core_type<tc>, window_params = [{transform_indices = @transform_0, window_bounds = array<i64: 2, 4608>}, {transform_indices = @transform_1, window_bounds = array<i64: 4608, 256>}, {pipeline_mode = #tpu.pipeline_mode<synchronous>, transform_indices = @transform_2, window_bounds = array<i64: 1, 256>}, {pipeline_mode = #tpu.pipeline_mode<synchronous>, transform_indices = @transform_3, window_bounds = array<i64: 256, 128>}, {pipeline_mode = #tpu.pipeline_mode<synchronous>, transform_indices = @transform_4, window_bounds = array<i64: 1, 128>}, {pipeline_mode = #tpu.pipeline_mode<synchronous>, transform_indices = @transform_5, window_bounds = array<i64: 128, 128>}, {pipeline_mode = #tpu.pipeline_mode<synchronous>, transform_indices = @transform_6, window_bounds = array<i64: 1, 128>}, {pipeline_mode = #tpu.pipeline_mode<synchronous>, transform_indices = @transform_7, window_bounds = array<i64: 128, 128>}, {pipeline_mode = #tpu.pipeline_mode<synchronous>, transform_indices = @transform_8, window_bounds = array<i64: 1, 128>}, {pipeline_mode = #tpu.pipeline_mode<synchronous>, transform_indices = @transform_9, window_bounds = array<i64: 2, 128>}, {pipeline_mode = #tpu.pipeline_mode<synchronous>, transform_indices = @transform_10, window_bounds = array<i64: 2, 128>}]} {
    %c0_i32 = arith.constant 0 : i32
    %0 = arith.cmpi eq, %arg0, %c0_i32 : i32
    %1 = arith.extui %0 : i1 to i32
    %c0_i32_0 = arith.constant 0 : i32
    %2 = arith.cmpi ne, %1, %c0_i32_0 : i32
    scf.if %2 {
      %cst_9 = arith.constant 0.000000e+00 : f32
      %12 = vector.broadcast %cst_9 : f32 to vector<2x256xf32>
      %c0_10 = arith.constant 0 : index
      %c0_11 = arith.constant 0 : index
      %13 = vector.load %arg12[%c0_10, %c0_11] : memref<2x256xf32, #tpu.memory_space<vmem>>, vector<2x256xf32>
      tpu.vector_store %arg12[%c0_10, %c0_11], %12 {strides = array<i32>} : memref<2x256xf32, #tpu.memory_space<vmem>>, vector<2x256xf32>,
    } else {
    }
    %c0 = arith.constant 0 : index
    %c0_1 = arith.constant 0 : index
    %3 = vector.load %arg12[%c0, %c0_1] : memref<2x256xf32, #tpu.memory_space<vmem>>, vector<2x256xf32>
    %c0_2 = arith.constant 0 : index
    %c0_3 = arith.constant 0 : index
    %4 = vector.load %arg1[%c0_2, %c0_3] : memref<2x4608xbf16, #tpu.memory_space<vmem>>, vector<2x4608xbf16>
    %c0_4 = arith.constant 0 : index
    %c0_5 = arith.constant 0 : index
    %5 = vector.load %arg2[%c0_4, %c0_5] : memref<4608x256xbf16, #tpu.memory_space<vmem>>, vector<4608x256xbf16>
    %cst = arith.constant dense<0.000000e+00> : vector<2x256xf32>
    %6 = tpu.matmul %4, %5, %cst {dimension_numbers = #tpu.dot_dimension_numbers<[1], [0], [0], [1], [0, 0, 1, 1], [], []>} : vector<2x4608xbf16>, vector<4608x256xbf16>, vector<2x256xf32> -> vector<2x256xf32>
    %7 = arith.addf %3, %6 : vector<2x256xf32>
    %c0_6 = arith.constant 0 : index
    %c0_7 = arith.constant 0 : index
    %8 = vector.load %arg12[%c0_6, %c0_7] : memref<2x256xf32, #tpu.memory_space<vmem>>, vector<2x256xf32>
    tpu.vector_store %arg12[%c0_6, %c0_7], %7 {strides = array<i32>} : memref<2x256xf32, #tpu.memory_space<vmem>>, vector<2x256xf32>,
    %c1_i32 = arith.constant 1 : i32
    %9 = arith.cmpi eq, %arg0, %c1_i32 : i32
    %10 = arith.extui %9 : i1 to i32
    %c0_i32_8 = arith.constant 0 : i32
    %11 = arith.cmpi ne, %10, %c0_i32_8 : i32
    scf.if %11 {
      %c0_9 = arith.constant 0 : index
      %c0_10 = arith.constant 0 : index
      %12 = vector.load %arg12[%c0_9, %c0_10] : memref<2x256xf32, #tpu.memory_space<vmem>>, vector<2x256xf32>
      %c0_11 = arith.constant 0 : index
      %c0_12 = arith.constant 0 : index
      %13 = vector.load %arg3[%c0_11, %c0_12] : memref<1x256xf32, #tpu.memory_space<vmem>>, vector<1x256xf32>
      %14 = vector.broadcast %13 : vector<1x256xf32> to vector<2x256xf32>
      %15 = arith.addf %12, %14 : vector<2x256xf32>
      %cst_13 = arith.constant 0.000000e+00 : f32
      %16 = vector.broadcast %cst_13 : f32 to vector<2x256xf32>
      %17 = arith.maximumf %15, %16 : vector<2x256xf32>
      %18 = arith.truncf %17 : vector<2x256xf32> to vector<2x256xbf16>
      %c0_14 = arith.constant 0 : index
      %c0_15 = arith.constant 0 : index
      %19 = vector.load %arg4[%c0_14, %c0_15] : memref<256x128xbf16, #tpu.memory_space<vmem>>, vector<256x128xbf16>
      %cst_16 = arith.constant dense<0.000000e+00> : vector<2x128xf32>
      %20 = tpu.matmul %18, %19, %cst_16 {dimension_numbers = #tpu.dot_dimension_numbers<[1], [0], [0], [1], [0, 0, 1, 1], [], []>} : vector<2x256xbf16>, vector<256x128xbf16>, vector<2x128xf32> -> vector<2x128xf32>
      %c0_17 = arith.constant 0 : index
      %c0_18 = arith.constant 0 : index
      %21 = vector.load %arg5[%c0_17, %c0_18] : memref<1x128xf32, #tpu.memory_space<vmem>>, vector<1x128xf32>
      %22 = vector.broadcast %21 : vector<1x128xf32> to vector<2x128xf32>
      %23 = arith.addf %20, %22 : vector<2x128xf32>
      %c0_19 = arith.constant 0 : index
      %c0_20 = arith.constant 0 : index
      %24 = vector.load %arg10[%c0_19, %c0_20] : memref<2x128xf32, #tpu.memory_space<vmem>>, vector<2x128xf32>
      tpu.vector_store %arg10[%c0_19, %c0_20], %23 {strides = array<i32>} : memref<2x128xf32, #tpu.memory_space<vmem>>, vector<2x128xf32>,
      %25 = arith.truncf %23 : vector<2x128xf32> to vector<2x128xbf16>
      %c0_21 = arith.constant 0 : index
      %c0_22 = arith.constant 0 : index
      %26 = vector.load %arg6[%c0_21, %c0_22] : memref<128x128xbf16, #tpu.memory_space<vmem>>, vector<128x128xbf16>
      %cst_23 = arith.constant dense<0.000000e+00> : vector<2x128xf32>
      %27 = tpu.matmul %25, %26, %cst_23 {dimension_numbers = #tpu.dot_dimension_numbers<[1], [0], [0], [1], [0, 0, 1, 1], [], []>} : vector<2x128xbf16>, vector<128x128xbf16>, vector<2x128xf32> -> vector<2x128xf32>
      %c0_24 = arith.constant 0 : index
      %c0_25 = arith.constant 0 : index
      %28 = vector.load %arg7[%c0_24, %c0_25] : memref<1x128xf32, #tpu.memory_space<vmem>>, vector<1x128xf32>
      %29 = vector.broadcast %28 : vector<1x128xf32> to vector<2x128xf32>
      %30 = arith.addf %27, %29 : vector<2x128xf32>
      %cst_26 = arith.constant 0.000000e+00 : f32
      %31 = vector.broadcast %cst_26 : f32 to vector<2x128xf32>
      %32 = arith.maximumf %30, %31 : vector<2x128xf32>
      %33 = arith.truncf %32 : vector<2x128xf32> to vector<2x128xbf16>
      %c0_27 = arith.constant 0 : index
      %c0_28 = arith.constant 0 : index
      %34 = vector.load %arg8[%c0_27, %c0_28] : memref<128x128xbf16, #tpu.memory_space<vmem>>, vector<128x128xbf16>
      %cst_29 = arith.constant dense<0.000000e+00> : vector<2x128xf32>
      %35 = tpu.matmul %33, %34, %cst_29 {dimension_numbers = #tpu.dot_dimension_numbers<[1], [0], [0], [1], [0, 0, 1, 1], [], []>} : vector<2x128xbf16>, vector<128x128xbf16>, vector<2x128xf32> -> vector<2x128xf32>
      %c0_30 = arith.constant 0 : index
      %c0_31 = arith.constant 0 : index
      %36 = vector.load %arg9[%c0_30, %c0_31] : memref<1x128xf32, #tpu.memory_space<vmem>>, vector<1x128xf32>
      %37 = vector.broadcast %36 : vector<1x128xf32> to vector<2x128xf32>
      %38 = arith.addf %35, %37 : vector<2x128xf32>
      %c0_32 = arith.constant 0 : index
      %c0_33 = arith.constant 0 : index
      %39 = vector.load %arg11[%c0_32, %c0_33] : memref<2x128xf32, #tpu.memory_space<vmem>>, vector<2x128xf32>
      tpu.vector_store %arg11[%c0_32, %c0_33], %38 {strides = array<i32>} : memref<2x128xf32, #tpu.memory_space<vmem>>, vector<2x128xf32>,
    } else {
    }
    return
  }
  func.func @transform_0(%arg0: i32) -> (i32, i32) {
    %c0_i32 = arith.constant 0 : i32
    %c0_i32_0 = arith.constant 0 : i32
    return %c0_i32, %arg0 : i32, i32
  }
  func.func @transform_1(%arg0: i32) -> (i32, i32) {
    %c0_i32 = arith.constant 0 : i32
    %c0_i32_0 = arith.constant 0 : i32
    return %arg0, %c0_i32 : i32, i32
  }
  func.func @transform_2(%arg0: i32) -> (i32, i32) {
    %c0_i32 = arith.constant 0 : i32
    %c0_i32_0 = arith.constant 0 : i32
    %c0_i32_1 = arith.constant 0 : i32
    return %c0_i32, %c0_i32_0 : i32, i32
  }
  func.func @transform_3(%arg0: i32) -> (i32, i32) {
    %c0_i32 = arith.constant 0 : i32
    %c0_i32_0 = arith.constant 0 : i32
    %c0_i32_1 = arith.constant 0 : i32
    return %c0_i32, %c0_i32_0 : i32, i32
  }
  func.func @transform_4(%arg0: i32) -> (i32, i32) {
    %c0_i32 = arith.constant 0 : i32
    %c0_i32_0 = arith.constant 0 : i32
    %c0_i32_1 = arith.constant 0 : i32
    return %c0_i32, %c0_i32_0 : i32, i32
  }
  func.func @transform_5(%arg0: i32) -> (i32, i32) {
    %c0_i32 = arith.constant 0 : i32
    %c0_i32_0 = arith.constant 0 : i32
    %c0_i32_1 = arith.constant 0 : i32
    return %c0_i32, %c0_i32_0 : i32, i32
  }
  func.func @transform_6(%arg0: i32) -> (i32, i32) {
    %c0_i32 = arith.constant 0 : i32
    %c0_i32_0 = arith.constant 0 : i32
    %c0_i32_1 = arith.constant 0 : i32
    return %c0_i32, %c0_i32_0 : i32, i32
  }
  func.func @transform_7(%arg0: i32) -> (i32, i32) {
    %c0_i32 = arith.constant 0 : i32
    %c0_i32_0 = arith.constant 0 : i32
    %c0_i32_1 = arith.constant 0 : i32
    return %c0_i32, %c0_i32_0 : i32, i32
  }
  func.func @transform_8(%arg0: i32) -> (i32, i32) {
    %c0_i32 = arith.constant 0 : i32
    %c0_i32_0 = arith.constant 0 : i32
    %c0_i32_1 = arith.constant 0 : i32
    return %c0_i32, %c0_i32_0 : i32, i32
  }
  func.func @transform_9(%arg0: i32) -> (i32, i32) {
    %c0_i32 = arith.constant 0 : i32
    %c0_i32_0 = arith.constant 0 : i32
    %c0_i32_1 = arith.constant 0 : i32
    return %c0_i32, %c0_i32_0 : i32, i32
  }
  func.func @transform_10(%arg0: i32) -> (i32, i32) {
    %c0_i32 = arith.constant 0 : i32
    %c0_i32_0 = arith.constant 0 : i32
    %c0_i32_1 = arith.constant 0 : i32
    return %c0_i32, %c0_i32_0 : i32, i32
  }
}

</mosaic_0001>

<llo_original>
// kernel: simsiam_forward.3
$region0: #{simsiam_forward.3}
  #allocation0 [shape = 'u32[]', space=smem, size = 0x4, offset = 0x4, fixed_abs, tag = 'smem constant byte address 0x4 - core index']
  #allocation1 [shape = 'u32[144,128]{1,0:T(1,128)}', space=vmem, size = 0x12000, scoped, tag = 'internal scratch']
  %s0 = inlined_call_operand.vmem [shape: bf16[1352,9], index: 0, kind: input, shape index: {}]
  %s1 = inlined_call_operand.hbm [shape: bf16[9,32], index: 1, kind: input, shape index: {}]
  %s2 = inlined_call_operand.hbm [shape: f32[1,32], index: 2, kind: input, shape index: {}]
  %s3 = inlined_call_operand.vmem [shape: bf16[1352,32], index: 3, kind: output, shape index: {}]
  %s4 = sld [smem:[#allocation0]]
  $region30: #{simsiam_forward.3} parent=0
    _
  %s6 = ssub.s32 1, %s4
  %s7 = scalar_select 0, %s6, %s4
  $region1: #{simsiam_forward.3} parent=0
    #allocation2 [shape = 'u8[4096]{0}', space=vmem, size = 0x1000, scoped, tag = 'input window, operand 1, single buffered']
    #allocation3 [shape = 's32[1]{0}', space=sflag, size = 0x4, scoped, tag = 'scoped memory for simsiam_forward.3']
    #allocation4 [shape = 'u8[512]{0}', space=vmem, size = 0x400, scoped, tag = 'input window, operand 2, single buffered']
    #allocation5 [shape = 's32[1]{0}', space=sflag, size = 0x4, scoped, tag = 'scoped memory for simsiam_forward.3']
    %8 = vsyncpa [#allocation3], 0
    %9 = vsyncpa [#allocation5], 0
    // Predicated region
    $region2: #{simsiam_forward.3} parent=1 // pred_check
      _
    $region3: #{simsiam_forward.3} parent=1 // pred_check_branch
      %11 = sbr.rel (0) target = $region5
    $region4: #{simsiam_forward.3} parent=1 // pred_region
      _
    $region5: #{simsiam_forward.3} parent=1 // pred_fallthru
      _
    // Predicated region
    $region6: #{simsiam_forward.3} parent=1 // pred_check
      _
    $region7: #{simsiam_forward.3} parent=1 // pred_check_branch
      %13 = sbr.rel (0) target = $region9
    $region8: #{simsiam_forward.3} parent=1 // pred_region
      %s15 = ssub.s32 128, 128
      %16 = vsyncadd [#allocation3], %s15
      %s17 = sshll.u32 [#allocation2], 4
      %s18 = int_to_ptr.vmem [resolvable:$true] %s17
      %23 = dma.hbm_to_vmem [thread:$0]  %s1, 128, %s18, [#allocation3], 64, 64, 4
    $region9: #{simsiam_forward.3} parent=1 // pred_fallthru
      _
    // Predicated region
    $region10: #{simsiam_forward.3} parent=1 // pred_check
      _
    $region11: #{simsiam_forward.3} parent=1 // pred_check_branch
      %25 = sbr.rel (0) target = $region13
    $region12: #{simsiam_forward.3} parent=1 // pred_region
      %s27 = ssub.s32 16, 16
      %28 = vsyncadd [#allocation5], %s27
      %s30 = sshll.u32 [#allocation4], 4
      %s31 = int_to_ptr.vmem [resolvable:$true] %s30
      %33 = dma.hbm_to_vmem [thread:$0]  %s2, 16, %s31, [#allocation5]
    $region13: #{simsiam_forward.3} parent=1 // pred_fallthru
      _
    // Predicated region
    $region14: #{simsiam_forward.3} parent=1 // pred_check
      _
    $region15: #{simsiam_forward.3} parent=1 // pred_check_branch
      %35 = sbr.rel (0) target = $region17
    $region16: #{simsiam_forward.3} parent=1 // pred_region
      %36 = dma.done [#allocation3], 128
    $region17: #{simsiam_forward.3} parent=1 // pred_fallthru
      _
    // Predicated region
    $region18: #{simsiam_forward.3} parent=1 // pred_check
      _
    $region19: #{simsiam_forward.3} parent=1 // pred_check_branch
      %38 = sbr.rel (0) target = $region21
    $region20: #{simsiam_forward.3} parent=1 // pred_region
      %39 = dma.done [#allocation5], 16
    $region21: #{simsiam_forward.3} parent=1 // pred_fallthru
      _
    %v41 = vld [vmem:[%s0] sm:$0xf]
    %v42 = vld [vmem:[%s0 + $0x4] sm:$0xf]
    %v43 = vld [vmem:[%s0 + $0x8] sm:$0xf]
    %v44 = vld [vmem:[%s0 + $0xc] sm:$0xf]
    %v45 = vld [vmem:[%s0 + $0x10] sm:$0xf]
    %v46 = vld [vmem:[%s0 + $0x14] sm:$0xf]
    %v47 = vld [vmem:[%s0 + $0x18] sm:$0xf]
    %v48 = vld [vmem:[%s0 + $0x1c] sm:$0xf]
    %v49 = vld [vmem:[%s0 + $0x20] sm:$0xf]
    %v50 = vld [vmem:[%s0 + $0x24] sm:$0xf]
    %v51 = vld [vmem:[%s0 + $0x28] sm:$0xf]
    %v52 = vld [vmem:[%s0 + $0x2c] sm:$0xf]
    %v53 = vld [vmem:[%s0 + $0x30] sm:$0xf]
    %v54 = vld [vmem:[%s0 + $0x34] sm:$0xf]
    %v55 = vld [vmem:[%s0 + $0x38] sm:$0xf]
    %v56 = vld [vmem:[%s0 + $0x3c] sm:$0xf]
    %v57 = vld [vmem:[%s0 + $0x40] sm:$0xf]
    %v58 = vld [vmem:[%s0 + $0x44] sm:$0xf]
    %v59 = vld [vmem:[%s0 + $0x48] sm:$0xf]
    %v60 = vld [vmem:[%s0 + $0x4c] sm:$0xf]
    %v61 = vld [vmem:[%s0 + $0x50] sm:$0xf]
    %v62 = vld [vmem:[%s0 + $0x54] sm:$0xf]
    %v63 = vld [vmem:[%s0 + $0x58] sm:$0xf]
    %v64 = vld [vmem:[%s0 + $0x5c] sm:$0xf]
    %v65 = vld [vmem:[%s0 + $0x60] sm:$0xf]
    %v66 = vld [vmem:[%s0 + $0x64] sm:$0xf]
    %v67 = vld [vmem:[%s0 + $0x68] sm:$0xf]
    %v68 = vld [vmem:[%s0 + $0x6c] sm:$0xf]
    %v69 = vld [vmem:[%s0 + $0x70] sm:$0xf]
    %v70 = vld [vmem:[%s0 + $0x74] sm:$0xf]
    %v71 = vld [vmem:[%s0 + $0x78] sm:$0xf]
    %v72 = vld [vmem:[%s0 + $0x7c] sm:$0xf]
    %v73 = vld [vmem:[%s0 + $0x80] sm:$0xf]
    %v74 = vld [vmem:[%s0 + $0x84] sm:$0xf]
    %v75 = vld [vmem:[%s0 + $0x88] sm:$0xf]
    %v76 = vld [vmem:[%s0 + $0x8c] sm:$0xf]
    %v77 = vld [vmem:[%s0 + $0x90] sm:$0xf]
    %v78 = vld [vmem:[%s0 + $0x94] sm:$0xf]
    %v79 = vld [vmem:[%s0 + $0x98] sm:$0xf]
    %v80 = vld [vmem:[%s0 + $0x9c] sm:$0xf]
    %v81 = vld [vmem:[%s0 + $0xa0] sm:$0xf]
    %v82 = vld [vmem:[%s0 + $0xa4] sm:$0xf]
    %v83 = vld [vmem:[%s0 + $0xa8] sm:$0xf]
    %v84 = vld [vmem:[%s0 + $0xac] sm:$0xf]
    %v85 = vld [vmem:[%s0 + $0xb0] sm:$0xf]
    %v86 = vld [vmem:[%s0 + $0xb4] sm:$0xf]
    %v87 = vld [vmem:[%s0 + $0xb8] sm:$0xf]
    %v88 = vld [vmem:[%s0 + $0xbc] sm:$0xf]
    %v89 = vld [vmem:[%s0 + $0xc0] sm:$0xf]
    %v90 = vld [vmem:[%s0 + $0xc4] sm:$0xf]
    %v91 = vld [vmem:[%s0 + $0xc8] sm:$0xf]
    %v92 = vld [vmem:[%s0 + $0xcc] sm:$0xf]
    %v93 = vld [vmem:[%s0 + $0xd0] sm:$0xf]
    %v94 = vld [vmem:[%s0 + $0xd4] sm:$0xf]
    %v95 = vld [vmem:[%s0 + $0xd8] sm:$0xf]
    %v96 = vld [vmem:[%s0 + $0xdc] sm:$0xf]
    %v97 = vld [vmem:[%s0 + $0xe0] sm:$0xf]
    %v98 = vld [vmem:[%s0 + $0xe4] sm:$0xf]
    %v99 = vld [vmem:[%s0 + $0xe8] sm:$0xf]
    %v100 = vld [vmem:[%s0 + $0xec] sm:$0xf]
    %v101 = vld [vmem:[%s0 + $0xf0] sm:$0xf]
    %v102 = vld [vmem:[%s0 + $0xf4] sm:$0xf]
    %v103 = vld [vmem:[%s0 + $0xf8] sm:$0xf]
    %v104 = vld [vmem:[%s0 + $0xfc] sm:$0xf]
    %v105 = vld [vmem:[%s0 + $0x100] sm:$0xf]
    %v106 = vld [vmem:[%s0 + $0x104] sm:$0xf]
    %v107 = vld [vmem:[%s0 + $0x108] sm:$0xf]
    %v108 = vld [vmem:[%s0 + $0x10c] sm:$0xf]
    %v109 = vld [vmem:[%s0 + $0x110] sm:$0xf]
    %v110 = vld [vmem:[%s0 + $0x114] sm:$0xf]
    %v111 = vld [vmem:[%s0 + $0x118] sm:$0xf]
    %v112 = vld [vmem:[%s0 + $0x11c] sm:$0xf]
    %v113 = vld [vmem:[%s0 + $0x120] sm:$0xf]
    %v114 = vld [vmem:[%s0 + $0x124] sm:$0xf]
    %v115 = vld [vmem:[%s0 + $0x128] sm:$0xf]
    %v116 = vld [vmem:[%s0 + $0x12c] sm:$0xf]
    %v117 = vld [vmem:[%s0 + $0x130] sm:$0xf]
    %v118 = vld [vmem:[%s0 + $0x134] sm:$0xf]
    %v119 = vld [vmem:[%s0 + $0x138] sm:$0xf]
    %v120 = vld [vmem:[%s0 + $0x13c] sm:$0xf]
    %v121 = vld [vmem:[%s0 + $0x140] sm:$0xf]
    %v122 = vld [vmem:[%s0 + $0x144] sm:$0xf]
    %v123 = vld [vmem:[%s0 + $0x148] sm:$0xf]
    %v124 = vld [vmem:[%s0 + $0x14c] sm:$0xf]
    %v125 = vld [vmem:[%s0 + $0x150] sm:$0xf]
    %v126 = vld [vmem:[%s0 + $0x154] sm:$0xf]
    %v127 = vld [vmem:[%s0 + $0x158] sm:$0xf]
    %v128 = vld [vmem:[%s0 + $0x15c] sm:$0xf]
    %v129 = vld [vmem:[%s0 + $0x160] sm:$0xf]
    %v130 = vld [vmem:[%s0 + $0x164] sm:$0xf]
    %v131 = vld [vmem:[%s0 + $0x168] sm:$0xf]
    %v132 = vld [vmem:[%s0 + $0x16c] sm:$0xf]
    %v133 = vld [vmem:[%s0 + $0x170] sm:$0xf]
    %v134 = vld [vmem:[%s0 + $0x174] sm:$0xf]
    %v135 = vld [vmem:[%s0 + $0x178] sm:$0xf]
    %v136 = vld [vmem:[%s0 + $0x17c] sm:$0xf]
    %v137 = vld [vmem:[%s0 + $0x180] sm:$0xf]
    %v138 = vld [vmem:[%s0 + $0x184] sm:$0xf]
    %v139 = vld [vmem:[%s0 + $0x188] sm:$0xf]
    %v140 = vld [vmem:[%s0 + $0x18c] sm:$0xf]
    %v141 = vld [vmem:[%s0 + $0x190] sm:$0xf]
    %v142 = vld [vmem:[%s0 + $0x194] sm:$0xf]
    %v143 = vld [vmem:[%s0 + $0x198] sm:$0xf]
    %v144 = vld [vmem:[%s0 + $0x19c] sm:$0xf]
    %v145 = vld [vmem:[%s0 + $0x1a0] sm:$0xf]
    %v146 = vld [vmem:[%s0 + $0x1a4] sm:$0xf]
    %v147 = vld [vmem:[%s0 + $0x1a8] sm:$0xf]
    %v148 = vld [vmem:[%s0 + $0x1ac] sm:$0xf]
    %v149 = vld [vmem:[%s0 + $0x1b0] sm:$0xf]
    %v150 = vld [vmem:[%s0 + $0x1b4] sm:$0xf]
    %v151 = vld [vmem:[%s0 + $0x1b8] sm:$0xf]
    %v152 = vld [vmem:[%s0 + $0x1bc] sm:$0xf]
    %v153 = vld [vmem:[%s0 + $0x1c0] sm:$0xf]
    %v154 = vld [vmem:[%s0 + $0x1c4] sm:$0xf]
    %v155 = vld [vmem:[%s0 + $0x1c8] sm:$0xf]
    %v156 = vld [vmem:[%s0 + $0x1cc] sm:$0xf]
    %v157 = vld [vmem:[%s0 + $0x1d0] sm:$0xf]
    %v158 = vld [vmem:[%s0 + $0x1d4] sm:$0xf]
    %v159 = vld [vmem:[%s0 + $0x1d8] sm:$0xf]
    %v160 = vld [vmem:[%s0 + $0x1dc] sm:$0xf]
    %v161 = vld [vmem:[%s0 + $0x1e0] sm:$0xf]
    %v162 = vld [vmem:[%s0 + $0x1e4] sm:$0xf]
    %v163 = vld [vmem:[%s0 + $0x1e8] sm:$0xf]
    %v164 = vld [vmem:[%s0 + $0x1ec] sm:$0xf]
    %v165 = vld [vmem:[%s0 + $0x1f0] sm:$0xf]
    %v166 = vld [vmem:[%s0 + $0x1f4] sm:$0xf]
    %v167 = vld [vmem:[%s0 + $0x1f8] sm:$0xf]
    %v168 = vld [vmem:[%s0 + $0x1fc] sm:$0xf]
    %v169 = vld [vmem:[%s0 + $0x200] sm:$0xf]
    %v170 = vld [vmem:[%s0 + $0x204] sm:$0xf]
    %v171 = vld [vmem:[%s0 + $0x208] sm:$0xf]
    %v172 = vld [vmem:[%s0 + $0x20c] sm:$0xf]
    %v173 = vld [vmem:[%s0 + $0x210] sm:$0xf]
    %v174 = vld [vmem:[%s0 + $0x214] sm:$0xf]
    %v175 = vld [vmem:[%s0 + $0x218] sm:$0xf]
    %v176 = vld [vmem:[%s0 + $0x21c] sm:$0xf]
    %v177 = vld [vmem:[%s0 + $0x220] sm:$0xf]
    %v178 = vld [vmem:[%s0 + $0x224] sm:$0xf]
    %v179 = vld [vmem:[%s0 + $0x228] sm:$0xf]
    %v180 = vld [vmem:[%s0 + $0x22c] sm:$0xf]
    %v181 = vld [vmem:[%s0 + $0x230] sm:$0xf]
    %v182 = vld [vmem:[%s0 + $0x234] sm:$0xf]
    %v183 = vld [vmem:[%s0 + $0x238] sm:$0xf]
    %v184 = vld [vmem:[%s0 + $0x23c] sm:$0xf]
    %v185 = vld [vmem:[%s0 + $0x240] sm:$0xf]
    %v186 = vld [vmem:[%s0 + $0x244] sm:$0xf]
    %v187 = vld [vmem:[%s0 + $0x248] sm:$0xf]
    %v188 = vld [vmem:[%s0 + $0x24c] sm:$0xf]
    %v189 = vld [vmem:[%s0 + $0x250] sm:$0xf]
    %v190 = vld [vmem:[%s0 + $0x254] sm:$0xf]
    %v191 = vld [vmem:[%s0 + $0x258] sm:$0xf]
    %v192 = vld [vmem:[%s0 + $0x25c] sm:$0xf]
    %v193 = vld [vmem:[%s0 + $0x260] sm:$0xf]
    %v194 = vld [vmem:[%s0 + $0x264] sm:$0xf]
    %v195 = vld [vmem:[%s0 + $0x268] sm:$0xf]
    %v196 = vld [vmem:[%s0 + $0x26c] sm:$0xf]
    %v197 = vld [vmem:[%s0 + $0x270] sm:$0xf]
    %v198 = vld [vmem:[%s0 + $0x274] sm:$0xf]
    %v199 = vld [vmem:[%s0 + $0x278] sm:$0xf]
    %v200 = vld [vmem:[%s0 + $0x27c] sm:$0xf]
    %v201 = vld [vmem:[%s0 + $0x280] sm:$0xf]
    %v202 = vld [vmem:[%s0 + $0x284] sm:$0xf]
    %v203 = vld [vmem:[%s0 + $0x288] sm:$0xf]
    %v204 = vld [vmem:[%s0 + $0x28c] sm:$0xf]
    %v205 = vld [vmem:[%s0 + $0x290] sm:$0xf]
    %v206 = vld [vmem:[%s0 + $0x294] sm:$0xf]
    %v207 = vld [vmem:[%s0 + $0x298] sm:$0xf]
    %v208 = vld [vmem:[%s0 + $0x29c] sm:$0xf]
    %v209 = vld [vmem:[%s0 + $0x2a0] sm:$0xf]
    %v210 = vld [vmem:[#allocation2] sm:$0xf]
    %v211 = vld [vmem:[#allocation2 + $0x4] sm:$0x1]
    %v212 = vld [vmem:[#allocation4] sm:$0x1]
    %v214 = vlaneseq
    %v215 = vshrl.u32 %v214, 7
    %v216 = vsub.s32 0, %v215
    %v217 = vrot.slane %v212, %v216
    %v388 = vunpack.c.l.b16 %v41
    %v389 = vunpack.c.l.b16 %v42
    %v390 = vunpack.c.l.b16 %v43
    %v391 = vunpack.c.l.b16 %v44
    %v392 = vunpack.c.l.b16 %v45
    %v393 = vunpack.c.l.b16 %v46
    %v394 = vunpack.c.l.b16 %v47
    %v395 = vunpack.c.l.b16 %v48
    %v396 = vunpack.c.l.b16 %v49
    %v397 = vunpack.c.l.b16 %v50
    %v398 = vunpack.c.l.b16 %v51
    %v399 = vunpack.c.l.b16 %v52
    %v400 = vunpack.c.l.b16 %v53
    %v401 = vunpack.c.l.b16 %v54
    %v402 = vunpack.c.l.b16 %v55
    %v403 = vunpack.c.l.b16 %v56
    %v404 = vunpack.c.l.b16 %v57
    %v405 = vunpack.c.l.b16 %v58
    %v406 = vunpack.c.l.b16 %v59
    %v407 = vunpack.c.l.b16 %v60
    %v408 = vunpack.c.l.b16 %v61
    %v409 = vunpack.c.l.b16 %v62
    %v410 = vunpack.c.l.b16 %v63
    %v411 = vunpack.c.l.b16 %v64
    %v412 = vunpack.c.l.b16 %v65
    %v413 = vunpack.c.l.b16 %v66
    %v414 = vunpack.c.l.b16 %v67
    %v415 = vunpack.c.l.b16 %v68
    %v416 = vunpack.c.l.b16 %v69
    %v417 = vunpack.c.l.b16 %v70
    %v418 = vunpack.c.l.b16 %v71
    %v419 = vunpack.c.l.b16 %v72
    %v420 = vunpack.c.l.b16 %v73
    %v421 = vunpack.c.l.b16 %v74
    %v422 = vunpack.c.l.b16 %v75
    %v423 = vunpack.c.l.b16 %v76
    %v424 = vunpack.c.l.b16 %v77
    %v425 = vunpack.c.l.b16 %v78
    %v426 = vunpack.c.l.b16 %v79
    %v427 = vunpack.c.l.b16 %v80
    %v428 = vunpack.c.l.b16 %v81
    %v429 = vunpack.c.l.b16 %v82
    %v430 = vunpack.c.l.b16 %v83
    %v431 = vunpack.c.l.b16 %v84
    %v432 = vunpack.c.l.b16 %v85
    %v433 = vunpack.c.l.b16 %v86
    %v434 = vunpack.c.l.b16 %v87
    %v435 = vunpack.c.l.b16 %v88
    %v436 = vunpack.c.l.b16 %v89
    %v437 = vunpack.c.l.b16 %v90
    %v438 = vunpack.c.l.b16 %v91
    %v439 = vunpack.c.l.b16 %v92
    %v440 = vunpack.c.l.b16 %v93
    %v441 = vunpack.c.l.b16 %v94
    %v442 = vunpack.c.l.b16 %v95
    %v443 = vunpack.c.l.b16 %v96
    %v444 = vunpack.c.l.b16 %v97
    %v445 = vunpack.c.l.b16 %v98
    %v446 = vunpack.c.l.b16 %v99
    %v447 = vunpack.c.l.b16 %v100
    %v448 = vunpack.c.l.b16 %v101
    %v449 = vunpack.c.l.b16 %v102
    %v450 = vunpack.c.l.b16 %v103
    %v451 = vunpack.c.l.b16 %v104
    %v452 = vunpack.c.l.b16 %v105
    %v453 = vunpack.c.l.b16 %v106
    %v454 = vunpack.c.l.b16 %v107
    %v455 = vunpack.c.l.b16 %v108
    %v456 = vunpack.c.l.b16 %v109
    %v457 = vunpack.c.l.b16 %v110
    %v458 = vunpack.c.l.b16 %v111
    %v459 = vunpack.c.l.b16 %v112
    %v460 = vunpack.c.l.b16 %v113
    %v461 = vunpack.c.l.b16 %v114
    %v462 = vunpack.c.l.b16 %v115
    %v463 = vunpack.c.l.b16 %v116
    %v464 = vunpack.c.l.b16 %v117
    %v465 = vunpack.c.l.b16 %v118
    %v466 = vunpack.c.l.b16 %v119
    %v467 = vunpack.c.l.b16 %v120
    %v468 = vunpack.c.l.b16 %v121
    %v469 = vunpack.c.l.b16 %v122
    %v470 = vunpack.c.l.b16 %v123
    %v471 = vunpack.c.l.b16 %v124
    %v472 = vunpack.c.l.b16 %v125
    %v473 = vunpack.c.l.b16 %v126
    %v474 = vunpack.c.l.b16 %v127
    %v475 = vunpack.c.l.b16 %v128
    %v476 = vunpack.c.l.b16 %v129
    %v477 = vunpack.c.l.b16 %v130
    %v478 = vunpack.c.l.b16 %v131
    %v479 = vunpack.c.l.b16 %v132
    %v480 = vunpack.c.l.b16 %v133
    %v481 = vunpack.c.l.b16 %v134
    %v482 = vunpack.c.l.b16 %v135
    %v483 = vunpack.c.l.b16 %v136
    %v484 = vunpack.c.l.b16 %v137
    %v485 = vunpack.c.l.b16 %v138
    %v486 = vunpack.c.l.b16 %v139
    %v487 = vunpack.c.l.b16 %v140
    %v488 = vunpack.c.l.b16 %v141
    %v489 = vunpack.c.l.b16 %v142
    %v490 = vunpack.c.l.b16 %v143
    %v491 = vunpack.c.l.b16 %v144
    %v492 = vunpack.c.l.b16 %v145
    %v493 = vunpack.c.l.b16 %v146
    %v494 = vunpack.c.l.b16 %v147
    %v495 = vunpack.c.l.b16 %v148
    %v496 = vunpack.c.l.b16 %v149
    %v497 = vunpack.c.l.b16 %v150
    %v498 = vunpack.c.l.b16 %v151
    %v499 = vunpack.c.l.b16 %v152
    %v500 = vunpack.c.l.b16 %v153
    %v501 = vunpack.c.l.b16 %v154
    %v502 = vunpack.c.l.b16 %v155
    %v503 = vunpack.c.l.b16 %v156
    %v504 = vunpack.c.l.b16 %v157
    %v505 = vunpack.c.l.b16 %v158
    %v506 = vunpack.c.l.b16 %v159
    %v507 = vunpack.c.l.b16 %v160
    %v508 = vunpack.c.l.b16 %v161
    %v509 = vunpack.c.l.b16 %v162
    %v510 = vunpack.c.l.b16 %v163
    %v511 = vunpack.c.l.b16 %v164
    %v512 = vunpack.c.l.b16 %v165
    %v513 = vunpack.c.l.b16 %v166
    %v514 = vunpack.c.l.b16 %v167
    %v515 = vunpack.c.l.b16 %v168
    %v516 = vunpack.c.l.b16 %v169
    %v517 = vunpack.c.l.b16 %v170
    %v518 = vunpack.c.l.b16 %v171
    %v519 = vunpack.c.l.b16 %v172
    %v520 = vunpack.c.l.b16 %v173
    %v521 = vunpack.c.l.b16 %v174
    %v522 = vunpack.c.l.b16 %v175
    %v523 = vunpack.c.l.b16 %v176
    %v524 = vunpack.c.l.b16 %v177
    %v525 = vunpack.c.l.b16 %v178
    %v526 = vunpack.c.l.b16 %v179
    %v527 = vunpack.c.l.b16 %v180
    %v528 = vunpack.c.l.b16 %v181
    %v529 = vunpack.c.l.b16 %v182
    %v530 = vunpack.c.l.b16 %v183
    %v531 = vunpack.c.l.b16 %v184
    %v532 = vunpack.c.l.b16 %v185
    %v533 = vunpack.c.l.b16 %v186
    %v534 = vunpack.c.l.b16 %v187
    %v535 = vunpack.c.l.b16 %v188
    %v536 = vunpack.c.l.b16 %v189
    %v537 = vunpack.c.l.b16 %v190
    %v538 = vunpack.c.l.b16 %v191
    %v539 = vunpack.c.l.b16 %v192
    %v540 = vunpack.c.l.b16 %v193
    %v541 = vunpack.c.l.b16 %v194
    %v542 = vunpack.c.l.b16 %v195
    %v543 = vunpack.c.l.b16 %v196
    %v544 = vunpack.c.l.b16 %v197
    %v545 = vunpack.c.l.b16 %v198
    %v546 = vunpack.c.l.b16 %v199
    %v547 = vunpack.c.l.b16 %v200
    %v548 = vunpack.c.l.b16 %v201
    %v549 = vunpack.c.l.b16 %v202
    %v550 = vunpack.c.l.b16 %v203
    %v551 = vunpack.c.l.b16 %v204
    %v552 = vunpack.c.l.b16 %v205
    %v553 = vunpack.c.l.b16 %v206
    %v554 = vunpack.c.l.b16 %v207
    %v555 = vunpack.c.l.b16 %v208
    %v556 = vunpack.c.l.b16 %v209
    %v557 = vpack.c.b16 %v389, %v388
    %v558 = vpack.c.b16 %v391, %v390
    %v559 = vpack.c.b16 %v393, %v392
    %v560 = vpack.c.b16 %v395, %v394
    %v561 = vpack.c.b16 %v397, %v396
    %v562 = vpack.c.b16 %v399, %v398
    %v563 = vpack.c.b16 %v401, %v400
    %v564 = vpack.c.b16 %v403, %v402
    %v565 = vpack.c.b16 %v405, %v404
    %v566 = vpack.c.b16 %v407, %v406
    %v567 = vpack.c.b16 %v409, %v408
    %v568 = vpack.c.b16 %v411, %v410
    %v569 = vpack.c.b16 %v413, %v412
    %v570 = vpack.c.b16 %v415, %v414
    %v571 = vpack.c.b16 %v417, %v416
    %v572 = vpack.c.b16 %v419, %v418
    %v573 = vpack.c.b16 %v421, %v420
    %v574 = vpack.c.b16 %v423, %v422
    %v575 = vpack.c.b16 %v425, %v424
    %v576 = vpack.c.b16 %v427, %v426
    %v577 = vpack.c.b16 %v429, %v428
    %v578 = vpack.c.b16 %v431, %v430
    %v579 = vpack.c.b16 %v433, %v432
    %v580 = vpack.c.b16 %v435, %v434
    %v581 = vpack.c.b16 %v437, %v436
    %v582 = vpack.c.b16 %v439, %v438
    %v583 = vpack.c.b16 %v441, %v440
    %v584 = vpack.c.b16 %v443, %v442
    %v585 = vpack.c.b16 %v445, %v444
    %v586 = vpack.c.b16 %v447, %v446
    %v587 = vpack.c.b16 %v449, %v448
    %v588 = vpack.c.b16 %v451, %v450
    %v589 = vpack.c.b16 %v453, %v452
    %v590 = vpack.c.b16 %v455, %v454
    %v591 = vpack.c.b16 %v457, %v456
    %v592 = vpack.c.b16 %v459, %v458
    %v593 = vpack.c.b16 %v461, %v460
    %v594 = vpack.c.b16 %v463, %v462
    %v595 = vpack.c.b16 %v465, %v464
    %v596 = vpack.c.b16 %v467, %v466
    %v597 = vpack.c.b16 %v469, %v468
    %v598 = vpack.c.b16 %v471, %v470
    %v599 = vpack.c.b16 %v473, %v472
    %v600 = vpack.c.b16 %v475, %v474
    %v601 = vpack.c.b16 %v477, %v476
    %v602 = vpack.c.b16 %v479, %v478
    %v603 = vpack.c.b16 %v481, %v480
    %v604 = vpack.c.b16 %v483, %v482
    %v605 = vpack.c.b16 %v485, %v484
    %v606 = vpack.c.b16 %v487, %v486
    %v607 = vpack.c.b16 %v489, %v488
    %v608 = vpack.c.b16 %v491, %v490
    %v609 = vpack.c.b16 %v493, %v492
    %v610 = vpack.c.b16 %v495, %v494
    %v611 = vpack.c.b16 %v497, %v496
    %v612 = vpack.c.b16 %v499, %v498
    %v613 = vpack.c.b16 %v501, %v500
    %v614 = vpack.c.b16 %v503, %v502
    %v615 = vpack.c.b16 %v505, %v504
    %v616 = vpack.c.b16 %v507, %v506
    %v617 = vpack.c.b16 %v509, %v508
    %v618 = vpack.c.b16 %v511, %v510
    %v619 = vpack.c.b16 %v513, %v512
    %v620 = vpack.c.b16 %v515, %v514
    %v621 = vpack.c.b16 %v517, %v516
    %v622 = vpack.c.b16 %v519, %v518
    %v623 = vpack.c.b16 %v521, %v520
    %v624 = vpack.c.b16 %v523, %v522
    %v625 = vpack.c.b16 %v525, %v524
    %v626 = vpack.c.b16 %v527, %v526
    %v627 = vpack.c.b16 %v529, %v528
    %v628 = vpack.c.b16 %v531, %v530
    %v629 = vpack.c.b16 %v533, %v532
    %v630 = vpack.c.b16 %v535, %v534
    %v631 = vpack.c.b16 %v537, %v536
    %v632 = vpack.c.b16 %v539, %v538
    %v633 = vpack.c.b16 %v541, %v540
    %v634 = vpack.c.b16 %v543, %v542
    %v635 = vpack.c.b16 %v545, %v544
    %v636 = vpack.c.b16 %v547, %v546
    %v637 = vpack.c.b16 %v549, %v548
    %v638 = vpack.c.b16 %v551, %v550
    %v639 = vpack.c.b16 %v553, %v552
    %v640 = vpack.c.b16 %v555, %v554
    %v641 = vpack.c.b16 %v556, %v556
    %v644 = vunpack.c.l.b16 %v210
    %v645 = vunpack.c.l.b16 %v211
    %v646 = vpack.c.b16 %v645, %v644
    %vm647 = vcmask 72704
    %v649 = vsel %vm647, %v557, 0
    %v652 = vsel %vm647, %v558, 0
    %v655 = vsel %vm647, %v559, 0
    %v658 = vsel %vm647, %v560, 0
    %v661 = vsel %vm647, %v561, 0
    %v664 = vsel %vm647, %v562, 0
    %v667 = vsel %vm647, %v563, 0
    %v670 = vsel %vm647, %v564, 0
    %v673 = vsel %vm647, %v565, 0
    %v676 = vsel %vm647, %v566, 0
    %v679 = vsel %vm647, %v567, 0
    %v682 = vsel %vm647, %v568, 0
    %v685 = vsel %vm647, %v569, 0
    %v688 = vsel %vm647, %v570, 0
    %v691 = vsel %vm647, %v571, 0
    %v694 = vsel %vm647, %v572, 0
    %v697 = vsel %vm647, %v573, 0
    %v700 = vsel %vm647, %v574, 0
    %v703 = vsel %vm647, %v575, 0
    %v706 = vsel %vm647, %v576, 0
    %v709 = vsel %vm647, %v577, 0
    %v712 = vsel %vm647, %v578, 0
    %v715 = vsel %vm647, %v579, 0
    %v718 = vsel %vm647, %v580, 0
    %v721 = vsel %vm647, %v581, 0
    %v724 = vsel %vm647, %v582, 0
    %v727 = vsel %vm647, %v583, 0
    %v730 = vsel %vm647, %v584, 0
    %v733 = vsel %vm647, %v585, 0
    %v736 = vsel %vm647, %v586, 0
    %v739 = vsel %vm647, %v587, 0
    %v742 = vsel %vm647, %v588, 0
    %v745 = vsel %vm647, %v589, 0
    %v748 = vsel %vm647, %v590, 0
    %v751 = vsel %vm647, %v591, 0
    %v754 = vsel %vm647, %v592, 0
    %v757 = vsel %vm647, %v593, 0
    %v760 = vsel %vm647, %v594, 0
    %v763 = vsel %vm647, %v595, 0
    %v766 = vsel %vm647, %v596, 0
    %v769 = vsel %vm647, %v597, 0
    %v772 = vsel %vm647, %v598, 0
    %v775 = vsel %vm647, %v599, 0
    %v778 = vsel %vm647, %v600, 0
    %v781 = vsel %vm647, %v601, 0
    %v784 = vsel %vm647, %v602, 0
    %v787 = vsel %vm647, %v603, 0
    %v790 = vsel %vm647, %v604, 0
    %v793 = vsel %vm647, %v605, 0
    %v796 = vsel %vm647, %v606, 0
    %v799 = vsel %vm647, %v607, 0
    %v802 = vsel %vm647, %v608, 0
    %v805 = vsel %vm647, %v609, 0
    %v808 = vsel %vm647, %v610, 0
    %v811 = vsel %vm647, %v611, 0
    %v814 = vsel %vm647, %v612, 0
    %v817 = vsel %vm647, %v613, 0
    %v820 = vsel %vm647, %v614, 0
    %v823 = vsel %vm647, %v615, 0
    %v826 = vsel %vm647, %v616, 0
    %v829 = vsel %vm647, %v617, 0
    %v832 = vsel %vm647, %v618, 0
    %v835 = vsel %vm647, %v619, 0
    %v838 = vsel %vm647, %v620, 0
    %v841 = vsel %vm647, %v621, 0
    %v844 = vsel %vm647, %v622, 0
    %v847 = vsel %vm647, %v623, 0
    %v850 = vsel %vm647, %v624, 0
    %v853 = vsel %vm647, %v625, 0
    %v856 = vsel %vm647, %v626, 0
    %v859 = vsel %vm647, %v627, 0
    %v862 = vsel %vm647, %v628, 0
    %v865 = vsel %vm647, %v629, 0
    %v868 = vsel %vm647, %v630, 0
    %v871 = vsel %vm647, %v631, 0
    %v874 = vsel %vm647, %v632, 0
    %v877 = vsel %vm647, %v633, 0
    %v880 = vsel %vm647, %v634, 0
    %v883 = vsel %vm647, %v635, 0
    %v886 = vsel %vm647, %v636, 0
    %v889 = vsel %vm647, %v637, 0
    %v892 = vsel %vm647, %v638, 0
    %v895 = vsel %vm647, %v639, 0
    %v898 = vsel %vm647, %v640, 0
    %v901 = vsel %vm647, %v641, 0
    %vm903 = vcmask 1043456
    %vm904 = vcmask 1044480
    %v905 = vsel %vm903, 4294967295, 65535
    %v906 = vsel %vm904, %v905, 0
    %v908 = vand.u32 %v646, %v906
    %910 = vmatprep.subr.bf16.mxu0 0
    %911 = vmatpush1.bf16.msra.mxu0 %v908
    %912 = vmatprep.subr.bf16.mxu0 0
    %913 = vmatpush1.bf16.msra.mxu0 0
    %914 = vmatprep.subr.bf16.mxu0 0
    %915 = vmatpush1.bf16.msra.mxu0 0
    %916 = vmatprep.subr.bf16.mxu0 0
    %917 = vmatpush1.bf16.msra.mxu0 0
    %918 = vmatprep.subr.bf16.mxu0 0
    %919 = vmatpush1.bf16.msra.mxu0 0
    %920 = vmatprep.subr.bf16.mxu0 0
    %921 = vmatpush1.bf16.msra.mxu0 0
    %922 = vmatprep.subr.bf16.mxu0 0
    %923 = vmatpush1.bf16.msra.mxu0 0
    %924 = vmatprep.subr.bf16.mxu0 0
    %925 = vmatpush1.bf16.msra.mxu0 0
    %926 = vmatprep.subr.bf16.mxu0 0
    %927 = vmatpush1.bf16.msra.mxu0 0
    %928 = vmatprep.subr.bf16.mxu0 0
    %929 = vmatpush1.bf16.msra.mxu0 0
    %930 = vmatprep.subr.bf16.mxu0 0
    %931 = vmatpush1.bf16.msra.mxu0 0
    %932 = vmatprep.subr.bf16.mxu0 0
    %933 = vmatpush1.bf16.msra.mxu0 0
    %934 = vmatprep.subr.bf16.mxu0 0
    %935 = vmatpush1.bf16.msra.mxu0 0
    %936 = vmatprep.subr.bf16.mxu0 0
    %937 = vmatpush1.bf16.msra.mxu0 0
    %938 = vmatprep.subr.bf16.mxu0 0
    %939 = vmatpush1.bf16.msra.mxu0 0
    %940 = vmatprep.subr.bf16.mxu0 0
    %941 = vmatpush1.bf16.msra.mxu0 0
    %942 = vmatprep.mubr.bf16.mxu0 0
    %943 = vmatmul.mubr.bf16.gmra.mrb[0].mxu0 %v649
    %v944 = vpop.f32.mrb[0].mxu0
    %v945 = vadd.f32 %v217, %v944
    %v946 = vpop.f32.mrb[0].mxu0
    %v947 = vpop.f32.mrb[0].mxu0
    %v948 = vadd.f32 %v217, %v947
    %v949 = vpop.f32.mrb[0].mxu0
    %950 = vmatprep.mubr.bf16.mxu0 0
    %951 = vmatmul.mubr.bf16.gmra.mrb[0].mxu0 %v652
    %v952 = vpop.f32.mrb[0].mxu0
    %v953 = vadd.f32 %v217, %v952
    %v954 = vpop.f32.mrb[0].mxu0
    %v955 = vpop.f32.mrb[0].mxu0
    %v956 = vadd.f32 %v217, %v955
    %v957 = vpop.f32.mrb[0].mxu0
    %958 = vmatprep.mubr.bf16.mxu0 0
    %959 = vmatmul.mubr.bf16.gmra.mrb[0].mxu0 %v655
    %v960 = vpop.f32.mrb[0].mxu0
    %v961 = vadd.f32 %v217, %v960
    %v962 = vpop.f32.mrb[0].mxu0
    %v963 = vpop.f32.mrb[0].mxu0
    %v964 = vadd.f32 %v217, %v963
    %v965 = vpop.f32.mrb[0].mxu0
    %966 = vmatprep.mubr.bf16.mxu0 0
    %967 = vmatmul.mubr.bf16.gmra.mrb[0].mxu0 %v658
    %v968 = vpop.f32.mrb[0].mxu0
    %v969 = vadd.f32 %v217, %v968
    %v970 = vpop.f32.mrb[0].mxu0
    %v971 = vpop.f32.mrb[0].mxu0
    %v972 = vadd.f32 %v217, %v971
    %v973 = vpop.f32.mrb[0].mxu0
    %974 = vmatprep.mubr.bf16.mxu0 0
    %975 = vmatmul.mubr.bf16.gmra.mrb[0].mxu0 %v661
    %v976 = vpop.f32.mrb[0].mxu0
    %v977 = vadd.f32 %v217, %v976
    %v978 = vpop.f32.mrb[0].mxu0
    %v979 = vpop.f32.mrb[0].mxu0
    %v980 = vadd.f32 %v217, %v979
    %v981 = vpop.f32.mrb[0].mxu0
    %982 = vmatprep.mubr.bf16.mxu0 0
    %983 = vmatmul.mubr.bf16.gmra.mrb[0].mxu0 %v664
    %v984 = vpop.f32.mrb[0].mxu0
    %v985 = vadd.f32 %v217, %v984
    %v986 = vpop.f32.mrb[0].mxu0
    %v987 = vpop.f32.mrb[0].mxu0
    %v988 = vadd.f32 %v217, %v987
    %v989 = vpop.f32.mrb[0].mxu0
    %990 = vmatprep.mubr.bf16.mxu0 0
    %991 = vmatmul.mubr.bf16.gmra.mrb[0].mxu0 %v667
    %v992 = vpop.f32.mrb[0].mxu0
    %v993 = vadd.f32 %v217, %v992
    %v994 = vpop.f32.mrb[0].mxu0
    %v995 = vpop.f32.mrb[0].mxu0
    %v996 = vadd.f32 %v217, %v995
    %v997 = vpop.f32.mrb[0].mxu0
    %998 = vmatprep.mubr.bf16.mxu0 0
    %999 = vmatmul.mubr.bf16.gmra.mrb[0].mxu0 %v670
    %v1000 = vpop.f32.mrb[0].mxu0
    %v1001 = vadd.f32 %v217, %v1000
    %v1002 = vpop.f32.mrb[0].mxu0
    %v1003 = vpop.f32.mrb[0].mxu0
    %v1004 = vadd.f32 %v217, %v1003
    %v1005 = vpop.f32.mrb[0].mxu0
    %1006 = vmatprep.mubr.bf16.mxu0 0
    %1007 = vmatmul.mubr.bf16.gmra.mrb[0].mxu0 %v673
    %v1008 = vpop.f32.mrb[0].mxu0
    %v1009 = vadd.f32 %v217, %v1008
    %v1010 = vpop.f32.mrb[0].mxu0
    %v1011 = vpop.f32.mrb[0].mxu0
    %v1012 = vadd.f32 %v217, %v1011
    %v1013 = vpop.f32.mrb[0].mxu0
    %1014 = vmatprep.mubr.bf16.mxu0 0
    %1015 = vmatmul.mubr.bf16.gmra.mrb[0].mxu0 %v676
    %v1016 = vpop.f32.mrb[0].mxu0
    %v1017 = vadd.f32 %v217, %v1016
    %v1018 = vpop.f32.mrb[0].mxu0
    %v1019 = vpop.f32.mrb[0].mxu0
    %v1020 = vadd.f32 %v217, %v1019
    %v1021 = vpop.f32.mrb[0].mxu0
    %1022 = vmatprep.mubr.bf16.mxu0 0
    %1023 = vmatmul.mubr.bf16.gmra.mrb[0].mxu0 %v679
    %v1024 = vpop.f32.mrb[0].mxu0
    %v1025 = vadd.f32 %v217, %v1024
    %v1026 = vpop.f32.mrb[0].mxu0
    %v1027 = vpop.f32.mrb[0].mxu0
    %v1028 = vadd.f32 %v217, %v1027
    %v1029 = vpop.f32.mrb[0].mxu0
    %1030 = vmatprep.mubr.bf16.mxu0 0
    %1031 = vmatmul.mubr.bf16.gmra.mrb[0].mxu0 %v682
    %v1032 = vpop.f32.mrb[0].mxu0
    %v1033 = vadd.f32 %v217, %v1032
    %v1034 = vpop.f32.mrb[0].mxu0
    %v1035 = vpop.f32.mrb[0].mxu0
    %v1036 = vadd.f32 %v217, %v1035
    %v1037 = vpop.f32.mrb[0].mxu0
    %1038 = vmatprep.mubr.bf16.mxu0 0
    %1039 = vmatmul.mubr.bf16.gmra.mrb[0].mxu0 %v685
    %v1040 = vpop.f32.mrb[0].mxu0
    %v1041 = vadd.f32 %v217, %v1040
    %v1042 = vpop.f32.mrb[0].mxu0
    %v1043 = vpop.f32.mrb[0].mxu0
    %v1044 = vadd.f32 %v217, %v1043
    %v1045 = vpop.f32.mrb[0].mxu0
    %1046 = vmatprep.mubr.bf16.mxu0 0
    %1047 = vmatmul.mubr.bf16.gmra.mrb[0].mxu0 %v688
    %v1048 = vpop.f32.mrb[0].mxu0
    %v1049 = vadd.f32 %v217, %v1048
    %v1050 = vpop.f32.mrb[0].mxu0
    %v1051 = vpop.f32.mrb[0].mxu0
    %v1052 = vadd.f32 %v217, %v1051
    %v1053 = vpop.f32.mrb[0].mxu0
    %1054 = vmatprep.mubr.bf16.mxu0 0
    %1055 = vmatmul.mubr.bf16.gmra.mrb[0].mxu0 %v691
    %v1056 = vpop.f32.mrb[0].mxu0
    %v1057 = vadd.f32 %v217, %v1056
    %v1058 = vpop.f32.mrb[0].mxu0
    %v1059 = vpop.f32.mrb[0].mxu0
    %v1060 = vadd.f32 %v217, %v1059
    %v1061 = vpop.f32.mrb[0].mxu0
    %1062 = vmatprep.mubr.bf16.mxu0 0
    %1063 = vmatmul.mubr.bf16.gmra.mrb[0].mxu0 %v694
    %v1064 = vpop.f32.mrb[0].mxu0
    %v1065 = vadd.f32 %v217, %v1064
    %v1066 = vpop.f32.mrb[0].mxu0
    %v1067 = vpop.f32.mrb[0].mxu0
    %v1068 = vadd.f32 %v217, %v1067
    %v1069 = vpop.f32.mrb[0].mxu0
    %1070 = vmatprep.mubr.bf16.mxu0 0
    %1071 = vmatmul.mubr.bf16.gmra.mrb[0].mxu0 %v697
    %v1072 = vpop.f32.mrb[0].mxu0
    %v1073 = vadd.f32 %v217, %v1072
    %v1074 = vpop.f32.mrb[0].mxu0
    %v1075 = vpop.f32.mrb[0].mxu0
    %v1076 = vadd.f32 %v217, %v1075
    %v1077 = vpop.f32.mrb[0].mxu0
    %1078 = vmatprep.mubr.bf16.mxu0 0
    %1079 = vmatmul.mubr.bf16.gmra.mrb[0].mxu0 %v700
    %v1080 = vpop.f32.mrb[0].mxu0
    %v1081 = vadd.f32 %v217, %v1080
    %v1082 = vpop.f32.mrb[0].mxu0
    %v1083 = vpop.f32.mrb[0].mxu0
    %v1084 = vadd.f32 %v217, %v1083
    %v1085 = vpop.f32.mrb[0].mxu0
    %1086 = vmatprep.mubr.bf16.mxu0 0
    %1087 = vmatmul.mubr.bf16.gmra.mrb[0].mxu0 %v703
    %v1088 = vpop.f32.mrb[0].mxu0
    %v1089 = vadd.f32 %v217, %v1088
    %v1090 = vpop.f32.mrb[0].mxu0
    %v1091 = vpop.f32.mrb[0].mxu0
    %v1092 = vadd.f32 %v217, %v1091
    %v1093 = vpop.f32.mrb[0].mxu0
    %1094 = vmatprep.mubr.bf16.mxu0 0
    %1095 = vmatmul.mubr.bf16.gmra.mrb[0].mxu0 %v706
    %v1096 = vpop.f32.mrb[0].mxu0
    %v1097 = vadd.f32 %v217, %v1096
    %v1098 = vpop.f32.mrb[0].mxu0
    %v1099 = vpop.f32.mrb[0].mxu0
    %v1100 = vadd.f32 %v217, %v1099
    %v1101 = vpop.f32.mrb[0].mxu0
    %1102 = vmatprep.mubr.bf16.mxu0 0
    %1103 = vmatmul.mubr.bf16.gmra.mrb[0].mxu0 %v709
    %v1104 = vpop.f32.mrb[0].mxu0
    %v1105 = vadd.f32 %v217, %v1104
    %v1106 = vpop.f32.mrb[0].mxu0
    %v1107 = vpop.f32.mrb[0].mxu0
    %v1108 = vadd.f32 %v217, %v1107
    %v1109 = vpop.f32.mrb[0].mxu0
    %1110 = vmatprep.mubr.bf16.mxu0 0
    %1111 = vmatmul.mubr.bf16.gmra.mrb[0].mxu0 %v712
    %v1112 = vpop.f32.mrb[0].mxu0
    %v1113 = vadd.f32 %v217, %v1112
    %v1114 = vpop.f32.mrb[0].mxu0
    %v1115 = vpop.f32.mrb[0].mxu0
    %v1116 = vadd.f32 %v217, %v1115
    %v1117 = vpop.f32.mrb[0].mxu0
    %1118 = vmatprep.mubr.bf16.mxu0 0
    %1119 = vmatmul.mubr.bf16.gmra.mrb[0].mxu0 %v715
    %v1120 = vpop.f32.mrb[0].mxu0
    %v1121 = vadd.f32 %v217, %v1120
    %v1122 = vpop.f32.mrb[0].mxu0
    %v1123 = vpop.f32.mrb[0].mxu0
    %v1124 = vadd.f32 %v217, %v1123
    %v1125 = vpop.f32.mrb[0].mxu0
    %1126 = vmatprep.mubr.bf16.mxu0 0
    %1127 = vmatmul.mubr.bf16.gmra.mrb[0].mxu0 %v718
    %v1128 = vpop.f32.mrb[0].mxu0
    %v1129 = vadd.f32 %v217, %v1128
    %v1130 = vpop.f32.mrb[0].mxu0
    %v1131 = vpop.f32.mrb[0].mxu0
    %v1132 = vadd.f32 %v217, %v1131
    %v1133 = vpop.f32.mrb[0].mxu0
    %1134 = vmatprep.mubr.bf16.mxu0 0
    %1135 = vmatmul.mubr.bf16.gmra.mrb[0].mxu0 %v721
    %v1136 = vpop.f32.mrb[0].mxu0
    %v1137 = vadd.f32 %v217, %v1136
    %v1138 = vpop.f32.mrb[0].mxu0
    %v1139 = vpop.f32.mrb[0].mxu0
    %v1140 = vadd.f32 %v217, %v1139
    %v1141 = vpop.f32.mrb[0].mxu0
    %1142 = vmatprep.mubr.bf16.mxu0 0
    %1143 = vmatmul.mubr.bf16.gmra.mrb[0].mxu0 %v724
    %v1144 = vpop.f32.mrb[0].mxu0
    %v1145 = vadd.f32 %v217, %v1144
    %v1146 = vpop.f32.mrb[0].mxu0
    %v1147 = vpop.f32.mrb[0].mxu0
    %v1148 = vadd.f32 %v217, %v1147
    %v1149 = vpop.f32.mrb[0].mxu0
    %1150 = vmatprep.mubr.bf16.mxu0 0
    %1151 = vmatmul.mubr.bf16.gmra.mrb[0].mxu0 %v727
    %v1152 = vpop.f32.mrb[0].mxu0
    %v1153 = vadd.f32 %v217, %v1152
    %v1154 = vpop.f32.mrb[0].mxu0
    %v1155 = vpop.f32.mrb[0].mxu0
    %v1156 = vadd.f32 %v217, %v1155
    %v1157 = vpop.f32.mrb[0].mxu0
    %1158 = vmatprep.mubr.bf16.mxu0 0
    %1159 = vmatmul.mubr.bf16.gmra.mrb[0].mxu0 %v730
    %v1160 = vpop.f32.mrb[0].mxu0
    %v1161 = vadd.f32 %v217, %v1160
    %v1162 = vpop.f32.mrb[0].mxu0
    %v1163 = vpop.f32.mrb[0].mxu0
    %v1164 = vadd.f32 %v217, %v1163
    %v1165 = vpop.f32.mrb[0].mxu0
    %1166 = vmatprep.mubr.bf16.mxu0 0
    %1167 = vmatmul.mubr.bf16.gmra.mrb[0].mxu0 %v733
    %v1168 = vpop.f32.mrb[0].mxu0
    %v1169 = vadd.f32 %v217, %v1168
    %v1170 = vpop.f32.mrb[0].mxu0
    %v1171 = vpop.f32.mrb[0].mxu0
    %v1172 = vadd.f32 %v217, %v1171
    %v1173 = vpop.f32.mrb[0].mxu0
    %1174 = vmatprep.mubr.bf16.mxu0 0
    %1175 = vmatmul.mubr.bf16.gmra.mrb[0].mxu0 %v736
    %v1176 = vpop.f32.mrb[0].mxu0
    %v1177 = vadd.f32 %v217, %v1176
    %v1178 = vpop.f32.mrb[0].mxu0
    %v1179 = vpop.f32.mrb[0].mxu0
    %v1180 = vadd.f32 %v217, %v1179
    %v1181 = vpop.f32.mrb[0].mxu0
    %1182 = vmatprep.mubr.bf16.mxu0 0
    %1183 = vmatmul.mubr.bf16.gmra.mrb[0].mxu0 %v739
    %v1184 = vpop.f32.mrb[0].mxu0
    %v1185 = vadd.f32 %v217, %v1184
    %v1186 = vpop.f32.mrb[0].mxu0
    %v1187 = vpop.f32.mrb[0].mxu0
    %v1188 = vadd.f32 %v217, %v1187
    %v1189 = vpop.f32.mrb[0].mxu0
    %1190 = vmatprep.mubr.bf16.mxu0 0
    %1191 = vmatmul.mubr.bf16.gmra.mrb[0].mxu0 %v742
    %v1192 = vpop.f32.mrb[0].mxu0
    %v1193 = vadd.f32 %v217, %v1192
    %v1194 = vpop.f32.mrb[0].mxu0
    %v1195 = vpop.f32.mrb[0].mxu0
    %v1196 = vadd.f32 %v217, %v1195
    %v1197 = vpop.f32.mrb[0].mxu0
    %1198 = vmatprep.mubr.bf16.mxu0 0
    %1199 = vmatmul.mubr.bf16.gmra.mrb[0].mxu0 %v745
    %v1200 = vpop.f32.mrb[0].mxu0
    %v1201 = vadd.f32 %v217, %v1200
    %v1202 = vpop.f32.mrb[0].mxu0
    %v1203 = vpop.f32.mrb[0].mxu0
    %v1204 = vadd.f32 %v217, %v1203
    %v1205 = vpop.f32.mrb[0].mxu0
    %1206 = vmatprep.mubr.bf16.mxu0 0
    %1207 = vmatmul.mubr.bf16.gmra.mrb[0].mxu0 %v748
    %v1208 = vpop.f32.mrb[0].mxu0
    %v1209 = vadd.f32 %v217, %v1208
    %v1210 = vpop.f32.mrb[0].mxu0
    %v1211 = vpop.f32.mrb[0].mxu0
    %v1212 = vadd.f32 %v217, %v1211
    %v1213 = vpop.f32.mrb[0].mxu0
    %1214 = vmatprep.mubr.bf16.mxu0 0
    %1215 = vmatmul.mubr.bf16.gmra.mrb[0].mxu0 %v751
    %v1216 = vpop.f32.mrb[0].mxu0
    %v1217 = vadd.f32 %v217, %v1216
    %v1218 = vpop.f32.mrb[0].mxu0
    %v1219 = vpop.f32.mrb[0].mxu0
    %v1220 = vadd.f32 %v217, %v1219
    %v1221 = vpop.f32.mrb[0].mxu0
    %1222 = vmatprep.mubr.bf16.mxu0 0
    %1223 = vmatmul.mubr.bf16.gmra.mrb[0].mxu0 %v754
    %v1224 = vpop.f32.mrb[0].mxu0
    %v1225 = vadd.f32 %v217, %v1224
    %v1226 = vpop.f32.mrb[0].mxu0
    %v1227 = vpop.f32.mrb[0].mxu0
    %v1228 = vadd.f32 %v217, %v1227
    %v1229 = vpop.f32.mrb[0].mxu0
    %1230 = vmatprep.mubr.bf16.mxu0 0
    %1231 = vmatmul.mubr.bf16.gmra.mrb[0].mxu0 %v757
    %v1232 = vpop.f32.mrb[0].mxu0
    %v1233 = vadd.f32 %v217, %v1232
    %v1234 = vpop.f32.mrb[0].mxu0
    %v1235 = vpop.f32.mrb[0].mxu0
    %v1236 = vadd.f32 %v217, %v1235
    %v1237 = vpop.f32.mrb[0].mxu0
    %1238 = vmatprep.mubr.bf16.mxu0 0
    %1239 = vmatmul.mubr.bf16.gmra.mrb[0].mxu0 %v760
    %v1240 = vpop.f32.mrb[0].mxu0
    %v1241 = vadd.f32 %v217, %v1240
    %v1242 = vpop.f32.mrb[0].mxu0
    %v1243 = vpop.f32.mrb[0].mxu0
    %v1244 = vadd.f32 %v217, %v1243
    %v1245 = vpop.f32.mrb[0].mxu0
    %1246 = vmatprep.mubr.bf16.mxu0 0
    %1247 = vmatmul.mubr.bf16.gmra.mrb[0].mxu0 %v763
    %v1248 = vpop.f32.mrb[0].mxu0
    %v1249 = vadd.f32 %v217, %v1248
    %v1250 = vpop.f32.mrb[0].mxu0
    %v1251 = vpop.f32.mrb[0].mxu0
    %v1252 = vadd.f32 %v217, %v1251
    %v1253 = vpop.f32.mrb[0].mxu0
    %1254 = vmatprep.mubr.bf16.mxu0 0
    %1255 = vmatmul.mubr.bf16.gmra.mrb[0].mxu0 %v766
    %v1256 = vpop.f32.mrb[0].mxu0
    %v1257 = vadd.f32 %v217, %v1256
    %v1258 = vpop.f32.mrb[0].mxu0
    %v1259 = vpop.f32.mrb[0].mxu0
    %v1260 = vadd.f32 %v217, %v1259
    %v1261 = vpop.f32.mrb[0].mxu0
    %1262 = vmatprep.mubr.bf16.mxu0 0
    %1263 = vmatmul.mubr.bf16.gmra.mrb[0].mxu0 %v769
    %v1264 = vpop.f32.mrb[0].mxu0
    %v1265 = vadd.f32 %v217, %v1264
    %v1266 = vpop.f32.mrb[0].mxu0
    %v1267 = vpop.f32.mrb[0].mxu0
    %v1268 = vadd.f32 %v217, %v1267
    %v1269 = vpop.f32.mrb[0].mxu0
    %1270 = vmatprep.mubr.bf16.mxu0 0
    %1271 = vmatmul.mubr.bf16.gmra.mrb[0].mxu0 %v772
    %v1272 = vpop.f32.mrb[0].mxu0
    %v1273 = vadd.f32 %v217, %v1272
    %v1274 = vpop.f32.mrb[0].mxu0
    %v1275 = vpop.f32.mrb[0].mxu0
    %v1276 = vadd.f32 %v217, %v1275
    %v1277 = vpop.f32.mrb[0].mxu0
    %1278 = vmatprep.mubr.bf16.mxu0 0
    %1279 = vmatmul.mubr.bf16.gmra.mrb[0].mxu0 %v775
    %v1280 = vpop.f32.mrb[0].mxu0
    %v1281 = vadd.f32 %v217, %v1280
    %v1282 = vpop.f32.mrb[0].mxu0
    %v1283 = vpop.f32.mrb[0].mxu0
    %v1284 = vadd.f32 %v217, %v1283
    %v1285 = vpop.f32.mrb[0].mxu0
    %1286 = vmatprep.mubr.bf16.mxu0 0
    %1287 = vmatmul.mubr.bf16.gmra.mrb[0].mxu0 %v778
    %v1288 = vpop.f32.mrb[0].mxu0
    %v1289 = vadd.f32 %v217, %v1288
    %v1290 = vpop.f32.mrb[0].mxu0
    %v1291 = vpop.f32.mrb[0].mxu0
    %v1292 = vadd.f32 %v217, %v1291
    %v1293 = vpop.f32.mrb[0].mxu0
    %1294 = vmatprep.mubr.bf16.mxu0 0
    %1295 = vmatmul.mubr.bf16.gmra.mrb[0].mxu0 %v781
    %v1296 = vpop.f32.mrb[0].mxu0
    %v1297 = vadd.f32 %v217, %v1296
    %v1298 = vpop.f32.mrb[0].mxu0
    %v1299 = vpop.f32.mrb[0].mxu0
    %v1300 = vadd.f32 %v217, %v1299
    %v1301 = vpop.f32.mrb[0].mxu0
    %1302 = vmatprep.mubr.bf16.mxu0 0
    %1303 = vmatmul.mubr.bf16.gmra.mrb[0].mxu0 %v784
    %v1304 = vpop.f32.mrb[0].mxu0
    %v1305 = vadd.f32 %v217, %v1304
    %v1306 = vpop.f32.mrb[0].mxu0
    %v1307 = vpop.f32.mrb[0].mxu0
    %v1308 = vadd.f32 %v217, %v1307
    %v1309 = vpop.f32.mrb[0].mxu0
    %1310 = vmatprep.mubr.bf16.mxu0 0
    %1311 = vmatmul.mubr.bf16.gmra.mrb[0].mxu0 %v787
    %v1312 = vpop.f32.mrb[0].mxu0
    %v1313 = vadd.f32 %v217, %v1312
    %v1314 = vpop.f32.mrb[0].mxu0
    %v1315 = vpop.f32.mrb[0].mxu0
    %v1316 = vadd.f32 %v217, %v1315
    %v1317 = vpop.f32.mrb[0].mxu0
    %1318 = vmatprep.mubr.bf16.mxu0 0
    %1319 = vmatmul.mubr.bf16.gmra.mrb[0].mxu0 %v790
    %v1320 = vpop.f32.mrb[0].mxu0
    %v1321 = vadd.f32 %v217, %v1320
    %v1322 = vpop.f32.mrb[0].mxu0
    %v1323 = vpop.f32.mrb[0].mxu0
    %v1324 = vadd.f32 %v217, %v1323
    %v1325 = vpop.f32.mrb[0].mxu0
    %1326 = vmatprep.mubr.bf16.mxu0 0
    %1327 = vmatmul.mubr.bf16.gmra.mrb[0].mxu0 %v793
    %v1328 = vpop.f32.mrb[0].mxu0
    %v1329 = vadd.f32 %v217, %v1328
    %v1330 = vpop.f32.mrb[0].mxu0
    %v1331 = vpop.f32.mrb[0].mxu0
    %v1332 = vadd.f32 %v217, %v1331
    %v1333 = vpop.f32.mrb[0].mxu0
    %1334 = vmatprep.mubr.bf16.mxu0 0
    %1335 = vmatmul.mubr.bf16.gmra.mrb[0].mxu0 %v796
    %v1336 = vpop.f32.mrb[0].mxu0
    %v1337 = vadd.f32 %v217, %v1336
    %v1338 = vpop.f32.mrb[0].mxu0
    %v1339 = vpop.f32.mrb[0].mxu0
    %v1340 = vadd.f32 %v217, %v1339
    %v1341 = vpop.f32.mrb[0].mxu0
    %1342 = vmatprep.mubr.bf16.mxu0 0
    %1343 = vmatmul.mubr.bf16.gmra.mrb[0].mxu0 %v799
    %v1344 = vpop.f32.mrb[0].mxu0
    %v1345 = vadd.f32 %v217, %v1344
    %v1346 = vpop.f32.mrb[0].mxu0
    %v1347 = vpop.f32.mrb[0].mxu0
    %v1348 = vadd.f32 %v217, %v1347
    %v1349 = vpop.f32.mrb[0].mxu0
    %1350 = vmatprep.mubr.bf16.mxu0 0
    %1351 = vmatmul.mubr.bf16.gmra.mrb[0].mxu0 %v802
    %v1352 = vpop.f32.mrb[0].mxu0
    %v1353 = vadd.f32 %v217, %v1352
    %v1354 = vpop.f32.mrb[0].mxu0
    %v1355 = vpop.f32.mrb[0].mxu0
    %v1356 = vadd.f32 %v217, %v1355
    %v1357 = vpop.f32.mrb[0].mxu0
    %1358 = vmatprep.mubr.bf16.mxu0 0
    %1359 = vmatmul.mubr.bf16.gmra.mrb[0].mxu0 %v805
    %v1360 = vpop.f32.mrb[0].mxu0
    %v1361 = vadd.f32 %v217, %v1360
    %v1362 = vpop.f32.mrb[0].mxu0
    %v1363 = vpop.f32.mrb[0].mxu0
    %v1364 = vadd.f32 %v217, %v1363
    %v1365 = vpop.f32.mrb[0].mxu0
    %1366 = vmatprep.mubr.bf16.mxu0 0
    %1367 = vmatmul.mubr.bf16.gmra.mrb[0].mxu0 %v808
    %v1368 = vpop.f32.mrb[0].mxu0
    %v1369 = vadd.f32 %v217, %v1368
    %v1370 = vpop.f32.mrb[0].mxu0
    %v1371 = vpop.f32.mrb[0].mxu0
    %v1372 = vadd.f32 %v217, %v1371
    %v1373 = vpop.f32.mrb[0].mxu0
    %1374 = vmatprep.mubr.bf16.mxu0 0
    %1375 = vmatmul.mubr.bf16.gmra.mrb[0].mxu0 %v811
    %v1376 = vpop.f32.mrb[0].mxu0
    %v1377 = vadd.f32 %v217, %v1376
    %v1378 = vpop.f32.mrb[0].mxu0
    %v1379 = vpop.f32.mrb[0].mxu0
    %v1380 = vadd.f32 %v217, %v1379
    %v1381 = vpop.f32.mrb[0].mxu0
    %1382 = vmatprep.mubr.bf16.mxu0 0
    %1383 = vmatmul.mubr.bf16.gmra.mrb[0].mxu0 %v814
    %v1384 = vpop.f32.mrb[0].mxu0
    %v1385 = vadd.f32 %v217, %v1384
    %v1386 = vpop.f32.mrb[0].mxu0
    %v1387 = vpop.f32.mrb[0].mxu0
    %v1388 = vadd.f32 %v217, %v1387
    %v1389 = vpop.f32.mrb[0].mxu0
    %1390 = vmatprep.mubr.bf16.mxu0 0
    %1391 = vmatmul.mubr.bf16.gmra.mrb[0].mxu0 %v817
    %v1392 = vpop.f32.mrb[0].mxu0
    %v1393 = vadd.f32 %v217, %v1392
    %v1394 = vpop.f32.mrb[0].mxu0
    %v1395 = vpop.f32.mrb[0].mxu0
    %v1396 = vadd.f32 %v217, %v1395
    %v1397 = vpop.f32.mrb[0].mxu0
    %1398 = vmatprep.mubr.bf16.mxu0 0
    %1399 = vmatmul.mubr.bf16.gmra.mrb[0].mxu0 %v820
    %v1400 = vpop.f32.mrb[0].mxu0
    %v1401 = vadd.f32 %v217, %v1400
    %v1402 = vpop.f32.mrb[0].mxu0
    %v1403 = vpop.f32.mrb[0].mxu0
    %v1404 = vadd.f32 %v217, %v1403
    %v1405 = vpop.f32.mrb[0].mxu0
    %1406 = vmatprep.mubr.bf16.mxu0 0
    %1407 = vmatmul.mubr.bf16.gmra.mrb[0].mxu0 %v823
    %v1408 = vpop.f32.mrb[0].mxu0
    %v1409 = vadd.f32 %v217, %v1408
    %v1410 = vpop.f32.mrb[0].mxu0
    %v1411 = vpop.f32.mrb[0].mxu0
    %v1412 = vadd.f32 %v217, %v1411
    %v1413 = vpop.f32.mrb[0].mxu0
    %1414 = vmatprep.mubr.bf16.mxu0 0
    %1415 = vmatmul.mubr.bf16.gmra.mrb[0].mxu0 %v826
    %v1416 = vpop.f32.mrb[0].mxu0
    %v1417 = vadd.f32 %v217, %v1416
    %v1418 = vpop.f32.mrb[0].mxu0
    %v1419 = vpop.f32.mrb[0].mxu0
    %v1420 = vadd.f32 %v217, %v1419
    %v1421 = vpop.f32.mrb[0].mxu0
    %1422 = vmatprep.mubr.bf16.mxu0 0
    %1423 = vmatmul.mubr.bf16.gmra.mrb[0].mxu0 %v829
    %v1424 = vpop.f32.mrb[0].mxu0
    %v1425 = vadd.f32 %v217, %v1424
    %v1426 = vpop.f32.mrb[0].mxu0
    %v1427 = vpop.f32.mrb[0].mxu0
    %v1428 = vadd.f32 %v217, %v1427
    %v1429 = vpop.f32.mrb[0].mxu0
    %1430 = vmatprep.mubr.bf16.mxu0 0
    %1431 = vmatmul.mubr.bf16.gmra.mrb[0].mxu0 %v832
    %v1432 = vpop.f32.mrb[0].mxu0
    %v1433 = vadd.f32 %v217, %v1432
    %v1434 = vpop.f32.mrb[0].mxu0
    %v1435 = vpop.f32.mrb[0].mxu0
    %v1436 = vadd.f32 %v217, %v1435
    %v1437 = vpop.f32.mrb[0].mxu0
    %1438 = vmatprep.mubr.bf16.mxu0 0
    %1439 = vmatmul.mubr.bf16.gmra.mrb[0].mxu0 %v835
    %v1440 = vpop.f32.mrb[0].mxu0
    %v1441 = vadd.f32 %v217, %v1440
    %v1442 = vpop.f32.mrb[0].mxu0
    %v1443 = vpop.f32.mrb[0].mxu0
    %v1444 = vadd.f32 %v217, %v1443
    %v1445 = vpop.f32.mrb[0].mxu0
    %1446 = vmatprep.mubr.bf16.mxu0 0
    %1447 = vmatmul.mubr.bf16.gmra.mrb[0].mxu0 %v838
    %v1448 = vpop.f32.mrb[0].mxu0
    %v1449 = vadd.f32 %v217, %v1448
    %v1450 = vpop.f32.mrb[0].mxu0
    %v1451 = vpop.f32.mrb[0].mxu0
    %v1452 = vadd.f32 %v217, %v1451
    %v1453 = vpop.f32.mrb[0].mxu0
    %1454 = vmatprep.mubr.bf16.mxu0 0
    %1455 = vmatmul.mubr.bf16.gmra.mrb[0].mxu0 %v841
    %v1456 = vpop.f32.mrb[0].mxu0
    %v1457 = vadd.f32 %v217, %v1456
    %v1458 = vpop.f32.mrb[0].mxu0
    %v1459 = vpop.f32.mrb[0].mxu0
    %v1460 = vadd.f32 %v217, %v1459
    %v1461 = vpop.f32.mrb[0].mxu0
    %1462 = vmatprep.mubr.bf16.mxu0 0
    %1463 = vmatmul.mubr.bf16.gmra.mrb[0].mxu0 %v844
    %v1464 = vpop.f32.mrb[0].mxu0
    %v1465 = vadd.f32 %v217, %v1464
    %v1466 = vpop.f32.mrb[0].mxu0
    %v1467 = vpop.f32.mrb[0].mxu0
    %v1468 = vadd.f32 %v217, %v1467
    %v1469 = vpop.f32.mrb[0].mxu0
    %1470 = vmatprep.mubr.bf16.mxu0 0
    %1471 = vmatmul.mubr.bf16.gmra.mrb[0].mxu0 %v847
    %v1472 = vpop.f32.mrb[0].mxu0
    %v1473 = vadd.f32 %v217, %v1472
    %v1474 = vpop.f32.mrb[0].mxu0
    %v1475 = vpop.f32.mrb[0].mxu0
    %v1476 = vadd.f32 %v217, %v1475
    %v1477 = vpop.f32.mrb[0].mxu0
    %1478 = vmatprep.mubr.bf16.mxu0 0
    %1479 = vmatmul.mubr.bf16.gmra.mrb[0].mxu0 %v850
    %v1480 = vpop.f32.mrb[0].mxu0
    %v1481 = vadd.f32 %v217, %v1480
    %v1482 = vpop.f32.mrb[0].mxu0
    %v1483 = vpop.f32.mrb[0].mxu0
    %v1484 = vadd.f32 %v217, %v1483
    %v1485 = vpop.f32.mrb[0].mxu0
    %1486 = vmatprep.mubr.bf16.mxu0 0
    %1487 = vmatmul.mubr.bf16.gmra.mrb[0].mxu0 %v853
    %v1488 = vpop.f32.mrb[0].mxu0
    %v1489 = vadd.f32 %v217, %v1488
    %v1490 = vpop.f32.mrb[0].mxu0
    %v1491 = vpop.f32.mrb[0].mxu0
    %v1492 = vadd.f32 %v217, %v1491
    %v1493 = vpop.f32.mrb[0].mxu0
    %1494 = vmatprep.mubr.bf16.mxu0 0
    %1495 = vmatmul.mubr.bf16.gmra.mrb[0].mxu0 %v856
    %v1496 = vpop.f32.mrb[0].mxu0
    %v1497 = vadd.f32 %v217, %v1496
    %v1498 = vpop.f32.mrb[0].mxu0
    %v1499 = vpop.f32.mrb[0].mxu0
    %v1500 = vadd.f32 %v217, %v1499
    %v1501 = vpop.f32.mrb[0].mxu0
    %1502 = vmatprep.mubr.bf16.mxu0 0
    %1503 = vmatmul.mubr.bf16.gmra.mrb[0].mxu0 %v859
    %v1504 = vpop.f32.mrb[0].mxu0
    %v1505 = vadd.f32 %v217, %v1504
    %v1506 = vpop.f32.mrb[0].mxu0
    %v1507 = vpop.f32.mrb[0].mxu0
    %v1508 = vadd.f32 %v217, %v1507
    %v1509 = vpop.f32.mrb[0].mxu0
    %1510 = vmatprep.mubr.bf16.mxu0 0
    %1511 = vmatmul.mubr.bf16.gmra.mrb[0].mxu0 %v862
    %v1512 = vpop.f32.mrb[0].mxu0
    %v1513 = vadd.f32 %v217, %v1512
    %v1514 = vpop.f32.mrb[0].mxu0
    %v1515 = vpop.f32.mrb[0].mxu0
    %v1516 = vadd.f32 %v217, %v1515
    %v1517 = vpop.f32.mrb[0].mxu0
    %1518 = vmatprep.mubr.bf16.mxu0 0
    %1519 = vmatmul.mubr.bf16.gmra.mrb[0].mxu0 %v865
    %v1520 = vpop.f32.mrb[0].mxu0
    %v1521 = vadd.f32 %v217, %v1520
    %v1522 = vpop.f32.mrb[0].mxu0
    %v1523 = vpop.f32.mrb[0].mxu0
    %v1524 = vadd.f32 %v217, %v1523
    %v1525 = vpop.f32.mrb[0].mxu0
    %1526 = vmatprep.mubr.bf16.mxu0 0
    %1527 = vmatmul.mubr.bf16.gmra.mrb[0].mxu0 %v868
    %v1528 = vpop.f32.mrb[0].mxu0
    %v1529 = vadd.f32 %v217, %v1528
    %v1530 = vpop.f32.mrb[0].mxu0
    %v1531 = vpop.f32.mrb[0].mxu0
    %v1532 = vadd.f32 %v217, %v1531
    %v1533 = vpop.f32.mrb[0].mxu0
    %1534 = vmatprep.mubr.bf16.mxu0 0
    %1535 = vmatmul.mubr.bf16.gmra.mrb[0].mxu0 %v871
    %v1536 = vpop.f32.mrb[0].mxu0
    %v1537 = vadd.f32 %v217, %v1536
    %v1538 = vpop.f32.mrb[0].mxu0
    %v1539 = vpop.f32.mrb[0].mxu0
    %v1540 = vadd.f32 %v217, %v1539
    %v1541 = vpop.f32.mrb[0].mxu0
    %1542 = vmatprep.mubr.bf16.mxu0 0
    %1543 = vmatmul.mubr.bf16.gmra.mrb[0].mxu0 %v874
    %v1544 = vpop.f32.mrb[0].mxu0
    %v1545 = vadd.f32 %v217, %v1544
    %v1546 = vpop.f32.mrb[0].mxu0
    %v1547 = vpop.f32.mrb[0].mxu0
    %v1548 = vadd.f32 %v217, %v1547
    %v1549 = vpop.f32.mrb[0].mxu0
    %1550 = vmatprep.mubr.bf16.mxu0 0
    %1551 = vmatmul.mubr.bf16.gmra.mrb[0].mxu0 %v877
    %v1552 = vpop.f32.mrb[0].mxu0
    %v1553 = vadd.f32 %v217, %v1552
    %v1554 = vpop.f32.mrb[0].mxu0
    %v1555 = vpop.f32.mrb[0].mxu0
    %v1556 = vadd.f32 %v217, %v1555
    %v1557 = vpop.f32.mrb[0].mxu0
    %1558 = vmatprep.mubr.bf16.mxu0 0
    %1559 = vmatmul.mubr.bf16.gmra.mrb[0].mxu0 %v880
    %v1560 = vpop.f32.mrb[0].mxu0
    %v1561 = vadd.f32 %v217, %v1560
    %v1562 = vpop.f32.mrb[0].mxu0
    %v1563 = vpop.f32.mrb[0].mxu0
    %v1564 = vadd.f32 %v217, %v1563
    %v1565 = vpop.f32.mrb[0].mxu0
    %1566 = vmatprep.mubr.bf16.mxu0 0
    %1567 = vmatmul.mubr.bf16.gmra.mrb[0].mxu0 %v883
    %v1568 = vpop.f32.mrb[0].mxu0
    %v1569 = vadd.f32 %v217, %v1568
    %v1570 = vpop.f32.mrb[0].mxu0
    %v1571 = vpop.f32.mrb[0].mxu0
    %v1572 = vadd.f32 %v217, %v1571
    %v1573 = vpop.f32.mrb[0].mxu0
    %1574 = vmatprep.mubr.bf16.mxu0 0
    %1575 = vmatmul.mubr.bf16.gmra.mrb[0].mxu0 %v886
    %v1576 = vpop.f32.mrb[0].mxu0
    %v1577 = vadd.f32 %v217, %v1576
    %v1578 = vpop.f32.mrb[0].mxu0
    %v1579 = vpop.f32.mrb[0].mxu0
    %v1580 = vadd.f32 %v217, %v1579
    %v1581 = vpop.f32.mrb[0].mxu0
    %1582 = vmatprep.mubr.bf16.mxu0 0
    %1583 = vmatmul.mubr.bf16.gmra.mrb[0].mxu0 %v889
    %v1584 = vpop.f32.mrb[0].mxu0
    %v1585 = vadd.f32 %v217, %v1584
    %v1586 = vpop.f32.mrb[0].mxu0
    %v1587 = vpop.f32.mrb[0].mxu0
    %v1588 = vadd.f32 %v217, %v1587
    %v1589 = vpop.f32.mrb[0].mxu0
    %1590 = vmatprep.mubr.bf16.mxu0 0
    %1591 = vmatmul.mubr.bf16.gmra.mrb[0].mxu0 %v892
    %v1592 = vpop.f32.mrb[0].mxu0
    %v1593 = vadd.f32 %v217, %v1592
    %v1594 = vpop.f32.mrb[0].mxu0
    %v1595 = vpop.f32.mrb[0].mxu0
    %v1596 = vadd.f32 %v217, %v1595
    %v1597 = vpop.f32.mrb[0].mxu0
    %1598 = vmatprep.mubr.bf16.mxu0 0
    %1599 = vmatmul.mubr.bf16.gmra.mrb[0].mxu0 %v895
    %v1600 = vpop.f32.mrb[0].mxu0
    %v1601 = vadd.f32 %v217, %v1600
    %v1602 = vpop.f32.mrb[0].mxu0
    %v1603 = vpop.f32.mrb[0].mxu0
    %v1604 = vadd.f32 %v217, %v1603
    %v1605 = vpop.f32.mrb[0].mxu0
    %1606 = vmatprep.mubr.bf16.mxu0 0
    %1607 = vmatmul.mubr.bf16.gmra.mrb[0].mxu0 %v898
    %v1608 = vpop.f32.mrb[0].mxu0
    %v1609 = vadd.f32 %v217, %v1608
    %v1610 = vpop.f32.mrb[0].mxu0
    %v1611 = vpop.f32.mrb[0].mxu0
    %v1612 = vadd.f32 %v217, %v1611
    %v1613 = vpop.f32.mrb[0].mxu0
    %1614 = vmatprep.mubr.bf16.mxu0 0
    %1615 = vmatmul.mubr.bf16.gmra.mrb[0].mxu0 %v901
    %v1616 = vpop.f32.mrb[0].mxu0
    %v1617 = vadd.f32 %v217, %v1616
    %v1618 = vpop.f32.mrb[0].mxu0
    %v1619 = vpop.f32.mrb[0].mxu0
    %v1620 = vpop.f32.mrb[0].mxu0
    %1621 = vdwg.mxu0
    %v1622 = vmax.f32 %v945, 0.0
    %v1623 = vmax.f32 %v948, 0.0
    %v1624 = vmax.f32 %v953, 0.0
    %v1625 = vmax.f32 %v956, 0.0
    %v1626 = vmax.f32 %v961, 0.0
    %v1627 = vmax.f32 %v964, 0.0
    %v1628 = vmax.f32 %v969, 0.0
    %v1629 = vmax.f32 %v972, 0.0
    %v1630 = vmax.f32 %v977, 0.0
    %v1631 = vmax.f32 %v980, 0.0
    %v1632 = vmax.f32 %v985, 0.0
    %v1633 = vmax.f32 %v988, 0.0
    %v1634 = vmax.f32 %v993, 0.0
    %v1635 = vmax.f32 %v996, 0.0
    %v1636 = vmax.f32 %v1001, 0.0
    %v1637 = vmax.f32 %v1004, 0.0
    %v1638 = vmax.f32 %v1009, 0.0
    %v1639 = vmax.f32 %v1012, 0.0
    %v1640 = vmax.f32 %v1017, 0.0
    %v1641 = vmax.f32 %v1020, 0.0
    %v1642 = vmax.f32 %v1025, 0.0
    %v1643 = vmax.f32 %v1028, 0.0
    %v1644 = vmax.f32 %v1033, 0.0
    %v1645 = vmax.f32 %v1036, 0.0
    %v1646 = vmax.f32 %v1041, 0.0
    %v1647 = vmax.f32 %v1044, 0.0
    %v1648 = vmax.f32 %v1049, 0.0
    %v1649 = vmax.f32 %v1052, 0.0
    %v1650 = vmax.f32 %v1057, 0.0
    %v1651 = vmax.f32 %v1060, 0.0
    %v1652 = vmax.f32 %v1065, 0.0
    %v1653 = vmax.f32 %v1068, 0.0
    %v1654 = vmax.f32 %v1073, 0.0
    %v1655 = vmax.f32 %v1076, 0.0
    %v1656 = vmax.f32 %v1081, 0.0
    %v1657 = vmax.f32 %v1084, 0.0
    %v1658 = vmax.f32 %v1089, 0.0
    %v1659 = vmax.f32 %v1092, 0.0
    %v1660 = vmax.f32 %v1097, 0.0
    %v1661 = vmax.f32 %v1100, 0.0
    %v1662 = vmax.f32 %v1105, 0.0
    %v1663 = vmax.f32 %v1108, 0.0
    %v1664 = vmax.f32 %v1113, 0.0
    %v1665 = vmax.f32 %v1116, 0.0
    %v1666 = vmax.f32 %v1121, 0.0
    %v1667 = vmax.f32 %v1124, 0.0
    %v1668 = vmax.f32 %v1129, 0.0
    %v1669 = vmax.f32 %v1132, 0.0
    %v1670 = vmax.f32 %v1137, 0.0
    %v1671 = vmax.f32 %v1140, 0.0
    %v1672 = vmax.f32 %v1145, 0.0
    %v1673 = vmax.f32 %v1148, 0.0
    %v1674 = vmax.f32 %v1153, 0.0
    %v1675 = vmax.f32 %v1156, 0.0
    %v1676 = vmax.f32 %v1161, 0.0
    %v1677 = vmax.f32 %v1164, 0.0
    %v1678 = vmax.f32 %v1169, 0.0
    %v1679 = vmax.f32 %v1172, 0.0
    %v1680 = vmax.f32 %v1177, 0.0
    %v1681 = vmax.f32 %v1180, 0.0
    %v1682 = vmax.f32 %v1185, 0.0
    %v1683 = vmax.f32 %v1188, 0.0
    %v1684 = vmax.f32 %v1193, 0.0
    %v1685 = vmax.f32 %v1196, 0.0
    %v1686 = vmax.f32 %v1201, 0.0
    %v1687 = vmax.f32 %v1204, 0.0
    %v1688 = vmax.f32 %v1209, 0.0
    %v1689 = vmax.f32 %v1212, 0.0
    %v1690 = vmax.f32 %v1217, 0.0
    %v1691 = vmax.f32 %v1220, 0.0
    %v1692 = vmax.f32 %v1225, 0.0
    %v1693 = vmax.f32 %v1228, 0.0
    %v1694 = vmax.f32 %v1233, 0.0
    %v1695 = vmax.f32 %v1236, 0.0
    %v1696 = vmax.f32 %v1241, 0.0
    %v1697 = vmax.f32 %v1244, 0.0
    %v1698 = vmax.f32 %v1249, 0.0
    %v1699 = vmax.f32 %v1252, 0.0
    %v1700 = vmax.f32 %v1257, 0.0
    %v1701 = vmax.f32 %v1260, 0.0
    %v1702 = vmax.f32 %v1265, 0.0
    %v1703 = vmax.f32 %v1268, 0.0
    %v1704 = vmax.f32 %v1273, 0.0
    %v1705 = vmax.f32 %v1276, 0.0
    %v1706 = vmax.f32 %v1281, 0.0
    %v1707 = vmax.f32 %v1284, 0.0
    %v1708 = vmax.f32 %v1289, 0.0
    %v1709 = vmax.f32 %v1292, 0.0
    %v1710 = vmax.f32 %v1297, 0.0
    %v1711 = vmax.f32 %v1300, 0.0
    %v1712 = vmax.f32 %v1305, 0.0
    %v1713 = vmax.f32 %v1308, 0.0
    %v1714 = vmax.f32 %v1313, 0.0
    %v1715 = vmax.f32 %v1316, 0.0
    %v1716 = vmax.f32 %v1321, 0.0
    %v1717 = vmax.f32 %v1324, 0.0
    %v1718 = vmax.f32 %v1329, 0.0
    %v1719 = vmax.f32 %v1332, 0.0
    %v1720 = vmax.f32 %v1337, 0.0
    %v1721 = vmax.f32 %v1340, 0.0
    %v1722 = vmax.f32 %v1345, 0.0
    %v1723 = vmax.f32 %v1348, 0.0
    %v1724 = vmax.f32 %v1353, 0.0
    %v1725 = vmax.f32 %v1356, 0.0
    %v1726 = vmax.f32 %v1361, 0.0
    %v1727 = vmax.f32 %v1364, 0.0
    %v1728 = vmax.f32 %v1369, 0.0
    %v1729 = vmax.f32 %v1372, 0.0
    %v1730 = vmax.f32 %v1377, 0.0
    %v1731 = vmax.f32 %v1380, 0.0
    %v1732 = vmax.f32 %v1385, 0.0
    %v1733 = vmax.f32 %v1388, 0.0
    %v1734 = vmax.f32 %v1393, 0.0
    %v1735 = vmax.f32 %v1396, 0.0
    %v1736 = vmax.f32 %v1401, 0.0
    %v1737 = vmax.f32 %v1404, 0.0
    %v1738 = vmax.f32 %v1409, 0.0
    %v1739 = vmax.f32 %v1412, 0.0
    %v1740 = vmax.f32 %v1417, 0.0
    %v1741 = vmax.f32 %v1420, 0.0
    %v1742 = vmax.f32 %v1425, 0.0
    %v1743 = vmax.f32 %v1428, 0.0
    %v1744 = vmax.f32 %v1433, 0.0
    %v1745 = vmax.f32 %v1436, 0.0
    %v1746 = vmax.f32 %v1441, 0.0
    %v1747 = vmax.f32 %v1444, 0.0
    %v1748 = vmax.f32 %v1449, 0.0
    %v1749 = vmax.f32 %v1452, 0.0
    %v1750 = vmax.f32 %v1457, 0.0
    %v1751 = vmax.f32 %v1460, 0.0
    %v1752 = vmax.f32 %v1465, 0.0
    %v1753 = vmax.f32 %v1468, 0.0
    %v1754 = vmax.f32 %v1473, 0.0
    %v1755 = vmax.f32 %v1476, 0.0
    %v1756 = vmax.f32 %v1481, 0.0
    %v1757 = vmax.f32 %v1484, 0.0
    %v1758 = vmax.f32 %v1489, 0.0
    %v1759 = vmax.f32 %v1492, 0.0
    %v1760 = vmax.f32 %v1497, 0.0
    %v1761 = vmax.f32 %v1500, 0.0
    %v1762 = vmax.f32 %v1505, 0.0
    %v1763 = vmax.f32 %v1508, 0.0
    %v1764 = vmax.f32 %v1513, 0.0
    %v1765 = vmax.f32 %v1516, 0.0
    %v1766 = vmax.f32 %v1521, 0.0
    %v1767 = vmax.f32 %v1524, 0.0
    %v1768 = vmax.f32 %v1529, 0.0
    %v1769 = vmax.f32 %v1532, 0.0
    %v1770 = vmax.f32 %v1537, 0.0
    %v1771 = vmax.f32 %v1540, 0.0
    %v1772 = vmax.f32 %v1545, 0.0
    %v1773 = vmax.f32 %v1548, 0.0
    %v1774 = vmax.f32 %v1553, 0.0
    %v1775 = vmax.f32 %v1556, 0.0
    %v1776 = vmax.f32 %v1561, 0.0
    %v1777 = vmax.f32 %v1564, 0.0
    %v1778 = vmax.f32 %v1569, 0.0
    %v1779 = vmax.f32 %v1572, 0.0
    %v1780 = vmax.f32 %v1577, 0.0
    %v1781 = vmax.f32 %v1580, 0.0
    %v1782 = vmax.f32 %v1585, 0.0
    %v1783 = vmax.f32 %v1588, 0.0
    %v1784 = vmax.f32 %v1593, 0.0
    %v1785 = vmax.f32 %v1596, 0.0
    %v1786 = vmax.f32 %v1601, 0.0
    %v1787 = vmax.f32 %v1604, 0.0
    %v1788 = vmax.f32 %v1609, 0.0
    %v1789 = vmax.f32 %v1612, 0.0
    %v1790 = vmax.f32 %v1617, 0.0
    %v1791 = vpack.c.bf16 %v1623, %v1622
    %v1792 = vpack.c.bf16 %v1625, %v1624
    %v1793 = vpack.c.bf16 %v1627, %v1626
    %v1794 = vpack.c.bf16 %v1629, %v1628
    %v1795 = vpack.c.bf16 %v1631, %v1630
    %v1796 = vpack.c.bf16 %v1633, %v1632
    %v1797 = vpack.c.bf16 %v1635, %v1634
    %v1798 = vpack.c.bf16 %v1637, %v1636
    %v1799 = vpack.c.bf16 %v1639, %v1638
    %v1800 = vpack.c.bf16 %v1641, %v1640
    %v1801 = vpack.c.bf16 %v1643, %v1642
    %v1802 = vpack.c.bf16 %v1645, %v1644
    %v1803 = vpack.c.bf16 %v1647, %v1646
    %v1804 = vpack.c.bf16 %v1649, %v1648
    %v1805 = vpack.c.bf16 %v1651, %v1650
    %v1806 = vpack.c.bf16 %v1653, %v1652
    %v1807 = vpack.c.bf16 %v1655, %v1654
    %v1808 = vpack.c.bf16 %v1657, %v1656
    %v1809 = vpack.c.bf16 %v1659, %v1658
    %v1810 = vpack.c.bf16 %v1661, %v1660
    %v1811 = vpack.c.bf16 %v1663, %v1662
    %v1812 = vpack.c.bf16 %v1665, %v1664
    %v1813 = vpack.c.bf16 %v1667, %v1666
    %v1814 = vpack.c.bf16 %v1669, %v1668
    %v1815 = vpack.c.bf16 %v1671, %v1670
    %v1816 = vpack.c.bf16 %v1673, %v1672
    %v1817 = vpack.c.bf16 %v1675, %v1674
    %v1818 = vpack.c.bf16 %v1677, %v1676
    %v1819 = vpack.c.bf16 %v1679, %v1678
    %v1820 = vpack.c.bf16 %v1681, %v1680
    %v1821 = vpack.c.bf16 %v1683, %v1682
    %v1822 = vpack.c.bf16 %v1685, %v1684
    %v1823 = vpack.c.bf16 %v1687, %v1686
    %v1824 = vpack.c.bf16 %v1689, %v1688
    %v1825 = vpack.c.bf16 %v1691, %v1690
    %v1826 = vpack.c.bf16 %v1693, %v1692
    %v1827 = vpack.c.bf16 %v1695, %v1694
    %v1828 = vpack.c.bf16 %v1697, %v1696
    %v1829 = vpack.c.bf16 %v1699, %v1698
    %v1830 = vpack.c.bf16 %v1701, %v1700
    %v1831 = vpack.c.bf16 %v1703, %v1702
    %v1832 = vpack.c.bf16 %v1705, %v1704
    %v1833 = vpack.c.bf16 %v1707, %v1706
    %v1834 = vpack.c.bf16 %v1709, %v1708
    %v1835 = vpack.c.bf16 %v1711, %v1710
    %v1836 = vpack.c.bf16 %v1713, %v1712
    %v1837 = vpack.c.bf16 %v1715, %v1714
    %v1838 = vpack.c.bf16 %v1717, %v1716
    %v1839 = vpack.c.bf16 %v1719, %v1718
    %v1840 = vpack.c.bf16 %v1721, %v1720
    %v1841 = vpack.c.bf16 %v1723, %v1722
    %v1842 = vpack.c.bf16 %v1725, %v1724
    %v1843 = vpack.c.bf16 %v1727, %v1726
    %v1844 = vpack.c.bf16 %v1729, %v1728
    %v1845 = vpack.c.bf16 %v1731, %v1730
    %v1846 = vpack.c.bf16 %v1733, %v1732
    %v1847 = vpack.c.bf16 %v1735, %v1734
    %v1848 = vpack.c.bf16 %v1737, %v1736
    %v1849 = vpack.c.bf16 %v1739, %v1738
    %v1850 = vpack.c.bf16 %v1741, %v1740
    %v1851 = vpack.c.bf16 %v1743, %v1742
    %v1852 = vpack.c.bf16 %v1745, %v1744
    %v1853 = vpack.c.bf16 %v1747, %v1746
    %v1854 = vpack.c.bf16 %v1749, %v1748
    %v1855 = vpack.c.bf16 %v1751, %v1750
    %v1856 = vpack.c.bf16 %v1753, %v1752
    %v1857 = vpack.c.bf16 %v1755, %v1754
    %v1858 = vpack.c.bf16 %v1757, %v1756
    %v1859 = vpack.c.bf16 %v1759, %v1758
    %v1860 = vpack.c.bf16 %v1761, %v1760
    %v1861 = vpack.c.bf16 %v1763, %v1762
    %v1862 = vpack.c.bf16 %v1765, %v1764
    %v1863 = vpack.c.bf16 %v1767, %v1766
    %v1864 = vpack.c.bf16 %v1769, %v1768
    %v1865 = vpack.c.bf16 %v1771, %v1770
    %v1866 = vpack.c.bf16 %v1773, %v1772
    %v1867 = vpack.c.bf16 %v1775, %v1774
    %v1868 = vpack.c.bf16 %v1777, %v1776
    %v1869 = vpack.c.bf16 %v1779, %v1778
    %v1870 = vpack.c.bf16 %v1781, %v1780
    %v1871 = vpack.c.bf16 %v1783, %v1782
    %v1872 = vpack.c.bf16 %v1785, %v1784
    %v1873 = vpack.c.bf16 %v1787, %v1786
    %v1874 = vpack.c.bf16 %v1789, %v1788
    %v1875 = vpack.c.bf16 %v1790, %v1790
    %v1961 = vunpack.c.l.b16 %v1791
    %v1962 = vunpack.c.h.b16 %v1791
    %v1963 = vunpack.c.l.b16 %v1792
    %v1964 = vunpack.c.h.b16 %v1792
    %v1965 = vunpack.c.l.b16 %v1793
    %v1966 = vunpack.c.h.b16 %v1793
    %v1967 = vunpack.c.l.b16 %v1794
    %v1968 = vunpack.c.h.b16 %v1794
    %v1969 = vunpack.c.l.b16 %v1795
    %v1970 = vunpack.c.h.b16 %v1795
    %v1971 = vunpack.c.l.b16 %v1796
    %v1972 = vunpack.c.h.b16 %v1796
    %v1973 = vunpack.c.l.b16 %v1797
    %v1974 = vunpack.c.h.b16 %v1797
    %v1975 = vunpack.c.l.b16 %v1798
    %v1976 = vunpack.c.h.b16 %v1798
    %v1977 = vunpack.c.l.b16 %v1799
    %v1978 = vunpack.c.h.b16 %v1799
    %v1979 = vunpack.c.l.b16 %v1800
    %v1980 = vunpack.c.h.b16 %v1800
    %v1981 = vunpack.c.l.b16 %v1801
    %v1982 = vunpack.c.h.b16 %v1801
    %v1983 = vunpack.c.l.b16 %v1802
    %v1984 = vunpack.c.h.b16 %v1802
    %v1985 = vunpack.c.l.b16 %v1803
    %v1986 = vunpack.c.h.b16 %v1803
    %v1987 = vunpack.c.l.b16 %v1804
    %v1988 = vunpack.c.h.b16 %v1804
    %v1989 = vunpack.c.l.b16 %v1805
    %v1990 = vunpack.c.h.b16 %v1805
    %v1991 = vunpack.c.l.b16 %v1806
    %v1992 = vunpack.c.h.b16 %v1806
    %v1993 = vunpack.c.l.b16 %v1807
    %v1994 = vunpack.c.h.b16 %v1807
    %v1995 = vunpack.c.l.b16 %v1808
    %v1996 = vunpack.c.h.b16 %v1808
    %v1997 = vunpack.c.l.b16 %v1809
    %v1998 = vunpack.c.h.b16 %v1809
    %v1999 = vunpack.c.l.b16 %v1810
    %v2000 = vunpack.c.h.b16 %v1810
    %v2001 = vunpack.c.l.b16 %v1811
    %v2002 = vunpack.c.h.b16 %v1811
    %v2003 = vunpack.c.l.b16 %v1812
    %v2004 = vunpack.c.h.b16 %v1812
    %v2005 = vunpack.c.l.b16 %v1813
    %v2006 = vunpack.c.h.b16 %v1813
    %v2007 = vunpack.c.l.b16 %v1814
    %v2008 = vunpack.c.h.b16 %v1814
    %v2009 = vunpack.c.l.b16 %v1815
    %v2010 = vunpack.c.h.b16 %v1815
    %v2011 = vunpack.c.l.b16 %v1816
    %v2012 = vunpack.c.h.b16 %v1816
    %v2013 = vunpack.c.l.b16 %v1817
    %v2014 = vunpack.c.h.b16 %v1817
    %v2015 = vunpack.c.l.b16 %v1818
    %v2016 = vunpack.c.h.b16 %v1818
    %v2017 = vunpack.c.l.b16 %v1819
    %v2018 = vunpack.c.h.b16 %v1819
    %v2019 = vunpack.c.l.b16 %v1820
    %v2020 = vunpack.c.h.b16 %v1820
    %v2021 = vunpack.c.l.b16 %v1821
    %v2022 = vunpack.c.h.b16 %v1821
    %v2023 = vunpack.c.l.b16 %v1822
    %v2024 = vunpack.c.h.b16 %v1822
    %v2025 = vunpack.c.l.b16 %v1823
    %v2026 = vunpack.c.h.b16 %v1823
    %v2027 = vunpack.c.l.b16 %v1824
    %v2028 = vunpack.c.h.b16 %v1824
    %v2029 = vunpack.c.l.b16 %v1825
    %v2030 = vunpack.c.h.b16 %v1825
    %v2031 = vunpack.c.l.b16 %v1826
    %v2032 = vunpack.c.h.b16 %v1826
    %v2033 = vunpack.c.l.b16 %v1827
    %v2034 = vunpack.c.h.b16 %v1827
    %v2035 = vunpack.c.l.b16 %v1828
    %v2036 = vunpack.c.h.b16 %v1828
    %v2037 = vunpack.c.l.b16 %v1829
    %v2038 = vunpack.c.h.b16 %v1829
    %v2039 = vunpack.c.l.b16 %v1830
    %v2040 = vunpack.c.h.b16 %v1830
    %v2041 = vunpack.c.l.b16 %v1831
    %v2042 = vunpack.c.h.b16 %v1831
    %v2043 = vunpack.c.l.b16 %v1832
    %v2044 = vunpack.c.h.b16 %v1832
    %v2045 = vunpack.c.l.b16 %v1833
    %v2046 = vunpack.c.h.b16 %v1833
    %v2047 = vunpack.c.l.b16 %v1834
    %v2048 = vunpack.c.h.b16 %v1834
    %v2049 = vunpack.c.l.b16 %v1835
    %v2050 = vunpack.c.h.b16 %v1835
    %v2051 = vunpack.c.l.b16 %v1836
    %v2052 = vunpack.c.h.b16 %v1836
    %v2053 = vunpack.c.l.b16 %v1837
    %v2054 = vunpack.c.h.b16 %v1837
    %v2055 = vunpack.c.l.b16 %v1838
    %v2056 = vunpack.c.h.b16 %v1838
    %v2057 = vunpack.c.l.b16 %v1839
    %v2058 = vunpack.c.h.b16 %v1839
    %v2059 = vunpack.c.l.b16 %v1840
    %v2060 = vunpack.c.h.b16 %v1840
    %v2061 = vunpack.c.l.b16 %v1841
    %v2062 = vunpack.c.h.b16 %v1841
    %v2063 = vunpack.c.l.b16 %v1842
    %v2064 = vunpack.c.h.b16 %v1842
    %v2065 = vunpack.c.l.b16 %v1843
    %v2066 = vunpack.c.h.b16 %v1843
    %v2067 = vunpack.c.l.b16 %v1844
    %v2068 = vunpack.c.h.b16 %v1844
    %v2069 = vunpack.c.l.b16 %v1845
    %v2070 = vunpack.c.h.b16 %v1845
    %v2071 = vunpack.c.l.b16 %v1846
    %v2072 = vunpack.c.h.b16 %v1846
    %v2073 = vunpack.c.l.b16 %v1847
    %v2074 = vunpack.c.h.b16 %v1847
    %v2075 = vunpack.c.l.b16 %v1848
    %v2076 = vunpack.c.h.b16 %v1848
    %v2077 = vunpack.c.l.b16 %v1849
    %v2078 = vunpack.c.h.b16 %v1849
    %v2079 = vunpack.c.l.b16 %v1850
    %v2080 = vunpack.c.h.b16 %v1850
    %v2081 = vunpack.c.l.b16 %v1851
    %v2082 = vunpack.c.h.b16 %v1851
    %v2083 = vunpack.c.l.b16 %v1852
    %v2084 = vunpack.c.h.b16 %v1852
    %v2085 = vunpack.c.l.b16 %v1853
    %v2086 = vunpack.c.h.b16 %v1853
    %v2087 = vunpack.c.l.b16 %v1854
    %v2088 = vunpack.c.h.b16 %v1854
    %v2089 = vunpack.c.l.b16 %v1855
    %v2090 = vunpack.c.h.b16 %v1855
    %v2091 = vunpack.c.l.b16 %v1856
    %v2092 = vunpack.c.h.b16 %v1856
    %v2093 = vunpack.c.l.b16 %v1857
    %v2094 = vunpack.c.h.b16 %v1857
    %v2095 = vunpack.c.l.b16 %v1858
    %v2096 = vunpack.c.h.b16 %v1858
    %v2097 = vunpack.c.l.b16 %v1859
    %v2098 = vunpack.c.h.b16 %v1859
    %v2099 = vunpack.c.l.b16 %v1860
    %v2100 = vunpack.c.h.b16 %v1860
    %v2101 = vunpack.c.l.b16 %v1861
    %v2102 = vunpack.c.h.b16 %v1861
    %v2103 = vunpack.c.l.b16 %v1862
    %v2104 = vunpack.c.h.b16 %v1862
    %v2105 = vunpack.c.l.b16 %v1863
    %v2106 = vunpack.c.h.b16 %v1863
    %v2107 = vunpack.c.l.b16 %v1864
    %v2108 = vunpack.c.h.b16 %v1864
    %v2109 = vunpack.c.l.b16 %v1865
    %v2110 = vunpack.c.h.b16 %v1865
    %v2111 = vunpack.c.l.b16 %v1866
    %v2112 = vunpack.c.h.b16 %v1866
    %v2113 = vunpack.c.l.b16 %v1867
    %v2114 = vunpack.c.h.b16 %v1867
    %v2115 = vunpack.c.l.b16 %v1868
    %v2116 = vunpack.c.h.b16 %v1868
    %v2117 = vunpack.c.l.b16 %v1869
    %v2118 = vunpack.c.h.b16 %v1869
    %v2119 = vunpack.c.l.b16 %v1870
    %v2120 = vunpack.c.h.b16 %v1870
    %v2121 = vunpack.c.l.b16 %v1871
    %v2122 = vunpack.c.h.b16 %v1871
    %v2123 = vunpack.c.l.b16 %v1872
    %v2124 = vunpack.c.h.b16 %v1872
    %v2125 = vunpack.c.l.b16 %v1873
    %v2126 = vunpack.c.h.b16 %v1873
    %v2127 = vunpack.c.l.b16 %v1874
    %v2128 = vunpack.c.h.b16 %v1874
    %v2129 = vunpack.c.l.b16 %v1875
    %v2130 = vpack.c.b16 %v1961, %v1961
    %v2131 = vpack.c.b16 %v1962, %v1962
    %v2132 = vpack.c.b16 %v1963, %v1963
    %v2133 = vpack.c.b16 %v1964, %v1964
    %v2134 = vpack.c.b16 %v1965, %v1965
    %v2135 = vpack.c.b16 %v1966, %v1966
    %v2136 = vpack.c.b16 %v1967, %v1967
    %v2137 = vpack.c.b16 %v1968, %v1968
    %v2138 = vpack.c.b16 %v1969, %v1969
    %v2139 = vpack.c.b16 %v1970, %v1970
    %v2140 = vpack.c.b16 %v1971, %v1971
    %v2141 = vpack.c.b16 %v1972, %v1972
    %v2142 = vpack.c.b16 %v1973, %v1973
    %v2143 = vpack.c.b16 %v1974, %v1974
    %v2144 = vpack.c.b16 %v1975, %v1975
    %v2145 = vpack.c.b16 %v1976, %v1976
    %v2146 = vpack.c.b16 %v1977, %v1977
    %v2147 = vpack.c.b16 %v1978, %v1978
    %v2148 = vpack.c.b16 %v1979, %v1979
    %v2149 = vpack.c.b16 %v1980, %v1980
    %v2150 = vpack.c.b16 %v1981, %v1981
    %v2151 = vpack.c.b16 %v1982, %v1982
    %v2152 = vpack.c.b16 %v1983, %v1983
    %v2153 = vpack.c.b16 %v1984, %v1984
    %v2154 = vpack.c.b16 %v1985, %v1985
    %v2155 = vpack.c.b16 %v1986, %v1986
    %v2156 = vpack.c.b16 %v1987, %v1987
    %v2157 = vpack.c.b16 %v1988, %v1988
    %v2158 = vpack.c.b16 %v1989, %v1989
    %v2159 = vpack.c.b16 %v1990, %v1990
    %v2160 = vpack.c.b16 %v1991, %v1991
    %v2161 = vpack.c.b16 %v1992, %v1992
    %v2162 = vpack.c.b16 %v1993, %v1993
    %v2163 = vpack.c.b16 %v1994, %v1994
    %v2164 = vpack.c.b16 %v1995, %v1995
    %v2165 = vpack.c.b16 %v1996, %v1996
    %v2166 = vpack.c.b16 %v1997, %v1997
    %v2167 = vpack.c.b16 %v1998, %v1998
    %v2168 = vpack.c.b16 %v1999, %v1999
    %v2169 = vpack.c.b16 %v2000, %v2000
    %v2170 = vpack.c.b16 %v2001, %v2001
    %v2171 = vpack.c.b16 %v2002, %v2002
    %v2172 = vpack.c.b16 %v2003, %v2003
    %v2173 = vpack.c.b16 %v2004, %v2004
    %v2174 = vpack.c.b16 %v2005, %v2005
    %v2175 = vpack.c.b16 %v2006, %v2006
    %v2176 = vpack.c.b16 %v2007, %v2007
    %v2177 = vpack.c.b16 %v2008, %v2008
    %v2178 = vpack.c.b16 %v2009, %v2009
    %v2179 = vpack.c.b16 %v2010, %v2010
    %v2180 = vpack.c.b16 %v2011, %v2011
    %v2181 = vpack.c.b16 %v2012, %v2012
    %v2182 = vpack.c.b16 %v2013, %v2013
    %v2183 = vpack.c.b16 %v2014, %v2014
    %v2184 = vpack.c.b16 %v2015, %v2015
    %v2185 = vpack.c.b16 %v2016, %v2016
    %v2186 = vpack.c.b16 %v2017, %v2017
    %v2187 = vpack.c.b16 %v2018, %v2018
    %v2188 = vpack.c.b16 %v2019, %v2019
    %v2189 = vpack.c.b16 %v2020, %v2020
    %v2190 = vpack.c.b16 %v2021, %v2021
    %v2191 = vpack.c.b16 %v2022, %v2022
    %v2192 = vpack.c.b16 %v2023, %v2023
    %v2193 = vpack.c.b16 %v2024, %v2024
    %v2194 = vpack.c.b16 %v2025, %v2025
    %v2195 = vpack.c.b16 %v2026, %v2026
    %v2196 = vpack.c.b16 %v2027, %v2027
    %v2197 = vpack.c.b16 %v2028, %v2028
    %v2198 = vpack.c.b16 %v2029, %v2029
    %v2199 = vpack.c.b16 %v2030, %v2030
    %v2200 = vpack.c.b16 %v2031, %v2031
    %v2201 = vpack.c.b16 %v2032, %v2032
    %v2202 = vpack.c.b16 %v2033, %v2033
    %v2203 = vpack.c.b16 %v2034, %v2034
    %v2204 = vpack.c.b16 %v2035, %v2035
    %v2205 = vpack.c.b16 %v2036, %v2036
    %v2206 = vpack.c.b16 %v2037, %v2037
    %v2207 = vpack.c.b16 %v2038, %v2038
    %v2208 = vpack.c.b16 %v2039, %v2039
    %v2209 = vpack.c.b16 %v2040, %v2040
    %v2210 = vpack.c.b16 %v2041, %v2041
    %v2211 = vpack.c.b16 %v2042, %v2042
    %v2212 = vpack.c.b16 %v2043, %v2043
    %v2213 = vpack.c.b16 %v2044, %v2044
    %v2214 = vpack.c.b16 %v2045, %v2045
    %v2215 = vpack.c.b16 %v2046, %v2046
    %v2216 = vpack.c.b16 %v2047, %v2047
    %v2217 = vpack.c.b16 %v2048, %v2048
    %v2218 = vpack.c.b16 %v2049, %v2049
    %v2219 = vpack.c.b16 %v2050, %v2050
    %v2220 = vpack.c.b16 %v2051, %v2051
    %v2221 = vpack.c.b16 %v2052, %v2052
    %v2222 = vpack.c.b16 %v2053, %v2053
    %v2223 = vpack.c.b16 %v2054, %v2054
    %v2224 = vpack.c.b16 %v2055, %v2055
    %v2225 = vpack.c.b16 %v2056, %v2056
    %v2226 = vpack.c.b16 %v2057, %v2057
    %v2227 = vpack.c.b16 %v2058, %v2058
    %v2228 = vpack.c.b16 %v2059, %v2059
    %v2229 = vpack.c.b16 %v2060, %v2060
    %v2230 = vpack.c.b16 %v2061, %v2061
    %v2231 = vpack.c.b16 %v2062, %v2062
    %v2232 = vpack.c.b16 %v2063, %v2063
    %v2233 = vpack.c.b16 %v2064, %v2064
    %v2234 = vpack.c.b16 %v2065, %v2065
    %v2235 = vpack.c.b16 %v2066, %v2066
    %v2236 = vpack.c.b16 %v2067, %v2067
    %v2237 = vpack.c.b16 %v2068, %v2068
    %v2238 = vpack.c.b16 %v2069, %v2069
    %v2239 = vpack.c.b16 %v2070, %v2070
    %v2240 = vpack.c.b16 %v2071, %v2071
    %v2241 = vpack.c.b16 %v2072, %v2072
    %v2242 = vpack.c.b16 %v2073, %v2073
    %v2243 = vpack.c.b16 %v2074, %v2074
    %v2244 = vpack.c.b16 %v2075, %v2075
    %v2245 = vpack.c.b16 %v2076, %v2076
    %v2246 = vpack.c.b16 %v2077, %v2077
    %v2247 = vpack.c.b16 %v2078, %v2078
    %v2248 = vpack.c.b16 %v2079, %v2079
    %v2249 = vpack.c.b16 %v2080, %v2080
    %v2250 = vpack.c.b16 %v2081, %v2081
    %v2251 = vpack.c.b16 %v2082, %v2082
    %v2252 = vpack.c.b16 %v2083, %v2083
    %v2253 = vpack.c.b16 %v2084, %v2084
    %v2254 = vpack.c.b16 %v2085, %v2085
    %v2255 = vpack.c.b16 %v2086, %v2086
    %v2256 = vpack.c.b16 %v2087, %v2087
    %v2257 = vpack.c.b16 %v2088, %v2088
    %v2258 = vpack.c.b16 %v2089, %v2089
    %v2259 = vpack.c.b16 %v2090, %v2090
    %v2260 = vpack.c.b16 %v2091, %v2091
    %v2261 = vpack.c.b16 %v2092, %v2092
    %v2262 = vpack.c.b16 %v2093, %v2093
    %v2263 = vpack.c.b16 %v2094, %v2094
    %v2264 = vpack.c.b16 %v2095, %v2095
    %v2265 = vpack.c.b16 %v2096, %v2096
    %v2266 = vpack.c.b16 %v2097, %v2097
    %v2267 = vpack.c.b16 %v2098, %v2098
    %v2268 = vpack.c.b16 %v2099, %v2099
    %v2269 = vpack.c.b16 %v2100, %v2100
    %v2270 = vpack.c.b16 %v2101, %v2101
    %v2271 = vpack.c.b16 %v2102, %v2102
    %v2272 = vpack.c.b16 %v2103, %v2103
    %v2273 = vpack.c.b16 %v2104, %v2104
    %v2274 = vpack.c.b16 %v2105, %v2105
    %v2275 = vpack.c.b16 %v2106, %v2106
    %v2276 = vpack.c.b16 %v2107, %v2107
    %v2277 = vpack.c.b16 %v2108, %v2108
    %v2278 = vpack.c.b16 %v2109, %v2109
    %v2279 = vpack.c.b16 %v2110, %v2110
    %v2280 = vpack.c.b16 %v2111, %v2111
    %v2281 = vpack.c.b16 %v2112, %v2112
    %v2282 = vpack.c.b16 %v2113, %v2113
    %v2283 = vpack.c.b16 %v2114, %v2114
    %v2284 = vpack.c.b16 %v2115, %v2115
    %v2285 = vpack.c.b16 %v2116, %v2116
    %v2286 = vpack.c.b16 %v2117, %v2117
    %v2287 = vpack.c.b16 %v2118, %v2118
    %v2288 = vpack.c.b16 %v2119, %v2119
    %v2289 = vpack.c.b16 %v2120, %v2120
    %v2290 = vpack.c.b16 %v2121, %v2121
    %v2291 = vpack.c.b16 %v2122, %v2122
    %v2292 = vpack.c.b16 %v2123, %v2123
    %v2293 = vpack.c.b16 %v2124, %v2124
    %v2294 = vpack.c.b16 %v2125, %v2125
    %v2295 = vpack.c.b16 %v2126, %v2126
    %v2296 = vpack.c.b16 %v2127, %v2127
    %v2297 = vpack.c.b16 %v2128, %v2128
    %v2298 = vpack.c.b16 %v2129, %v2129
    %vm2468 = vcmask 257024
    %2469 = vst.msk [vmem:[%s3] sm:$0xf] %vm2468, %v2130
    %2470 = vst.msk [vmem:[%s3 + $0x4] sm:$0xf] %vm2468, %v2131
    %2471 = vst.msk [vmem:[%s3 + $0x8] sm:$0xf] %vm2468, %v2132
    %2472 = vst.msk [vmem:[%s3 + $0xc] sm:$0xf] %vm2468, %v2133
    %2473 = vst.msk [vmem:[%s3 + $0x10] sm:$0xf] %vm2468, %v2134
    %2474 = vst.msk [vmem:[%s3 + $0x14] sm:$0xf] %vm2468, %v2135
    %2475 = vst.msk [vmem:[%s3 + $0x18] sm:$0xf] %vm2468, %v2136
    %2476 = vst.msk [vmem:[%s3 + $0x1c] sm:$0xf] %vm2468, %v2137
    %2477 = vst.msk [vmem:[%s3 + $0x20] sm:$0xf] %vm2468, %v2138
    %2478 = vst.msk [vmem:[%s3 + $0x24] sm:$0xf] %vm2468, %v2139
    %2479 = vst.msk [vmem:[%s3 + $0x28] sm:$0xf] %vm2468, %v2140
    %2480 = vst.msk [vmem:[%s3 + $0x2c] sm:$0xf] %vm2468, %v2141
    %2481 = vst.msk [vmem:[%s3 + $0x30] sm:$0xf] %vm2468, %v2142
    %2482 = vst.msk [vmem:[%s3 + $0x34] sm:$0xf] %vm2468, %v2143
    %2483 = vst.msk [vmem:[%s3 + $0x38] sm:$0xf] %vm2468, %v2144
    %2484 = vst.msk [vmem:[%s3 + $0x3c] sm:$0xf] %vm2468, %v2145
    %2485 = vst.msk [vmem:[%s3 + $0x40] sm:$0xf] %vm2468, %v2146
    %2486 = vst.msk [vmem:[%s3 + $0x44] sm:$0xf] %vm2468, %v2147
    %2487 = vst.msk [vmem:[%s3 + $0x48] sm:$0xf] %vm2468, %v2148
    %2488 = vst.msk [vmem:[%s3 + $0x4c] sm:$0xf] %vm2468, %v2149
    %2489 = vst.msk [vmem:[%s3 + $0x50] sm:$0xf] %vm2468, %v2150
    %2490 = vst.msk [vmem:[%s3 + $0x54] sm:$0xf] %vm2468, %v2151
    %2491 = vst.msk [vmem:[%s3 + $0x58] sm:$0xf] %vm2468, %v2152
    %2492 = vst.msk [vmem:[%s3 + $0x5c] sm:$0xf] %vm2468, %v2153
    %2493 = vst.msk [vmem:[%s3 + $0x60] sm:$0xf] %vm2468, %v2154
    %2494 = vst.msk [vmem:[%s3 + $0x64] sm:$0xf] %vm2468, %v2155
    %2495 = vst.msk [vmem:[%s3 + $0x68] sm:$0xf] %vm2468, %v2156
    %2496 = vst.msk [vmem:[%s3 + $0x6c] sm:$0xf] %vm2468, %v2157
    %2497 = vst.msk [vmem:[%s3 + $0x70] sm:$0xf] %vm2468, %v2158
    %2498 = vst.msk [vmem:[%s3 + $0x74] sm:$0xf] %vm2468, %v2159
    %2499 = vst.msk [vmem:[%s3 + $0x78] sm:$0xf] %vm2468, %v2160
    %2500 = vst.msk [vmem:[%s3 + $0x7c] sm:$0xf] %vm2468, %v2161
    %2501 = vst.msk [vmem:[%s3 + $0x80] sm:$0xf] %vm2468, %v2162
    %2502 = vst.msk [vmem:[%s3 + $0x84] sm:$0xf] %vm2468, %v2163
    %2503 = vst.msk [vmem:[%s3 + $0x88] sm:$0xf] %vm2468, %v2164
    %2504 = vst.msk [vmem:[%s3 + $0x8c] sm:$0xf] %vm2468, %v2165
    %2505 = vst.msk [vmem:[%s3 + $0x90] sm:$0xf] %vm2468, %v2166
    %2506 = vst.msk [vmem:[%s3 + $0x94] sm:$0xf] %vm2468, %v2167
    %2507 = vst.msk [vmem:[%s3 + $0x98] sm:$0xf] %vm2468, %v2168
    %2508 = vst.msk [vmem:[%s3 + $0x9c] sm:$0xf] %vm2468, %v2169
    %2509 = vst.msk [vmem:[%s3 + $0xa0] sm:$0xf] %vm2468, %v2170
    %2510 = vst.msk [vmem:[%s3 + $0xa4] sm:$0xf] %vm2468, %v2171
    %2511 = vst.msk [vmem:[%s3 + $0xa8] sm:$0xf] %vm2468, %v2172
    %2512 = vst.msk [vmem:[%s3 + $0xac] sm:$0xf] %vm2468, %v2173
    %2513 = vst.msk [vmem:[%s3 + $0xb0] sm:$0xf] %vm2468, %v2174
    %2514 = vst.msk [vmem:[%s3 + $0xb4] sm:$0xf] %vm2468, %v2175
    %2515 = vst.msk [vmem:[%s3 + $0xb8] sm:$0xf] %vm2468, %v2176
    %2516 = vst.msk [vmem:[%s3 + $0xbc] sm:$0xf] %vm2468, %v2177
    %2517 = vst.msk [vmem:[%s3 + $0xc0] sm:$0xf] %vm2468, %v2178
    %2518 = vst.msk [vmem:[%s3 + $0xc4] sm:$0xf] %vm2468, %v2179
    %2519 = vst.msk [vmem:[%s3 + $0xc8] sm:$0xf] %vm2468, %v2180
    %2520 = vst.msk [vmem:[%s3 + $0xcc] sm:$0xf] %vm2468, %v2181
    %2521 = vst.msk [vmem:[%s3 + $0xd0] sm:$0xf] %vm2468, %v2182
    %2522 = vst.msk [vmem:[%s3 + $0xd4] sm:$0xf] %vm2468, %v2183
    %2523 = vst.msk [vmem:[%s3 + $0xd8] sm:$0xf] %vm2468, %v2184
    %2524 = vst.msk [vmem:[%s3 + $0xdc] sm:$0xf] %vm2468, %v2185
    %2525 = vst.msk [vmem:[%s3 + $0xe0] sm:$0xf] %vm2468, %v2186
    %2526 = vst.msk [vmem:[%s3 + $0xe4] sm:$0xf] %vm2468, %v2187
    %2527 = vst.msk [vmem:[%s3 + $0xe8] sm:$0xf] %vm2468, %v2188
    %2528 = vst.msk [vmem:[%s3 + $0xec] sm:$0xf] %vm2468, %v2189
    %2529 = vst.msk [vmem:[%s3 + $0xf0] sm:$0xf] %vm2468, %v2190
    %2530 = vst.msk [vmem:[%s3 + $0xf4] sm:$0xf] %vm2468, %v2191
    %2531 = vst.msk [vmem:[%s3 + $0xf8] sm:$0xf] %vm2468, %v2192
    %2532 = vst.msk [vmem:[%s3 + $0xfc] sm:$0xf] %vm2468, %v2193
    %2533 = vst.msk [vmem:[%s3 + $0x100] sm:$0xf] %vm2468, %v2194
    %2534 = vst.msk [vmem:[%s3 + $0x104] sm:$0xf] %vm2468, %v2195
    %2535 = vst.msk [vmem:[%s3 + $0x108] sm:$0xf] %vm2468, %v2196
    %2536 = vst.msk [vmem:[%s3 + $0x10c] sm:$0xf] %vm2468, %v2197
    %2537 = vst.msk [vmem:[%s3 + $0x110] sm:$0xf] %vm2468, %v2198
    %2538 = vst.msk [vmem:[%s3 + $0x114] sm:$0xf] %vm2468, %v2199
    %2539 = vst.msk [vmem:[%s3 + $0x118] sm:$0xf] %vm2468, %v2200
    %2540 = vst.msk [vmem:[%s3 + $0x11c] sm:$0xf] %vm2468, %v2201
    %2541 = vst.msk [vmem:[%s3 + $0x120] sm:$0xf] %vm2468, %v2202
    %2542 = vst.msk [vmem:[%s3 + $0x124] sm:$0xf] %vm2468, %v2203
    %2543 = vst.msk [vmem:[%s3 + $0x128] sm:$0xf] %vm2468, %v2204
    %2544 = vst.msk [vmem:[%s3 + $0x12c] sm:$0xf] %vm2468, %v2205
    %2545 = vst.msk [vmem:[%s3 + $0x130] sm:$0xf] %vm2468, %v2206
    %2546 = vst.msk [vmem:[%s3 + $0x134] sm:$0xf] %vm2468, %v2207
    %2547 = vst.msk [vmem:[%s3 + $0x138] sm:$0xf] %vm2468, %v2208
    %2548 = vst.msk [vmem:[%s3 + $0x13c] sm:$0xf] %vm2468, %v2209
    %2549 = vst.msk [vmem:[%s3 + $0x140] sm:$0xf] %vm2468, %v2210
    %2550 = vst.msk [vmem:[%s3 + $0x144] sm:$0xf] %vm2468, %v2211
    %2551 = vst.msk [vmem:[%s3 + $0x148] sm:$0xf] %vm2468, %v2212
    %2552 = vst.msk [vmem:[%s3 + $0x14c] sm:$0xf] %vm2468, %v2213
    %2553 = vst.msk [vmem:[%s3 + $0x150] sm:$0xf] %vm2468, %v2214
    %2554 = vst.msk [vmem:[%s3 + $0x154] sm:$0xf] %vm2468, %v2215
    %2555 = vst.msk [vmem:[%s3 + $0x158] sm:$0xf] %vm2468, %v2216
    %2556 = vst.msk [vmem:[%s3 + $0x15c] sm:$0xf] %vm2468, %v2217
    %2557 = vst.msk [vmem:[%s3 + $0x160] sm:$0xf] %vm2468, %v2218
    %2558 = vst.msk [vmem:[%s3 + $0x164] sm:$0xf] %vm2468, %v2219
    %2559 = vst.msk [vmem:[%s3 + $0x168] sm:$0xf] %vm2468, %v2220
    %2560 = vst.msk [vmem:[%s3 + $0x16c] sm:$0xf] %vm2468, %v2221
    %2561 = vst.msk [vmem:[%s3 + $0x170] sm:$0xf] %vm2468, %v2222
    %2562 = vst.msk [vmem:[%s3 + $0x174] sm:$0xf] %vm2468, %v2223
    %2563 = vst.msk [vmem:[%s3 + $0x178] sm:$0xf] %vm2468, %v2224
    %2564 = vst.msk [vmem:[%s3 + $0x17c] sm:$0xf] %vm2468, %v2225
    %2565 = vst.msk [vmem:[%s3 + $0x180] sm:$0xf] %vm2468, %v2226
    %2566 = vst.msk [vmem:[%s3 + $0x184] sm:$0xf] %vm2468, %v2227
    %2567 = vst.msk [vmem:[%s3 + $0x188] sm:$0xf] %vm2468, %v2228
    %2568 = vst.msk [vmem:[%s3 + $0x18c] sm:$0xf] %vm2468, %v2229
    %2569 = vst.msk [vmem:[%s3 + $0x190] sm:$0xf] %vm2468, %v2230
    %2570 = vst.msk [vmem:[%s3 + $0x194] sm:$0xf] %vm2468, %v2231
    %2571 = vst.msk [vmem:[%s3 + $0x198] sm:$0xf] %vm2468, %v2232
    %2572 = vst.msk [vmem:[%s3 + $0x19c] sm:$0xf] %vm2468, %v2233
    %2573 = vst.msk [vmem:[%s3 + $0x1a0] sm:$0xf] %vm2468, %v2234
    %2574 = vst.msk [vmem:[%s3 + $0x1a4] sm:$0xf] %vm2468, %v2235
    %2575 = vst.msk [vmem:[%s3 + $0x1a8] sm:$0xf] %vm2468, %v2236
    %2576 = vst.msk [vmem:[%s3 + $0x1ac] sm:$0xf] %vm2468, %v2237
    %2577 = vst.msk [vmem:[%s3 + $0x1b0] sm:$0xf] %vm2468, %v2238
    %2578 = vst.msk [vmem:[%s3 + $0x1b4] sm:$0xf] %vm2468, %v2239
    %2579 = vst.msk [vmem:[%s3 + $0x1b8] sm:$0xf] %vm2468, %v2240
    %2580 = vst.msk [vmem:[%s3 + $0x1bc] sm:$0xf] %vm2468, %v2241
    %2581 = vst.msk [vmem:[%s3 + $0x1c0] sm:$0xf] %vm2468, %v2242
    %2582 = vst.msk [vmem:[%s3 + $0x1c4] sm:$0xf] %vm2468, %v2243
    %2583 = vst.msk [vmem:[%s3 + $0x1c8] sm:$0xf] %vm2468, %v2244
    %2584 = vst.msk [vmem:[%s3 + $0x1cc] sm:$0xf] %vm2468, %v2245
    %2585 = vst.msk [vmem:[%s3 + $0x1d0] sm:$0xf] %vm2468, %v2246
    %2586 = vst.msk [vmem:[%s3 + $0x1d4] sm:$0xf] %vm2468, %v2247
    %2587 = vst.msk [vmem:[%s3 + $0x1d8] sm:$0xf] %vm2468, %v2248
    %2588 = vst.msk [vmem:[%s3 + $0x1dc] sm:$0xf] %vm2468, %v2249
    %2589 = vst.msk [vmem:[%s3 + $0x1e0] sm:$0xf] %vm2468, %v2250
    %2590 = vst.msk [vmem:[%s3 + $0x1e4] sm:$0xf] %vm2468, %v2251
    %2591 = vst.msk [vmem:[%s3 + $0x1e8] sm:$0xf] %vm2468, %v2252
    %2592 = vst.msk [vmem:[%s3 + $0x1ec] sm:$0xf] %vm2468, %v2253
    %2593 = vst.msk [vmem:[%s3 + $0x1f0] sm:$0xf] %vm2468, %v2254
    %2594 = vst.msk [vmem:[%s3 + $0x1f4] sm:$0xf] %vm2468, %v2255
    %2595 = vst.msk [vmem:[%s3 + $0x1f8] sm:$0xf] %vm2468, %v2256
    %2596 = vst.msk [vmem:[%s3 + $0x1fc] sm:$0xf] %vm2468, %v2257
    %2597 = vst.msk [vmem:[%s3 + $0x200] sm:$0xf] %vm2468, %v2258
    %2598 = vst.msk [vmem:[%s3 + $0x204] sm:$0xf] %vm2468, %v2259
    %2599 = vst.msk [vmem:[%s3 + $0x208] sm:$0xf] %vm2468, %v2260
    %2600 = vst.msk [vmem:[%s3 + $0x20c] sm:$0xf] %vm2468, %v2261
    %2601 = vst.msk [vmem:[%s3 + $0x210] sm:$0xf] %vm2468, %v2262
    %2602 = vst.msk [vmem:[%s3 + $0x214] sm:$0xf] %vm2468, %v2263
    %2603 = vst.msk [vmem:[%s3 + $0x218] sm:$0xf] %vm2468, %v2264
    %2604 = vst.msk [vmem:[%s3 + $0x21c] sm:$0xf] %vm2468, %v2265
    %2605 = vst.msk [vmem:[%s3 + $0x220] sm:$0xf] %vm2468, %v2266
    %2606 = vst.msk [vmem:[%s3 + $0x224] sm:$0xf] %vm2468, %v2267
    %2607 = vst.msk [vmem:[%s3 + $0x228] sm:$0xf] %vm2468, %v2268
    %2608 = vst.msk [vmem:[%s3 + $0x22c] sm:$0xf] %vm2468, %v2269
    %2609 = vst.msk [vmem:[%s3 + $0x230] sm:$0xf] %vm2468, %v2270
    %2610 = vst.msk [vmem:[%s3 + $0x234] sm:$0xf] %vm2468, %v2271
    %2611 = vst.msk [vmem:[%s3 + $0x238] sm:$0xf] %vm2468, %v2272
    %2612 = vst.msk [vmem:[%s3 + $0x23c] sm:$0xf] %vm2468, %v2273
    %2613 = vst.msk [vmem:[%s3 + $0x240] sm:$0xf] %vm2468, %v2274
    %2614 = vst.msk [vmem:[%s3 + $0x244] sm:$0xf] %vm2468, %v2275
    %2615 = vst.msk [vmem:[%s3 + $0x248] sm:$0xf] %vm2468, %v2276
    %2616 = vst.msk [vmem:[%s3 + $0x24c] sm:$0xf] %vm2468, %v2277
    %2617 = vst.msk [vmem:[%s3 + $0x250] sm:$0xf] %vm2468, %v2278
    %2618 = vst.msk [vmem:[%s3 + $0x254] sm:$0xf] %vm2468, %v2279
    %2619 = vst.msk [vmem:[%s3 + $0x258] sm:$0xf] %vm2468, %v2280
    %2620 = vst.msk [vmem:[%s3 + $0x25c] sm:$0xf] %vm2468, %v2281
    %2621 = vst.msk [vmem:[%s3 + $0x260] sm:$0xf] %vm2468, %v2282
    %2622 = vst.msk [vmem:[%s3 + $0x264] sm:$0xf] %vm2468, %v2283
    %2623 = vst.msk [vmem:[%s3 + $0x268] sm:$0xf] %vm2468, %v2284
    %2624 = vst.msk [vmem:[%s3 + $0x26c] sm:$0xf] %vm2468, %v2285
    %2625 = vst.msk [vmem:[%s3 + $0x270] sm:$0xf] %vm2468, %v2286
    %2626 = vst.msk [vmem:[%s3 + $0x274] sm:$0xf] %vm2468, %v2287
    %2627 = vst.msk [vmem:[%s3 + $0x278] sm:$0xf] %vm2468, %v2288
    %2628 = vst.msk [vmem:[%s3 + $0x27c] sm:$0xf] %vm2468, %v2289
    %2629 = vst.msk [vmem:[%s3 + $0x280] sm:$0xf] %vm2468, %v2290
    %2630 = vst.msk [vmem:[%s3 + $0x284] sm:$0xf] %vm2468, %v2291
    %2631 = vst.msk [vmem:[%s3 + $0x288] sm:$0xf] %vm2468, %v2292
    %2632 = vst.msk [vmem:[%s3 + $0x28c] sm:$0xf] %vm2468, %v2293
    %2633 = vst.msk [vmem:[%s3 + $0x290] sm:$0xf] %vm2468, %v2294
    %2634 = vst.msk [vmem:[%s3 + $0x294] sm:$0xf] %vm2468, %v2295
    %2635 = vst.msk [vmem:[%s3 + $0x298] sm:$0xf] %vm2468, %v2296
    %2636 = vst.msk [vmem:[%s3 + $0x29c] sm:$0xf] %vm2468, %v2297
    %2637 = vst.msk [vmem:[%s3 + $0x2a0] sm:$0xf] %vm2468, %v2298
    // Predicated region
    $region22: #{simsiam_forward.3} parent=1 // pred_check
      _
    $region23: #{simsiam_forward.3} parent=1 // pred_check_branch
      %2639 = sbr.rel (0) target = $region25
    $region24: #{simsiam_forward.3} parent=1 // pred_region
      _
    $region25: #{simsiam_forward.3} parent=1 // pred_fallthru
      _
    // Predicated region
    $region26: #{simsiam_forward.3} parent=1 // pred_check
      _
    $region27: #{simsiam_forward.3} parent=1 // pred_check_branch
      %2641 = sbr.rel (0) target = $region29
    $region28: #{simsiam_forward.3} parent=1 // pred_region
      _
    $region29: #{simsiam_forward.3} parent=1 // pred_fallthru
      _
    %2642 = vsyncpa [#allocation3], 1
    %2643 = vsyncpa [#allocation5], 1

// kernel: simsiam_forward.4
$region0: #{simsiam_forward.4}
  #allocation0 [shape = 'u32[]', space=smem, size = 0x4, offset = 0x4, fixed_abs, tag = 'smem constant byte address 0x4 - core index']
  #allocation1 [shape = 'u32[144,128]{1,0:T(1,128)}', space=vmem, size = 0x12000, scoped, tag = 'internal scratch']
  #allocation2 [shape = 'f32[576,128]{1,0:T(8,128)}', space=vmem, size = 0x48000, scoped, tag = 'scratch operand']
  %s0 = inlined_call_operand.vmem [shape: bf16[1152,288], index: 0, kind: input, shape index: {}]
  %s1 = inlined_call_operand.vmem [shape: bf16[288,128], index: 1, kind: input, shape index: {}]
  %s2 = inlined_call_operand.vmem [shape: f32[1,128], index: 2, kind: input, shape index: {}]
  %s3 = inlined_call_operand.vmem [shape: bf16[288,64], index: 3, kind: output, shape index: {}]
  %s4 = sld [smem:[#allocation0]]
  $region45: #{simsiam_forward.4} parent=0
    _
  %s6 = ssub.s32 1, %s4
  %s7 = scalar_select 0, %s6, %s4
  loop: start=0, step=1, limit=4
  $region2: #{simsiam_forward.4} parent=0 // loop_pre_header
    _
  $region3: #{simsiam_forward.4} parent=0 // loop_header
    %s9 = sphi 0, %s13
    %p10 = scmp.ge.s32.totalorder %s9, 4
    %s19 = sphi 0, %s21
    %s22 = sphi 0, %s19
    %s23 = sphi 0, %s22
    %s39 = sphi 0, %s23
    %s43 = sphi 0, %s43
    %s45 = sphi 0, %s43
    %s46 = sphi 0, %s45
    %s60 = sphi 0, %s46
    %s64 = sphi 0, %s64
    %s66 = sphi 0, %s64
    %s67 = sphi 0, %s66
    %s81 = sphi 0, %s67
    %s87 = sphi 0, %s89
    %s90 = sphi 0, %s87
    %s91 = sphi 0, %s90
    %s107 = sphi 0, %s91
  $region4: #{simsiam_forward.4} parent=0 // loop_header_branch
    %12 = sbr.rel (%p10) target = $region8
  $region5: #{simsiam_forward.4} parent=0 // loop_body
    %s14 = ssub.s32 %s9, 1
    %s15 = ssub.s32 %s9, 2
    %s16 = sadd.s32 %s9, 1
    %s17 = ssub.s32 %s9, %s16
    %p18 = scmp.eq.s32.totalorder %s17, 0
    %s20 = sadd.s32 %s19, 1
    %s21 = scalar_select %p18, %s19, %s20
    %p24 = pneg %p18
    %p25 = scmp.eq.s32.totalorder %s9, 1
    %p26 = por %p24, %p25
    %p27 = scmp.ne.s32.totalorder %s19, %s22
    %p28 = scmp.eq.s32.totalorder %s9, 0
    %p29 = por %p27, %p28
    %p30 = scmp.ne.s32.totalorder %s19, %s22
    %p31 = scmp.eq.s32.totalorder %s14, 1
    %p32 = por %p30, %p31
    %p33 = scmp.ne.s32.totalorder %s22, %s23
    %p34 = scmp.eq.s32.totalorder %s14, 0
    %p35 = por %p33, %p34
    %p36 = scmp.ne.s32.totalorder %s22, %s23
    %p37 = scmp.eq.s32.totalorder %s15, 1
    %p38 = por %p36, %p37
    %p40 = scmp.ne.s32.totalorder %s23, %s39
    %p41 = scmp.eq.s32.totalorder %s15, 0
    %p42 = por %p40, %p41
    %s44 = sadd.s32 %s43, 1
    %p47 = scmp.eq.s32.totalorder %s9, 1
    %p48 = scmp.ne.s32.totalorder %s43, %s45
    %p49 = scmp.eq.s32.totalorder %s9, 0
    %p50 = por %p48, %p49
    %p51 = scmp.ne.s32.totalorder %s43, %s45
    %p52 = scmp.eq.s32.totalorder %s14, 1
    %p53 = por %p51, %p52
    %p54 = scmp.ne.s32.totalorder %s45, %s46
    %p55 = scmp.eq.s32.totalorder %s14, 0
    %p56 = por %p54, %p55
    %p57 = scmp.ne.s32.totalorder %s45, %s46
    %p58 = scmp.eq.s32.totalorder %s15, 1
    %p59 = por %p57, %p58
    %p61 = scmp.ne.s32.totalorder %s46, %s60
    %p62 = scmp.eq.s32.totalorder %s15, 0
    %p63 = por %p61, %p62
    %s65 = sadd.s32 %s64, 1
    %p68 = scmp.eq.s32.totalorder %s9, 1
    %p69 = scmp.ne.s32.totalorder %s64, %s66
    %p70 = scmp.eq.s32.totalorder %s9, 0
    %p71 = por %p69, %p70
    %p72 = scmp.ne.s32.totalorder %s64, %s66
    %p73 = scmp.eq.s32.totalorder %s14, 1
    %p74 = por %p72, %p73
    %p75 = scmp.ne.s32.totalorder %s66, %s67
    %p76 = scmp.eq.s32.totalorder %s14, 0
    %p77 = por %p75, %p76
    %p78 = scmp.ne.s32.totalorder %s66, %s67
    %p79 = scmp.eq.s32.totalorder %s15, 1
    %p80 = por %p78, %p79
    %p82 = scmp.ne.s32.totalorder %s67, %s81
    %p83 = scmp.eq.s32.totalorder %s15, 0
    %p84 = por %p82, %p83
    %s85 = ssub.s32 %s9, %s16
    %p86 = scmp.eq.s32.totalorder %s85, 0
    %s88 = sadd.s32 %s87, 1
    %s89 = scalar_select %p86, %s87, %s88
    %p92 = pneg %p86
    %p93 = scmp.eq.s32.totalorder %s9, 1
    %p94 = por %p92, %p93
    %p95 = scmp.ne.s32.totalorder %s87, %s90
    %p96 = scmp.eq.s32.totalorder %s9, 0
    %p97 = por %p95, %p96
    %p98 = scmp.ne.s32.totalorder %s87, %s90
    %p99 = scmp.eq.s32.totalorder %s14, 1
    %p100 = por %p98, %p99
    %p101 = scmp.ne.s32.totalorder %s90, %s91
    %p102 = scmp.eq.s32.totalorder %s14, 0
    %p103 = por %p101, %p102
    %p104 = scmp.ne.s32.totalorder %s90, %s91
    %p105 = scmp.eq.s32.totalorder %s15, 1
    %p106 = por %p104, %p105
    %p108 = scmp.ne.s32.totalorder %s91, %s107
    %p109 = scmp.eq.s32.totalorder %s15, 0
    %p110 = por %p108, %p109
    %p111 = scmp.le.s32.totalorder 1, %s9
    %p112 = scmp.lt.s32.totalorder %s9, 3
    %p113 = pnand %p111, %p112
    %p114 = pneg %p113
    // Predicated region
    $region9: #{simsiam_forward.4} parent=5 // pred_check
      _
    $region10: #{simsiam_forward.4} parent=5 // pred_check_branch
      %116 = sbr.rel (%p113) target = $region12
    $region11: #{simsiam_forward.4} parent=5 // pred_region
      %s117 = ssub.s32 %s9, 1
      // Predicated region
      $region13: #{simsiam_forward.4} parent=11 // pred_check
        %p118 = pneg %p56
      $region14: #{simsiam_forward.4} parent=11 // pred_check_branch
        %120 = sbr.rel (%p118) target = $region16
      $region15: #{simsiam_forward.4} parent=11 // pred_region
        _
      $region16: #{simsiam_forward.4} parent=11 // pred_fallthru
        _
      // Predicated region
      $region17: #{simsiam_forward.4} parent=11 // pred_check
        %p121 = pneg %p77
      $region18: #{simsiam_forward.4} parent=11 // pred_check_branch
        %123 = sbr.rel (%p121) target = $region20
      $region19: #{simsiam_forward.4} parent=11 // pred_region
        _
      $region20: #{simsiam_forward.4} parent=11 // pred_fallthru
        _
    $region12: #{simsiam_forward.4} parent=5 // pred_fallthru
      _
    %p124 = scmp.lt.s32.totalorder %s9, 2
    // Predicated region
    $region21: #{simsiam_forward.4} parent=5 // pred_check
      %p125 = pneg %p124
    $region22: #{simsiam_forward.4} parent=5 // pred_check_branch
      %127 = sbr.rel (%p125) target = $region24
    $region23: #{simsiam_forward.4} parent=5 // pred_region
      // Predicated region
      $region25: #{simsiam_forward.4} parent=23 // pred_check
        %p128 = pneg %p29
      $region26: #{simsiam_forward.4} parent=23 // pred_check_branch
        %130 = sbr.rel (%p128) target = $region28
      $region27: #{simsiam_forward.4} parent=23 // pred_region
        %s131 = smul.u32 72, %s9
        %p132 = scmp.lt.s32.totalorder %s131, 143
        %s133 = scalar_select %p132, %s131, 143
        %s134 = smul.addr %s133, 3
        %s135 = smul.addr %s134, 4
        %s136 = scalar_lea.vmem %s0, %s135
        %s137 = smul.u32 72, %s9
      $region28: #{simsiam_forward.4} parent=23 // pred_fallthru
        _
    $region24: #{simsiam_forward.4} parent=5 // pred_fallthru
      _
    %p138 = scmp.le.s32.totalorder 1, %s9
    %p139 = scmp.lt.s32.totalorder %s9, 3
    %p140 = pnand %p138, %p139
    %p141 = pneg %p140
    // Predicated region
    $region29: #{simsiam_forward.4} parent=5 // pred_check
      _
    $region30: #{simsiam_forward.4} parent=5 // pred_check_branch
      %143 = sbr.rel (%p140) target = $region32
    $region31: #{simsiam_forward.4} parent=5 // pred_region
      %s144 = ssub.s32 %s9, 1
      %s145 = smul.u32 72, %s14
      %p146 = scmp.lt.s32.totalorder %s145, 143
      %s147 = scalar_select %p146, %s145, 143
      %s148 = smul.addr %s147, 3
      %s149 = smul.addr %s148, 4
      %s150 = scalar_lea.vmem %s0, %s149
      %p151 = pneg %p35
      %p152 = pneg %p32
      %p153 = pneg %p56
      %p154 = pneg %p53
      %p155 = pneg %p77
      %p156 = pneg %p74
      %p157 = pneg %p103
      %p158 = pneg %p100
      %s159 = smul.u32 18, %s14
      %p160 = scmp.lt.s32.totalorder %s159, 35
      %s161 = scalar_select %p160, %s159, 35
      %s162 = smul.addr %s161, 4
      %s163 = scalar_lea.vmem %s3, %s162
      %s164 = smul.u32 72, %s14
      %p165 = scmp.lt.s32.totalorder %s164, 143
      %s166 = scalar_select %p165, %s164, 143
      %s167 = smul.addr %s166, 3
      %s168 = smul.addr %s167, 4
      %s169 = scalar_lea.vmem %s0, %s168
      %s170 = smul.u32 72, %s14
      %s171 = smul.u32 18, %s14
      %p172 = scmp.lt.s32.totalorder %s171, 35
      %s173 = scalar_select %p172, %s171, 35
      %s174 = smul.addr %s173, 4
      %s175 = scalar_lea.vmem %s3, %s174
      %s176 = smul.u32 18, %s14
      %v178 = vld [vmem:[%s169] sm:$0xff]
      %v179 = vld [vmem:[%s169 + $0x8] sm:$0xf]
      %v180 = vld [vmem:[%s169 + $0xc] sm:$0xff]
      %v181 = vld [vmem:[%s169 + $0x14] sm:$0xf]
      %v182 = vld [vmem:[%s169 + $0x18] sm:$0xff]
      %v183 = vld [vmem:[%s169 + $0x20] sm:$0xf]
      %v184 = vld [vmem:[%s169 + $0x24] sm:$0xff]
      %v185 = vld [vmem:[%s169 + $0x2c] sm:$0xf]
      %v186 = vld [vmem:[%s169 + $0x30] sm:$0xff]
      %v187 = vld [vmem:[%s169 + $0x38] sm:$0xf]
      %v188 = vld [vmem:[%s169 + $0x3c] sm:$0xff]
      %v189 = vld [vmem:[%s169 + $0x44] sm:$0xf]
      %v190 = vld [vmem:[%s169 + $0x48] sm:$0xff]
      %v191 = vld [vmem:[%s169 + $0x50] sm:$0xf]
      %v192 = vld [vmem:[%s169 + $0x54] sm:$0xff]
      %v193 = vld [vmem:[%s169 + $0x5c] sm:$0xf]
      %v194 = vld [vmem:[%s169 + $0x60] sm:$0xff]
      %v195 = vld [vmem:[%s169 + $0x68] sm:$0xf]
      %v196 = vld [vmem:[%s169 + $0x6c] sm:$0xff]
      %v197 = vld [vmem:[%s169 + $0x74] sm:$0xf]
      %v198 = vld [vmem:[%s169 + $0x78] sm:$0xff]
      %v199 = vld [vmem:[%s169 + $0x80] sm:$0xf]
      %v200 = vld [vmem:[%s169 + $0x84] sm:$0xff]
      %v201 = vld [vmem:[%s169 + $0x8c] sm:$0xf]
      %v202 = vld [vmem:[%s169 + $0x90] sm:$0xff]
      %v203 = vld [vmem:[%s169 + $0x98] sm:$0xf]
      %v204 = vld [vmem:[%s169 + $0x9c] sm:$0xff]
      %v205 = vld [vmem:[%s169 + $0xa4] sm:$0xf]
      %v206 = vld [vmem:[%s169 + $0xa8] sm:$0xff]
      %v207 = vld [vmem:[%s169 + $0xb0] sm:$0xf]
      %v208 = vld [vmem:[%s169 + $0xb4] sm:$0xff]
      %v209 = vld [vmem:[%s169 + $0xbc] sm:$0xf]
      %v210 = vld [vmem:[%s169 + $0xc0] sm:$0xff]
      %v211 = vld [vmem:[%s169 + $0xc8] sm:$0xf]
      %v212 = vld [vmem:[%s169 + $0xcc] sm:$0xff]
      %v213 = vld [vmem:[%s169 + $0xd4] sm:$0xf]
      %v214 = vld [vmem:[%s169 + $0xd8] sm:$0xff]
      %v215 = vld [vmem:[%s169 + $0xe0] sm:$0xf]
      %v216 = vld [vmem:[%s169 + $0xe4] sm:$0xff]
      %v217 = vld [vmem:[%s169 + $0xec] sm:$0xf]
      %v218 = vld [vmem:[%s169 + $0xf0] sm:$0xff]
      %v219 = vld [vmem:[%s169 + $0xf8] sm:$0xf]
      %v220 = vld [vmem:[%s169 + $0xfc] sm:$0xff]
      %v221 = vld [vmem:[%s169 + $0x104] sm:$0xf]
      %v222 = vld [vmem:[%s169 + $0x108] sm:$0xff]
      %v223 = vld [vmem:[%s169 + $0x110] sm:$0xf]
      %v224 = vld [vmem:[%s169 + $0x114] sm:$0xff]
      %v225 = vld [vmem:[%s169 + $0x11c] sm:$0xf]
      %v226 = vld [vmem:[%s169 + $0x120] sm:$0xff]
      %v227 = vld [vmem:[%s169 + $0x128] sm:$0xf]
      %v228 = vld [vmem:[%s169 + $0x12c] sm:$0xff]
      %v229 = vld [vmem:[%s169 + $0x134] sm:$0xf]
      %v230 = vld [vmem:[%s169 + $0x138] sm:$0xff]
      %v231 = vld [vmem:[%s169 + $0x140] sm:$0xf]
      %v232 = vld [vmem:[%s169 + $0x144] sm:$0xff]
      %v233 = vld [vmem:[%s169 + $0x14c] sm:$0xf]
      %v234 = vld [vmem:[%s169 + $0x150] sm:$0xff]
      %v235 = vld [vmem:[%s169 + $0x158] sm:$0xf]
      %v236 = vld [vmem:[%s169 + $0x15c] sm:$0xff]
      %v237 = vld [vmem:[%s169 + $0x164] sm:$0xf]
      %v238 = vld [vmem:[%s169 + $0x168] sm:$0xff]
      %v239 = vld [vmem:[%s169 + $0x170] sm:$0xf]
      %v240 = vld [vmem:[%s169 + $0x174] sm:$0xff]
      %v241 = vld [vmem:[%s169 + $0x17c] sm:$0xf]
      %v242 = vld [vmem:[%s169 + $0x180] sm:$0xff]
      %v243 = vld [vmem:[%s169 + $0x188] sm:$0xf]
      %v244 = vld [vmem:[%s169 + $0x18c] sm:$0xff]
      %v245 = vld [vmem:[%s169 + $0x194] sm:$0xf]
      %v246 = vld [vmem:[%s169 + $0x198] sm:$0xff]
      %v247 = vld [vmem:[%s169 + $0x1a0] sm:$0xf]
      %v248 = vld [vmem:[%s169 + $0x1a4] sm:$0xff]
      %v249 = vld [vmem:[%s169 + $0x1ac] sm:$0xf]
      %v250 = vld [vmem:[%s169 + $0x1b0] sm:$0xff]
      %v251 = vld [vmem:[%s169 + $0x1b8] sm:$0xf]
      %v252 = vld [vmem:[%s169 + $0x1bc] sm:$0xff]
      %v253 = vld [vmem:[%s169 + $0x1c4] sm:$0xf]
      %v254 = vld [vmem:[%s169 + $0x1c8] sm:$0xff]
      %v255 = vld [vmem:[%s169 + $0x1d0] sm:$0xf]
      %v256 = vld [vmem:[%s169 + $0x1d4] sm:$0xff]
      %v257 = vld [vmem:[%s169 + $0x1dc] sm:$0xf]
      %v258 = vld [vmem:[%s169 + $0x1e0] sm:$0xff]
      %v259 = vld [vmem:[%s169 + $0x1e8] sm:$0xf]
      %v260 = vld [vmem:[%s169 + $0x1ec] sm:$0xff]
      %v261 = vld [vmem:[%s169 + $0x1f4] sm:$0xf]
      %v262 = vld [vmem:[%s169 + $0x1f8] sm:$0xff]
      %v263 = vld [vmem:[%s169 + $0x200] sm:$0xf]
      %v264 = vld [vmem:[%s169 + $0x204] sm:$0xff]
      %v265 = vld [vmem:[%s169 + $0x20c] sm:$0xf]
      %v266 = vld [vmem:[%s169 + $0x210] sm:$0xff]
      %v267 = vld [vmem:[%s169 + $0x218] sm:$0xf]
      %v268 = vld [vmem:[%s169 + $0x21c] sm:$0xff]
      %v269 = vld [vmem:[%s169 + $0x224] sm:$0xf]
      %v270 = vld [vmem:[%s169 + $0x228] sm:$0xff]
      %v271 = vld [vmem:[%s169 + $0x230] sm:$0xf]
      %v272 = vld [vmem:[%s169 + $0x234] sm:$0xff]
      %v273 = vld [vmem:[%s169 + $0x23c] sm:$0xf]
      %v274 = vld [vmem:[%s169 + $0x240] sm:$0xff]
      %v275 = vld [vmem:[%s169 + $0x248] sm:$0xf]
      %v276 = vld [vmem:[%s169 + $0x24c] sm:$0xff]
      %v277 = vld [vmem:[%s169 + $0x254] sm:$0xf]
      %v278 = vld [vmem:[%s169 + $0x258] sm:$0xff]
      %v279 = vld [vmem:[%s169 + $0x260] sm:$0xf]
      %v280 = vld [vmem:[%s169 + $0x264] sm:$0xff]
      %v281 = vld [vmem:[%s169 + $0x26c] sm:$0xf]
      %v282 = vld [vmem:[%s169 + $0x270] sm:$0xff]
      %v283 = vld [vmem:[%s169 + $0x278] sm:$0xf]
      %v284 = vld [vmem:[%s169 + $0x27c] sm:$0xff]
      %v285 = vld [vmem:[%s169 + $0x284] sm:$0xf]
      %v286 = vld [vmem:[%s169 + $0x288] sm:$0xff]
      %v287 = vld [vmem:[%s169 + $0x290] sm:$0xf]
      %v288 = vld [vmem:[%s169 + $0x294] sm:$0xff]
      %v289 = vld [vmem:[%s169 + $0x29c] sm:$0xf]
      %v290 = vld [vmem:[%s169 + $0x2a0] sm:$0xff]
      %v291 = vld [vmem:[%s169 + $0x2a8] sm:$0xf]
      %v292 = vld [vmem:[%s169 + $0x2ac] sm:$0xff]
      %v293 = vld [vmem:[%s169 + $0x2b4] sm:$0xf]
      %v294 = vld [vmem:[%s169 + $0x2b8] sm:$0xff]
      %v295 = vld [vmem:[%s169 + $0x2c0] sm:$0xf]
      %v296 = vld [vmem:[%s169 + $0x2c4] sm:$0xff]
      %v297 = vld [vmem:[%s169 + $0x2cc] sm:$0xf]
      %v298 = vld [vmem:[%s169 + $0x2d0] sm:$0xff]
      %v299 = vld [vmem:[%s169 + $0x2d8] sm:$0xf]
      %v300 = vld [vmem:[%s169 + $0x2dc] sm:$0xff]
      %v301 = vld [vmem:[%s169 + $0x2e4] sm:$0xf]
      %v302 = vld [vmem:[%s169 + $0x2e8] sm:$0xff]
      %v303 = vld [vmem:[%s169 + $0x2f0] sm:$0xf]
      %v304 = vld [vmem:[%s169 + $0x2f4] sm:$0xff]
      %v305 = vld [vmem:[%s169 + $0x2fc] sm:$0xf]
      %v306 = vld [vmem:[%s169 + $0x300] sm:$0xff]
      %v307 = vld [vmem:[%s169 + $0x308] sm:$0xf]
      %v308 = vld [vmem:[%s169 + $0x30c] sm:$0xff]
      %v309 = vld [vmem:[%s169 + $0x314] sm:$0xf]
      %v310 = vld [vmem:[%s169 + $0x318] sm:$0xff]
      %v311 = vld [vmem:[%s169 + $0x320] sm:$0xf]
      %v312 = vld [vmem:[%s169 + $0x324] sm:$0xff]
      %v313 = vld [vmem:[%s169 + $0x32c] sm:$0xf]
      %v314 = vld [vmem:[%s169 + $0x330] sm:$0xff]
      %v315 = vld [vmem:[%s169 + $0x338] sm:$0xf]
      %v316 = vld [vmem:[%s169 + $0x33c] sm:$0xff]
      %v317 = vld [vmem:[%s169 + $0x344] sm:$0xf]
      %v318 = vld [vmem:[%s169 + $0x348] sm:$0xff]
      %v319 = vld [vmem:[%s169 + $0x350] sm:$0xf]
      %v320 = vld [vmem:[%s169 + $0x354] sm:$0xff]
      %v321 = vld [vmem:[%s169 + $0x35c] sm:$0xf]
      %v322 = vld [vmem:[%s1] sm:$0xf]
      %v323 = vld [vmem:[%s1 + $0x4] sm:$0xf]
      %v324 = vld [vmem:[%s1 + $0x8] sm:$0xf]
      %v325 = vld [vmem:[%s1 + $0xc] sm:$0xf]
      %v326 = vld [vmem:[%s1 + $0x10] sm:$0xf]
      %v327 = vld [vmem:[%s1 + $0x14] sm:$0xf]
      %v328 = vld [vmem:[%s1 + $0x18] sm:$0xf]
      %v329 = vld [vmem:[%s1 + $0x1c] sm:$0xf]
      %v330 = vld [vmem:[%s1 + $0x20] sm:$0xf]
      %v331 = vld [vmem:[%s1 + $0x24] sm:$0xf]
      %v332 = vld [vmem:[%s1 + $0x28] sm:$0xf]
      %v333 = vld [vmem:[%s1 + $0x2c] sm:$0xf]
      %v334 = vld [vmem:[%s1 + $0x30] sm:$0xf]
      %v335 = vld [vmem:[%s1 + $0x34] sm:$0xf]
      %v336 = vld [vmem:[%s1 + $0x38] sm:$0xf]
      %v337 = vld [vmem:[%s1 + $0x3c] sm:$0xf]
      %v338 = vld [vmem:[%s1 + $0x40] sm:$0xf]
      %v339 = vld [vmem:[%s1 + $0x44] sm:$0xf]
      %v340 = vld [vmem:[%s1 + $0x48] sm:$0xf]
      %v341 = vld [vmem:[%s1 + $0x4c] sm:$0xf]
      %v342 = vld [vmem:[%s1 + $0x50] sm:$0xf]
      %v343 = vld [vmem:[%s1 + $0x54] sm:$0xf]
      %v344 = vld [vmem:[%s1 + $0x58] sm:$0xf]
      %v345 = vld [vmem:[%s1 + $0x5c] sm:$0xf]
      %v346 = vld [vmem:[%s1 + $0x60] sm:$0xf]
      %v347 = vld [vmem:[%s1 + $0x64] sm:$0xf]
      %v348 = vld [vmem:[%s1 + $0x68] sm:$0xf]
      %v349 = vld [vmem:[%s1 + $0x6c] sm:$0xf]
      %v350 = vld [vmem:[%s1 + $0x70] sm:$0xf]
      %v351 = vld [vmem:[%s1 + $0x74] sm:$0xf]
      %v352 = vld [vmem:[%s1 + $0x78] sm:$0xf]
      %v353 = vld [vmem:[%s1 + $0x7c] sm:$0xf]
      %v354 = vld [vmem:[%s1 + $0x80] sm:$0xf]
      %v355 = vld [vmem:[%s1 + $0x84] sm:$0xf]
      %v356 = vld [vmem:[%s1 + $0x88] sm:$0xf]
      %v357 = vld [vmem:[%s1 + $0x8c] sm:$0xf]
      %v502 = vunpack.c.l.b16 %v178
      %v503 = vunpack.c.h.b16 %v178
      %v504 = vunpack.c.l.b16 %v179
      %v505 = vunpack.c.l.b16 %v180
      %v506 = vunpack.c.h.b16 %v180
      %v507 = vunpack.c.l.b16 %v181
      %v508 = vunpack.c.l.b16 %v182
      %v509 = vunpack.c.h.b16 %v182
      %v510 = vunpack.c.l.b16 %v183
      %v511 = vunpack.c.l.b16 %v184
      %v512 = vunpack.c.h.b16 %v184
      %v513 = vunpack.c.l.b16 %v185
      %v514 = vunpack.c.l.b16 %v186
      %v515 = vunpack.c.h.b16 %v186
      %v516 = vunpack.c.l.b16 %v187
      %v517 = vunpack.c.l.b16 %v188
      %v518 = vunpack.c.h.b16 %v188
      %v519 = vunpack.c.l.b16 %v189
      %v520 = vunpack.c.l.b16 %v190
      %v521 = vunpack.c.h.b16 %v190
      %v522 = vunpack.c.l.b16 %v191
      %v523 = vunpack.c.l.b16 %v192
      %v524 = vunpack.c.h.b16 %v192
      %v525 = vunpack.c.l.b16 %v193
      %v526 = vunpack.c.l.b16 %v194
      %v527 = vunpack.c.h.b16 %v194
      %v528 = vunpack.c.l.b16 %v195
      %v529 = vunpack.c.l.b16 %v196
      %v530 = vunpack.c.h.b16 %v196
      %v531 = vunpack.c.l.b16 %v197
      %v532 = vunpack.c.l.b16 %v198
      %v533 = vunpack.c.h.b16 %v198
      %v534 = vunpack.c.l.b16 %v199
      %v535 = vunpack.c.l.b16 %v200
      %v536 = vunpack.c.h.b16 %v200
      %v537 = vunpack.c.l.b16 %v201
      %v538 = vunpack.c.l.b16 %v202
      %v539 = vunpack.c.h.b16 %v202
      %v540 = vunpack.c.l.b16 %v203
      %v541 = vunpack.c.l.b16 %v204
      %v542 = vunpack.c.h.b16 %v204
      %v543 = vunpack.c.l.b16 %v205
      %v544 = vunpack.c.l.b16 %v206
      %v545 = vunpack.c.h.b16 %v206
      %v546 = vunpack.c.l.b16 %v207
      %v547 = vunpack.c.l.b16 %v208
      %v548 = vunpack.c.h.b16 %v208
      %v549 = vunpack.c.l.b16 %v209
      %v550 = vunpack.c.l.b16 %v210
      %v551 = vunpack.c.h.b16 %v210
      %v552 = vunpack.c.l.b16 %v211
      %v553 = vunpack.c.l.b16 %v212
      %v554 = vunpack.c.h.b16 %v212
      %v555 = vunpack.c.l.b16 %v213
      %v556 = vunpack.c.l.b16 %v214
      %v557 = vunpack.c.h.b16 %v214
      %v558 = vunpack.c.l.b16 %v215
      %v559 = vunpack.c.l.b16 %v216
      %v560 = vunpack.c.h.b16 %v216
      %v561 = vunpack.c.l.b16 %v217
      %v562 = vunpack.c.l.b16 %v218
      %v563 = vunpack.c.h.b16 %v218
      %v564 = vunpack.c.l.b16 %v219
      %v565 = vunpack.c.l.b16 %v220
      %v566 = vunpack.c.h.b16 %v220
      %v567 = vunpack.c.l.b16 %v221
      %v568 = vunpack.c.l.b16 %v222
      %v569 = vunpack.c.h.b16 %v222
      %v570 = vunpack.c.l.b16 %v223
      %v571 = vunpack.c.l.b16 %v224
      %v572 = vunpack.c.h.b16 %v224
      %v573 = vunpack.c.l.b16 %v225
      %v574 = vunpack.c.l.b16 %v226
      %v575 = vunpack.c.h.b16 %v226
      %v576 = vunpack.c.l.b16 %v227
      %v577 = vunpack.c.l.b16 %v228
      %v578 = vunpack.c.h.b16 %v228
      %v579 = vunpack.c.l.b16 %v229
      %v580 = vunpack.c.l.b16 %v230
      %v581 = vunpack.c.h.b16 %v230
      %v582 = vunpack.c.l.b16 %v231
      %v583 = vunpack.c.l.b16 %v232
      %v584 = vunpack.c.h.b16 %v232
      %v585 = vunpack.c.l.b16 %v233
      %v586 = vunpack.c.l.b16 %v234
      %v587 = vunpack.c.h.b16 %v234
      %v588 = vunpack.c.l.b16 %v235
      %v589 = vunpack.c.l.b16 %v236
      %v590 = vunpack.c.h.b16 %v236
      %v591 = vunpack.c.l.b16 %v237
      %v592 = vunpack.c.l.b16 %v238
      %v593 = vunpack.c.h.b16 %v238
      %v594 = vunpack.c.l.b16 %v239
      %v595 = vunpack.c.l.b16 %v240
      %v596 = vunpack.c.h.b16 %v240
      %v597 = vunpack.c.l.b16 %v241
      %v598 = vunpack.c.l.b16 %v242
      %v599 = vunpack.c.h.b16 %v242
      %v600 = vunpack.c.l.b16 %v243
      %v601 = vunpack.c.l.b16 %v244
      %v602 = vunpack.c.h.b16 %v244
      %v603 = vunpack.c.l.b16 %v245
      %v604 = vunpack.c.l.b16 %v246
      %v605 = vunpack.c.h.b16 %v246
      %v606 = vunpack.c.l.b16 %v247
      %v607 = vunpack.c.l.b16 %v248
      %v608 = vunpack.c.h.b16 %v248
      %v609 = vunpack.c.l.b16 %v249
      %v610 = vunpack.c.l.b16 %v250
      %v611 = vunpack.c.h.b16 %v250
      %v612 = vunpack.c.l.b16 %v251
      %v613 = vunpack.c.l.b16 %v252
      %v614 = vunpack.c.h.b16 %v252
      %v615 = vunpack.c.l.b16 %v253
      %v616 = vunpack.c.l.b16 %v254
      %v617 = vunpack.c.h.b16 %v254
      %v618 = vunpack.c.l.b16 %v255
      %v619 = vunpack.c.l.b16 %v256
      %v620 = vunpack.c.h.b16 %v256
      %v621 = vunpack.c.l.b16 %v257
      %v622 = vunpack.c.l.b16 %v258
      %v623 = vunpack.c.h.b16 %v258
      %v624 = vunpack.c.l.b16 %v259
      %v625 = vunpack.c.l.b16 %v260
      %v626 = vunpack.c.h.b16 %v260
      %v627 = vunpack.c.l.b16 %v261
      %v628 = vunpack.c.l.b16 %v262
      %v629 = vunpack.c.h.b16 %v262
      %v630 = vunpack.c.l.b16 %v263
      %v631 = vunpack.c.l.b16 %v264
      %v632 = vunpack.c.h.b16 %v264
      %v633 = vunpack.c.l.b16 %v265
      %v634 = vunpack.c.l.b16 %v266
      %v635 = vunpack.c.h.b16 %v266
      %v636 = vunpack.c.l.b16 %v267
      %v637 = vunpack.c.l.b16 %v268
      %v638 = vunpack.c.h.b16 %v268
      %v639 = vunpack.c.l.b16 %v269
      %v640 = vunpack.c.l.b16 %v270
      %v641 = vunpack.c.h.b16 %v270
      %v642 = vunpack.c.l.b16 %v271
      %v643 = vunpack.c.l.b16 %v272
      %v644 = vunpack.c.h.b16 %v272
      %v645 = vunpack.c.l.b16 %v273
      %v646 = vunpack.c.l.b16 %v274
      %v647 = vunpack.c.h.b16 %v274
      %v648 = vunpack.c.l.b16 %v275
      %v649 = vunpack.c.l.b16 %v276
      %v650 = vunpack.c.h.b16 %v276
      %v651 = vunpack.c.l.b16 %v277
      %v652 = vunpack.c.l.b16 %v278
      %v653 = vunpack.c.h.b16 %v278
      %v654 = vunpack.c.l.b16 %v279
      %v655 = vunpack.c.l.b16 %v280
      %v656 = vunpack.c.h.b16 %v280
      %v657 = vunpack.c.l.b16 %v281
      %v658 = vunpack.c.l.b16 %v282
      %v659 = vunpack.c.h.b16 %v282
      %v660 = vunpack.c.l.b16 %v283
      %v661 = vunpack.c.l.b16 %v284
      %v662 = vunpack.c.h.b16 %v284
      %v663 = vunpack.c.l.b16 %v285
      %v664 = vunpack.c.l.b16 %v286
      %v665 = vunpack.c.h.b16 %v286
      %v666 = vunpack.c.l.b16 %v287
      %v667 = vunpack.c.l.b16 %v288
      %v668 = vunpack.c.h.b16 %v288
      %v669 = vunpack.c.l.b16 %v289
      %v670 = vunpack.c.l.b16 %v290
      %v671 = vunpack.c.h.b16 %v290
      %v672 = vunpack.c.l.b16 %v291
      %v673 = vunpack.c.l.b16 %v292
      %v674 = vunpack.c.h.b16 %v292
      %v675 = vunpack.c.l.b16 %v293
      %v676 = vunpack.c.l.b16 %v294
      %v677 = vunpack.c.h.b16 %v294
      %v678 = vunpack.c.l.b16 %v295
      %v679 = vunpack.c.l.b16 %v296
      %v680 = vunpack.c.h.b16 %v296
      %v681 = vunpack.c.l.b16 %v297
      %v682 = vunpack.c.l.b16 %v298
      %v683 = vunpack.c.h.b16 %v298
      %v684 = vunpack.c.l.b16 %v299
      %v685 = vunpack.c.l.b16 %v300
      %v686 = vunpack.c.h.b16 %v300
      %v687 = vunpack.c.l.b16 %v301
      %v688 = vunpack.c.l.b16 %v302
      %v689 = vunpack.c.h.b16 %v302
      %v690 = vunpack.c.l.b16 %v303
      %v691 = vunpack.c.l.b16 %v304
      %v692 = vunpack.c.h.b16 %v304
      %v693 = vunpack.c.l.b16 %v305
      %v694 = vunpack.c.l.b16 %v306
      %v695 = vunpack.c.h.b16 %v306
      %v696 = vunpack.c.l.b16 %v307
      %v697 = vunpack.c.l.b16 %v308
      %v698 = vunpack.c.h.b16 %v308
      %v699 = vunpack.c.l.b16 %v309
      %v700 = vunpack.c.l.b16 %v310
      %v701 = vunpack.c.h.b16 %v310
      %v702 = vunpack.c.l.b16 %v311
      %v703 = vunpack.c.l.b16 %v312
      %v704 = vunpack.c.h.b16 %v312
      %v705 = vunpack.c.l.b16 %v313
      %v706 = vunpack.c.l.b16 %v314
      %v707 = vunpack.c.h.b16 %v314
      %v708 = vunpack.c.l.b16 %v315
      %v709 = vunpack.c.l.b16 %v316
      %v710 = vunpack.c.h.b16 %v316
      %v711 = vunpack.c.l.b16 %v317
      %v712 = vunpack.c.l.b16 %v318
      %v713 = vunpack.c.h.b16 %v318
      %v714 = vunpack.c.l.b16 %v319
      %v715 = vunpack.c.l.b16 %v320
      %v716 = vunpack.c.h.b16 %v320
      %v717 = vunpack.c.l.b16 %v321
      %v718 = vpack.c.b16 %v505, %v502
      %v719 = vpack.c.b16 %v506, %v503
      %v720 = vpack.c.b16 %v507, %v504
      %v721 = vpack.c.b16 %v511, %v508
      %v722 = vpack.c.b16 %v512, %v509
      %v723 = vpack.c.b16 %v513, %v510
      %v724 = vpack.c.b16 %v517, %v514
      %v725 = vpack.c.b16 %v518, %v515
      %v726 = vpack.c.b16 %v519, %v516
      %v727 = vpack.c.b16 %v523, %v520
      %v728 = vpack.c.b16 %v524, %v521
      %v729 = vpack.c.b16 %v525, %v522
      %v730 = vpack.c.b16 %v529, %v526
      %v731 = vpack.c.b16 %v530, %v527
      %v732 = vpack.c.b16 %v531, %v528
      %v733 = vpack.c.b16 %v535, %v532
      %v734 = vpack.c.b16 %v536, %v533
      %v735 = vpack.c.b16 %v537, %v534
      %v736 = vpack.c.b16 %v541, %v538
      %v737 = vpack.c.b16 %v542, %v539
      %v738 = vpack.c.b16 %v543, %v540
      %v739 = vpack.c.b16 %v547, %v544
      %v740 = vpack.c.b16 %v548, %v545
      %v741 = vpack.c.b16 %v549, %v546
      %v742 = vpack.c.b16 %v553, %v550
      %v743 = vpack.c.b16 %v554, %v551
      %v744 = vpack.c.b16 %v555, %v552
      %v745 = vpack.c.b16 %v559, %v556
      %v746 = vpack.c.b16 %v560, %v557
      %v747 = vpack.c.b16 %v561, %v558
      %v748 = vpack.c.b16 %v565, %v562
      %v749 = vpack.c.b16 %v566, %v563
      %v750 = vpack.c.b16 %v567, %v564
      %v751 = vpack.c.b16 %v571, %v568
      %v752 = vpack.c.b16 %v572, %v569
      %v753 = vpack.c.b16 %v573, %v570
      %v754 = vpack.c.b16 %v577, %v574
      %v755 = vpack.c.b16 %v578, %v575
      %v756 = vpack.c.b16 %v579, %v576
      %v757 = vpack.c.b16 %v583, %v580
      %v758 = vpack.c.b16 %v584, %v581
      %v759 = vpack.c.b16 %v585, %v582
      %v760 = vpack.c.b16 %v589, %v586
      %v761 = vpack.c.b16 %v590, %v587
      %v762 = vpack.c.b16 %v591, %v588
      %v763 = vpack.c.b16 %v595, %v592
      %v764 = vpack.c.b16 %v596, %v593
      %v765 = vpack.c.b16 %v597, %v594
      %v766 = vpack.c.b16 %v601, %v598
      %v767 = vpack.c.b16 %v602, %v599
      %v768 = vpack.c.b16 %v603, %v600
      %v769 = vpack.c.b16 %v607, %v604
      %v770 = vpack.c.b16 %v608, %v605
      %v771 = vpack.c.b16 %v609, %v606
      %v772 = vpack.c.b16 %v613, %v610
      %v773 = vpack.c.b16 %v614, %v611
      %v774 = vpack.c.b16 %v615, %v612
      %v775 = vpack.c.b16 %v619, %v616
      %v776 = vpack.c.b16 %v620, %v617
      %v777 = vpack.c.b16 %v621, %v618
      %v778 = vpack.c.b16 %v625, %v622
      %v779 = vpack.c.b16 %v626, %v623
      %v780 = vpack.c.b16 %v627, %v624
      %v781 = vpack.c.b16 %v631, %v628
      %v782 = vpack.c.b16 %v632, %v629
      %v783 = vpack.c.b16 %v633, %v630
      %v784 = vpack.c.b16 %v637, %v634
      %v785 = vpack.c.b16 %v638, %v635
      %v786 = vpack.c.b16 %v639, %v636
      %v787 = vpack.c.b16 %v643, %v640
      %v788 = vpack.c.b16 %v644, %v641
      %v789 = vpack.c.b16 %v645, %v642
      %v790 = vpack.c.b16 %v649, %v646
      %v791 = vpack.c.b16 %v650, %v647
      %v792 = vpack.c.b16 %v651, %v648
      %v793 = vpack.c.b16 %v655, %v652
      %v794 = vpack.c.b16 %v656, %v653
      %v795 = vpack.c.b16 %v657, %v654
      %v796 = vpack.c.b16 %v661, %v658
      %v797 = vpack.c.b16 %v662, %v659
      %v798 = vpack.c.b16 %v663, %v660
      %v799 = vpack.c.b16 %v667, %v664
      %v800 = vpack.c.b16 %v668, %v665
      %v801 = vpack.c.b16 %v669, %v666
      %v802 = vpack.c.b16 %v673, %v670
      %v803 = vpack.c.b16 %v674, %v671
      %v804 = vpack.c.b16 %v675, %v672
      %v805 = vpack.c.b16 %v679, %v676
      %v806 = vpack.c.b16 %v680, %v677
      %v807 = vpack.c.b16 %v681, %v678
      %v808 = vpack.c.b16 %v685, %v682
      %v809 = vpack.c.b16 %v686, %v683
      %v810 = vpack.c.b16 %v687, %v684
      %v811 = vpack.c.b16 %v691, %v688
      %v812 = vpack.c.b16 %v692, %v689
      %v813 = vpack.c.b16 %v693, %v690
      %v814 = vpack.c.b16 %v697, %v694
      %v815 = vpack.c.b16 %v698, %v695
      %v816 = vpack.c.b16 %v699, %v696
      %v817 = vpack.c.b16 %v703, %v700
      %v818 = vpack.c.b16 %v704, %v701
      %v819 = vpack.c.b16 %v705, %v702
      %v820 = vpack.c.b16 %v709, %v706
      %v821 = vpack.c.b16 %v710, %v707
      %v822 = vpack.c.b16 %v711, %v708
      %v823 = vpack.c.b16 %v715, %v712
      %v824 = vpack.c.b16 %v716, %v713
      %v825 = vpack.c.b16 %v717, %v714
      %v934 = vunpack.c.l.b16 %v322
      %v935 = vunpack.c.l.b16 %v323
      %v936 = vunpack.c.l.b16 %v324
      %v937 = vunpack.c.l.b16 %v325
      %v938 = vunpack.c.l.b16 %v326
      %v939 = vunpack.c.l.b16 %v327
      %v940 = vunpack.c.l.b16 %v328
      %v941 = vunpack.c.l.b16 %v329
      %v942 = vunpack.c.l.b16 %v330
      %v943 = vunpack.c.l.b16 %v331
      %v944 = vunpack.c.l.b16 %v332
      %v945 = vunpack.c.l.b16 %v333
      %v946 = vunpack.c.l.b16 %v334
      %v947 = vunpack.c.l.b16 %v335
      %v948 = vunpack.c.l.b16 %v336
      %v949 = vunpack.c.l.b16 %v337
      %v950 = vunpack.c.l.b16 %v338
      %v951 = vunpack.c.l.b16 %v339
      %v952 = vunpack.c.l.b16 %v340
      %v953 = vunpack.c.l.b16 %v341
      %v954 = vunpack.c.l.b16 %v342
      %v955 = vunpack.c.l.b16 %v343
      %v956 = vunpack.c.l.b16 %v344
      %v957 = vunpack.c.l.b16 %v345
      %v958 = vunpack.c.l.b16 %v346
      %v959 = vunpack.c.l.b16 %v347
      %v960 = vunpack.c.l.b16 %v348
      %v961 = vunpack.c.l.b16 %v349
      %v962 = vunpack.c.l.b16 %v350
      %v963 = vunpack.c.l.b16 %v351
      %v964 = vunpack.c.l.b16 %v352
      %v965 = vunpack.c.l.b16 %v353
      %v966 = vunpack.c.l.b16 %v354
      %v967 = vunpack.c.l.b16 %v355
      %v968 = vunpack.c.l.b16 %v356
      %v969 = vunpack.c.l.b16 %v357
      %v970 = vpack.c.b16 %v935, %v934
      %v971 = vpack.c.b16 %v937, %v936
      %v972 = vpack.c.b16 %v939, %v938
      %v973 = vpack.c.b16 %v941, %v940
      %v974 = vpack.c.b16 %v943, %v942
      %v975 = vpack.c.b16 %v945, %v944
      %v976 = vpack.c.b16 %v947, %v946
      %v977 = vpack.c.b16 %v949, %v948
      %v978 = vpack.c.b16 %v951, %v950
      %v979 = vpack.c.b16 %v953, %v952
      %v980 = vpack.c.b16 %v955, %v954
      %v981 = vpack.c.b16 %v957, %v956
      %v982 = vpack.c.b16 %v959, %v958
      %v983 = vpack.c.b16 %v961, %v960
      %v984 = vpack.c.b16 %v963, %v962
      %v985 = vpack.c.b16 %v965, %v964
      %v986 = vpack.c.b16 %v967, %v966
      %v987 = vpack.c.b16 %v969, %v968
      %vm1006 = vcmask 261120
      %v1008 = vsel %vm1006, %v720, 0
      %v1011 = vsel %vm1006, %v723, 0
      %v1014 = vsel %vm1006, %v726, 0
      %v1017 = vsel %vm1006, %v729, 0
      %v1020 = vsel %vm1006, %v732, 0
      %v1023 = vsel %vm1006, %v735, 0
      %v1026 = vsel %vm1006, %v738, 0
      %v1029 = vsel %vm1006, %v741, 0
      %v1032 = vsel %vm1006, %v744, 0
      %v1035 = vsel %vm1006, %v747, 0
      %v1038 = vsel %vm1006, %v750, 0
      %v1041 = vsel %vm1006, %v753, 0
      %v1044 = vsel %vm1006, %v756, 0
      %v1047 = vsel %vm1006, %v759, 0
      %v1050 = vsel %vm1006, %v762, 0
      %v1053 = vsel %vm1006, %v765, 0
      %v1056 = vsel %vm1006, %v768, 0
      %v1059 = vsel %vm1006, %v771, 0
      %v1062 = vsel %vm1006, %v774, 0
      %v1065 = vsel %vm1006, %v777, 0
      %v1068 = vsel %vm1006, %v780, 0
      %v1071 = vsel %vm1006, %v783, 0
      %v1074 = vsel %vm1006, %v786, 0
      %v1077 = vsel %vm1006, %v789, 0
      %v1080 = vsel %vm1006, %v792, 0
      %v1083 = vsel %vm1006, %v795, 0
      %v1086 = vsel %vm1006, %v798, 0
      %v1089 = vsel %vm1006, %v801, 0
      %v1092 = vsel %vm1006, %v804, 0
      %v1095 = vsel %vm1006, %v807, 0
      %v1098 = vsel %vm1006, %v810, 0
      %v1101 = vsel %vm1006, %v813, 0
      %v1104 = vsel %vm1006, %v816, 0
      %v1107 = vsel %vm1006, %v819, 0
      %v1110 = vsel %vm1006, %v822, 0
      %v1113 = vsel %vm1006, %v825, 0
      %1115 = vmatprep.subr.bf16.mxu0 0
      %1116 = vmatpush1.bf16.msra.mxu0 %v970
      %1117 = vmatprep.subr.bf16.mxu0 0
      %1118 = vmatpush1.bf16.msra.mxu0 %v971
      %1119 = vmatprep.subr.bf16.mxu0 0
      %1120 = vmatpush1.bf16.msra.mxu0 %v972
      %1121 = vmatprep.subr.bf16.mxu0 0
      %1122 = vmatpush1.bf16.msra.mxu0 %v973
      %1123 = vmatprep.subr.bf16.mxu0 0
      %1124 = vmatpush1.bf16.msra.mxu0 %v974
      %1125 = vmatprep.subr.bf16.mxu0 0
      %1126 = vmatpush1.bf16.msra.mxu0 %v975
      %1127 = vmatprep.subr.bf16.mxu0 0
      %1128 = vmatpush1.bf16.msra.mxu0 %v976
      %1129 = vmatprep.subr.bf16.mxu0 0
      %1130 = vmatpush1.bf16.msra.mxu0 %v977
      %1131 = vmatprep.subr.bf16.mxu0 0
      %1132 = vmatpush1.bf16.msra.mxu0 %v978
      %1133 = vmatprep.subr.bf16.mxu0 0
      %1134 = vmatpush1.bf16.msra.mxu0 %v979
      %1135 = vmatprep.subr.bf16.mxu0 0
      %1136 = vmatpush1.bf16.msra.mxu0 %v980
      %1137 = vmatprep.subr.bf16.mxu0 0
      %1138 = vmatpush1.bf16.msra.mxu0 %v981
      %1139 = vmatprep.subr.bf16.mxu0 0
      %1140 = vmatpush1.bf16.msra.mxu0 %v982
      %1141 = vmatprep.subr.bf16.mxu0 0
      %1142 = vmatpush1.bf16.msra.mxu0 %v983
      %1143 = vmatprep.subr.bf16.mxu0 0
      %1144 = vmatpush1.bf16.msra.mxu0 %v984
      %1145 = vmatprep.subr.bf16.mxu0 0
      %1146 = vmatpush1.bf16.msra.mxu0 %v985
      %1147 = vmatprep.mubr.bf16.mxu0 %v719
      %1148 = vmatmul.mubr.bf16.gmra.mrb[0].mxu0 %v718
      %v1149 = vpop.f32.mrb[0].mxu0
      %v1150 = vadd.f32 0.0, %v1149
      %v1151 = vpop.f32.mrb[0].mxu0
      %v1152 = vpop.f32.mrb[0].mxu0
      %v1153 = vadd.f32 0.0, %v1152
      %v1154 = vpop.f32.mrb[0].mxu0
      %1155 = vmatprep.mubr.bf16.mxu0 %v722
      %1156 = vmatmul.mubr.bf16.gmra.mrb[0].mxu0 %v721
      %v1157 = vpop.f32.mrb[0].mxu0
      %v1158 = vadd.f32 0.0, %v1157
      %v1159 = vpop.f32.mrb[0].mxu0
      %v1160 = vpop.f32.mrb[0].mxu0
      %v1161 = vadd.f32 0.0, %v1160
      %v1162 = vpop.f32.mrb[0].mxu0
      %1163 = vmatprep.mubr.bf16.mxu0 %v725
      %1164 = vmatmul.mubr.bf16.gmra.mrb[0].mxu0 %v724
      %v1165 = vpop.f32.mrb[0].mxu0
      %v1166 = vadd.f32 0.0, %v1165
      %v1167 = vpop.f32.mrb[0].mxu0
      %v1168 = vpop.f32.mrb[0].mxu0
      %v1169 = vadd.f32 0.0, %v1168
      %v1170 = vpop.f32.mrb[0].mxu0
      %1171 = vmatprep.mubr.bf16.mxu0 %v728
      %1172 = vmatmul.mubr.bf16.gmra.mrb[0].mxu0 %v727
      %v1173 = vpop.f32.mrb[0].mxu0
      %v1174 = vadd.f32 0.0, %v1173
      %v1175 = vpop.f32.mrb[0].mxu0
      %v1176 = vpop.f32.mrb[0].mxu0
      %v1177 = vadd.f32 0.0, %v1176
      %v1178 = vpop.f32.mrb[0].mxu0
      %1179 = vmatprep.mubr.bf16.mxu0 %v731
      %1180 = vmatmul.mubr.bf16.gmra.mrb[0].mxu0 %v730
      %v1181 = vpop.f32.mrb[0].mxu0
      %v1182 = vadd.f32 0.0, %v1181
      %v1183 = vpop.f32.mrb[0].mxu0
      %v1184 = vpop.f32.mrb[0].mxu0
      %v1185 = vadd.f32 0.0, %v1184
      %v1186 = vpop.f32.mrb[0].mxu0
      %1187 = vmatprep.mubr.bf16.mxu0 %v734
      %1188 = vmatmul.mubr.bf16.gmra.mrb[0].mxu0 %v733
      %v1189 = vpop.f32.mrb[0].mxu0
      %v1190 = vadd.f32 0.0, %v1189
      %v1191 = vpop.f32.mrb[0].mxu0
      %v1192 = vpop.f32.mrb[0].mxu0
      %v1193 = vadd.f32 0.0, %v1192
      %v1194 = vpop.f32.mrb[0].mxu0
      %1195 = vmatprep.mubr.bf16.mxu0 %v737
      %1196 = vmatmul.mubr.bf16.gmra.mrb[0].mxu0 %v736
      %v1197 = vpop.f32.mrb[0].mxu0
      %v1198 = vadd.f32 0.0, %v1197
      %v1199 = vpop.f32.mrb[0].mxu0
      %v1200 = vpop.f32.mrb[0].mxu0
      %v1201 = vadd.f32 0.0, %v1200
      %v1202 = vpop.f32.mrb[0].mxu0
      %1203 = vmatprep.mubr.bf16.mxu0 %v740
      %1204 = vmatmul.mubr.bf16.gmra.mrb[0].mxu0 %v739
      %v1205 = vpop.f32.mrb[0].mxu0
      %v1206 = vadd.f32 0.0, %v1205
      %v1207 = vpop.f32.mrb[0].mxu0
      %v1208 = vpop.f32.mrb[0].mxu0
      %v1209 = vadd.f32 0.0, %v1208
      %v1210 = vpop.f32.mrb[0].mxu0
      %1211 = vmatprep.mubr.bf16.mxu0 %v743
      %1212 = vmatmul.mubr.bf16.gmra.mrb[0].mxu0 %v742
      %v1213 = vpop.f32.mrb[0].mxu0
      %v1214 = vadd.f32 0.0, %v1213
      %v1215 = vpop.f32.mrb[0].mxu0
      %v1216 = vpop.f32.mrb[0].mxu0
      %v1217 = vadd.f32 0.0, %v1216
      %v1218 = vpop.f32.mrb[0].mxu0
      %1219 = vmatprep.mubr.bf16.mxu0 %v746
      %1220 = vmatmul.mubr.bf16.gmra.mrb[0].mxu0 %v745
      %v1221 = vpop.f32.mrb[0].mxu0
      %v1222 = vadd.f32 0.0, %v1221
      %v1223 = vpop.f32.mrb[0].mxu0
      %v1224 = vpop.f32.mrb[0].mxu0
      %v1225 = vadd.f32 0.0, %v1224
      %v1226 = vpop.f32.mrb[0].mxu0
      %1227 = vmatprep.mubr.bf16.mxu0 %v749
      %1228 = vmatmul.mubr.bf16.gmra.mrb[0].mxu0 %v748
      %v1229 = vpop.f32.mrb[0].mxu0
      %v1230 = vadd.f32 0.0, %v1229
      %v1231 = vpop.f32.mrb[0].mxu0
      %v1232 = vpop.f32.mrb[0].mxu0
      %v1233 = vadd.f32 0.0, %v1232
      %v1234 = vpop.f32.mrb[0].mxu0
      %1235 = vmatprep.mubr.bf16.mxu0 %v752
      %1236 = vmatmul.mubr.bf16.gmra.mrb[0].mxu0 %v751
      %v1237 = vpop.f32.mrb[0].mxu0
      %v1238 = vadd.f32 0.0, %v1237
      %v1239 = vpop.f32.mrb[0].mxu0
      %v1240 = vpop.f32.mrb[0].mxu0
      %v1241 = vadd.f32 0.0, %v1240
      %v1242 = vpop.f32.mrb[0].mxu0
      %1243 = vmatprep.mubr.bf16.mxu0 %v755
      %1244 = vmatmul.mubr.bf16.gmra.mrb[0].mxu0 %v754
      %v1245 = vpop.f32.mrb[0].mxu0
      %v1246 = vadd.f32 0.0, %v1245
      %v1247 = vpop.f32.mrb[0].mxu0
      %v1248 = vpop.f32.mrb[0].mxu0
      %v1249 = vadd.f32 0.0, %v1248
      %v1250 = vpop.f32.mrb[0].mxu0
      %1251 = vmatprep.mubr.bf16.mxu0 %v758
      %1252 = vmatmul.mubr.bf16.gmra.mrb[0].mxu0 %v757
      %v1253 = vpop.f32.mrb[0].mxu0
      %v1254 = vadd.f32 0.0, %v1253
      %v1255 = vpop.f32.mrb[0].mxu0
      %v1256 = vpop.f32.mrb[0].mxu0
      %v1257 = vadd.f32 0.0, %v1256
      %v1258 = vpop.f32.mrb[0].mxu0
      %1259 = vmatprep.mubr.bf16.mxu0 %v761
      %1260 = vmatmul.mubr.bf16.gmra.mrb[0].mxu0 %v760
      %v1261 = vpop.f32.mrb[0].mxu0
      %v1262 = vadd.f32 0.0, %v1261
      %v1263 = vpop.f32.mrb[0].mxu0
      %v1264 = vpop.f32.mrb[0].mxu0
      %v1265 = vadd.f32 0.0, %v1264
      %v1266 = vpop.f32.mrb[0].mxu0
      %1267 = vmatprep.mubr.bf16.mxu0 %v764
      %1268 = vmatmul.mubr.bf16.gmra.mrb[0].mxu0 %v763
      %v1269 = vpop.f32.mrb[0].mxu0
      %v1270 = vadd.f32 0.0, %v1269
      %v1271 = vpop.f32.mrb[0].mxu0
      %v1272 = vpop.f32.mrb[0].mxu0
      %v1273 = vadd.f32 0.0, %v1272
      %v1274 = vpop.f32.mrb[0].mxu0
      %1275 = vmatprep.mubr.bf16.mxu0 %v767
      %1276 = vmatmul.mubr.bf16.gmra.mrb[0].mxu0 %v766
      %v1277 = vpop.f32.mrb[0].mxu0
      %v1278 = vadd.f32 0.0, %v1277
      %v1279 = vpop.f32.mrb[0].mxu0
      %v1280 = vpop.f32.mrb[0].mxu0
      %v1281 = vadd.f32 0.0, %v1280
      %v1282 = vpop.f32.mrb[0].mxu0
      %1283 = vmatprep.mubr.bf16.mxu0 %v770
      %1284 = vmatmul.mubr.bf16.gmra.mrb[0].mxu0 %v769
      %v1285 = vpop.f32.mrb[0].mxu0
      %v1286 = vadd.f32 0.0, %v1285
      %v1287 = vpop.f32.mrb[0].mxu0
      %v1288 = vpop.f32.mrb[0].mxu0
      %v1289 = vadd.f32 0.0, %v1288
      %v1290 = vpop.f32.mrb[0].mxu0
      %1291 = vmatprep.mubr.bf16.mxu0 %v773
      %1292 = vmatmul.mubr.bf16.gmra.mrb[0].mxu0 %v772
      %v1293 = vpop.f32.mrb[0].mxu0
      %v1294 = vadd.f32 0.0, %v1293
      %v1295 = vpop.f32.mrb[0].mxu0
      %v1296 = vpop.f32.mrb[0].mxu0
      %v1297 = vadd.f32 0.0, %v1296
      %v1298 = vpop.f32.mrb[0].mxu0
      %1299 = vmatprep.mubr.bf16.mxu0 %v776
      %1300 = vmatmul.mubr.bf16.gmra.mrb[0].mxu0 %v775
      %v1301 = vpop.f32.mrb[0].mxu0
      %v1302 = vadd.f32 0.0, %v1301
      %v1303 = vpop.f32.mrb[0].mxu0
      %v1304 = vpop.f32.mrb[0].mxu0
      %v1305 = vadd.f32 0.0, %v1304
      %v1306 = vpop.f32.mrb[0].mxu0
      %1307 = vmatprep.mubr.bf16.mxu0 %v779
      %1308 = vmatmul.mubr.bf16.gmra.mrb[0].mxu0 %v778
      %v1309 = vpop.f32.mrb[0].mxu0
      %v1310 = vadd.f32 0.0, %v1309
      %v1311 = vpop.f32.mrb[0].mxu0
      %v1312 = vpop.f32.mrb[0].mxu0
      %v1313 = vadd.f32 0.0, %v1312
      %v1314 = vpop.f32.mrb[0].mxu0
      %1315 = vmatprep.mubr.bf16.mxu0 %v782
      %1316 = vmatmul.mubr.bf16.gmra.mrb[0].mxu0 %v781
      %v1317 = vpop.f32.mrb[0].mxu0
      %v1318 = vadd.f32 0.0, %v1317
      %v1319 = vpop.f32.mrb[0].mxu0
      %v1320 = vpop.f32.mrb[0].mxu0
      %v1321 = vadd.f32 0.0, %v1320
      %v1322 = vpop.f32.mrb[0].mxu0
      %1323 = vmatprep.mubr.bf16.mxu0 %v785
      %1324 = vmatmul.mubr.bf16.gmra.mrb[0].mxu0 %v784
      %v1325 = vpop.f32.mrb[0].mxu0
      %v1326 = vadd.f32 0.0, %v1325
      %v1327 = vpop.f32.mrb[0].mxu0
      %v1328 = vpop.f32.mrb[0].mxu0
      %v1329 = vadd.f32 0.0, %v1328
      %v1330 = vpop.f32.mrb[0].mxu0
      %1331 = vmatprep.mubr.bf16.mxu0 %v788
      %1332 = vmatmul.mubr.bf16.gmra.mrb[0].mxu0 %v787
      %v1333 = vpop.f32.mrb[0].mxu0
      %v1334 = vadd.f32 0.0, %v1333
      %v1335 = vpop.f32.mrb[0].mxu0
      %v1336 = vpop.f32.mrb[0].mxu0
      %v1337 = vadd.f32 0.0, %v1336
      %v1338 = vpop.f32.mrb[0].mxu0
      %1339 = vmatprep.mubr.bf16.mxu0 %v791
      %1340 = vmatmul.mubr.bf16.gmra.mrb[0].mxu0 %v790
      %v1341 = vpop.f32.mrb[0].mxu0
      %v1342 = vadd.f32 0.0, %v1341
      %v1343 = vpop.f32.mrb[0].mxu0
      %v1344 = vpop.f32.mrb[0].mxu0
      %v1345 = vadd.f32 0.0, %v1344
      %v1346 = vpop.f32.mrb[0].mxu0
      %1347 = vmatprep.mubr.bf16.mxu0 %v794
      %1348 = vmatmul.mubr.bf16.gmra.mrb[0].mxu0 %v793
      %v1349 = vpop.f32.mrb[0].mxu0
      %v1350 = vadd.f32 0.0, %v1349
      %v1351 = vpop.f32.mrb[0].mxu0
      %v1352 = vpop.f32.mrb[0].mxu0
      %v1353 = vadd.f32 0.0, %v1352
      %v1354 = vpop.f32.mrb[0].mxu0
      %1355 = vmatprep.mubr.bf16.mxu0 %v797
      %1356 = vmatmul.mubr.bf16.gmra.mrb[0].mxu0 %v796
      %v1357 = vpop.f32.mrb[0].mxu0
      %v1358 = vadd.f32 0.0, %v1357
      %v1359 = vpop.f32.mrb[0].mxu0
      %v1360 = vpop.f32.mrb[0].mxu0
      %v1361 = vadd.f32 0.0, %v1360
      %v1362 = vpop.f32.mrb[0].mxu0
      %1363 = vmatprep.mubr.bf16.mxu0 %v800
      %1364 = vmatmul.mubr.bf16.gmra.mrb[0].mxu0 %v799
      %v1365 = vpop.f32.mrb[0].mxu0
      %v1366 = vadd.f32 0.0, %v1365
      %v1367 = vpop.f32.mrb[0].mxu0
      %v1368 = vpop.f32.mrb[0].mxu0
      %v1369 = vadd.f32 0.0, %v1368
      %v1370 = vpop.f32.mrb[0].mxu0
      %1371 = vmatprep.mubr.bf16.mxu0 %v803
      %1372 = vmatmul.mubr.bf16.gmra.mrb[0].mxu0 %v802
      %v1373 = vpop.f32.mrb[0].mxu0
      %v1374 = vadd.f32 0.0, %v1373
      %v1375 = vpop.f32.mrb[0].mxu0
      %v1376 = vpop.f32.mrb[0].mxu0
      %v1377 = vadd.f32 0.0, %v1376
      %v1378 = vpop.f32.mrb[0].mxu0
      %1379 = vmatprep.mubr.bf16.mxu0 %v806
      %1380 = vmatmul.mubr.bf16.gmra.mrb[0].mxu0 %v805
      %v1381 = vpop.f32.mrb[0].mxu0
      %v1382 = vadd.f32 0.0, %v1381
      %v1383 = vpop.f32.mrb[0].mxu0
      %v1384 = vpop.f32.mrb[0].mxu0
      %v1385 = vadd.f32 0.0, %v1384
      %v1386 = vpop.f32.mrb[0].mxu0
      %1387 = vmatprep.mubr.bf16.mxu0 %v809
      %1388 = vmatmul.mubr.bf16.gmra.mrb[0].mxu0 %v808
      %v1389 = vpop.f32.mrb[0].mxu0
      %v1390 = vadd.f32 0.0, %v1389
      %v1391 = vpop.f32.mrb[0].mxu0
      %v1392 = vpop.f32.mrb[0].mxu0
      %v1393 = vadd.f32 0.0, %v1392
      %v1394 = vpop.f32.mrb[0].mxu0
      %1395 = vmatprep.mubr.bf16.mxu0 %v812
      %1396 = vmatmul.mubr.bf16.gmra.mrb[0].mxu0 %v811
      %v1397 = vpop.f32.mrb[0].mxu0
      %v1398 = vadd.f32 0.0, %v1397
      %v1399 = vpop.f32.mrb[0].mxu0
      %v1400 = vpop.f32.mrb[0].mxu0
      %v1401 = vadd.f32 0.0, %v1400
      %v1402 = vpop.f32.mrb[0].mxu0
      %1403 = vmatprep.mubr.bf16.mxu0 %v815
      %1404 = vmatmul.mubr.bf16.gmra.mrb[0].mxu0 %v814
      %v1405 = vpop.f32.mrb[0].mxu0
      %v1406 = vadd.f32 0.0, %v1405
      %v1407 = vpop.f32.mrb[0].mxu0
      %v1408 = vpop.f32.mrb[0].mxu0
      %v1409 = vadd.f32 0.0, %v1408
      %v1410 = vpop.f32.mrb[0].mxu0
      %1411 = vmatprep.mubr.bf16.mxu0 %v818
      %1412 = vmatmul.mubr.bf16.gmra.mrb[0].mxu0 %v817
      %v1413 = vpop.f32.mrb[0].mxu0
      %v1414 = vadd.f32 0.0, %v1413
      %v1415 = vpop.f32.mrb[0].mxu0
      %v1416 = vpop.f32.mrb[0].mxu0
      %v1417 = vadd.f32 0.0, %v1416
      %v1418 = vpop.f32.mrb[0].mxu0
      %1419 = vmatprep.mubr.bf16.mxu0 %v821
      %1420 = vmatmul.mubr.bf16.gmra.mrb[0].mxu0 %v820
      %v1421 = vpop.f32.mrb[0].mxu0
      %v1422 = vadd.f32 0.0, %v1421
      %v1423 = vpop.f32.mrb[0].mxu0
      %v1424 = vpop.f32.mrb[0].mxu0
      %v1425 = vadd.f32 0.0, %v1424
      %v1426 = vpop.f32.mrb[0].mxu0
      %1427 = vmatprep.mubr.bf16.mxu0 %v824
      %1428 = vmatmul.mubr.bf16.gmra.mrb[0].mxu0 %v823
      %v1429 = vpop.f32.mrb[0].mxu0
      %v1430 = vadd.f32 0.0, %v1429
      %v1431 = vpop.f32.mrb[0].mxu0
      %v1432 = vpop.f32.mrb[0].mxu0
      %v1433 = vadd.f32 0.0, %v1432
      %v1434 = vpop.f32.mrb[0].mxu0
      %1435 = vdwg.mxu0
      %1436 = vmatprep.subr.bf16.mxu0 0
      %1437 = vmatpush1.bf16.msra.mxu0 %v986
      %1438 = vmatprep.subr.bf16.mxu0 0
      %1439 = vmatpush1.bf16.msra.mxu0 %v987
      %1440 = vmatprep.subr.bf16.mxu0 0
      %1441 = vmatpush1.bf16.msra.mxu0 0
      %1442 = vmatprep.subr.bf16.mxu0 0
      %1443 = vmatpush1.bf16.msra.mxu0 0
      %1444 = vmatprep.subr.bf16.mxu0 0
      %1445 = vmatpush1.bf16.msra.mxu0 0
      %1446 = vmatprep.subr.bf16.mxu0 0
      %1447 = vmatpush1.bf16.msra.mxu0 0
      %1448 = vmatprep.subr.bf16.mxu0 0
      %1449 = vmatpush1.bf16.msra.mxu0 0
      %1450 = vmatprep.subr.bf16.mxu0 0
      %1451 = vmatpush1.bf16.msra.mxu0 0
      %1452 = vmatprep.subr.bf16.mxu0 0
      %1453 = vmatpush1.bf16.msra.mxu0 0
      %1454 = vmatprep.subr.bf16.mxu0 0
      %1455 = vmatpush1.bf16.msra.mxu0 0
      %1456 = vmatprep.subr.bf16.mxu0 0
      %1457 = vmatpush1.bf16.msra.mxu0 0
      %1458 = vmatprep.subr.bf16.mxu0 0
      %1459 = vmatpush1.bf16.msra.mxu0 0
      %1460 = vmatprep.subr.bf16.mxu0 0
      %1461 = vmatpush1.bf16.msra.mxu0 0
      %1462 = vmatprep.subr.bf16.mxu0 0
      %1463 = vmatpush1.bf16.msra.mxu0 0
      %1464 = vmatprep.subr.bf16.mxu0 0
      %1465 = vmatpush1.bf16.msra.mxu0 0
      %1466 = vmatprep.subr.bf16.mxu0 0
      %1467 = vmatpush1.bf16.msra.mxu0 0
      %1468 = vmatprep.mubr.bf16.mxu0 0
      %1469 = vmatmul.mubr.bf16.gmra.mrb[0].mxu0 %v1008
      %v1470 = vpop.f32.mrb[0].mxu0
      %v1471 = vadd.f32 %v1150, %v1470
      %v1472 = vpop.f32.mrb[0].mxu0
      %v1473 = vpop.f32.mrb[0].mxu0
      %v1474 = vadd.f32 %v1153, %v1473
      %v1475 = vpop.f32.mrb[0].mxu0
      %1476 = vmatprep.mubr.bf16.mxu0 0
      %1477 = vmatmul.mubr.bf16.gmra.mrb[0].mxu0 %v1011
      %v1478 = vpop.f32.mrb[0].mxu0
      %v1479 = vadd.f32 %v1158, %v1478
      %v1480 = vpop.f32.mrb[0].mxu0
      %v1481 = vpop.f32.mrb[0].mxu0
      %v1482 = vadd.f32 %v1161, %v1481
      %v1483 = vpop.f32.mrb[0].mxu0
      %1484 = vmatprep.mubr.bf16.mxu0 0
      %1485 = vmatmul.mubr.bf16.gmra.mrb[0].mxu0 %v1014
      %v1486 = vpop.f32.mrb[0].mxu0
      %v1487 = vadd.f32 %v1166, %v1486
      %v1488 = vpop.f32.mrb[0].mxu0
      %v1489 = vpop.f32.mrb[0].mxu0
      %v1490 = vadd.f32 %v1169, %v1489
      %v1491 = vpop.f32.mrb[0].mxu0
      %1492 = vmatprep.mubr.bf16.mxu0 0
      %1493 = vmatmul.mubr.bf16.gmra.mrb[0].mxu0 %v1017
      %v1494 = vpop.f32.mrb[0].mxu0
      %v1495 = vadd.f32 %v1174, %v1494
      %v1496 = vpop.f32.mrb[0].mxu0
      %v1497 = vpop.f32.mrb[0].mxu0
      %v1498 = vadd.f32 %v1177, %v1497
      %v1499 = vpop.f32.mrb[0].mxu0
      %1500 = vmatprep.mubr.bf16.mxu0 0
      %1501 = vmatmul.mubr.bf16.gmra.mrb[0].mxu0 %v1020
      %v1502 = vpop.f32.mrb[0].mxu0
      %v1503 = vadd.f32 %v1182, %v1502
      %v1504 = vpop.f32.mrb[0].mxu0
      %v1505 = vpop.f32.mrb[0].mxu0
      %v1506 = vadd.f32 %v1185, %v1505
      %v1507 = vpop.f32.mrb[0].mxu0
      %1508 = vmatprep.mubr.bf16.mxu0 0
      %1509 = vmatmul.mubr.bf16.gmra.mrb[0].mxu0 %v1023
      %v1510 = vpop.f32.mrb[0].mxu0
      %v1511 = vadd.f32 %v1190, %v1510
      %v1512 = vpop.f32.mrb[0].mxu0
      %v1513 = vpop.f32.mrb[0].mxu0
      %v1514 = vadd.f32 %v1193, %v1513
      %v1515 = vpop.f32.mrb[0].mxu0
      %1516 = vmatprep.mubr.bf16.mxu0 0
      %1517 = vmatmul.mubr.bf16.gmra.mrb[0].mxu0 %v1026
      %v1518 = vpop.f32.mrb[0].mxu0
      %v1519 = vadd.f32 %v1198, %v1518
      %v1520 = vpop.f32.mrb[0].mxu0
      %v1521 = vpop.f32.mrb[0].mxu0
      %v1522 = vadd.f32 %v1201, %v1521
      %v1523 = vpop.f32.mrb[0].mxu0
      %1524 = vmatprep.mubr.bf16.mxu0 0
      %1525 = vmatmul.mubr.bf16.gmra.mrb[0].mxu0 %v1029
      %v1526 = vpop.f32.mrb[0].mxu0
      %v1527 = vadd.f32 %v1206, %v1526
      %v1528 = vpop.f32.mrb[0].mxu0
      %v1529 = vpop.f32.mrb[0].mxu0
      %v1530 = vadd.f32 %v1209, %v1529
      %v1531 = vpop.f32.mrb[0].mxu0
      %1532 = vmatprep.mubr.bf16.mxu0 0
      %1533 = vmatmul.mubr.bf16.gmra.mrb[0].mxu0 %v1032
      %v1534 = vpop.f32.mrb[0].mxu0
      %v1535 = vadd.f32 %v1214, %v1534
      %v1536 = vpop.f32.mrb[0].mxu0
      %v1537 = vpop.f32.mrb[0].mxu0
      %v1538 = vadd.f32 %v1217, %v1537
      %v1539 = vpop.f32.mrb[0].mxu0
      %1540 = vmatprep.mubr.bf16.mxu0 0
      %1541 = vmatmul.mubr.bf16.gmra.mrb[0].mxu0 %v1035
      %v1542 = vpop.f32.mrb[0].mxu0
      %v1543 = vadd.f32 %v1222, %v1542
      %v1544 = vpop.f32.mrb[0].mxu0
      %v1545 = vpop.f32.mrb[0].mxu0
      %v1546 = vadd.f32 %v1225, %v1545
      %v1547 = vpop.f32.mrb[0].mxu0
      %1548 = vmatprep.mubr.bf16.mxu0 0
      %1549 = vmatmul.mubr.bf16.gmra.mrb[0].mxu0 %v1038
      %v1550 = vpop.f32.mrb[0].mxu0
      %v1551 = vadd.f32 %v1230, %v1550
      %v1552 = vpop.f32.mrb[0].mxu0
      %v1553 = vpop.f32.mrb[0].mxu0
      %v1554 = vadd.f32 %v1233, %v1553
      %v1555 = vpop.f32.mrb[0].mxu0
      %1556 = vmatprep.mubr.bf16.mxu0 0
      %1557 = vmatmul.mubr.bf16.gmra.mrb[0].mxu0 %v1041
      %v1558 = vpop.f32.mrb[0].mxu0
      %v1559 = vadd.f32 %v1238, %v1558
      %v1560 = vpop.f32.mrb[0].mxu0
      %v1561 = vpop.f32.mrb[0].mxu0
      %v1562 = vadd.f32 %v1241, %v1561
      %v1563 = vpop.f32.mrb[0].mxu0
      %1564 = vmatprep.mubr.bf16.mxu0 0
      %1565 = vmatmul.mubr.bf16.gmra.mrb[0].mxu0 %v1044
      %v1566 = vpop.f32.mrb[0].mxu0
      %v1567 = vadd.f32 %v1246, %v1566
      %v1568 = vpop.f32.mrb[0].mxu0
      %v1569 = vpop.f32.mrb[0].mxu0
      %v1570 = vadd.f32 %v1249, %v1569
      %v1571 = vpop.f32.mrb[0].mxu0
      %1572 = vmatprep.mubr.bf16.mxu0 0
      %1573 = vmatmul.mubr.bf16.gmra.mrb[0].mxu0 %v1047
      %v1574 = vpop.f32.mrb[0].mxu0
      %v1575 = vadd.f32 %v1254, %v1574
      %v1576 = vpop.f32.mrb[0].mxu0
      %v1577 = vpop.f32.mrb[0].mxu0
      %v1578 = vadd.f32 %v1257, %v1577
      %v1579 = vpop.f32.mrb[0].mxu0
      %1580 = vmatprep.mubr.bf16.mxu0 0
      %1581 = vmatmul.mubr.bf16.gmra.mrb[0].mxu0 %v1050
      %v1582 = vpop.f32.mrb[0].mxu0
      %v1583 = vadd.f32 %v1262, %v1582
      %v1584 = vpop.f32.mrb[0].mxu0
      %v1585 = vpop.f32.mrb[0].mxu0
      %v1586 = vadd.f32 %v1265, %v1585
      %v1587 = vpop.f32.mrb[0].mxu0
      %1588 = vmatprep.mubr.bf16.mxu0 0
      %1589 = vmatmul.mubr.bf16.gmra.mrb[0].mxu0 %v1053
      %v1590 = vpop.f32.mrb[0].mxu0
      %v1591 = vadd.f32 %v1270, %v1590
      %v1592 = vpop.f32.mrb[0].mxu0
      %v1593 = vpop.f32.mrb[0].mxu0
      %v1594 = vadd.f32 %v1273, %v1593
      %v1595 = vpop.f32.mrb[0].mxu0
      %1596 = vmatprep.mubr.bf16.mxu0 0
      %1597 = vmatmul.mubr.bf16.gmra.mrb[0].mxu0 %v1056
      %v1598 = vpop.f32.mrb[0].mxu0
      %v1599 = vadd.f32 %v1278, %v1598
      %v1600 = vpop.f32.mrb[0].mxu0
      %v1601 = vpop.f32.mrb[0].mxu0
      %v1602 = vadd.f32 %v1281, %v1601
      %v1603 = vpop.f32.mrb[0].mxu0
      %1604 = vmatprep.mubr.bf16.mxu0 0
      %1605 = vmatmul.mubr.bf16.gmra.mrb[0].mxu0 %v1059
      %v1606 = vpop.f32.mrb[0].mxu0
      %v1607 = vadd.f32 %v1286, %v1606
      %v1608 = vpop.f32.mrb[0].mxu0
      %v1609 = vpop.f32.mrb[0].mxu0
      %v1610 = vadd.f32 %v1289, %v1609
      %v1611 = vpop.f32.mrb[0].mxu0
      %1612 = vmatprep.mubr.bf16.mxu0 0
      %1613 = vmatmul.mubr.bf16.gmra.mrb[0].mxu0 %v1062
      %v1614 = vpop.f32.mrb[0].mxu0
      %v1615 = vadd.f32 %v1294, %v1614
      %v1616 = vpop.f32.mrb[0].mxu0
      %v1617 = vpop.f32.mrb[0].mxu0
      %v1618 = vadd.f32 %v1297, %v1617
      %v1619 = vpop.f32.mrb[0].mxu0
      %1620 = vmatprep.mubr.bf16.mxu0 0
      %1621 = vmatmul.mubr.bf16.gmra.mrb[0].mxu0 %v1065
      %v1622 = vpop.f32.mrb[0].mxu0
      %v1623 = vadd.f32 %v1302, %v1622
      %v1624 = vpop.f32.mrb[0].mxu0
      %v1625 = vpop.f32.mrb[0].mxu0
      %v1626 = vadd.f32 %v1305, %v1625
      %v1627 = vpop.f32.mrb[0].mxu0
      %1628 = vmatprep.mubr.bf16.mxu0 0
      %1629 = vmatmul.mubr.bf16.gmra.mrb[0].mxu0 %v1068
      %v1630 = vpop.f32.mrb[0].mxu0
      %v1631 = vadd.f32 %v1310, %v1630
      %v1632 = vpop.f32.mrb[0].mxu0
      %v1633 = vpop.f32.mrb[0].mxu0
      %v1634 = vadd.f32 %v1313, %v1633
      %v1635 = vpop.f32.mrb[0].mxu0
      %1636 = vmatprep.mubr.bf16.mxu0 0
      %1637 = vmatmul.mubr.bf16.gmra.mrb[0].mxu0 %v1071
      %v1638 = vpop.f32.mrb[0].mxu0
      %v1639 = vadd.f32 %v1318, %v1638
      %v1640 = vpop.f32.mrb[0].mxu0
      %v1641 = vpop.f32.mrb[0].mxu0
      %v1642 = vadd.f32 %v1321, %v1641
      %v1643 = vpop.f32.mrb[0].mxu0
      %1644 = vmatprep.mubr.bf16.mxu0 0
      %1645 = vmatmul.mubr.bf16.gmra.mrb[0].mxu0 %v1074
      %v1646 = vpop.f32.mrb[0].mxu0
      %v1647 = vadd.f32 %v1326, %v1646
      %v1648 = vpop.f32.mrb[0].mxu0
      %v1649 = vpop.f32.mrb[0].mxu0
      %v1650 = vadd.f32 %v1329, %v1649
      %v1651 = vpop.f32.mrb[0].mxu0
      %1652 = vmatprep.mubr.bf16.mxu0 0
      %1653 = vmatmul.mubr.bf16.gmra.mrb[0].mxu0 %v1077
      %v1654 = vpop.f32.mrb[0].mxu0
      %v1655 = vadd.f32 %v1334, %v1654
      %v1656 = vpop.f32.mrb[0].mxu0
      %v1657 = vpop.f32.mrb[0].mxu0
      %v1658 = vadd.f32 %v1337, %v1657
      %v1659 = vpop.f32.mrb[0].mxu0
      %1660 = vmatprep.mubr.bf16.mxu0 0
      %1661 = vmatmul.mubr.bf16.gmra.mrb[0].mxu0 %v1080
      %v1662 = vpop.f32.mrb[0].mxu0
      %v1663 = vadd.f32 %v1342, %v1662
      %v1664 = vpop.f32.mrb[0].mxu0
      %v1665 = vpop.f32.mrb[0].mxu0
      %v1666 = vadd.f32 %v1345, %v1665
      %v1667 = vpop.f32.mrb[0].mxu0
      %1668 = vmatprep.mubr.bf16.mxu0 0
      %1669 = vmatmul.mubr.bf16.gmra.mrb[0].mxu0 %v1083
      %v1670 = vpop.f32.mrb[0].mxu0
      %v1671 = vadd.f32 %v1350, %v1670
      %v1672 = vpop.f32.mrb[0].mxu0
      %v1673 = vpop.f32.mrb[0].mxu0
      %v1674 = vadd.f32 %v1353, %v1673
      %v1675 = vpop.f32.mrb[0].mxu0
      %1676 = vmatprep.mubr.bf16.mxu0 0
      %1677 = vmatmul.mubr.bf16.gmra.mrb[0].mxu0 %v1086
      %v1678 = vpop.f32.mrb[0].mxu0
      %v1679 = vadd.f32 %v1358, %v1678
      %v1680 = vpop.f32.mrb[0].mxu0
      %v1681 = vpop.f32.mrb[0].mxu0
      %v1682 = vadd.f32 %v1361, %v1681
      %v1683 = vpop.f32.mrb[0].mxu0
      %1684 = vmatprep.mubr.bf16.mxu0 0
      %1685 = vmatmul.mubr.bf16.gmra.mrb[0].mxu0 %v1089
      %v1686 = vpop.f32.mrb[0].mxu0
      %v1687 = vadd.f32 %v1366, %v1686
      %v1688 = vpop.f32.mrb[0].mxu0
      %v1689 = vpop.f32.mrb[0].mxu0
      %v1690 = vadd.f32 %v1369, %v1689
      %v1691 = vpop.f32.mrb[0].mxu0
      %1692 = vmatprep.mubr.bf16.mxu0 0
      %1693 = vmatmul.mubr.bf16.gmra.mrb[0].mxu0 %v1092
      %v1694 = vpop.f32.mrb[0].mxu0
      %v1695 = vadd.f32 %v1374, %v1694
      %v1696 = vpop.f32.mrb[0].mxu0
      %v1697 = vpop.f32.mrb[0].mxu0
      %v1698 = vadd.f32 %v1377, %v1697
      %v1699 = vpop.f32.mrb[0].mxu0
      %1700 = vmatprep.mubr.bf16.mxu0 0
      %1701 = vmatmul.mubr.bf16.gmra.mrb[0].mxu0 %v1095
      %v1702 = vpop.f32.mrb[0].mxu0
      %v1703 = vadd.f32 %v1382, %v1702
      %v1704 = vpop.f32.mrb[0].mxu0
      %v1705 = vpop.f32.mrb[0].mxu0
      %v1706 = vadd.f32 %v1385, %v1705
      %v1707 = vpop.f32.mrb[0].mxu0
      %1708 = vmatprep.mubr.bf16.mxu0 0
      %1709 = vmatmul.mubr.bf16.gmra.mrb[0].mxu0 %v1098
      %v1710 = vpop.f32.mrb[0].mxu0
      %v1711 = vadd.f32 %v1390, %v1710
      %v1712 = vpop.f32.mrb[0].mxu0
      %v1713 = vpop.f32.mrb[0].mxu0
      %v1714 = vadd.f32 %v1393, %v1713
      %v1715 = vpop.f32.mrb[0].mxu0
      %1716 = vmatprep.mubr.bf16.mxu0 0
      %1717 = vmatmul.mubr.bf16.gmra.mrb[0].mxu0 %v1101
      %v1718 = vpop.f32.mrb[0].mxu0
      %v1719 = vadd.f32 %v1398, %v1718
      %v1720 = vpop.f32.mrb[0].mxu0
      %v1721 = vpop.f32.mrb[0].mxu0
      %v1722 = vadd.f32 %v1401, %v1721
      %v1723 = vpop.f32.mrb[0].mxu0
      %1724 = vmatprep.mubr.bf16.mxu0 0
      %1725 = vmatmul.mubr.bf16.gmra.mrb[0].mxu0 %v1104
      %v1726 = vpop.f32.mrb[0].mxu0
      %v1727 = vadd.f32 %v1406, %v1726
      %v1728 = vpop.f32.mrb[0].mxu0
      %v1729 = vpop.f32.mrb[0].mxu0
      %v1730 = vadd.f32 %v1409, %v1729
      %v1731 = vpop.f32.mrb[0].mxu0
      %1732 = vmatprep.mubr.bf16.mxu0 0
      %1733 = vmatmul.mubr.bf16.gmra.mrb[0].mxu0 %v1107
      %v1734 = vpop.f32.mrb[0].mxu0
      %v1735 = vadd.f32 %v1414, %v1734
      %v1736 = vpop.f32.mrb[0].mxu0
      %v1737 = vpop.f32.mrb[0].mxu0
      %v1738 = vadd.f32 %v1417, %v1737
      %v1739 = vpop.f32.mrb[0].mxu0
      %1740 = vmatprep.mubr.bf16.mxu0 0
      %1741 = vmatmul.mubr.bf16.gmra.mrb[0].mxu0 %v1110
      %v1742 = vpop.f32.mrb[0].mxu0
      %v1743 = vadd.f32 %v1422, %v1742
      %v1744 = vpop.f32.mrb[0].mxu0
      %v1745 = vpop.f32.mrb[0].mxu0
      %v1746 = vadd.f32 %v1425, %v1745
      %v1747 = vpop.f32.mrb[0].mxu0
      %1748 = vmatprep.mubr.bf16.mxu0 0
      %1749 = vmatmul.mubr.bf16.gmra.mrb[0].mxu0 %v1113
      %v1750 = vpop.f32.mrb[0].mxu0
      %v1751 = vadd.f32 %v1430, %v1750
      %v1752 = vpop.f32.mrb[0].mxu0
      %v1753 = vpop.f32.mrb[0].mxu0
      %v1754 = vadd.f32 %v1433, %v1753
      %v1755 = vpop.f32.mrb[0].mxu0
      %1756 = vdwg.mxu0
      %1757 = vst [vmem:[#allocation2] sm:$0xff] %v1471
      %1758 = vst [vmem:[#allocation2 + $0x8] sm:$0xff] %v1474
      %1759 = vst [vmem:[#allocation2 + $0x10] sm:$0xff] %v1479
      %1760 = vst [vmem:[#allocation2 + $0x18] sm:$0xff] %v1482
      %1761 = vst [vmem:[#allocation2 + $0x20] sm:$0xff] %v1487
      %1762 = vst [vmem:[#allocation2 + $0x28] sm:$0xff] %v1490
      %1763 = vst [vmem:[#allocation2 + $0x30] sm:$0xff] %v1495
      %1764 = vst [vmem:[#allocation2 + $0x38] sm:$0xff] %v1498
      %1765 = vst [vmem:[#allocation2 + $0x40] sm:$0xff] %v1503
      %1766 = vst [vmem:[#allocation2 + $0x48] sm:$0xff] %v1506
      %1767 = vst [vmem:[#allocation2 + $0x50] sm:$0xff] %v1511
      %1768 = vst [vmem:[#allocation2 + $0x58] sm:$0xff] %v1514
      %1769 = vst [vmem:[#allocation2 + $0x60] sm:$0xff] %v1519
      %1770 = vst [vmem:[#allocation2 + $0x68] sm:$0xff] %v1522
      %1771 = vst [vmem:[#allocation2 + $0x70] sm:$0xff] %v1527
      %1772 = vst [vmem:[#allocation2 + $0x78] sm:$0xff] %v1530
      %1773 = vst [vmem:[#allocation2 + $0x80] sm:$0xff] %v1535
      %1774 = vst [vmem:[#allocation2 + $0x88] sm:$0xff] %v1538
      %1775 = vst [vmem:[#allocation2 + $0x90] sm:$0xff] %v1543
      %1776 = vst [vmem:[#allocation2 + $0x98] sm:$0xff] %v1546
      %1777 = vst [vmem:[#allocation2 + $0xa0] sm:$0xff] %v1551
      %1778 = vst [vmem:[#allocation2 + $0xa8] sm:$0xff] %v1554
      %1779 = vst [vmem:[#allocation2 + $0xb0] sm:$0xff] %v1559
      %1780 = vst [vmem:[#allocation2 + $0xb8] sm:$0xff] %v1562
      %1781 = vst [vmem:[#allocation2 + $0xc0] sm:$0xff] %v1567
      %1782 = vst [vmem:[#allocation2 + $0xc8] sm:$0xff] %v1570
      %1783 = vst [vmem:[#allocation2 + $0xd0] sm:$0xff] %v1575
      %1784 = vst [vmem:[#allocation2 + $0xd8] sm:$0xff] %v1578
      %1785 = vst [vmem:[#allocation2 + $0xe0] sm:$0xff] %v1583
      %1786 = vst [vmem:[#allocation2 + $0xe8] sm:$0xff] %v1586
      %1787 = vst [vmem:[#allocation2 + $0xf0] sm:$0xff] %v1591
      %1788 = vst [vmem:[#allocation2 + $0xf8] sm:$0xff] %v1594
      %1789 = vst [vmem:[#allocation2 + $0x100] sm:$0xff] %v1599
      %1790 = vst [vmem:[#allocation2 + $0x108] sm:$0xff] %v1602
      %1791 = vst [vmem:[#allocation2 + $0x110] sm:$0xff] %v1607
      %1792 = vst [vmem:[#allocation2 + $0x118] sm:$0xff] %v1610
      %1793 = vst [vmem:[#allocation2 + $0x120] sm:$0xff] %v1615
      %1794 = vst [vmem:[#allocation2 + $0x128] sm:$0xff] %v1618
      %1795 = vst [vmem:[#allocation2 + $0x130] sm:$0xff] %v1623
      %1796 = vst [vmem:[#allocation2 + $0x138] sm:$0xff] %v1626
      %1797 = vst [vmem:[#allocation2 + $0x140] sm:$0xff] %v1631
      %1798 = vst [vmem:[#allocation2 + $0x148] sm:$0xff] %v1634
      %1799 = vst [vmem:[#allocation2 + $0x150] sm:$0xff] %v1639
      %1800 = vst [vmem:[#allocation2 + $0x158] sm:$0xff] %v1642
      %1801 = vst [vmem:[#allocation2 + $0x160] sm:$0xff] %v1647
      %1802 = vst [vmem:[#allocation2 + $0x168] sm:$0xff] %v1650
      %1803 = vst [vmem:[#allocation2 + $0x170] sm:$0xff] %v1655
      %1804 = vst [vmem:[#allocation2 + $0x178] sm:$0xff] %v1658
      %1805 = vst [vmem:[#allocation2 + $0x180] sm:$0xff] %v1663
      %1806 = vst [vmem:[#allocation2 + $0x188] sm:$0xff] %v1666
      %1807 = vst [vmem:[#allocation2 + $0x190] sm:$0xff] %v1671
      %1808 = vst [vmem:[#allocation2 + $0x198] sm:$0xff] %v1674
      %1809 = vst [vmem:[#allocation2 + $0x1a0] sm:$0xff] %v1679
      %1810 = vst [vmem:[#allocation2 + $0x1a8] sm:$0xff] %v1682
      %1811 = vst [vmem:[#allocation2 + $0x1b0] sm:$0xff] %v1687
      %1812 = vst [vmem:[#allocation2 + $0x1b8] sm:$0xff] %v1690
      %1813 = vst [vmem:[#allocation2 + $0x1c0] sm:$0xff] %v1695
      %1814 = vst [vmem:[#allocation2 + $0x1c8] sm:$0xff] %v1698
      %1815 = vst [vmem:[#allocation2 + $0x1d0] sm:$0xff] %v1703
      %1816 = vst [vmem:[#allocation2 + $0x1d8] sm:$0xff] %v1706
      %1817 = vst [vmem:[#allocation2 + $0x1e0] sm:$0xff] %v1711
      %1818 = vst [vmem:[#allocation2 + $0x1e8] sm:$0xff] %v1714
      %1819 = vst [vmem:[#allocation2 + $0x1f0] sm:$0xff] %v1719
      %1820 = vst [vmem:[#allocation2 + $0x1f8] sm:$0xff] %v1722
      %1821 = vst [vmem:[#allocation2 + $0x200] sm:$0xff] %v1727
      %1822 = vst [vmem:[#allocation2 + $0x208] sm:$0xff] %v1730
      %1823 = vst [vmem:[#allocation2 + $0x210] sm:$0xff] %v1735
      %1824 = vst [vmem:[#allocation2 + $0x218] sm:$0xff] %v1738
      %1825 = vst [vmem:[#allocation2 + $0x220] sm:$0xff] %v1743
      %1826 = vst [vmem:[#allocation2 + $0x228] sm:$0xff] %v1746
      %1827 = vst [vmem:[#allocation2 + $0x230] sm:$0xff] %v1751
      %1828 = vst [vmem:[#allocation2 + $0x238] sm:$0xff] %v1754
      %v1829 = vld [vmem:[%s2] sm:$0x1]
      %v1830 = vld [vmem:[#allocation2] ss:$2 sm:$0xff]
      %s1831 = scalar_lea.vmem [#allocation2], 16
      %v1832 = vld [vmem:[%s1831] ss:$2 sm:$0xf]
      %s1833 = scalar_lea.vmem [#allocation2], 1
      %v1834 = vld [vmem:[%s1833] ss:$2 sm:$0xff]
      %s1835 = scalar_lea.vmem [#allocation2], 17
      %v1836 = vld [vmem:[%s1835] ss:$2 sm:$0xf]
      %s1837 = scalar_lea.vmem [#allocation2], 24
      %v1838 = vld [vmem:[%s1837] ss:$2 sm:$0xff]
      %s1839 = scalar_lea.vmem [#allocation2], 40
      %v1840 = vld [vmem:[%s1839] ss:$2 sm:$0xf]
      %s1841 = scalar_lea.vmem [#allocation2], 25
      %v1842 = vld [vmem:[%s1841] ss:$2 sm:$0xff]
      %s1843 = scalar_lea.vmem [#allocation2], 41
      %v1844 = vld [vmem:[%s1843] ss:$2 sm:$0xf]
      %v1845 = vmax.f32 %v1830, %v1834
      %v1846 = vmax.f32 %v1832, %v1836
      %v1847 = vmax.f32 %v1838, %v1842
      %v1848 = vmax.f32 %v1840, %v1844
      %v1849 = vmax.f32 %v1845, %v1847
      %v1850 = vmax.f32 %v1846, %v1848
      %v1852 = vlaneseq
      %v1853 = vshrl.u32 %v1852, 7
      %v1854 = vsub.s32 0, %v1853
      %v1855 = vrot.slane %v1829, %v1854
      %v1857 = vadd.f32 %v1849, %v1855
      %v1858 = vadd.f32 %v1850, %v1855
      %v1859 = vmax.f32 %v1857, 0.0
      %v1860 = vmax.f32 %v1858, 0.0
      %v1861 = vpack.c.bf16 %v1860, %v1859
      %v1863 = vunpack.c.l.b16 %v1861
      %v1864 = vunpack.c.h.b16 %v1861
      %v1865 = vpack.c.b16 %v1863, %v1863
      %v1866 = vpack.c.b16 %v1864, %v1864
      %vm1869 = vcmask 519168
      %1870 = vst.msk [vmem:[%s175] sm:$0xf] %vm1869, %v1865
      %vm1871 = vcmask 517120
      %1872 = vst.msk [vmem:[%s175 + $0x4] sm:$0x3] %vm1871, %v1866
      %s1873 = scalar_lea.vmem [#allocation2], 48
      %v1874 = vld [vmem:[%s1873] ss:$2 sm:$0xff]
      %s1875 = scalar_lea.vmem [#allocation2], 64
      %v1876 = vld [vmem:[%s1875] ss:$2 sm:$0xf]
      %s1877 = scalar_lea.vmem [#allocation2], 49
      %v1878 = vld [vmem:[%s1877] ss:$2 sm:$0xff]
      %s1879 = scalar_lea.vmem [#allocation2], 65
      %v1880 = vld [vmem:[%s1879] ss:$2 sm:$0xf]
      %s1881 = scalar_lea.vmem [#allocation2], 72
      %v1882 = vld [vmem:[%s1881] ss:$2 sm:$0xff]
      %s1883 = scalar_lea.vmem [#allocation2], 88
      %v1884 = vld [vmem:[%s1883] ss:$2 sm:$0xf]
      %s1885 = scalar_lea.vmem [#allocation2], 73
      %v1886 = vld [vmem:[%s1885] ss:$2 sm:$0xff]
      %s1887 = scalar_lea.vmem [#allocation2], 89
      %v1888 = vld [vmem:[%s1887] ss:$2 sm:$0xf]
      %v1889 = vmax.f32 %v1874, %v1878
      %v1890 = vmax.f32 %v1876, %v1880
      %v1891 = vmax.f32 %v1882, %v1886
      %v1892 = vmax.f32 %v1884, %v1888
      %v1893 = vmax.f32 %v1889, %v1891
      %v1894 = vmax.f32 %v1890, %v1892
      %v1895 = vadd.f32 %v1893, %v1855
      %v1896 = vadd.f32 %v1894, %v1855
      %v1897 = vmax.f32 %v1895, 0.0
      %v1898 = vmax.f32 %v1896, 0.0
      %v1899 = vpack.c.bf16 %v1898, %v1897
      %v1901 = vunpack.c.l.b16 %v1899
      %v1902 = vunpack.c.h.b16 %v1899
      %v1903 = vpack.c.b16 %v1901, %v1901
      %v1904 = vpack.c.b16 %v1902, %v1902
      %vm1905 = vcmask 1041408
      %vm1906 = vcmask 1045508
      %vm1907 = vmor %vm1905, %vm1906
      %v1908 = vrot.slane %v1903, 6
      %v1909 = vrot.slane %v1908, 4
      %v1910 = vrot.slane %v1904, 6
      %v1911 = vsel %vm1907, %v1909, %v1910
      %vm1914 = vcmask 519170
      %1915 = vst.msk [vmem:[%s175 + $0x4] sm:$0xc] %vm1914, %v1908
      %1916 = vst.msk [vmem:[%s175 + $0x8] sm:$0xf] %vm1869, %v1911
      %s1917 = scalar_lea.vmem [#allocation2], 96
      %v1918 = vld [vmem:[%s1917] ss:$2 sm:$0xff]
      %s1919 = scalar_lea.vmem [#allocation2], 112
      %v1920 = vld [vmem:[%s1919] ss:$2 sm:$0xf]
      %s1921 = scalar_lea.vmem [#allocation2], 97
      %v1922 = vld [vmem:[%s1921] ss:$2 sm:$0xff]
      %s1923 = scalar_lea.vmem [#allocation2], 113
      %v1924 = vld [vmem:[%s1923] ss:$2 sm:$0xf]
      %s1925 = scalar_lea.vmem [#allocation2], 120
      %v1926 = vld [vmem:[%s1925] ss:$2 sm:$0xff]
      %s1927 = scalar_lea.vmem [#allocation2], 136
      %v1928 = vld [vmem:[%s1927] ss:$2 sm:$0xf]
      %s1929 = scalar_lea.vmem [#allocation2], 121
      %v1930 = vld [vmem:[%s1929] ss:$2 sm:$0xff]
      %s1931 = scalar_lea.vmem [#allocation2], 137
      %v1932 = vld [vmem:[%s1931] ss:$2 sm:$0xf]
      %v1933 = vmax.f32 %v1918, %v1922
      %v1934 = vmax.f32 %v1920, %v1924
      %v1935 = vmax.f32 %v1926, %v1930
      %v1936 = vmax.f32 %v1928, %v1932
      %v1937 = vmax.f32 %v1933, %v1935
      %v1938 = vmax.f32 %v1934, %v1936
      %v1939 = vadd.f32 %v1937, %v1855
      %v1940 = vadd.f32 %v1938, %v1855
      %v1941 = vmax.f32 %v1939, 0.0
      %v1942 = vmax.f32 %v1940, 0.0
      %v1943 = vpack.c.bf16 %v1942, %v1941
      %v1945 = vunpack.c.l.b16 %v1943
      %v1946 = vunpack.c.h.b16 %v1943
      %v1947 = vpack.c.b16 %v1945, %v1945
      %v1948 = vpack.c.b16 %v1946, %v1946
      %1951 = vst.msk [vmem:[%s175 + $0xc] sm:$0xf] %vm1869, %v1947
      %1952 = vst.msk [vmem:[%s175 + $0x10] sm:$0x3] %vm1871, %v1948
      %s1953 = scalar_lea.vmem [#allocation2], 144
      %v1954 = vld [vmem:[%s1953] ss:$2 sm:$0xff]
      %s1955 = scalar_lea.vmem [#allocation2], 160
      %v1956 = vld [vmem:[%s1955] ss:$2 sm:$0xf]
      %s1957 = scalar_lea.vmem [#allocation2], 145
      %v1958 = vld [vmem:[%s1957] ss:$2 sm:$0xff]
      %s1959 = scalar_lea.vmem [#allocation2], 161
      %v1960 = vld [vmem:[%s1959] ss:$2 sm:$0xf]
      %s1961 = scalar_lea.vmem [#allocation2], 168
      %v1962 = vld [vmem:[%s1961] ss:$2 sm:$0xff]
      %s1963 = scalar_lea.vmem [#allocation2], 184
      %v1964 = vld [vmem:[%s1963] ss:$2 sm:$0xf]
      %s1965 = scalar_lea.vmem [#allocation2], 169
      %v1966 = vld [vmem:[%s1965] ss:$2 sm:$0xff]
      %s1967 = scalar_lea.vmem [#allocation2], 185
      %v1968 = vld [vmem:[%s1967] ss:$2 sm:$0xf]
      %v1969 = vmax.f32 %v1954, %v1958
      %v1970 = vmax.f32 %v1956, %v1960
      %v1971 = vmax.f32 %v1962, %v1966
      %v1972 = vmax.f32 %v1964, %v1968
      %v1973 = vmax.f32 %v1969, %v1971
      %v1974 = vmax.f32 %v1970, %v1972
      %v1975 = vadd.f32 %v1973, %v1855
      %v1976 = vadd.f32 %v1974, %v1855
      %v1977 = vmax.f32 %v1975, 0.0
      %v1978 = vmax.f32 %v1976, 0.0
      %v1979 = vpack.c.bf16 %v1978, %v1977
      %v1981 = vunpack.c.l.b16 %v1979
      %v1982 = vunpack.c.h.b16 %v1979
      %v1983 = vpack.c.b16 %v1981, %v1981
      %v1984 = vpack.c.b16 %v1982, %v1982
      %v1985 = vrot.slane %v1983, 6
      %v1986 = vrot.slane %v1985, 4
      %v1987 = vrot.slane %v1984, 6
      %v1988 = vsel %vm1907, %v1986, %v1987
      %1991 = vst.msk [vmem:[%s175 + $0x10] sm:$0xc] %vm1914, %v1985
      %1992 = vst.msk [vmem:[%s175 + $0x14] sm:$0xf] %vm1869, %v1988
      %s1993 = scalar_lea.vmem [#allocation2], 192
      %v1994 = vld [vmem:[%s1993] ss:$2 sm:$0xff]
      %s1995 = scalar_lea.vmem [#allocation2], 208
      %v1996 = vld [vmem:[%s1995] ss:$2 sm:$0xf]
      %s1997 = scalar_lea.vmem [#allocation2], 193
      %v1998 = vld [vmem:[%s1997] ss:$2 sm:$0xff]
      %s1999 = scalar_lea.vmem [#allocation2], 209
      %v2000 = vld [vmem:[%s1999] ss:$2 sm:$0xf]
      %s2001 = scalar_lea.vmem [#allocation2], 216
      %v2002 = vld [vmem:[%s2001] ss:$2 sm:$0xff]
      %s2003 = scalar_lea.vmem [#allocation2], 232
      %v2004 = vld [vmem:[%s2003] ss:$2 sm:$0xf]
      %s2005 = scalar_lea.vmem [#allocation2], 217
      %v2006 = vld [vmem:[%s2005] ss:$2 sm:$0xff]
      %s2007 = scalar_lea.vmem [#allocation2], 233
      %v2008 = vld [vmem:[%s2007] ss:$2 sm:$0xf]
      %v2009 = vmax.f32 %v1994, %v1998
      %v2010 = vmax.f32 %v1996, %v2000
      %v2011 = vmax.f32 %v2002, %v2006
      %v2012 = vmax.f32 %v2004, %v2008
      %v2013 = vmax.f32 %v2009, %v2011
      %v2014 = vmax.f32 %v2010, %v2012
      %v2015 = vadd.f32 %v2013, %v1855
      %v2016 = vadd.f32 %v2014, %v1855
      %v2017 = vmax.f32 %v2015, 0.0
      %v2018 = vmax.f32 %v2016, 0.0
      %v2019 = vpack.c.bf16 %v2018, %v2017
      %v2021 = vunpack.c.l.b16 %v2019
      %v2022 = vunpack.c.h.b16 %v2019
      %v2023 = vpack.c.b16 %v2021, %v2021
      %v2024 = vpack.c.b16 %v2022, %v2022
      %2027 = vst.msk [vmem:[%s175 + $0x18] sm:$0xf] %vm1869, %v2023
      %2028 = vst.msk [vmem:[%s175 + $0x1c] sm:$0x3] %vm1871, %v2024
      %s2029 = scalar_lea.vmem [#allocation2], 240
      %v2030 = vld [vmem:[%s2029] ss:$2 sm:$0xff]
      %s2031 = scalar_lea.vmem [#allocation2], 256
      %v2032 = vld [vmem:[%s2031] ss:$2 sm:$0xf]
      %s2033 = scalar_lea.vmem [#allocation2], 241
      %v2034 = vld [vmem:[%s2033] ss:$2 sm:$0xff]
      %s2035 = scalar_lea.vmem [#allocation2], 257
      %v2036 = vld [vmem:[%s2035] ss:$2 sm:$0xf]
      %s2037 = scalar_lea.vmem [#allocation2], 264
      %v2038 = vld [vmem:[%s2037] ss:$2 sm:$0xff]
      %s2039 = scalar_lea.vmem [#allocation2], 280
      %v2040 = vld [vmem:[%s2039] ss:$2 sm:$0xf]
      %s2041 = scalar_lea.vmem [#allocation2], 265
      %v2042 = vld [vmem:[%s2041] ss:$2 sm:$0xff]
      %s2043 = scalar_lea.vmem [#allocation2], 281
      %v2044 = vld [vmem:[%s2043] ss:$2 sm:$0xf]
      %v2045 = vmax.f32 %v2030, %v2034
      %v2046 = vmax.f32 %v2032, %v2036
      %v2047 = vmax.f32 %v2038, %v2042
      %v2048 = vmax.f32 %v2040, %v2044
      %v2049 = vmax.f32 %v2045, %v2047
      %v2050 = vmax.f32 %v2046, %v2048
      %v2051 = vadd.f32 %v2049, %v1855
      %v2052 = vadd.f32 %v2050, %v1855
      %v2053 = vmax.f32 %v2051, 0.0
      %v2054 = vmax.f32 %v2052, 0.0
      %v2055 = vpack.c.bf16 %v2054, %v2053
      %v2057 = vunpack.c.l.b16 %v2055
      %v2058 = vunpack.c.h.b16 %v2055
      %v2059 = vpack.c.b16 %v2057, %v2057
      %v2060 = vpack.c.b16 %v2058, %v2058
      %v2061 = vrot.slane %v2059, 6
      %v2062 = vrot.slane %v2061, 4
      %v2063 = vrot.slane %v2060, 6
      %v2064 = vsel %vm1907, %v2062, %v2063
      %2067 = vst.msk [vmem:[%s175 + $0x1c] sm:$0xc] %vm1914, %v2061
      %2068 = vst.msk [vmem:[%s175 + $0x20] sm:$0xf] %vm1869, %v2064
      %s2069 = scalar_lea.vmem [#allocation2], 288
      %v2070 = vld [vmem:[%s2069] ss:$2 sm:$0xff]
      %s2071 = scalar_lea.vmem [#allocation2], 304
      %v2072 = vld [vmem:[%s2071] ss:$2 sm:$0xf]
      %s2073 = scalar_lea.vmem [#allocation2], 289
      %v2074 = vld [vmem:[%s2073] ss:$2 sm:$0xff]
      %s2075 = scalar_lea.vmem [#allocation2], 305
      %v2076 = vld [vmem:[%s2075] ss:$2 sm:$0xf]
      %s2077 = scalar_lea.vmem [#allocation2], 312
      %v2078 = vld [vmem:[%s2077] ss:$2 sm:$0xff]
      %s2079 = scalar_lea.vmem [#allocation2], 328
      %v2080 = vld [vmem:[%s2079] ss:$2 sm:$0xf]
      %s2081 = scalar_lea.vmem [#allocation2], 313
      %v2082 = vld [vmem:[%s2081] ss:$2 sm:$0xff]
      %s2083 = scalar_lea.vmem [#allocation2], 329
      %v2084 = vld [vmem:[%s2083] ss:$2 sm:$0xf]
      %v2085 = vmax.f32 %v2070, %v2074
      %v2086 = vmax.f32 %v2072, %v2076
      %v2087 = vmax.f32 %v2078, %v2082
      %v2088 = vmax.f32 %v2080, %v2084
      %v2089 = vmax.f32 %v2085, %v2087
      %v2090 = vmax.f32 %v2086, %v2088
      %v2091 = vadd.f32 %v2089, %v1855
      %v2092 = vadd.f32 %v2090, %v1855
      %v2093 = vmax.f32 %v2091, 0.0
      %v2094 = vmax.f32 %v2092, 0.0
      %v2095 = vpack.c.bf16 %v2094, %v2093
      %v2097 = vunpack.c.l.b16 %v2095
      %v2098 = vunpack.c.h.b16 %v2095
      %v2099 = vpack.c.b16 %v2097, %v2097
      %v2100 = vpack.c.b16 %v2098, %v2098
      %2103 = vst.msk [vmem:[%s175 + $0x24] sm:$0xf] %vm1869, %v2099
      %2104 = vst.msk [vmem:[%s175 + $0x28] sm:$0x3] %vm1871, %v2100
      %s2105 = scalar_lea.vmem [#allocation2], 336
      %v2106 = vld [vmem:[%s2105] ss:$2 sm:$0xff]
      %s2107 = scalar_lea.vmem [#allocation2], 352
      %v2108 = vld [vmem:[%s2107] ss:$2 sm:$0xf]
      %s2109 = scalar_lea.vmem [#allocation2], 337
      %v2110 = vld [vmem:[%s2109] ss:$2 sm:$0xff]
      %s2111 = scalar_lea.vmem [#allocation2], 353
      %v2112 = vld [vmem:[%s2111] ss:$2 sm:$0xf]
      %s2113 = scalar_lea.vmem [#allocation2], 360
      %v2114 = vld [vmem:[%s2113] ss:$2 sm:$0xff]
      %s2115 = scalar_lea.vmem [#allocation2], 376
      %v2116 = vld [vmem:[%s2115] ss:$2 sm:$0xf]
      %s2117 = scalar_lea.vmem [#allocation2], 361
      %v2118 = vld [vmem:[%s2117] ss:$2 sm:$0xff]
      %s2119 = scalar_lea.vmem [#allocation2], 377
      %v2120 = vld [vmem:[%s2119] ss:$2 sm:$0xf]
      %v2121 = vmax.f32 %v2106, %v2110
      %v2122 = vmax.f32 %v2108, %v2112
      %v2123 = vmax.f32 %v2114, %v2118
      %v2124 = vmax.f32 %v2116, %v2120
      %v2125 = vmax.f32 %v2121, %v2123
      %v2126 = vmax.f32 %v2122, %v2124
      %v2127 = vadd.f32 %v2125, %v1855
      %v2128 = vadd.f32 %v2126, %v1855
      %v2129 = vmax.f32 %v2127, 0.0
      %v2130 = vmax.f32 %v2128, 0.0
      %v2131 = vpack.c.bf16 %v2130, %v2129
      %v2133 = vunpack.c.l.b16 %v2131
      %v2134 = vunpack.c.h.b16 %v2131
      %v2135 = vpack.c.b16 %v2133, %v2133
      %v2136 = vpack.c.b16 %v2134, %v2134
      %v2137 = vrot.slane %v2135, 6
      %v2138 = vrot.slane %v2137, 4
      %v2139 = vrot.slane %v2136, 6
      %v2140 = vsel %vm1907, %v2138, %v2139
      %2143 = vst.msk [vmem:[%s175 + $0x28] sm:$0xc] %vm1914, %v2137
      %2144 = vst.msk [vmem:[%s175 + $0x2c] sm:$0xf] %vm1869, %v2140
      %s2145 = scalar_lea.vmem [#allocation2], 384
      %v2146 = vld [vmem:[%s2145] ss:$2 sm:$0xff]
      %s2147 = scalar_lea.vmem [#allocation2], 400
      %v2148 = vld [vmem:[%s2147] ss:$2 sm:$0xf]
      %s2149 = scalar_lea.vmem [#allocation2], 385
      %v2150 = vld [vmem:[%s2149] ss:$2 sm:$0xff]
      %s2151 = scalar_lea.vmem [#allocation2], 401
      %v2152 = vld [vmem:[%s2151] ss:$2 sm:$0xf]
      %s2153 = scalar_lea.vmem [#allocation2], 408
      %v2154 = vld [vmem:[%s2153] ss:$2 sm:$0xff]
      %s2155 = scalar_lea.vmem [#allocation2], 424
      %v2156 = vld [vmem:[%s2155] ss:$2 sm:$0xf]
      %s2157 = scalar_lea.vmem [#allocation2], 409
      %v2158 = vld [vmem:[%s2157] ss:$2 sm:$0xff]
      %s2159 = scalar_lea.vmem [#allocation2], 425
      %v2160 = vld [vmem:[%s2159] ss:$2 sm:$0xf]
      %v2161 = vmax.f32 %v2146, %v2150
      %v2162 = vmax.f32 %v2148, %v2152
      %v2163 = vmax.f32 %v2154, %v2158
      %v2164 = vmax.f32 %v2156, %v2160
      %v2165 = vmax.f32 %v2161, %v2163
      %v2166 = vmax.f32 %v2162, %v2164
      %v2167 = vadd.f32 %v2165, %v1855
      %v2168 = vadd.f32 %v2166, %v1855
      %v2169 = vmax.f32 %v2167, 0.0
      %v2170 = vmax.f32 %v2168, 0.0
      %v2171 = vpack.c.bf16 %v2170, %v2169
      %v2173 = vunpack.c.l.b16 %v2171
      %v2174 = vunpack.c.h.b16 %v2171
      %v2175 = vpack.c.b16 %v2173, %v2173
      %v2176 = vpack.c.b16 %v2174, %v2174
      %2179 = vst.msk [vmem:[%s175 + $0x30] sm:$0xf] %vm1869, %v2175
      %2180 = vst.msk [vmem:[%s175 + $0x34] sm:$0x3] %vm1871, %v2176
      %s2181 = scalar_lea.vmem [#allocation2], 432
      %v2182 = vld [vmem:[%s2181] ss:$2 sm:$0xff]
      %s2183 = scalar_lea.vmem [#allocation2], 448
      %v2184 = vld [vmem:[%s2183] ss:$2 sm:$0xf]
      %s2185 = scalar_lea.vmem [#allocation2], 433
      %v2186 = vld [vmem:[%s2185] ss:$2 sm:$0xff]
      %s2187 = scalar_lea.vmem [#allocation2], 449
      %v2188 = vld [vmem:[%s2187] ss:$2 sm:$0xf]
      %s2189 = scalar_lea.vmem [#allocation2], 456
      %v2190 = vld [vmem:[%s2189] ss:$2 sm:$0xff]
      %s2191 = scalar_lea.vmem [#allocation2], 472
      %v2192 = vld [vmem:[%s2191] ss:$2 sm:$0xf]
      %s2193 = scalar_lea.vmem [#allocation2], 457
      %v2194 = vld [vmem:[%s2193] ss:$2 sm:$0xff]
      %s2195 = scalar_lea.vmem [#allocation2], 473
      %v2196 = vld [vmem:[%s2195] ss:$2 sm:$0xf]
      %v2197 = vmax.f32 %v2182, %v2186
      %v2198 = vmax.f32 %v2184, %v2188
      %v2199 = vmax.f32 %v2190, %v2194
      %v2200 = vmax.f32 %v2192, %v2196
      %v2201 = vmax.f32 %v2197, %v2199
      %v2202 = vmax.f32 %v2198, %v2200
      %v2203 = vadd.f32 %v2201, %v1855
      %v2204 = vadd.f32 %v2202, %v1855
      %v2205 = vmax.f32 %v2203, 0.0
      %v2206 = vmax.f32 %v2204, 0.0
      %v2207 = vpack.c.bf16 %v2206, %v2205
      %v2209 = vunpack.c.l.b16 %v2207
      %v2210 = vunpack.c.h.b16 %v2207
      %v2211 = vpack.c.b16 %v2209, %v2209
      %v2212 = vpack.c.b16 %v2210, %v2210
      %v2213 = vrot.slane %v2211, 6
      %v2214 = vrot.slane %v2213, 4
      %v2215 = vrot.slane %v2212, 6
      %v2216 = vsel %vm1907, %v2214, %v2215
      %2219 = vst.msk [vmem:[%s175 + $0x34] sm:$0xc] %vm1914, %v2213
      %2220 = vst.msk [vmem:[%s175 + $0x38] sm:$0xf] %vm1869, %v2216
      %s2221 = scalar_lea.vmem [#allocation2], 480
      %v2222 = vld [vmem:[%s2221] ss:$2 sm:$0xff]
      %s2223 = scalar_lea.vmem [#allocation2], 496
      %v2224 = vld [vmem:[%s2223] ss:$2 sm:$0xf]
      %s2225 = scalar_lea.vmem [#allocation2], 481
      %v2226 = vld [vmem:[%s2225] ss:$2 sm:$0xff]
      %s2227 = scalar_lea.vmem [#allocation2], 497
      %v2228 = vld [vmem:[%s2227] ss:$2 sm:$0xf]
      %s2229 = scalar_lea.vmem [#allocation2], 504
      %v2230 = vld [vmem:[%s2229] ss:$2 sm:$0xff]
      %s2231 = scalar_lea.vmem [#allocation2], 520
      %v2232 = vld [vmem:[%s2231] ss:$2 sm:$0xf]
      %s2233 = scalar_lea.vmem [#allocation2], 505
      %v2234 = vld [vmem:[%s2233] ss:$2 sm:$0xff]
      %s2235 = scalar_lea.vmem [#allocation2], 521
      %v2236 = vld [vmem:[%s2235] ss:$2 sm:$0xf]
      %v2237 = vmax.f32 %v2222, %v2226
      %v2238 = vmax.f32 %v2224, %v2228
      %v2239 = vmax.f32 %v2230, %v2234
      %v2240 = vmax.f32 %v2232, %v2236
      %v2241 = vmax.f32 %v2237, %v2239
      %v2242 = vmax.f32 %v2238, %v2240
      %v2243 = vadd.f32 %v2241, %v1855
      %v2244 = vadd.f32 %v2242, %v1855
      %v2245 = vmax.f32 %v2243, 0.0
      %v2246 = vmax.f32 %v2244, 0.0
      %v2247 = vpack.c.bf16 %v2246, %v2245
      %v2249 = vunpack.c.l.b16 %v2247
      %v2250 = vunpack.c.h.b16 %v2247
      %v2251 = vpack.c.b16 %v2249, %v2249
      %v2252 = vpack.c.b16 %v2250, %v2250
      %2255 = vst.msk [vmem:[%s175 + $0x3c] sm:$0xf] %vm1869, %v2251
      %2256 = vst.msk [vmem:[%s175 + $0x40] sm:$0x3] %vm1871, %v2252
      %s2257 = scalar_lea.vmem [#allocation2], 528
      %v2258 = vld [vmem:[%s2257] ss:$2 sm:$0xff]
      %s2259 = scalar_lea.vmem [#allocation2], 544
      %v2260 = vld [vmem:[%s2259] ss:$2 sm:$0xf]
      %s2261 = scalar_lea.vmem [#allocation2], 529
      %v2262 = vld [vmem:[%s2261] ss:$2 sm:$0xff]
      %s2263 = scalar_lea.vmem [#allocation2], 545
      %v2264 = vld [vmem:[%s2263] ss:$2 sm:$0xf]
      %s2265 = scalar_lea.vmem [#allocation2], 552
      %v2266 = vld [vmem:[%s2265] ss:$2 sm:$0xff]
      %s2267 = scalar_lea.vmem [#allocation2], 568
      %v2268 = vld [vmem:[%s2267] ss:$2 sm:$0xf]
      %s2269 = scalar_lea.vmem [#allocation2], 553
      %v2270 = vld [vmem:[%s2269] ss:$2 sm:$0xff]
      %s2271 = scalar_lea.vmem [#allocation2], 569
      %v2272 = vld [vmem:[%s2271] ss:$2 sm:$0xf]
      %v2273 = vmax.f32 %v2258, %v2262
      %v2274 = vmax.f32 %v2260, %v2264
      %v2275 = vmax.f32 %v2266, %v2270
      %v2276 = vmax.f32 %v2268, %v2272
      %v2277 = vmax.f32 %v2273, %v2275
      %v2278 = vmax.f32 %v2274, %v2276
      %v2279 = vadd.f32 %v2277, %v1855
      %v2280 = vadd.f32 %v2278, %v1855
      %v2281 = vmax.f32 %v2279, 0.0
      %v2282 = vmax.f32 %v2280, 0.0
      %v2283 = vpack.c.bf16 %v2282, %v2281
      %v2285 = vunpack.c.l.b16 %v2283
      %v2286 = vunpack.c.h.b16 %v2283
      %v2287 = vpack.c.b16 %v2285, %v2285
      %v2288 = vpack.c.b16 %v2286, %v2286
      %v2289 = vrot.slane %v2287, 6
      %v2290 = vrot.slane %v2289, 4
      %v2291 = vrot.slane %v2288, 6
      %v2292 = vsel %vm1907, %v2290, %v2291
      %2295 = vst.msk [vmem:[%s175 + $0x40] sm:$0xc] %vm1914, %v2289
      %2296 = vst.msk [vmem:[%s175 + $0x44] sm:$0xf] %vm1869, %v2292
      %s2297 = smul.u32 18, %s14
      %p2298 = scmp.lt.s32.totalorder %s2297, 35
      %s2299 = scalar_select %p2298, %s2297, 35
      %s2300 = smul.addr %s2299, 4
      %s2301 = scalar_lea.vmem %s3, %s2300
      // Predicated region
      $region33: #{simsiam_forward.4} parent=31 // pred_check
        %p2302 = pneg %p100
      $region34: #{simsiam_forward.4} parent=31 // pred_check_branch
        %2304 = sbr.rel (%p2302) target = $region36
      $region35: #{simsiam_forward.4} parent=31 // pred_region
        %s2305 = smul.u32 18, %s14
      $region36: #{simsiam_forward.4} parent=31 // pred_fallthru
        _
    $region32: #{simsiam_forward.4} parent=5 // pred_fallthru
      _
    %p2306 = scmp.le.s32.totalorder 2, %s9
    // Predicated region
    $region37: #{simsiam_forward.4} parent=5 // pred_check
      %p2307 = pneg %p2306
    $region38: #{simsiam_forward.4} parent=5 // pred_check_branch
      %2309 = sbr.rel (%p2307) target = $region40
    $region39: #{simsiam_forward.4} parent=5 // pred_region
      %s2310 = ssub.s32 %s9, 2
      // Predicated region
      $region41: #{simsiam_forward.4} parent=39 // pred_check
        %p2311 = pneg %p106
      $region42: #{simsiam_forward.4} parent=39 // pred_check_branch
        %2313 = sbr.rel (%p2311) target = $region44
      $region43: #{simsiam_forward.4} parent=39 // pred_region
        %s2314 = smul.u32 18, %s15
        %p2315 = scmp.lt.s32.totalorder %s2314, 35
        %s2316 = scalar_select %p2315, %s2314, 35
        %s2317 = smul.addr %s2316, 4
        %s2318 = scalar_lea.vmem %s3, %s2317
      $region44: #{simsiam_forward.4} parent=39 // pred_fallthru
        _
    $region40: #{simsiam_forward.4} parent=5 // pred_fallthru
      _
  $region6: #{simsiam_forward.4} parent=0 // loop_footer
    %s13 = sadd.s32 1, %s9
  $region7: #{simsiam_forward.4} parent=0 // loop_footer_branch
    %8 = sbr.rel target = $region3
  $region8: #{simsiam_forward.4} parent=0 // loop_exit
    _

// kernel: simsiam_forward.5
$region0: #{simsiam_forward.5}
  #allocation0 [shape = 'u32[]', space=smem, size = 0x4, offset = 0x4, fixed_abs, tag = 'smem constant byte address 0x4 - core index']
  #allocation1 [shape = 'u32[144,128]{1,0:T(1,128)}', space=vmem, size = 0x12000, scoped, tag = 'internal scratch']
  #allocation2 [shape = 'f32[2,256]{1,0:T(2,128)}', space=vmem, size = 0x800, scoped, tag = 'scratch operand']
  %s0 = inlined_call_operand.vmem [shape: bf16[2,9216], index: 0, kind: input, shape index: {}]
  %s1 = inlined_call_operand.vmem [shape: bf16[9216,256], index: 1, kind: input, shape index: {}]
  %s2 = inlined_call_operand.vmem [shape: f32[1,256], index: 2, kind: input, shape index: {}]
  %s3 = inlined_call_operand.vmem [shape: bf16[256,128], index: 3, kind: input, shape index: {}]
  %s4 = inlined_call_operand.vmem [shape: f32[1,128], index: 4, kind: input, shape index: {}]
  %s5 = inlined_call_operand.vmem [shape: bf16[128,128], index: 5, kind: input, shape index: {}]
  %s6 = inlined_call_operand.vmem [shape: f32[1,128], index: 6, kind: input, shape index: {}]
  %s7 = inlined_call_operand.vmem [shape: bf16[128,128], index: 7, kind: input, shape index: {}]
  %s8 = inlined_call_operand.vmem [shape: f32[1,128], index: 8, kind: input, shape index: {}]
  %s9 = inlined_call_operand.vmem [shape: f32[2,128], index: 9, kind: output, shape index: {0}]
  %s10 = inlined_call_operand.vmem [shape: f32[2,128], index: 10, kind: output, shape index: {1}]
  %11 = xla_tuple %s9, %s10
  %s12 = sld [smem:[#allocation0]]
  $region85: #{simsiam_forward.5} parent=0
    _
  %s14 = ssub.s32 1, %s12
  %s15 = scalar_select 0, %s14, %s12
  loop: start=0, step=1, limit=4
  $region2: #{simsiam_forward.5} parent=0 // loop_pre_header
    _
  $region3: #{simsiam_forward.5} parent=0 // loop_header
    %s17 = sphi 0, %s21
    %p18 = scmp.ge.s32.totalorder %s17, 4
    %s27 = sphi 0, %s29
    %s30 = sphi 0, %s27
    %s31 = sphi 0, %s30
    %s47 = sphi 0, %s31
    %s53 = sphi 0, %s55
    %s56 = sphi 0, %s53
    %s57 = sphi 0, %s56
    %s73 = sphi 0, %s57
    %s77 = sphi 0, %s77
    %s79 = sphi 0, %s77
    %s80 = sphi 0, %s79
    %s94 = sphi 0, %s80
    %s98 = sphi 0, %s98
    %s100 = sphi 0, %s98
    %s101 = sphi 0, %s100
    %s115 = sphi 0, %s101
    %s119 = sphi 0, %s119
    %s121 = sphi 0, %s119
    %s122 = sphi 0, %s121
    %s136 = sphi 0, %s122
    %s140 = sphi 0, %s140
    %s142 = sphi 0, %s140
    %s143 = sphi 0, %s142
    %s157 = sphi 0, %s143
    %s161 = sphi 0, %s161
    %s163 = sphi 0, %s161
    %s164 = sphi 0, %s163
    %s178 = sphi 0, %s164
    %s182 = sphi 0, %s182
    %s184 = sphi 0, %s182
    %s185 = sphi 0, %s184
    %s199 = sphi 0, %s185
    %s203 = sphi 0, %s203
    %s205 = sphi 0, %s203
    %s206 = sphi 0, %s205
    %s220 = sphi 0, %s206
    %s224 = sphi 0, %s224
    %s226 = sphi 0, %s224
    %s227 = sphi 0, %s226
    %s241 = sphi 0, %s227
    %s245 = sphi 0, %s245
    %s247 = sphi 0, %s245
    %s248 = sphi 0, %s247
    %s262 = sphi 0, %s248
  $region4: #{simsiam_forward.5} parent=0 // loop_header_branch
    %20 = sbr.rel (%p18) target = $region8
  $region5: #{simsiam_forward.5} parent=0 // loop_body
    %s22 = ssub.s32 %s17, 1
    %s23 = ssub.s32 %s17, 2
    %s24 = sadd.s32 %s17, 1
    %s25 = ssub.s32 %s17, %s24
    %p26 = scmp.eq.s32.totalorder %s25, 0
    %s28 = sadd.s32 %s27, 1
    %s29 = scalar_select %p26, %s27, %s28
    %p32 = pneg %p26
    %p33 = scmp.eq.s32.totalorder %s17, 1
    %p34 = por %p32, %p33
    %p35 = scmp.ne.s32.totalorder %s27, %s30
    %p36 = scmp.eq.s32.totalorder %s17, 0
    %p37 = por %p35, %p36
    %p38 = scmp.ne.s32.totalorder %s27, %s30
    %p39 = scmp.eq.s32.totalorder %s22, 1
    %p40 = por %p38, %p39
    %p41 = scmp.ne.s32.totalorder %s30, %s31
    %p42 = scmp.eq.s32.totalorder %s22, 0
    %p43 = por %p41, %p42
    %p44 = scmp.ne.s32.totalorder %s30, %s31
    %p45 = scmp.eq.s32.totalorder %s23, 1
    %p46 = por %p44, %p45
    %p48 = scmp.ne.s32.totalorder %s31, %s47
    %p49 = scmp.eq.s32.totalorder %s23, 0
    %p50 = por %p48, %p49
    %s51 = ssub.s32 %s17, %s24
    %p52 = scmp.eq.s32.totalorder %s51, 0
    %s54 = sadd.s32 %s53, 1
    %s55 = scalar_select %p52, %s53, %s54
    %p58 = pneg %p52
    %p59 = scmp.eq.s32.totalorder %s17, 1
    %p60 = por %p58, %p59
    %p61 = scmp.ne.s32.totalorder %s53, %s56
    %p62 = scmp.eq.s32.totalorder %s17, 0
    %p63 = por %p61, %p62
    %p64 = scmp.ne.s32.totalorder %s53, %s56
    %p65 = scmp.eq.s32.totalorder %s22, 1
    %p66 = por %p64, %p65
    %p67 = scmp.ne.s32.totalorder %s56, %s57
    %p68 = scmp.eq.s32.totalorder %s22, 0
    %p69 = por %p67, %p68
    %p70 = scmp.ne.s32.totalorder %s56, %s57
    %p71 = scmp.eq.s32.totalorder %s23, 1
    %p72 = por %p70, %p71
    %p74 = scmp.ne.s32.totalorder %s57, %s73
    %p75 = scmp.eq.s32.totalorder %s23, 0
    %p76 = por %p74, %p75
    %s78 = sadd.s32 %s77, 1
    %p81 = scmp.eq.s32.totalorder %s17, 1
    %p82 = scmp.ne.s32.totalorder %s77, %s79
    %p83 = scmp.eq.s32.totalorder %s17, 0
    %p84 = por %p82, %p83
    %p85 = scmp.ne.s32.totalorder %s77, %s79
    %p86 = scmp.eq.s32.totalorder %s22, 1
    %p87 = por %p85, %p86
    %p88 = scmp.ne.s32.totalorder %s79, %s80
    %p89 = scmp.eq.s32.totalorder %s22, 0
    %p90 = por %p88, %p89
    %p91 = scmp.ne.s32.totalorder %s79, %s80
    %p92 = scmp.eq.s32.totalorder %s23, 1
    %p93 = por %p91, %p92
    %p95 = scmp.ne.s32.totalorder %s80, %s94
    %p96 = scmp.eq.s32.totalorder %s23, 0
    %p97 = por %p95, %p96
    %s99 = sadd.s32 %s98, 1
    %p102 = scmp.eq.s32.totalorder %s17, 1
    %p103 = scmp.ne.s32.totalorder %s98, %s100
    %p104 = scmp.eq.s32.totalorder %s17, 0
    %p105 = por %p103, %p104
    %p106 = scmp.ne.s32.totalorder %s98, %s100
    %p107 = scmp.eq.s32.totalorder %s22, 1
    %p108 = por %p106, %p107
    %p109 = scmp.ne.s32.totalorder %s100, %s101
    %p110 = scmp.eq.s32.totalorder %s22, 0
    %p111 = por %p109, %p110
    %p112 = scmp.ne.s32.totalorder %s100, %s101
    %p113 = scmp.eq.s32.totalorder %s23, 1
    %p114 = por %p112, %p113
    %p116 = scmp.ne.s32.totalorder %s101, %s115
    %p117 = scmp.eq.s32.totalorder %s23, 0
    %p118 = por %p116, %p117
    %s120 = sadd.s32 %s119, 1
    %p123 = scmp.eq.s32.totalorder %s17, 1
    %p124 = scmp.ne.s32.totalorder %s119, %s121
    %p125 = scmp.eq.s32.totalorder %s17, 0
    %p126 = por %p124, %p125
    %p127 = scmp.ne.s32.totalorder %s119, %s121
    %p128 = scmp.eq.s32.totalorder %s22, 1
    %p129 = por %p127, %p128
    %p130 = scmp.ne.s32.totalorder %s121, %s122
    %p131 = scmp.eq.s32.totalorder %s22, 0
    %p132 = por %p130, %p131
    %p133 = scmp.ne.s32.totalorder %s121, %s122
    %p134 = scmp.eq.s32.totalorder %s23, 1
    %p135 = por %p133, %p134
    %p137 = scmp.ne.s32.totalorder %s122, %s136
    %p138 = scmp.eq.s32.totalorder %s23, 0
    %p139 = por %p137, %p138
    %s141 = sadd.s32 %s140, 1
    %p144 = scmp.eq.s32.totalorder %s17, 1
    %p145 = scmp.ne.s32.totalorder %s140, %s142
    %p146 = scmp.eq.s32.totalorder %s17, 0
    %p147 = por %p145, %p146
    %p148 = scmp.ne.s32.totalorder %s140, %s142
    %p149 = scmp.eq.s32.totalorder %s22, 1
    %p150 = por %p148, %p149
    %p151 = scmp.ne.s32.totalorder %s142, %s143
    %p152 = scmp.eq.s32.totalorder %s22, 0
    %p153 = por %p151, %p152
    %p154 = scmp.ne.s32.totalorder %s142, %s143
    %p155 = scmp.eq.s32.totalorder %s23, 1
    %p156 = por %p154, %p155
    %p158 = scmp.ne.s32.totalorder %s143, %s157
    %p159 = scmp.eq.s32.totalorder %s23, 0
    %p160 = por %p158, %p159
    %s162 = sadd.s32 %s161, 1
    %p165 = scmp.eq.s32.totalorder %s17, 1
    %p166 = scmp.ne.s32.totalorder %s161, %s163
    %p167 = scmp.eq.s32.totalorder %s17, 0
    %p168 = por %p166, %p167
    %p169 = scmp.ne.s32.totalorder %s161, %s163
    %p170 = scmp.eq.s32.totalorder %s22, 1
    %p171 = por %p169, %p170
    %p172 = scmp.ne.s32.totalorder %s163, %s164
    %p173 = scmp.eq.s32.totalorder %s22, 0
    %p174 = por %p172, %p173
    %p175 = scmp.ne.s32.totalorder %s163, %s164
    %p176 = scmp.eq.s32.totalorder %s23, 1
    %p177 = por %p175, %p176
    %p179 = scmp.ne.s32.totalorder %s164, %s178
    %p180 = scmp.eq.s32.totalorder %s23, 0
    %p181 = por %p179, %p180
    %s183 = sadd.s32 %s182, 1
    %p186 = scmp.eq.s32.totalorder %s17, 1
    %p187 = scmp.ne.s32.totalorder %s182, %s184
    %p188 = scmp.eq.s32.totalorder %s17, 0
    %p189 = por %p187, %p188
    %p190 = scmp.ne.s32.totalorder %s182, %s184
    %p191 = scmp.eq.s32.totalorder %s22, 1
    %p192 = por %p190, %p191
    %p193 = scmp.ne.s32.totalorder %s184, %s185
    %p194 = scmp.eq.s32.totalorder %s22, 0
    %p195 = por %p193, %p194
    %p196 = scmp.ne.s32.totalorder %s184, %s185
    %p197 = scmp.eq.s32.totalorder %s23, 1
    %p198 = por %p196, %p197
    %p200 = scmp.ne.s32.totalorder %s185, %s199
    %p201 = scmp.eq.s32.totalorder %s23, 0
    %p202 = por %p200, %p201
    %s204 = sadd.s32 %s203, 1
    %p207 = scmp.eq.s32.totalorder %s17, 1
    %p208 = scmp.ne.s32.totalorder %s203, %s205
    %p209 = scmp.eq.s32.totalorder %s17, 0
    %p210 = por %p208, %p209
    %p211 = scmp.ne.s32.totalorder %s203, %s205
    %p212 = scmp.eq.s32.totalorder %s22, 1
    %p213 = por %p211, %p212
    %p214 = scmp.ne.s32.totalorder %s205, %s206
    %p215 = scmp.eq.s32.totalorder %s22, 0
    %p216 = por %p214, %p215
    %p217 = scmp.ne.s32.totalorder %s205, %s206
    %p218 = scmp.eq.s32.totalorder %s23, 1
    %p219 = por %p217, %p218
    %p221 = scmp.ne.s32.totalorder %s206, %s220
    %p222 = scmp.eq.s32.totalorder %s23, 0
    %p223 = por %p221, %p222
    %s225 = sadd.s32 %s224, 1
    %p228 = scmp.eq.s32.totalorder %s17, 1
    %p229 = scmp.ne.s32.totalorder %s224, %s226
    %p230 = scmp.eq.s32.totalorder %s17, 0
    %p231 = por %p229, %p230
    %p232 = scmp.ne.s32.totalorder %s224, %s226
    %p233 = scmp.eq.s32.totalorder %s22, 1
    %p234 = por %p232, %p233
    %p235 = scmp.ne.s32.totalorder %s226, %s227
    %p236 = scmp.eq.s32.totalorder %s22, 0
    %p237 = por %p235, %p236
    %p238 = scmp.ne.s32.totalorder %s226, %s227
    %p239 = scmp.eq.s32.totalorder %s23, 1
    %p240 = por %p238, %p239
    %p242 = scmp.ne.s32.totalorder %s227, %s241
    %p243 = scmp.eq.s32.totalorder %s23, 0
    %p244 = por %p242, %p243
    %s246 = sadd.s32 %s245, 1
    %p249 = scmp.eq.s32.totalorder %s17, 1
    %p250 = scmp.ne.s32.totalorder %s245, %s247
    %p251 = scmp.eq.s32.totalorder %s17, 0
    %p252 = por %p250, %p251
    %p253 = scmp.ne.s32.totalorder %s245, %s247
    %p254 = scmp.eq.s32.totalorder %s22, 1
    %p255 = por %p253, %p254
    %p256 = scmp.ne.s32.totalorder %s247, %s248
    %p257 = scmp.eq.s32.totalorder %s22, 0
    %p258 = por %p256, %p257
    %p259 = scmp.ne.s32.totalorder %s247, %s248
    %p260 = scmp.eq.s32.totalorder %s23, 1
    %p261 = por %p259, %p260
    %p263 = scmp.ne.s32.totalorder %s248, %s262
    %p264 = scmp.eq.s32.totalorder %s23, 0
    %p265 = por %p263, %p264
    %p266 = scmp.le.s32.totalorder 1, %s17
    %p267 = scmp.lt.s32.totalorder %s17, 3
    %p268 = pnand %p266, %p267
    %p269 = pneg %p268
    // Predicated region
    $region9: #{simsiam_forward.5} parent=5 // pred_check
      _
    $region10: #{simsiam_forward.5} parent=5 // pred_check_branch
      %271 = sbr.rel (%p268) target = $region12
    $region11: #{simsiam_forward.5} parent=5 // pred_region
      %s272 = ssub.s32 %s17, 1
      // Predicated region
      $region13: #{simsiam_forward.5} parent=11 // pred_check
        %p273 = pneg %p90
      $region14: #{simsiam_forward.5} parent=11 // pred_check_branch
        %275 = sbr.rel (%p273) target = $region16
      $region15: #{simsiam_forward.5} parent=11 // pred_region
        _
      $region16: #{simsiam_forward.5} parent=11 // pred_fallthru
        _
      // Predicated region
      $region17: #{simsiam_forward.5} parent=11 // pred_check
        %p276 = pneg %p111
      $region18: #{simsiam_forward.5} parent=11 // pred_check_branch
        %278 = sbr.rel (%p276) target = $region20
      $region19: #{simsiam_forward.5} parent=11 // pred_region
        _
      $region20: #{simsiam_forward.5} parent=11 // pred_fallthru
        _
      // Predicated region
      $region21: #{simsiam_forward.5} parent=11 // pred_check
        %p279 = pneg %p132
      $region22: #{simsiam_forward.5} parent=11 // pred_check_branch
        %281 = sbr.rel (%p279) target = $region24
      $region23: #{simsiam_forward.5} parent=11 // pred_region
        _
      $region24: #{simsiam_forward.5} parent=11 // pred_fallthru
        _
      // Predicated region
      $region25: #{simsiam_forward.5} parent=11 // pred_check
        %p282 = pneg %p153
      $region26: #{simsiam_forward.5} parent=11 // pred_check_branch
        %284 = sbr.rel (%p282) target = $region28
      $region27: #{simsiam_forward.5} parent=11 // pred_region
        _
      $region28: #{simsiam_forward.5} parent=11 // pred_fallthru
        _
      // Predicated region
      $region29: #{simsiam_forward.5} parent=11 // pred_check
        %p285 = pneg %p174
      $region30: #{simsiam_forward.5} parent=11 // pred_check_branch
        %287 = sbr.rel (%p285) target = $region32
      $region31: #{simsiam_forward.5} parent=11 // pred_region
        _
      $region32: #{simsiam_forward.5} parent=11 // pred_fallthru
        _
      // Predicated region
      $region33: #{simsiam_forward.5} parent=11 // pred_check
        %p288 = pneg %p195
      $region34: #{simsiam_forward.5} parent=11 // pred_check_branch
        %290 = sbr.rel (%p288) target = $region36
      $region35: #{simsiam_forward.5} parent=11 // pred_region
        _
      $region36: #{simsiam_forward.5} parent=11 // pred_fallthru
        _
      // Predicated region
      $region37: #{simsiam_forward.5} parent=11 // pred_check
        %p291 = pneg %p216
      $region38: #{simsiam_forward.5} parent=11 // pred_check_branch
        %293 = sbr.rel (%p291) target = $region40
      $region39: #{simsiam_forward.5} parent=11 // pred_region
        _
      $region40: #{simsiam_forward.5} parent=11 // pred_fallthru
        _
    $region12: #{simsiam_forward.5} parent=5 // pred_fallthru
      _
    %p294 = scmp.lt.s32.totalorder %s17, 2
    // Predicated region
    $region41: #{simsiam_forward.5} parent=5 // pred_check
      %p295 = pneg %p294
    $region42: #{simsiam_forward.5} parent=5 // pred_check_branch
      %297 = sbr.rel (%p295) target = $region44
    $region43: #{simsiam_forward.5} parent=5 // pred_region
      // Predicated region
      $region45: #{simsiam_forward.5} parent=43 // pred_check
        %p298 = pneg %p37
      $region46: #{simsiam_forward.5} parent=43 // pred_check_branch
        %300 = sbr.rel (%p298) target = $region48
      $region47: #{simsiam_forward.5} parent=43 // pred_region
        %s301 = smul.u32 36, %s17
        %p302 = scmp.lt.s32.totalorder %s301, 71
        %s303 = scalar_select %p302, %s301, 71
        %s304 = scalar_lea.vmem %s0, %s303
        %s305 = smul.u32 36, %s17
      $region48: #{simsiam_forward.5} parent=43 // pred_fallthru
        _
      // Predicated region
      $region49: #{simsiam_forward.5} parent=43 // pred_check
        %p306 = pneg %p63
      $region50: #{simsiam_forward.5} parent=43 // pred_check_branch
        %308 = sbr.rel (%p306) target = $region52
      $region51: #{simsiam_forward.5} parent=43 // pred_region
        %s309 = smul.u32 576, %s17
        %p310 = scmp.lt.s32.totalorder %s309, 1151
        %s311 = scalar_select %p310, %s309, 1151
        %s312 = smul.addr %s311, 2
        %s313 = smul.addr %s312, 4
        %s314 = scalar_lea.vmem %s1, %s313
        %s315 = smul.u32 576, %s17
      $region52: #{simsiam_forward.5} parent=43 // pred_fallthru
        _
    $region44: #{simsiam_forward.5} parent=5 // pred_fallthru
      _
    %p316 = scmp.le.s32.totalorder 1, %s17
    %p317 = scmp.lt.s32.totalorder %s17, 3
    %p318 = pnand %p316, %p317
    %p319 = pneg %p318
    // Predicated region
    $region53: #{simsiam_forward.5} parent=5 // pred_check
      _
    $region54: #{simsiam_forward.5} parent=5 // pred_check_branch
      %321 = sbr.rel (%p318) target = $region56
    $region55: #{simsiam_forward.5} parent=5 // pred_region
      %s322 = ssub.s32 %s17, 1
      %s323 = smul.u32 36, %s22
      %p324 = scmp.lt.s32.totalorder %s323, 71
      %s325 = scalar_select %p324, %s323, 71
      %s326 = scalar_lea.vmem %s0, %s325
      %p327 = pneg %p43
      %p328 = pneg %p40
      %s329 = smul.u32 576, %s22
      %p330 = scmp.lt.s32.totalorder %s329, 1151
      %s331 = scalar_select %p330, %s329, 1151
      %s332 = smul.addr %s331, 2
      %s333 = smul.addr %s332, 4
      %s334 = scalar_lea.vmem %s1, %s333
      %p335 = pneg %p69
      %p336 = pneg %p66
      %p337 = pneg %p90
      %p338 = pneg %p87
      %p339 = pneg %p111
      %p340 = pneg %p108
      %p341 = pneg %p132
      %p342 = pneg %p129
      %p343 = pneg %p153
      %p344 = pneg %p150
      %p345 = pneg %p174
      %p346 = pneg %p171
      %p347 = pneg %p195
      %p348 = pneg %p192
      %p349 = pneg %p216
      %p350 = pneg %p213
      %p351 = pneg %p237
      %p352 = pneg %p234
      %p353 = pneg %p258
      %p354 = pneg %p255
      %s355 = smul.u32 36, %s22
      %p356 = scmp.lt.s32.totalorder %s355, 71
      %s357 = scalar_select %p356, %s355, 71
      %s358 = scalar_lea.vmem %s0, %s357
      %s359 = smul.u32 36, %s22
      %s360 = smul.u32 576, %s22
      %p361 = scmp.lt.s32.totalorder %s360, 1151
      %s362 = scalar_select %p361, %s360, 1151
      %s363 = smul.addr %s362, 2
      %s364 = smul.addr %s363, 4
      %s365 = scalar_lea.vmem %s1, %s364
      %s366 = smul.u32 576, %s22
      %p368 = scmp.eq.s32.totalorder %s22, 0
      // Predicated region
      $region57: #{simsiam_forward.5} parent=55 // pred_check
        %p369 = pneg %p368
      $region58: #{simsiam_forward.5} parent=55 // pred_check_branch
        %371 = sbr.rel (%p369) target = $region60
      $region59: #{simsiam_forward.5} parent=55 // pred_region
        %372 = vst [vmem:[#allocation2] sm:$0xf] 0.0
      $region60: #{simsiam_forward.5} parent=55 // pred_fallthru
        _
      %v373 = vld [vmem:[#allocation2] sm:$0xf]
      %v374 = vld [vmem:[%s358] sm:$0xff]
      %v375 = vld [vmem:[%s358 + $0x8] sm:$0xff]
      %v376 = vld [vmem:[%s358 + $0x10] sm:$0xff]
      %v377 = vld [vmem:[%s358 + $0x18] sm:$0xff]
      %v378 = vld [vmem:[%s358 + $0x20] sm:$0xf]
      %v379 = vld [vmem:[%s365] sm:$0xff]
      %v380 = vld [vmem:[%s365 + $0x8] sm:$0xff]
      %v381 = vld [vmem:[%s365 + $0x10] sm:$0xff]
      %v382 = vld [vmem:[%s365 + $0x18] sm:$0xff]
      %v383 = vld [vmem:[%s365 + $0x20] sm:$0xff]
      %v384 = vld [vmem:[%s365 + $0x28] sm:$0xff]
      %v385 = vld [vmem:[%s365 + $0x30] sm:$0xff]
      %v386 = vld [vmem:[%s365 + $0x38] sm:$0xff]
      %v387 = vld [vmem:[%s365 + $0x40] sm:$0xff]
      %v388 = vld [vmem:[%s365 + $0x48] sm:$0xff]
      %v389 = vld [vmem:[%s365 + $0x50] sm:$0xff]
      %v390 = vld [vmem:[%s365 + $0x58] sm:$0xff]
      %v391 = vld [vmem:[%s365 + $0x60] sm:$0xff]
      %v392 = vld [vmem:[%s365 + $0x68] sm:$0xff]
      %v393 = vld [vmem:[%s365 + $0x70] sm:$0xff]
      %v394 = vld [vmem:[%s365 + $0x78] sm:$0xff]
      %v395 = vld [vmem:[%s365 + $0x80] sm:$0xff]
      %v396 = vld [vmem:[%s365 + $0x88] sm:$0xff]
      %v397 = vld [vmem:[%s365 + $0x90] sm:$0xff]
      %v398 = vld [vmem:[%s365 + $0x98] sm:$0xff]
      %v399 = vld [vmem:[%s365 + $0xa0] sm:$0xff]
      %v400 = vld [vmem:[%s365 + $0xa8] sm:$0xff]
      %v401 = vld [vmem:[%s365 + $0xb0] sm:$0xff]
      %v402 = vld [vmem:[%s365 + $0xb8] sm:$0xff]
      %v403 = vld [vmem:[%s365 + $0xc0] sm:$0xff]
      %v404 = vld [vmem:[%s365 + $0xc8] sm:$0xff]
      %v405 = vld [vmem:[%s365 + $0xd0] sm:$0xff]
      %v406 = vld [vmem:[%s365 + $0xd8] sm:$0xff]
      %v407 = vld [vmem:[%s365 + $0xe0] sm:$0xff]
      %v408 = vld [vmem:[%s365 + $0xe8] sm:$0xff]
      %v409 = vld [vmem:[%s365 + $0xf0] sm:$0xff]
      %v410 = vld [vmem:[%s365 + $0xf8] sm:$0xff]
      %v411 = vld [vmem:[%s365 + $0x100] sm:$0xff]
      %v412 = vld [vmem:[%s365 + $0x108] sm:$0xff]
      %v413 = vld [vmem:[%s365 + $0x110] sm:$0xff]
      %v414 = vld [vmem:[%s365 + $0x118] sm:$0xff]
      %v415 = vld [vmem:[%s365 + $0x120] sm:$0xff]
      %v416 = vld [vmem:[%s365 + $0x128] sm:$0xff]
      %v417 = vld [vmem:[%s365 + $0x130] sm:$0xff]
      %v418 = vld [vmem:[%s365 + $0x138] sm:$0xff]
      %v419 = vld [vmem:[%s365 + $0x140] sm:$0xff]
      %v420 = vld [vmem:[%s365 + $0x148] sm:$0xff]
      %v421 = vld [vmem:[%s365 + $0x150] sm:$0xff]
      %v422 = vld [vmem:[%s365 + $0x158] sm:$0xff]
      %v423 = vld [vmem:[%s365 + $0x160] sm:$0xff]
      %v424 = vld [vmem:[%s365 + $0x168] sm:$0xff]
      %v425 = vld [vmem:[%s365 + $0x170] sm:$0xff]
      %v426 = vld [vmem:[%s365 + $0x178] sm:$0xff]
      %v427 = vld [vmem:[%s365 + $0x180] sm:$0xff]
      %v428 = vld [vmem:[%s365 + $0x188] sm:$0xff]
      %v429 = vld [vmem:[%s365 + $0x190] sm:$0xff]
      %v430 = vld [vmem:[%s365 + $0x198] sm:$0xff]
      %v431 = vld [vmem:[%s365 + $0x1a0] sm:$0xff]
      %v432 = vld [vmem:[%s365 + $0x1a8] sm:$0xff]
      %v433 = vld [vmem:[%s365 + $0x1b0] sm:$0xff]
      %v434 = vld [vmem:[%s365 + $0x1b8] sm:$0xff]
      %v435 = vld [vmem:[%s365 + $0x1c0] sm:$0xff]
      %v436 = vld [vmem:[%s365 + $0x1c8] sm:$0xff]
      %v437 = vld [vmem:[%s365 + $0x1d0] sm:$0xff]
      %v438 = vld [vmem:[%s365 + $0x1d8] sm:$0xff]
      %v439 = vld [vmem:[%s365 + $0x1e0] sm:$0xff]
      %v440 = vld [vmem:[%s365 + $0x1e8] sm:$0xff]
      %v441 = vld [vmem:[%s365 + $0x1f0] sm:$0xff]
      %v442 = vld [vmem:[%s365 + $0x1f8] sm:$0xff]
      %v443 = vld [vmem:[%s365 + $0x200] sm:$0xff]
      %v444 = vld [vmem:[%s365 + $0x208] sm:$0xff]
      %v445 = vld [vmem:[%s365 + $0x210] sm:$0xff]
      %v446 = vld [vmem:[%s365 + $0x218] sm:$0xff]
      %v447 = vld [vmem:[%s365 + $0x220] sm:$0xff]
      %v448 = vld [vmem:[%s365 + $0x228] sm:$0xff]
      %v449 = vld [vmem:[%s365 + $0x230] sm:$0xff]
      %v450 = vld [vmem:[%s365 + $0x238] sm:$0xff]
      %v451 = vld [vmem:[%s365 + $0x240] sm:$0xff]
      %v452 = vld [vmem:[%s365 + $0x248] sm:$0xff]
      %v453 = vld [vmem:[%s365 + $0x250] sm:$0xff]
      %v454 = vld [vmem:[%s365 + $0x258] sm:$0xff]
      %v455 = vld [vmem:[%s365 + $0x260] sm:$0xff]
      %v456 = vld [vmem:[%s365 + $0x268] sm:$0xff]
      %v457 = vld [vmem:[%s365 + $0x270] sm:$0xff]
      %v458 = vld [vmem:[%s365 + $0x278] sm:$0xff]
      %v459 = vld [vmem:[%s365 + $0x280] sm:$0xff]
      %v460 = vld [vmem:[%s365 + $0x288] sm:$0xff]
      %v461 = vld [vmem:[%s365 + $0x290] sm:$0xff]
      %v462 = vld [vmem:[%s365 + $0x298] sm:$0xff]
      %v463 = vld [vmem:[%s365 + $0x2a0] sm:$0xff]
      %v464 = vld [vmem:[%s365 + $0x2a8] sm:$0xff]
      %v465 = vld [vmem:[%s365 + $0x2b0] sm:$0xff]
      %v466 = vld [vmem:[%s365 + $0x2b8] sm:$0xff]
      %v467 = vld [vmem:[%s365 + $0x2c0] sm:$0xff]
      %v468 = vld [vmem:[%s365 + $0x2c8] sm:$0xff]
      %v469 = vld [vmem:[%s365 + $0x2d0] sm:$0xff]
      %v470 = vld [vmem:[%s365 + $0x2d8] sm:$0xff]
      %v471 = vld [vmem:[%s365 + $0x2e0] sm:$0xff]
      %v472 = vld [vmem:[%s365 + $0x2e8] sm:$0xff]
      %v473 = vld [vmem:[%s365 + $0x2f0] sm:$0xff]
      %v474 = vld [vmem:[%s365 + $0x2f8] sm:$0xff]
      %v475 = vld [vmem:[%s365 + $0x300] sm:$0xff]
      %v476 = vld [vmem:[%s365 + $0x308] sm:$0xff]
      %v477 = vld [vmem:[%s365 + $0x310] sm:$0xff]
      %v478 = vld [vmem:[%s365 + $0x318] sm:$0xff]
      %v479 = vld [vmem:[%s365 + $0x320] sm:$0xff]
      %v480 = vld [vmem:[%s365 + $0x328] sm:$0xff]
      %v481 = vld [vmem:[%s365 + $0x330] sm:$0xff]
      %v482 = vld [vmem:[%s365 + $0x338] sm:$0xff]
      %v483 = vld [vmem:[%s365 + $0x340] sm:$0xff]
      %v484 = vld [vmem:[%s365 + $0x348] sm:$0xff]
      %v485 = vld [vmem:[%s365 + $0x350] sm:$0xff]
      %v486 = vld [vmem:[%s365 + $0x358] sm:$0xff]
      %v487 = vld [vmem:[%s365 + $0x360] sm:$0xff]
      %v488 = vld [vmem:[%s365 + $0x368] sm:$0xff]
      %v489 = vld [vmem:[%s365 + $0x370] sm:$0xff]
      %v490 = vld [vmem:[%s365 + $0x378] sm:$0xff]
      %v491 = vld [vmem:[%s365 + $0x380] sm:$0xff]
      %v492 = vld [vmem:[%s365 + $0x388] sm:$0xff]
      %v493 = vld [vmem:[%s365 + $0x390] sm:$0xff]
      %v494 = vld [vmem:[%s365 + $0x398] sm:$0xff]
      %v495 = vld [vmem:[%s365 + $0x3a0] sm:$0xff]
      %v496 = vld [vmem:[%s365 + $0x3a8] sm:$0xff]
      %v497 = vld [vmem:[%s365 + $0x3b0] sm:$0xff]
      %v498 = vld [vmem:[%s365 + $0x3b8] sm:$0xff]
      %v499 = vld [vmem:[%s365 + $0x3c0] sm:$0xff]
      %v500 = vld [vmem:[%s365 + $0x3c8] sm:$0xff]
      %v501 = vld [vmem:[%s365 + $0x3d0] sm:$0xff]
      %v502 = vld [vmem:[%s365 + $0x3d8] sm:$0xff]
      %v503 = vld [vmem:[%s365 + $0x3e0] sm:$0xff]
      %v504 = vld [vmem:[%s365 + $0x3e8] sm:$0xff]
      %v505 = vld [vmem:[%s365 + $0x3f0] sm:$0xff]
      %v506 = vld [vmem:[%s365 + $0x3f8] sm:$0xff]
      %v507 = vld [vmem:[%s365 + $0x400] sm:$0xff]
      %v508 = vld [vmem:[%s365 + $0x408] sm:$0xff]
      %v509 = vld [vmem:[%s365 + $0x410] sm:$0xff]
      %v510 = vld [vmem:[%s365 + $0x418] sm:$0xff]
      %v511 = vld [vmem:[%s365 + $0x420] sm:$0xff]
      %v512 = vld [vmem:[%s365 + $0x428] sm:$0xff]
      %v513 = vld [vmem:[%s365 + $0x430] sm:$0xff]
      %v514 = vld [vmem:[%s365 + $0x438] sm:$0xff]
      %v515 = vld [vmem:[%s365 + $0x440] sm:$0xff]
      %v516 = vld [vmem:[%s365 + $0x448] sm:$0xff]
      %v517 = vld [vmem:[%s365 + $0x450] sm:$0xff]
      %v518 = vld [vmem:[%s365 + $0x458] sm:$0xff]
      %v519 = vld [vmem:[%s365 + $0x460] sm:$0xff]
      %v520 = vld [vmem:[%s365 + $0x468] sm:$0xff]
      %v521 = vld [vmem:[%s365 + $0x470] sm:$0xff]
      %v522 = vld [vmem:[%s365 + $0x478] sm:$0xff]
      %v523 = vld [vmem:[%s365 + $0x480] sm:$0xff]
      %v524 = vld [vmem:[%s365 + $0x488] sm:$0xff]
      %v525 = vld [vmem:[%s365 + $0x490] sm:$0xff]
      %v526 = vld [vmem:[%s365 + $0x498] sm:$0xff]
      %v527 = vld [vmem:[%s365 + $0x4a0] sm:$0xff]
      %v528 = vld [vmem:[%s365 + $0x4a8] sm:$0xff]
      %v529 = vld [vmem:[%s365 + $0x4b0] sm:$0xff]
      %v530 = vld [vmem:[%s365 + $0x4b8] sm:$0xff]
      %v531 = vld [vmem:[%s365 + $0x4c0] sm:$0xff]
      %v532 = vld [vmem:[%s365 + $0x4c8] sm:$0xff]
      %v533 = vld [vmem:[%s365 + $0x4d0] sm:$0xff]
      %v534 = vld [vmem:[%s365 + $0x4d8] sm:$0xff]
      %v535 = vld [vmem:[%s365 + $0x4e0] sm:$0xff]
      %v536 = vld [vmem:[%s365 + $0x4e8] sm:$0xff]
      %v537 = vld [vmem:[%s365 + $0x4f0] sm:$0xff]
      %v538 = vld [vmem:[%s365 + $0x4f8] sm:$0xff]
      %v539 = vld [vmem:[%s365 + $0x500] sm:$0xff]
      %v540 = vld [vmem:[%s365 + $0x508] sm:$0xff]
      %v541 = vld [vmem:[%s365 + $0x510] sm:$0xff]
      %v542 = vld [vmem:[%s365 + $0x518] sm:$0xff]
      %v543 = vld [vmem:[%s365 + $0x520] sm:$0xff]
      %v544 = vld [vmem:[%s365 + $0x528] sm:$0xff]
      %v545 = vld [vmem:[%s365 + $0x530] sm:$0xff]
      %v546 = vld [vmem:[%s365 + $0x538] sm:$0xff]
      %v547 = vld [vmem:[%s365 + $0x540] sm:$0xff]
      %v548 = vld [vmem:[%s365 + $0x548] sm:$0xff]
      %v549 = vld [vmem:[%s365 + $0x550] sm:$0xff]
      %v550 = vld [vmem:[%s365 + $0x558] sm:$0xff]
      %v551 = vld [vmem:[%s365 + $0x560] sm:$0xff]
      %v552 = vld [vmem:[%s365 + $0x568] sm:$0xff]
      %v553 = vld [vmem:[%s365 + $0x570] sm:$0xff]
      %v554 = vld [vmem:[%s365 + $0x578] sm:$0xff]
      %v555 = vld [vmem:[%s365 + $0x580] sm:$0xff]
      %v556 = vld [vmem:[%s365 + $0x588] sm:$0xff]
      %v557 = vld [vmem:[%s365 + $0x590] sm:$0xff]
      %v558 = vld [vmem:[%s365 + $0x598] sm:$0xff]
      %v559 = vld [vmem:[%s365 + $0x5a0] sm:$0xff]
      %v560 = vld [vmem:[%s365 + $0x5a8] sm:$0xff]
      %v561 = vld [vmem:[%s365 + $0x5b0] sm:$0xff]
      %v562 = vld [vmem:[%s365 + $0x5b8] sm:$0xff]
      %v563 = vld [vmem:[%s365 + $0x5c0] sm:$0xff]
      %v564 = vld [vmem:[%s365 + $0x5c8] sm:$0xff]
      %v565 = vld [vmem:[%s365 + $0x5d0] sm:$0xff]
      %v566 = vld [vmem:[%s365 + $0x5d8] sm:$0xff]
      %v567 = vld [vmem:[%s365 + $0x5e0] sm:$0xff]
      %v568 = vld [vmem:[%s365 + $0x5e8] sm:$0xff]
      %v569 = vld [vmem:[%s365 + $0x5f0] sm:$0xff]
      %v570 = vld [vmem:[%s365 + $0x5f8] sm:$0xff]
      %v571 = vld [vmem:[%s365 + $0x600] sm:$0xff]
      %v572 = vld [vmem:[%s365 + $0x608] sm:$0xff]
      %v573 = vld [vmem:[%s365 + $0x610] sm:$0xff]
      %v574 = vld [vmem:[%s365 + $0x618] sm:$0xff]
      %v575 = vld [vmem:[%s365 + $0x620] sm:$0xff]
      %v576 = vld [vmem:[%s365 + $0x628] sm:$0xff]
      %v577 = vld [vmem:[%s365 + $0x630] sm:$0xff]
      %v578 = vld [vmem:[%s365 + $0x638] sm:$0xff]
      %v579 = vld [vmem:[%s365 + $0x640] sm:$0xff]
      %v580 = vld [vmem:[%s365 + $0x648] sm:$0xff]
      %v581 = vld [vmem:[%s365 + $0x650] sm:$0xff]
      %v582 = vld [vmem:[%s365 + $0x658] sm:$0xff]
      %v583 = vld [vmem:[%s365 + $0x660] sm:$0xff]
      %v584 = vld [vmem:[%s365 + $0x668] sm:$0xff]
      %v585 = vld [vmem:[%s365 + $0x670] sm:$0xff]
      %v586 = vld [vmem:[%s365 + $0x678] sm:$0xff]
      %v587 = vld [vmem:[%s365 + $0x680] sm:$0xff]
      %v588 = vld [vmem:[%s365 + $0x688] sm:$0xff]
      %v589 = vld [vmem:[%s365 + $0x690] sm:$0xff]
      %v590 = vld [vmem:[%s365 + $0x698] sm:$0xff]
      %v591 = vld [vmem:[%s365 + $0x6a0] sm:$0xff]
      %v592 = vld [vmem:[%s365 + $0x6a8] sm:$0xff]
      %v593 = vld [vmem:[%s365 + $0x6b0] sm:$0xff]
      %v594 = vld [vmem:[%s365 + $0x6b8] sm:$0xff]
      %v595 = vld [vmem:[%s365 + $0x6c0] sm:$0xff]
      %v596 = vld [vmem:[%s365 + $0x6c8] sm:$0xff]
      %v597 = vld [vmem:[%s365 + $0x6d0] sm:$0xff]
      %v598 = vld [vmem:[%s365 + $0x6d8] sm:$0xff]
      %v599 = vld [vmem:[%s365 + $0x6e0] sm:$0xff]
      %v600 = vld [vmem:[%s365 + $0x6e8] sm:$0xff]
      %v601 = vld [vmem:[%s365 + $0x6f0] sm:$0xff]
      %v602 = vld [vmem:[%s365 + $0x6f8] sm:$0xff]
      %v603 = vld [vmem:[%s365 + $0x700] sm:$0xff]
      %v604 = vld [vmem:[%s365 + $0x708] sm:$0xff]
      %v605 = vld [vmem:[%s365 + $0x710] sm:$0xff]
      %v606 = vld [vmem:[%s365 + $0x718] sm:$0xff]
      %v607 = vld [vmem:[%s365 + $0x720] sm:$0xff]
      %v608 = vld [vmem:[%s365 + $0x728] sm:$0xff]
      %v609 = vld [vmem:[%s365 + $0x730] sm:$0xff]
      %v610 = vld [vmem:[%s365 + $0x738] sm:$0xff]
      %v611 = vld [vmem:[%s365 + $0x740] sm:$0xff]
      %v612 = vld [vmem:[%s365 + $0x748] sm:$0xff]
      %v613 = vld [vmem:[%s365 + $0x750] sm:$0xff]
      %v614 = vld [vmem:[%s365 + $0x758] sm:$0xff]
      %v615 = vld [vmem:[%s365 + $0x760] sm:$0xff]
      %v616 = vld [vmem:[%s365 + $0x768] sm:$0xff]
      %v617 = vld [vmem:[%s365 + $0x770] sm:$0xff]
      %v618 = vld [vmem:[%s365 + $0x778] sm:$0xff]
      %v619 = vld [vmem:[%s365 + $0x780] sm:$0xff]
      %v620 = vld [vmem:[%s365 + $0x788] sm:$0xff]
      %v621 = vld [vmem:[%s365 + $0x790] sm:$0xff]
      %v622 = vld [vmem:[%s365 + $0x798] sm:$0xff]
      %v623 = vld [vmem:[%s365 + $0x7a0] sm:$0xff]
      %v624 = vld [vmem:[%s365 + $0x7a8] sm:$0xff]
      %v625 = vld [vmem:[%s365 + $0x7b0] sm:$0xff]
      %v626 = vld [vmem:[%s365 + $0x7b8] sm:$0xff]
      %v627 = vld [vmem:[%s365 + $0x7c0] sm:$0xff]
      %v628 = vld [vmem:[%s365 + $0x7c8] sm:$0xff]
      %v629 = vld [vmem:[%s365 + $0x7d0] sm:$0xff]
      %v630 = vld [vmem:[%s365 + $0x7d8] sm:$0xff]
      %v631 = vld [vmem:[%s365 + $0x7e0] sm:$0xff]
      %v632 = vld [vmem:[%s365 + $0x7e8] sm:$0xff]
      %v633 = vld [vmem:[%s365 + $0x7f0] sm:$0xff]
      %v634 = vld [vmem:[%s365 + $0x7f8] sm:$0xff]
      %v635 = vld [vmem:[%s365 + $0x800] sm:$0xff]
      %v636 = vld [vmem:[%s365 + $0x808] sm:$0xff]
      %v637 = vld [vmem:[%s365 + $0x810] sm:$0xff]
      %v638 = vld [vmem:[%s365 + $0x818] sm:$0xff]
      %v639 = vld [vmem:[%s365 + $0x820] sm:$0xff]
      %v640 = vld [vmem:[%s365 + $0x828] sm:$0xff]
      %v641 = vld [vmem:[%s365 + $0x830] sm:$0xff]
      %v642 = vld [vmem:[%s365 + $0x838] sm:$0xff]
      %v643 = vld [vmem:[%s365 + $0x840] sm:$0xff]
      %v644 = vld [vmem:[%s365 + $0x848] sm:$0xff]
      %v645 = vld [vmem:[%s365 + $0x850] sm:$0xff]
      %v646 = vld [vmem:[%s365 + $0x858] sm:$0xff]
      %v647 = vld [vmem:[%s365 + $0x860] sm:$0xff]
      %v648 = vld [vmem:[%s365 + $0x868] sm:$0xff]
      %v649 = vld [vmem:[%s365 + $0x870] sm:$0xff]
      %v650 = vld [vmem:[%s365 + $0x878] sm:$0xff]
      %v651 = vld [vmem:[%s365 + $0x880] sm:$0xff]
      %v652 = vld [vmem:[%s365 + $0x888] sm:$0xff]
      %v653 = vld [vmem:[%s365 + $0x890] sm:$0xff]
      %v654 = vld [vmem:[%s365 + $0x898] sm:$0xff]
      %v655 = vld [vmem:[%s365 + $0x8a0] sm:$0xff]
      %v656 = vld [vmem:[%s365 + $0x8a8] sm:$0xff]
      %v657 = vld [vmem:[%s365 + $0x8b0] sm:$0xff]
      %v658 = vld [vmem:[%s365 + $0x8b8] sm:$0xff]
      %v659 = vld [vmem:[%s365 + $0x8c0] sm:$0xff]
      %v660 = vld [vmem:[%s365 + $0x8c8] sm:$0xff]
      %v661 = vld [vmem:[%s365 + $0x8d0] sm:$0xff]
      %v662 = vld [vmem:[%s365 + $0x8d8] sm:$0xff]
      %v663 = vld [vmem:[%s365 + $0x8e0] sm:$0xff]
      %v664 = vld [vmem:[%s365 + $0x8e8] sm:$0xff]
      %v665 = vld [vmem:[%s365 + $0x8f0] sm:$0xff]
      %v666 = vld [vmem:[%s365 + $0x8f8] sm:$0xff]
      %v667 = vld [vmem:[%s365 + $0x900] sm:$0xff]
      %v668 = vld [vmem:[%s365 + $0x908] sm:$0xff]
      %v669 = vld [vmem:[%s365 + $0x910] sm:$0xff]
      %v670 = vld [vmem:[%s365 + $0x918] sm:$0xff]
      %v671 = vld [vmem:[%s365 + $0x920] sm:$0xff]
      %v672 = vld [vmem:[%s365 + $0x928] sm:$0xff]
      %v673 = vld [vmem:[%s365 + $0x930] sm:$0xff]
      %v674 = vld [vmem:[%s365 + $0x938] sm:$0xff]
      %v675 = vld [vmem:[%s365 + $0x940] sm:$0xff]
      %v676 = vld [vmem:[%s365 + $0x948] sm:$0xff]
      %v677 = vld [vmem:[%s365 + $0x950] sm:$0xff]
      %v678 = vld [vmem:[%s365 + $0x958] sm:$0xff]
      %v679 = vld [vmem:[%s365 + $0x960] sm:$0xff]
      %v680 = vld [vmem:[%s365 + $0x968] sm:$0xff]
      %v681 = vld [vmem:[%s365 + $0x970] sm:$0xff]
      %v682 = vld [vmem:[%s365 + $0x978] sm:$0xff]
      %v683 = vld [vmem:[%s365 + $0x980] sm:$0xff]
      %v684 = vld [vmem:[%s365 + $0x988] sm:$0xff]
      %v685 = vld [vmem:[%s365 + $0x990] sm:$0xff]
      %v686 = vld [vmem:[%s365 + $0x998] sm:$0xff]
      %v687 = vld [vmem:[%s365 + $0x9a0] sm:$0xff]
      %v688 = vld [vmem:[%s365 + $0x9a8] sm:$0xff]
      %v689 = vld [vmem:[%s365 + $0x9b0] sm:$0xff]
      %v690 = vld [vmem:[%s365 + $0x9b8] sm:$0xff]
      %v691 = vld [vmem:[%s365 + $0x9c0] sm:$0xff]
      %v692 = vld [vmem:[%s365 + $0x9c8] sm:$0xff]
      %v693 = vld [vmem:[%s365 + $0x9d0] sm:$0xff]
      %v694 = vld [vmem:[%s365 + $0x9d8] sm:$0xff]
      %v695 = vld [vmem:[%s365 + $0x9e0] sm:$0xff]
      %v696 = vld [vmem:[%s365 + $0x9e8] sm:$0xff]
      %v697 = vld [vmem:[%s365 + $0x9f0] sm:$0xff]
      %v698 = vld [vmem:[%s365 + $0x9f8] sm:$0xff]
      %v699 = vld [vmem:[%s365 + $0xa00] sm:$0xff]
      %v700 = vld [vmem:[%s365 + $0xa08] sm:$0xff]
      %v701 = vld [vmem:[%s365 + $0xa10] sm:$0xff]
      %v702 = vld [vmem:[%s365 + $0xa18] sm:$0xff]
      %v703 = vld [vmem:[%s365 + $0xa20] sm:$0xff]
      %v704 = vld [vmem:[%s365 + $0xa28] sm:$0xff]
      %v705 = vld [vmem:[%s365 + $0xa30] sm:$0xff]
      %v706 = vld [vmem:[%s365 + $0xa38] sm:$0xff]
      %v707 = vld [vmem:[%s365 + $0xa40] sm:$0xff]
      %v708 = vld [vmem:[%s365 + $0xa48] sm:$0xff]
      %v709 = vld [vmem:[%s365 + $0xa50] sm:$0xff]
      %v710 = vld [vmem:[%s365 + $0xa58] sm:$0xff]
      %v711 = vld [vmem:[%s365 + $0xa60] sm:$0xff]
      %v712 = vld [vmem:[%s365 + $0xa68] sm:$0xff]
      %v713 = vld [vmem:[%s365 + $0xa70] sm:$0xff]
      %v714 = vld [vmem:[%s365 + $0xa78] sm:$0xff]
      %v715 = vld [vmem:[%s365 + $0xa80] sm:$0xff]
      %v716 = vld [vmem:[%s365 + $0xa88] sm:$0xff]
      %v717 = vld [vmem:[%s365 + $0xa90] sm:$0xff]
      %v718 = vld [vmem:[%s365 + $0xa98] sm:$0xff]
      %v719 = vld [vmem:[%s365 + $0xaa0] sm:$0xff]
      %v720 = vld [vmem:[%s365 + $0xaa8] sm:$0xff]
      %v721 = vld [vmem:[%s365 + $0xab0] sm:$0xff]
      %v722 = vld [vmem:[%s365 + $0xab8] sm:$0xff]
      %v723 = vld [vmem:[%s365 + $0xac0] sm:$0xff]
      %v724 = vld [vmem:[%s365 + $0xac8] sm:$0xff]
      %v725 = vld [vmem:[%s365 + $0xad0] sm:$0xff]
      %v726 = vld [vmem:[%s365 + $0xad8] sm:$0xff]
      %v727 = vld [vmem:[%s365 + $0xae0] sm:$0xff]
      %v728 = vld [vmem:[%s365 + $0xae8] sm:$0xff]
      %v729 = vld [vmem:[%s365 + $0xaf0] sm:$0xff]
      %v730 = vld [vmem:[%s365 + $0xaf8] sm:$0xff]
      %v731 = vld [vmem:[%s365 + $0xb00] sm:$0xff]
      %v732 = vld [vmem:[%s365 + $0xb08] sm:$0xff]
      %v733 = vld [vmem:[%s365 + $0xb10] sm:$0xff]
      %v734 = vld [vmem:[%s365 + $0xb18] sm:$0xff]
      %v735 = vld [vmem:[%s365 + $0xb20] sm:$0xff]
      %v736 = vld [vmem:[%s365 + $0xb28] sm:$0xff]
      %v737 = vld [vmem:[%s365 + $0xb30] sm:$0xff]
      %v738 = vld [vmem:[%s365 + $0xb38] sm:$0xff]
      %v739 = vld [vmem:[%s365 + $0xb40] sm:$0xff]
      %v740 = vld [vmem:[%s365 + $0xb48] sm:$0xff]
      %v741 = vld [vmem:[%s365 + $0xb50] sm:$0xff]
      %v742 = vld [vmem:[%s365 + $0xb58] sm:$0xff]
      %v743 = vld [vmem:[%s365 + $0xb60] sm:$0xff]
      %v744 = vld [vmem:[%s365 + $0xb68] sm:$0xff]
      %v745 = vld [vmem:[%s365 + $0xb70] sm:$0xff]
      %v746 = vld [vmem:[%s365 + $0xb78] sm:$0xff]
      %v747 = vld [vmem:[%s365 + $0xb80] sm:$0xff]
      %v748 = vld [vmem:[%s365 + $0xb88] sm:$0xff]
      %v749 = vld [vmem:[%s365 + $0xb90] sm:$0xff]
      %v750 = vld [vmem:[%s365 + $0xb98] sm:$0xff]
      %v751 = vld [vmem:[%s365 + $0xba0] sm:$0xff]
      %v752 = vld [vmem:[%s365 + $0xba8] sm:$0xff]
      %v753 = vld [vmem:[%s365 + $0xbb0] sm:$0xff]
      %v754 = vld [vmem:[%s365 + $0xbb8] sm:$0xff]
      %v755 = vld [vmem:[%s365 + $0xbc0] sm:$0xff]
      %v756 = vld [vmem:[%s365 + $0xbc8] sm:$0xff]
      %v757 = vld [vmem:[%s365 + $0xbd0] sm:$0xff]
      %v758 = vld [vmem:[%s365 + $0xbd8] sm:$0xff]
      %v759 = vld [vmem:[%s365 + $0xbe0] sm:$0xff]
      %v760 = vld [vmem:[%s365 + $0xbe8] sm:$0xff]
      %v761 = vld [vmem:[%s365 + $0xbf0] sm:$0xff]
      %v762 = vld [vmem:[%s365 + $0xbf8] sm:$0xff]
      %v763 = vld [vmem:[%s365 + $0xc00] sm:$0xff]
      %v764 = vld [vmem:[%s365 + $0xc08] sm:$0xff]
      %v765 = vld [vmem:[%s365 + $0xc10] sm:$0xff]
      %v766 = vld [vmem:[%s365 + $0xc18] sm:$0xff]
      %v767 = vld [vmem:[%s365 + $0xc20] sm:$0xff]
      %v768 = vld [vmem:[%s365 + $0xc28] sm:$0xff]
      %v769 = vld [vmem:[%s365 + $0xc30] sm:$0xff]
      %v770 = vld [vmem:[%s365 + $0xc38] sm:$0xff]
      %v771 = vld [vmem:[%s365 + $0xc40] sm:$0xff]
      %v772 = vld [vmem:[%s365 + $0xc48] sm:$0xff]
      %v773 = vld [vmem:[%s365 + $0xc50] sm:$0xff]
      %v774 = vld [vmem:[%s365 + $0xc58] sm:$0xff]
      %v775 = vld [vmem:[%s365 + $0xc60] sm:$0xff]
      %v776 = vld [vmem:[%s365 + $0xc68] sm:$0xff]
      %v777 = vld [vmem:[%s365 + $0xc70] sm:$0xff]
      %v778 = vld [vmem:[%s365 + $0xc78] sm:$0xff]
      %v779 = vld [vmem:[%s365 + $0xc80] sm:$0xff]
      %v780 = vld [vmem:[%s365 + $0xc88] sm:$0xff]
      %v781 = vld [vmem:[%s365 + $0xc90] sm:$0xff]
      %v782 = vld [vmem:[%s365 + $0xc98] sm:$0xff]
      %v783 = vld [vmem:[%s365 + $0xca0] sm:$0xff]
      %v784 = vld [vmem:[%s365 + $0xca8] sm:$0xff]
      %v785 = vld [vmem:[%s365 + $0xcb0] sm:$0xff]
      %v786 = vld [vmem:[%s365 + $0xcb8] sm:$0xff]
      %v787 = vld [vmem:[%s365 + $0xcc0] sm:$0xff]
      %v788 = vld [vmem:[%s365 + $0xcc8] sm:$0xff]
      %v789 = vld [vmem:[%s365 + $0xcd0] sm:$0xff]
      %v790 = vld [vmem:[%s365 + $0xcd8] sm:$0xff]
      %v791 = vld [vmem:[%s365 + $0xce0] sm:$0xff]
      %v792 = vld [vmem:[%s365 + $0xce8] sm:$0xff]
      %v793 = vld [vmem:[%s365 + $0xcf0] sm:$0xff]
      %v794 = vld [vmem:[%s365 + $0xcf8] sm:$0xff]
      %v795 = vld [vmem:[%s365 + $0xd00] sm:$0xff]
      %v796 = vld [vmem:[%s365 + $0xd08] sm:$0xff]
      %v797 = vld [vmem:[%s365 + $0xd10] sm:$0xff]
      %v798 = vld [vmem:[%s365 + $0xd18] sm:$0xff]
      %v799 = vld [vmem:[%s365 + $0xd20] sm:$0xff]
      %v800 = vld [vmem:[%s365 + $0xd28] sm:$0xff]
      %v801 = vld [vmem:[%s365 + $0xd30] sm:$0xff]
      %v802 = vld [vmem:[%s365 + $0xd38] sm:$0xff]
      %v803 = vld [vmem:[%s365 + $0xd40] sm:$0xff]
      %v804 = vld [vmem:[%s365 + $0xd48] sm:$0xff]
      %v805 = vld [vmem:[%s365 + $0xd50] sm:$0xff]
      %v806 = vld [vmem:[%s365 + $0xd58] sm:$0xff]
      %v807 = vld [vmem:[%s365 + $0xd60] sm:$0xff]
      %v808 = vld [vmem:[%s365 + $0xd68] sm:$0xff]
      %v809 = vld [vmem:[%s365 + $0xd70] sm:$0xff]
      %v810 = vld [vmem:[%s365 + $0xd78] sm:$0xff]
      %v811 = vld [vmem:[%s365 + $0xd80] sm:$0xff]
      %v812 = vld [vmem:[%s365 + $0xd88] sm:$0xff]
      %v813 = vld [vmem:[%s365 + $0xd90] sm:$0xff]
      %v814 = vld [vmem:[%s365 + $0xd98] sm:$0xff]
      %v815 = vld [vmem:[%s365 + $0xda0] sm:$0xff]
      %v816 = vld [vmem:[%s365 + $0xda8] sm:$0xff]
      %v817 = vld [vmem:[%s365 + $0xdb0] sm:$0xff]
      %v818 = vld [vmem:[%s365 + $0xdb8] sm:$0xff]
      %v819 = vld [vmem:[%s365 + $0xdc0] sm:$0xff]
      %v820 = vld [vmem:[%s365 + $0xdc8] sm:$0xff]
      %v821 = vld [vmem:[%s365 + $0xdd0] sm:$0xff]
      %v822 = vld [vmem:[%s365 + $0xdd8] sm:$0xff]
      %v823 = vld [vmem:[%s365 + $0xde0] sm:$0xff]
      %v824 = vld [vmem:[%s365 + $0xde8] sm:$0xff]
      %v825 = vld [vmem:[%s365 + $0xdf0] sm:$0xff]
      %v826 = vld [vmem:[%s365 + $0xdf8] sm:$0xff]
      %v827 = vld [vmem:[%s365 + $0xe00] sm:$0xff]
      %v828 = vld [vmem:[%s365 + $0xe08] sm:$0xff]
      %v829 = vld [vmem:[%s365 + $0xe10] sm:$0xff]
      %v830 = vld [vmem:[%s365 + $0xe18] sm:$0xff]
      %v831 = vld [vmem:[%s365 + $0xe20] sm:$0xff]
      %v832 = vld [vmem:[%s365 + $0xe28] sm:$0xff]
      %v833 = vld [vmem:[%s365 + $0xe30] sm:$0xff]
      %v834 = vld [vmem:[%s365 + $0xe38] sm:$0xff]
      %v835 = vld [vmem:[%s365 + $0xe40] sm:$0xff]
      %v836 = vld [vmem:[%s365 + $0xe48] sm:$0xff]
      %v837 = vld [vmem:[%s365 + $0xe50] sm:$0xff]
      %v838 = vld [vmem:[%s365 + $0xe58] sm:$0xff]
      %v839 = vld [vmem:[%s365 + $0xe60] sm:$0xff]
      %v840 = vld [vmem:[%s365 + $0xe68] sm:$0xff]
      %v841 = vld [vmem:[%s365 + $0xe70] sm:$0xff]
      %v842 = vld [vmem:[%s365 + $0xe78] sm:$0xff]
      %v843 = vld [vmem:[%s365 + $0xe80] sm:$0xff]
      %v844 = vld [vmem:[%s365 + $0xe88] sm:$0xff]
      %v845 = vld [vmem:[%s365 + $0xe90] sm:$0xff]
      %v846 = vld [vmem:[%s365 + $0xe98] sm:$0xff]
      %v847 = vld [vmem:[%s365 + $0xea0] sm:$0xff]
      %v848 = vld [vmem:[%s365 + $0xea8] sm:$0xff]
      %v849 = vld [vmem:[%s365 + $0xeb0] sm:$0xff]
      %v850 = vld [vmem:[%s365 + $0xeb8] sm:$0xff]
      %v851 = vld [vmem:[%s365 + $0xec0] sm:$0xff]
      %v852 = vld [vmem:[%s365 + $0xec8] sm:$0xff]
      %v853 = vld [vmem:[%s365 + $0xed0] sm:$0xff]
      %v854 = vld [vmem:[%s365 + $0xed8] sm:$0xff]
      %v855 = vld [vmem:[%s365 + $0xee0] sm:$0xff]
      %v856 = vld [vmem:[%s365 + $0xee8] sm:$0xff]
      %v857 = vld [vmem:[%s365 + $0xef0] sm:$0xff]
      %v858 = vld [vmem:[%s365 + $0xef8] sm:$0xff]
      %v859 = vld [vmem:[%s365 + $0xf00] sm:$0xff]
      %v860 = vld [vmem:[%s365 + $0xf08] sm:$0xff]
      %v861 = vld [vmem:[%s365 + $0xf10] sm:$0xff]
      %v862 = vld [vmem:[%s365 + $0xf18] sm:$0xff]
      %v863 = vld [vmem:[%s365 + $0xf20] sm:$0xff]
      %v864 = vld [vmem:[%s365 + $0xf28] sm:$0xff]
      %v865 = vld [vmem:[%s365 + $0xf30] sm:$0xff]
      %v866 = vld [vmem:[%s365 + $0xf38] sm:$0xff]
      %v867 = vld [vmem:[%s365 + $0xf40] sm:$0xff]
      %v868 = vld [vmem:[%s365 + $0xf48] sm:$0xff]
      %v869 = vld [vmem:[%s365 + $0xf50] sm:$0xff]
      %v870 = vld [vmem:[%s365 + $0xf58] sm:$0xff]
      %v871 = vld [vmem:[%s365 + $0xf60] sm:$0xff]
      %v872 = vld [vmem:[%s365 + $0xf68] sm:$0xff]
      %v873 = vld [vmem:[%s365 + $0xf70] sm:$0xff]
      %v874 = vld [vmem:[%s365 + $0xf78] sm:$0xff]
      %v875 = vld [vmem:[%s365 + $0xf80] sm:$0xff]
      %v876 = vld [vmem:[%s365 + $0xf88] sm:$0xff]
      %v877 = vld [vmem:[%s365 + $0xf90] sm:$0xff]
      %v878 = vld [vmem:[%s365 + $0xf98] sm:$0xff]
      %v879 = vld [vmem:[%s365 + $0xfa0] sm:$0xff]
      %v880 = vld [vmem:[%s365 + $0xfa8] sm:$0xff]
      %v881 = vld [vmem:[%s365 + $0xfb0] sm:$0xff]
      %v882 = vld [vmem:[%s365 + $0xfb8] sm:$0xff]
      %v883 = vld [vmem:[%s365 + $0xfc0] sm:$0xff]
      %v884 = vld [vmem:[%s365 + $0xfc8] sm:$0xff]
      %v885 = vld [vmem:[%s365 + $0xfd0] sm:$0xff]
      %v886 = vld [vmem:[%s365 + $0xfd8] sm:$0xff]
      %v887 = vld [vmem:[%s365 + $0xfe0] sm:$0xff]
      %v888 = vld [vmem:[%s365 + $0xfe8] sm:$0xff]
      %v889 = vld [vmem:[%s365 + $0xff0] sm:$0xff]
      %v890 = vld [vmem:[%s365 + $0xff8] sm:$0xff]
      %v891 = vld [vmem:[%s365 + $0x1000] sm:$0xff]
      %v892 = vld [vmem:[%s365 + $0x1008] sm:$0xff]
      %v893 = vld [vmem:[%s365 + $0x1010] sm:$0xff]
      %v894 = vld [vmem:[%s365 + $0x1018] sm:$0xff]
      %v895 = vld [vmem:[%s365 + $0x1020] sm:$0xff]
      %v896 = vld [vmem:[%s365 + $0x1028] sm:$0xff]
      %v897 = vld [vmem:[%s365 + $0x1030] sm:$0xff]
      %v898 = vld [vmem:[%s365 + $0x1038] sm:$0xff]
      %v899 = vld [vmem:[%s365 + $0x1040] sm:$0xff]
      %v900 = vld [vmem:[%s365 + $0x1048] sm:$0xff]
      %v901 = vld [vmem:[%s365 + $0x1050] sm:$0xff]
      %v902 = vld [vmem:[%s365 + $0x1058] sm:$0xff]
      %v903 = vld [vmem:[%s365 + $0x1060] sm:$0xff]
      %v904 = vld [vmem:[%s365 + $0x1068] sm:$0xff]
      %v905 = vld [vmem:[%s365 + $0x1070] sm:$0xff]
      %v906 = vld [vmem:[%s365 + $0x1078] sm:$0xff]
      %v907 = vld [vmem:[%s365 + $0x1080] sm:$0xff]
      %v908 = vld [vmem:[%s365 + $0x1088] sm:$0xff]
      %v909 = vld [vmem:[%s365 + $0x1090] sm:$0xff]
      %v910 = vld [vmem:[%s365 + $0x1098] sm:$0xff]
      %v911 = vld [vmem:[%s365 + $0x10a0] sm:$0xff]
      %v912 = vld [vmem:[%s365 + $0x10a8] sm:$0xff]
      %v913 = vld [vmem:[%s365 + $0x10b0] sm:$0xff]
      %v914 = vld [vmem:[%s365 + $0x10b8] sm:$0xff]
      %v915 = vld [vmem:[%s365 + $0x10c0] sm:$0xff]
      %v916 = vld [vmem:[%s365 + $0x10c8] sm:$0xff]
      %v917 = vld [vmem:[%s365 + $0x10d0] sm:$0xff]
      %v918 = vld [vmem:[%s365 + $0x10d8] sm:$0xff]
      %v919 = vld [vmem:[%s365 + $0x10e0] sm:$0xff]
      %v920 = vld [vmem:[%s365 + $0x10e8] sm:$0xff]
      %v921 = vld [vmem:[%s365 + $0x10f0] sm:$0xff]
      %v922 = vld [vmem:[%s365 + $0x10f8] sm:$0xff]
      %v923 = vld [vmem:[%s365 + $0x1100] sm:$0xff]
      %v924 = vld [vmem:[%s365 + $0x1108] sm:$0xff]
      %v925 = vld [vmem:[%s365 + $0x1110] sm:$0xff]
      %v926 = vld [vmem:[%s365 + $0x1118] sm:$0xff]
      %v927 = vld [vmem:[%s365 + $0x1120] sm:$0xff]
      %v928 = vld [vmem:[%s365 + $0x1128] sm:$0xff]
      %v929 = vld [vmem:[%s365 + $0x1130] sm:$0xff]
      %v930 = vld [vmem:[%s365 + $0x1138] sm:$0xff]
      %v931 = vld [vmem:[%s365 + $0x1140] sm:$0xff]
      %v932 = vld [vmem:[%s365 + $0x1148] sm:$0xff]
      %v933 = vld [vmem:[%s365 + $0x1150] sm:$0xff]
      %v934 = vld [vmem:[%s365 + $0x1158] sm:$0xff]
      %v935 = vld [vmem:[%s365 + $0x1160] sm:$0xff]
      %v936 = vld [vmem:[%s365 + $0x1168] sm:$0xff]
      %v937 = vld [vmem:[%s365 + $0x1170] sm:$0xff]
      %v938 = vld [vmem:[%s365 + $0x1178] sm:$0xff]
      %v939 = vld [vmem:[%s365 + $0x1180] sm:$0xff]
      %v940 = vld [vmem:[%s365 + $0x1188] sm:$0xff]
      %v941 = vld [vmem:[%s365 + $0x1190] sm:$0xff]
      %v942 = vld [vmem:[%s365 + $0x1198] sm:$0xff]
      %v943 = vld [vmem:[%s365 + $0x11a0] sm:$0xff]
      %v944 = vld [vmem:[%s365 + $0x11a8] sm:$0xff]
      %v945 = vld [vmem:[%s365 + $0x11b0] sm:$0xff]
      %v946 = vld [vmem:[%s365 + $0x11b8] sm:$0xff]
      %v947 = vld [vmem:[%s365 + $0x11c0] sm:$0xff]
      %v948 = vld [vmem:[%s365 + $0x11c8] sm:$0xff]
      %v949 = vld [vmem:[%s365 + $0x11d0] sm:$0xff]
      %v950 = vld [vmem:[%s365 + $0x11d8] sm:$0xff]
      %v951 = vld [vmem:[%s365 + $0x11e0] sm:$0xff]
      %v952 = vld [vmem:[%s365 + $0x11e8] sm:$0xff]
      %v953 = vld [vmem:[%s365 + $0x11f0] sm:$0xff]
      %v954 = vld [vmem:[%s365 + $0x11f8] sm:$0xff]
      %v960 = vcombine.high %v374, %v374
      %v962 = vunpack.c.l.s4 1966171168
      %v963 = vunpack.c.0.s8 %v962
      %v964 = vlaneseq
      %v965 = vshrl.u32 %v964, 7
      %v966 = vsub.s32 %v963, %v965
      %v967 = vrot.slane %v374, %v966
      %v969 = vunpack.c.l.s4 1966171168
      %v970 = vunpack.c.0.s8 %v969
      %v971 = vlaneseq
      %v972 = vshrl.u32 %v971, 7
      %v973 = vsub.s32 %v970, %v972
      %v974 = vrot.slane %v960, %v973
      %v975 = vcombine.high %v967, %v967
      %v976 = vcombine.high %v974, %v974
      %v978 = vunpack.c.l.s4 1966171168
      %v979 = vunpack.c.0.s8 %v978
      %v980 = vlaneseq
      %v981 = vshrl.u32 %v980, 7
      %v982 = vsub.s32 %v979, %v981
      %v983 = vrot.slane %v967, %v982
      %v985 = vunpack.c.l.s4 1966171168
      %v986 = vunpack.c.0.s8 %v985
      %v987 = vlaneseq
      %v988 = vshrl.u32 %v987, 7
      %v989 = vsub.s32 %v986, %v988
      %v990 = vrot.slane %v974, %v989
      %v992 = vunpack.c.l.s4 1966171168
      %v993 = vunpack.c.0.s8 %v992
      %v994 = vlaneseq
      %v995 = vshrl.u32 %v994, 7
      %v996 = vsub.s32 %v993, %v995
      %v997 = vrot.slane %v975, %v996
      %v999 = vunpack.c.l.s4 1966171168
      %v1000 = vunpack.c.0.s8 %v999
      %v1001 = vlaneseq
      %v1002 = vshrl.u32 %v1001, 7
      %v1003 = vsub.s32 %v1000, %v1002
      %v1004 = vrot.slane %v976, %v1003
      %v1005 = vcombine.high %v983, %v983
      %v1006 = vcombine.high %v990, %v990
      %v1007 = vcombine.high %v997, %v997
      %v1008 = vcombine.high %v1004, %v1004
      %v1009 = vcombine.high %v375, %v375
      %v1011 = vunpack.c.l.s4 1966171168
      %v1012 = vunpack.c.0.s8 %v1011
      %v1013 = vlaneseq
      %v1014 = vshrl.u32 %v1013, 7
      %v1015 = vsub.s32 %v1012, %v1014
      %v1016 = vrot.slane %v375, %v1015
      %v1018 = vunpack.c.l.s4 1966171168
      %v1019 = vunpack.c.0.s8 %v1018
      %v1020 = vlaneseq
      %v1021 = vshrl.u32 %v1020, 7
      %v1022 = vsub.s32 %v1019, %v1021
      %v1023 = vrot.slane %v1009, %v1022
      %v1024 = vcombine.high %v1016, %v1016
      %v1025 = vcombine.high %v1023, %v1023
      %v1027 = vunpack.c.l.s4 1966171168
      %v1028 = vunpack.c.0.s8 %v1027
      %v1029 = vlaneseq
      %v1030 = vshrl.u32 %v1029, 7
      %v1031 = vsub.s32 %v1028, %v1030
      %v1032 = vrot.slane %v1016, %v1031
      %v1034 = vunpack.c.l.s4 1966171168
      %v1035 = vunpack.c.0.s8 %v1034
      %v1036 = vlaneseq
      %v1037 = vshrl.u32 %v1036, 7
      %v1038 = vsub.s32 %v1035, %v1037
      %v1039 = vrot.slane %v1023, %v1038
      %v1041 = vunpack.c.l.s4 1966171168
      %v1042 = vunpack.c.0.s8 %v1041
      %v1043 = vlaneseq
      %v1044 = vshrl.u32 %v1043, 7
      %v1045 = vsub.s32 %v1042, %v1044
      %v1046 = vrot.slane %v1024, %v1045
      %v1048 = vunpack.c.l.s4 1966171168
      %v1049 = vunpack.c.0.s8 %v1048
      %v1050 = vlaneseq
      %v1051 = vshrl.u32 %v1050, 7
      %v1052 = vsub.s32 %v1049, %v1051
      %v1053 = vrot.slane %v1025, %v1052
      %v1054 = vcombine.high %v1032, %v1032
      %v1055 = vcombine.high %v1039, %v1039
      %v1056 = vcombine.high %v1046, %v1046
      %v1057 = vcombine.high %v1053, %v1053
      %v1058 = vcombine.high %v376, %v376
      %v1060 = vunpack.c.l.s4 1966171168
      %v1061 = vunpack.c.0.s8 %v1060
      %v1062 = vlaneseq
      %v1063 = vshrl.u32 %v1062, 7
      %v1064 = vsub.s32 %v1061, %v1063
      %v1065 = vrot.slane %v376, %v1064
      %v1067 = vunpack.c.l.s4 1966171168
      %v1068 = vunpack.c.0.s8 %v1067
      %v1069 = vlaneseq
      %v1070 = vshrl.u32 %v1069, 7
      %v1071 = vsub.s32 %v1068, %v1070
      %v1072 = vrot.slane %v1058, %v1071
      %v1073 = vcombine.high %v1065, %v1065
      %v1074 = vcombine.high %v1072, %v1072
      %v1076 = vunpack.c.l.s4 1966171168
      %v1077 = vunpack.c.0.s8 %v1076
      %v1078 = vlaneseq
      %v1079 = vshrl.u32 %v1078, 7
      %v1080 = vsub.s32 %v1077, %v1079
      %v1081 = vrot.slane %v1065, %v1080
      %v1083 = vunpack.c.l.s4 1966171168
      %v1084 = vunpack.c.0.s8 %v1083
      %v1085 = vlaneseq
      %v1086 = vshrl.u32 %v1085, 7
      %v1087 = vsub.s32 %v1084, %v1086
      %v1088 = vrot.slane %v1072, %v1087
      %v1090 = vunpack.c.l.s4 1966171168
      %v1091 = vunpack.c.0.s8 %v1090
      %v1092 = vlaneseq
      %v1093 = vshrl.u32 %v1092, 7
      %v1094 = vsub.s32 %v1091, %v1093
      %v1095 = vrot.slane %v1073, %v1094
      %v1097 = vunpack.c.l.s4 1966171168
      %v1098 = vunpack.c.0.s8 %v1097
      %v1099 = vlaneseq
      %v1100 = vshrl.u32 %v1099, 7
      %v1101 = vsub.s32 %v1098, %v1100
      %v1102 = vrot.slane %v1074, %v1101
      %v1103 = vcombine.high %v1081, %v1081
      %v1104 = vcombine.high %v1088, %v1088
      %v1105 = vcombine.high %v1095, %v1095
      %v1106 = vcombine.high %v1102, %v1102
      %v1107 = vcombine.high %v377, %v377
      %v1109 = vunpack.c.l.s4 1966171168
      %v1110 = vunpack.c.0.s8 %v1109
      %v1111 = vlaneseq
      %v1112 = vshrl.u32 %v1111, 7
      %v1113 = vsub.s32 %v1110, %v1112
      %v1114 = vrot.slane %v377, %v1113
      %v1116 = vunpack.c.l.s4 1966171168
      %v1117 = vunpack.c.0.s8 %v1116
      %v1118 = vlaneseq
      %v1119 = vshrl.u32 %v1118, 7
      %v1120 = vsub.s32 %v1117, %v1119
      %v1121 = vrot.slane %v1107, %v1120
      %v1122 = vcombine.high %v1114, %v1114
      %v1123 = vcombine.high %v1121, %v1121
      %v1125 = vunpack.c.l.s4 1966171168
      %v1126 = vunpack.c.0.s8 %v1125
      %v1127 = vlaneseq
      %v1128 = vshrl.u32 %v1127, 7
      %v1129 = vsub.s32 %v1126, %v1128
      %v1130 = vrot.slane %v1114, %v1129
      %v1132 = vunpack.c.l.s4 1966171168
      %v1133 = vunpack.c.0.s8 %v1132
      %v1134 = vlaneseq
      %v1135 = vshrl.u32 %v1134, 7
      %v1136 = vsub.s32 %v1133, %v1135
      %v1137 = vrot.slane %v1121, %v1136
      %v1139 = vunpack.c.l.s4 1966171168
      %v1140 = vunpack.c.0.s8 %v1139
      %v1141 = vlaneseq
      %v1142 = vshrl.u32 %v1141, 7
      %v1143 = vsub.s32 %v1140, %v1142
      %v1144 = vrot.slane %v1122, %v1143
      %v1146 = vunpack.c.l.s4 1966171168
      %v1147 = vunpack.c.0.s8 %v1146
      %v1148 = vlaneseq
      %v1149 = vshrl.u32 %v1148, 7
      %v1150 = vsub.s32 %v1147, %v1149
      %v1151 = vrot.slane %v1123, %v1150
      %v1152 = vcombine.high %v1130, %v1130
      %v1153 = vcombine.high %v1137, %v1137
      %v1154 = vcombine.high %v1144, %v1144
      %v1155 = vcombine.high %v1151, %v1151
      %v1157 = vunpack.c.l.s4 1966171168
      %v1158 = vunpack.c.0.s8 %v1157
      %v1159 = vlaneseq
      %v1160 = vshrl.u32 %v1159, 7
      %v1161 = vsub.s32 %v1158, %v1160
      %v1162 = vrot.slane %v378, %v1161
      %v1163 = vcombine.high %v1162, %v1162
      %v1165 = vunpack.c.l.s4 1966171168
      %v1166 = vunpack.c.0.s8 %v1165
      %v1167 = vlaneseq
      %v1168 = vshrl.u32 %v1167, 7
      %v1169 = vsub.s32 %v1166, %v1168
      %v1170 = vrot.slane %v1162, %v1169
      %v1172 = vunpack.c.l.s4 1966171168
      %v1173 = vunpack.c.0.s8 %v1172
      %v1174 = vlaneseq
      %v1175 = vshrl.u32 %v1174, 7
      %v1176 = vsub.s32 %v1173, %v1175
      %v1177 = vrot.slane %v1163, %v1176
      %v1178 = vcombine.high %v1170, %v1170
      %v1179 = vcombine.high %v1177, %v1177
      %v1792 = vunpack.c.l.b16 %v379
      %v1793 = vunpack.c.h.b16 %v379
      %v1794 = vunpack.c.l.b16 %v380
      %v1795 = vunpack.c.h.b16 %v380
      %v1796 = vunpack.c.l.b16 %v381
      %v1797 = vunpack.c.h.b16 %v381
      %v1798 = vunpack.c.l.b16 %v382
      %v1799 = vunpack.c.h.b16 %v382
      %v1800 = vunpack.c.l.b16 %v383
      %v1801 = vunpack.c.h.b16 %v383
      %v1802 = vunpack.c.l.b16 %v384
      %v1803 = vunpack.c.h.b16 %v384
      %v1804 = vunpack.c.l.b16 %v385
      %v1805 = vunpack.c.h.b16 %v385
      %v1806 = vunpack.c.l.b16 %v386
      %v1807 = vunpack.c.h.b16 %v386
      %v1808 = vunpack.c.l.b16 %v387
      %v1809 = vunpack.c.h.b16 %v387
      %v1810 = vunpack.c.l.b16 %v388
      %v1811 = vunpack.c.h.b16 %v388
      %v1812 = vunpack.c.l.b16 %v389
      %v1813 = vunpack.c.h.b16 %v389
      %v1814 = vunpack.c.l.b16 %v390
      %v1815 = vunpack.c.h.b16 %v390
      %v1816 = vunpack.c.l.b16 %v391
      %v1817 = vunpack.c.h.b16 %v391
      %v1818 = vunpack.c.l.b16 %v392
      %v1819 = vunpack.c.h.b16 %v392
      %v1820 = vunpack.c.l.b16 %v393
      %v1821 = vunpack.c.h.b16 %v393
      %v1822 = vunpack.c.l.b16 %v394
      %v1823 = vunpack.c.h.b16 %v394
      %v1824 = vunpack.c.l.b16 %v395
      %v1825 = vunpack.c.h.b16 %v395
      %v1826 = vunpack.c.l.b16 %v396
      %v1827 = vunpack.c.h.b16 %v396
      %v1828 = vunpack.c.l.b16 %v397
      %v1829 = vunpack.c.h.b16 %v397
      %v1830 = vunpack.c.l.b16 %v398
      %v1831 = vunpack.c.h.b16 %v398
      %v1832 = vunpack.c.l.b16 %v399
      %v1833 = vunpack.c.h.b16 %v399
      %v1834 = vunpack.c.l.b16 %v400
      %v1835 = vunpack.c.h.b16 %v400
      %v1836 = vunpack.c.l.b16 %v401
      %v1837 = vunpack.c.h.b16 %v401
      %v1838 = vunpack.c.l.b16 %v402
      %v1839 = vunpack.c.h.b16 %v402
      %v1840 = vunpack.c.l.b16 %v403
      %v1841 = vunpack.c.h.b16 %v403
      %v1842 = vunpack.c.l.b16 %v404
      %v1843 = vunpack.c.h.b16 %v404
      %v1844 = vunpack.c.l.b16 %v405
      %v1845 = vunpack.c.h.b16 %v405
      %v1846 = vunpack.c.l.b16 %v406
      %v1847 = vunpack.c.h.b16 %v406
      %v1848 = vunpack.c.l.b16 %v407
      %v1849 = vunpack.c.h.b16 %v407
      %v1850 = vunpack.c.l.b16 %v408
      %v1851 = vunpack.c.h.b16 %v408
      %v1852 = vunpack.c.l.b16 %v409
      %v1853 = vunpack.c.h.b16 %v409
      %v1854 = vunpack.c.l.b16 %v410
      %v1855 = vunpack.c.h.b16 %v410
      %v1856 = vunpack.c.l.b16 %v411
      %v1857 = vunpack.c.h.b16 %v411
      %v1858 = vunpack.c.l.b16 %v412
      %v1859 = vunpack.c.h.b16 %v412
      %v1860 = vunpack.c.l.b16 %v413
      %v1861 = vunpack.c.h.b16 %v413
      %v1862 = vunpack.c.l.b16 %v414
      %v1863 = vunpack.c.h.b16 %v414
      %v1864 = vunpack.c.l.b16 %v415
      %v1865 = vunpack.c.h.b16 %v415
      %v1866 = vunpack.c.l.b16 %v416
      %v1867 = vunpack.c.h.b16 %v416
      %v1868 = vunpack.c.l.b16 %v417
      %v1869 = vunpack.c.h.b16 %v417
      %v1870 = vunpack.c.l.b16 %v418
      %v1871 = vunpack.c.h.b16 %v418
      %v1872 = vunpack.c.l.b16 %v419
      %v1873 = vunpack.c.h.b16 %v419
      %v1874 = vunpack.c.l.b16 %v420
      %v1875 = vunpack.c.h.b16 %v420
      %v1876 = vunpack.c.l.b16 %v421
      %v1877 = vunpack.c.h.b16 %v421
      %v1878 = vunpack.c.l.b16 %v422
      %v1879 = vunpack.c.h.b16 %v422
      %v1880 = vunpack.c.l.b16 %v423
      %v1881 = vunpack.c.h.b16 %v423
      %v1882 = vunpack.c.l.b16 %v424
      %v1883 = vunpack.c.h.b16 %v424
      %v1884 = vunpack.c.l.b16 %v425
      %v1885 = vunpack.c.h.b16 %v425
      %v1886 = vunpack.c.l.b16 %v426
      %v1887 = vunpack.c.h.b16 %v426
      %v1888 = vunpack.c.l.b16 %v427
      %v1889 = vunpack.c.h.b16 %v427
      %v1890 = vunpack.c.l.b16 %v428
      %v1891 = vunpack.c.h.b16 %v428
      %v1892 = vunpack.c.l.b16 %v429
      %v1893 = vunpack.c.h.b16 %v429
      %v1894 = vunpack.c.l.b16 %v430
      %v1895 = vunpack.c.h.b16 %v430
      %v1896 = vunpack.c.l.b16 %v431
      %v1897 = vunpack.c.h.b16 %v431
      %v1898 = vunpack.c.l.b16 %v432
      %v1899 = vunpack.c.h.b16 %v432
      %v1900 = vunpack.c.l.b16 %v433
      %v1901 = vunpack.c.h.b16 %v433
      %v1902 = vunpack.c.l.b16 %v434
      %v1903 = vunpack.c.h.b16 %v434
      %v1904 = vunpack.c.l.b16 %v435
      %v1905 = vunpack.c.h.b16 %v435
      %v1906 = vunpack.c.l.b16 %v436
      %v1907 = vunpack.c.h.b16 %v436
      %v1908 = vunpack.c.l.b16 %v437
      %v1909 = vunpack.c.h.b16 %v437
      %v1910 = vunpack.c.l.b16 %v438
      %v1911 = vunpack.c.h.b16 %v438
      %v1912 = vunpack.c.l.b16 %v439
      %v1913 = vunpack.c.h.b16 %v439
      %v1914 = vunpack.c.l.b16 %v440
      %v1915 = vunpack.c.h.b16 %v440
      %v1916 = vunpack.c.l.b16 %v441
      %v1917 = vunpack.c.h.b16 %v441
      %v1918 = vunpack.c.l.b16 %v442
      %v1919 = vunpack.c.h.b16 %v442
      %v1920 = vunpack.c.l.b16 %v443
      %v1921 = vunpack.c.h.b16 %v443
      %v1922 = vunpack.c.l.b16 %v444
      %v1923 = vunpack.c.h.b16 %v444
      %v1924 = vunpack.c.l.b16 %v445
      %v1925 = vunpack.c.h.b16 %v445
      %v1926 = vunpack.c.l.b16 %v446
      %v1927 = vunpack.c.h.b16 %v446
      %v1928 = vunpack.c.l.b16 %v447
      %v1929 = vunpack.c.h.b16 %v447
      %v1930 = vunpack.c.l.b16 %v448
      %v1931 = vunpack.c.h.b16 %v448
      %v1932 = vunpack.c.l.b16 %v449
      %v1933 = vunpack.c.h.b16 %v449
      %v1934 = vunpack.c.l.b16 %v450
      %v1935 = vunpack.c.h.b16 %v450
      %v1936 = vunpack.c.l.b16 %v451
      %v1937 = vunpack.c.h.b16 %v451
      %v1938 = vunpack.c.l.b16 %v452
      %v1939 = vunpack.c.h.b16 %v452
      %v1940 = vunpack.c.l.b16 %v453
      %v1941 = vunpack.c.h.b16 %v453
      %v1942 = vunpack.c.l.b16 %v454
      %v1943 = vunpack.c.h.b16 %v454
      %v1944 = vunpack.c.l.b16 %v455
      %v1945 = vunpack.c.h.b16 %v455
      %v1946 = vunpack.c.l.b16 %v456
      %v1947 = vunpack.c.h.b16 %v456
      %v1948 = vunpack.c.l.b16 %v457
      %v1949 = vunpack.c.h.b16 %v457
      %v1950 = vunpack.c.l.b16 %v458
      %v1951 = vunpack.c.h.b16 %v458
      %v1952 = vunpack.c.l.b16 %v459
      %v1953 = vunpack.c.h.b16 %v459
      %v1954 = vunpack.c.l.b16 %v460
      %v1955 = vunpack.c.h.b16 %v460
      %v1956 = vunpack.c.l.b16 %v461
      %v1957 = vunpack.c.h.b16 %v461
      %v1958 = vunpack.c.l.b16 %v462
      %v1959 = vunpack.c.h.b16 %v462
      %v1960 = vunpack.c.l.b16 %v463
      %v1961 = vunpack.c.h.b16 %v463
      %v1962 = vunpack.c.l.b16 %v464
      %v1963 = vunpack.c.h.b16 %v464
      %v1964 = vunpack.c.l.b16 %v465
      %v1965 = vunpack.c.h.b16 %v465
      %v1966 = vunpack.c.l.b16 %v466
      %v1967 = vunpack.c.h.b16 %v466
      %v1968 = vunpack.c.l.b16 %v467
      %v1969 = vunpack.c.h.b16 %v467
      %v1970 = vunpack.c.l.b16 %v468
      %v1971 = vunpack.c.h.b16 %v468
      %v1972 = vunpack.c.l.b16 %v469
      %v1973 = vunpack.c.h.b16 %v469
      %v1974 = vunpack.c.l.b16 %v470
      %v1975 = vunpack.c.h.b16 %v470
      %v1976 = vunpack.c.l.b16 %v471
      %v1977 = vunpack.c.h.b16 %v471
      %v1978 = vunpack.c.l.b16 %v472
      %v1979 = vunpack.c.h.b16 %v472
      %v1980 = vunpack.c.l.b16 %v473
      %v1981 = vunpack.c.h.b16 %v473
      %v1982 = vunpack.c.l.b16 %v474
      %v1983 = vunpack.c.h.b16 %v474
      %v1984 = vunpack.c.l.b16 %v475
      %v1985 = vunpack.c.h.b16 %v475
      %v1986 = vunpack.c.l.b16 %v476
      %v1987 = vunpack.c.h.b16 %v476
      %v1988 = vunpack.c.l.b16 %v477
      %v1989 = vunpack.c.h.b16 %v477
      %v1990 = vunpack.c.l.b16 %v478
      %v1991 = vunpack.c.h.b16 %v478
      %v1992 = vunpack.c.l.b16 %v479
      %v1993 = vunpack.c.h.b16 %v479
      %v1994 = vunpack.c.l.b16 %v480
      %v1995 = vunpack.c.h.b16 %v480
      %v1996 = vunpack.c.l.b16 %v481
      %v1997 = vunpack.c.h.b16 %v481
      %v1998 = vunpack.c.l.b16 %v482
      %v1999 = vunpack.c.h.b16 %v482
      %v2000 = vunpack.c.l.b16 %v483
      %v2001 = vunpack.c.h.b16 %v483
      %v2002 = vunpack.c.l.b16 %v484
      %v2003 = vunpack.c.h.b16 %v484
      %v2004 = vunpack.c.l.b16 %v485
      %v2005 = vunpack.c.h.b16 %v485
      %v2006 = vunpack.c.l.b16 %v486
      %v2007 = vunpack.c.h.b16 %v486
      %v2008 = vunpack.c.l.b16 %v487
      %v2009 = vunpack.c.h.b16 %v487
      %v2010 = vunpack.c.l.b16 %v488
      %v2011 = vunpack.c.h.b16 %v488
      %v2012 = vunpack.c.l.b16 %v489
      %v2013 = vunpack.c.h.b16 %v489
      %v2014 = vunpack.c.l.b16 %v490
      %v2015 = vunpack.c.h.b16 %v490
      %v2016 = vunpack.c.l.b16 %v491
      %v2017 = vunpack.c.h.b16 %v491
      %v2018 = vunpack.c.l.b16 %v492
      %v2019 = vunpack.c.h.b16 %v492
      %v2020 = vunpack.c.l.b16 %v493
      %v2021 = vunpack.c.h.b16 %v493
      %v2022 = vunpack.c.l.b16 %v494
      %v2023 = vunpack.c.h.b16 %v494
      %v2024 = vunpack.c.l.b16 %v495
      %v2025 = vunpack.c.h.b16 %v495
      %v2026 = vunpack.c.l.b16 %v496
      %v2027 = vunpack.c.h.b16 %v496
      %v2028 = vunpack.c.l.b16 %v497
      %v2029 = vunpack.c.h.b16 %v497
      %v2030 = vunpack.c.l.b16 %v498
      %v2031 = vunpack.c.h.b16 %v498
      %v2032 = vunpack.c.l.b16 %v499
      %v2033 = vunpack.c.h.b16 %v499
      %v2034 = vunpack.c.l.b16 %v500
      %v2035 = vunpack.c.h.b16 %v500
      %v2036 = vunpack.c.l.b16 %v501
      %v2037 = vunpack.c.h.b16 %v501
      %v2038 = vunpack.c.l.b16 %v502
      %v2039 = vunpack.c.h.b16 %v502
      %v2040 = vunpack.c.l.b16 %v503
      %v2041 = vunpack.c.h.b16 %v503
      %v2042 = vunpack.c.l.b16 %v504
      %v2043 = vunpack.c.h.b16 %v504
      %v2044 = vunpack.c.l.b16 %v505
      %v2045 = vunpack.c.h.b16 %v505
      %v2046 = vunpack.c.l.b16 %v506
      %v2047 = vunpack.c.h.b16 %v506
      %v2048 = vunpack.c.l.b16 %v507
      %v2049 = vunpack.c.h.b16 %v507
      %v2050 = vunpack.c.l.b16 %v508
      %v2051 = vunpack.c.h.b16 %v508
      %v2052 = vunpack.c.l.b16 %v509
      %v2053 = vunpack.c.h.b16 %v509
      %v2054 = vunpack.c.l.b16 %v510
      %v2055 = vunpack.c.h.b16 %v510
      %v2056 = vunpack.c.l.b16 %v511
      %v2057 = vunpack.c.h.b16 %v511
      %v2058 = vunpack.c.l.b16 %v512
      %v2059 = vunpack.c.h.b16 %v512
      %v2060 = vunpack.c.l.b16 %v513
      %v2061 = vunpack.c.h.b16 %v513
      %v2062 = vunpack.c.l.b16 %v514
      %v2063 = vunpack.c.h.b16 %v514
      %v2064 = vunpack.c.l.b16 %v515
      %v2065 = vunpack.c.h.b16 %v515
      %v2066 = vunpack.c.l.b16 %v516
      %v2067 = vunpack.c.h.b16 %v516
      %v2068 = vunpack.c.l.b16 %v517
      %v2069 = vunpack.c.h.b16 %v517
      %v2070 = vunpack.c.l.b16 %v518
      %v2071 = vunpack.c.h.b16 %v518
      %v2072 = vunpack.c.l.b16 %v519
      %v2073 = vunpack.c.h.b16 %v519
      %v2074 = vunpack.c.l.b16 %v520
      %v2075 = vunpack.c.h.b16 %v520
      %v2076 = vunpack.c.l.b16 %v521
      %v2077 = vunpack.c.h.b16 %v521
      %v2078 = vunpack.c.l.b16 %v522
      %v2079 = vunpack.c.h.b16 %v522
      %v2080 = vunpack.c.l.b16 %v523
      %v2081 = vunpack.c.h.b16 %v523
      %v2082 = vunpack.c.l.b16 %v524
      %v2083 = vunpack.c.h.b16 %v524
      %v2084 = vunpack.c.l.b16 %v525
      %v2085 = vunpack.c.h.b16 %v525
      %v2086 = vunpack.c.l.b16 %v526
      %v2087 = vunpack.c.h.b16 %v526
      %v2088 = vunpack.c.l.b16 %v527
      %v2089 = vunpack.c.h.b16 %v527
      %v2090 = vunpack.c.l.b16 %v528
      %v2091 = vunpack.c.h.b16 %v528
      %v2092 = vunpack.c.l.b16 %v529
      %v2093 = vunpack.c.h.b16 %v529
      %v2094 = vunpack.c.l.b16 %v530
      %v2095 = vunpack.c.h.b16 %v530
      %v2096 = vunpack.c.l.b16 %v531
      %v2097 = vunpack.c.h.b16 %v531
      %v2098 = vunpack.c.l.b16 %v532
      %v2099 = vunpack.c.h.b16 %v532
      %v2100 = vunpack.c.l.b16 %v533
      %v2101 = vunpack.c.h.b16 %v533
      %v2102 = vunpack.c.l.b16 %v534
      %v2103 = vunpack.c.h.b16 %v534
      %v2104 = vunpack.c.l.b16 %v535
      %v2105 = vunpack.c.h.b16 %v535
      %v2106 = vunpack.c.l.b16 %v536
      %v2107 = vunpack.c.h.b16 %v536
      %v2108 = vunpack.c.l.b16 %v537
      %v2109 = vunpack.c.h.b16 %v537
      %v2110 = vunpack.c.l.b16 %v538
      %v2111 = vunpack.c.h.b16 %v538
      %v2112 = vunpack.c.l.b16 %v539
      %v2113 = vunpack.c.h.b16 %v539
      %v2114 = vunpack.c.l.b16 %v540
      %v2115 = vunpack.c.h.b16 %v540
      %v2116 = vunpack.c.l.b16 %v541
      %v2117 = vunpack.c.h.b16 %v541
      %v2118 = vunpack.c.l.b16 %v542
      %v2119 = vunpack.c.h.b16 %v542
      %v2120 = vunpack.c.l.b16 %v543
      %v2121 = vunpack.c.h.b16 %v543
      %v2122 = vunpack.c.l.b16 %v544
      %v2123 = vunpack.c.h.b16 %v544
      %v2124 = vunpack.c.l.b16 %v545
      %v2125 = vunpack.c.h.b16 %v545
      %v2126 = vunpack.c.l.b16 %v546
      %v2127 = vunpack.c.h.b16 %v546
      %v2128 = vunpack.c.l.b16 %v547
      %v2129 = vunpack.c.h.b16 %v547
      %v2130 = vunpack.c.l.b16 %v548
      %v2131 = vunpack.c.h.b16 %v548
      %v2132 = vunpack.c.l.b16 %v549
      %v2133 = vunpack.c.h.b16 %v549
      %v2134 = vunpack.c.l.b16 %v550
      %v2135 = vunpack.c.h.b16 %v550
      %v2136 = vunpack.c.l.b16 %v551
      %v2137 = vunpack.c.h.b16 %v551
      %v2138 = vunpack.c.l.b16 %v552
      %v2139 = vunpack.c.h.b16 %v552
      %v2140 = vunpack.c.l.b16 %v553
      %v2141 = vunpack.c.h.b16 %v553
      %v2142 = vunpack.c.l.b16 %v554
      %v2143 = vunpack.c.h.b16 %v554
      %v2144 = vunpack.c.l.b16 %v555
      %v2145 = vunpack.c.h.b16 %v555
      %v2146 = vunpack.c.l.b16 %v556
      %v2147 = vunpack.c.h.b16 %v556
      %v2148 = vunpack.c.l.b16 %v557
      %v2149 = vunpack.c.h.b16 %v557
      %v2150 = vunpack.c.l.b16 %v558
      %v2151 = vunpack.c.h.b16 %v558
      %v2152 = vunpack.c.l.b16 %v559
      %v2153 = vunpack.c.h.b16 %v559
      %v2154 = vunpack.c.l.b16 %v560
      %v2155 = vunpack.c.h.b16 %v560
      %v2156 = vunpack.c.l.b16 %v561
      %v2157 = vunpack.c.h.b16 %v561
      %v2158 = vunpack.c.l.b16 %v562
      %v2159 = vunpack.c.h.b16 %v562
      %v2160 = vunpack.c.l.b16 %v563
      %v2161 = vunpack.c.h.b16 %v563
      %v2162 = vunpack.c.l.b16 %v564
      %v2163 = vunpack.c.h.b16 %v564
      %v2164 = vunpack.c.l.b16 %v565
      %v2165 = vunpack.c.h.b16 %v565
      %v2166 = vunpack.c.l.b16 %v566
      %v2167 = vunpack.c.h.b16 %v566
      %v2168 = vunpack.c.l.b16 %v567
      %v2169 = vunpack.c.h.b16 %v567
      %v2170 = vunpack.c.l.b16 %v568
      %v2171 = vunpack.c.h.b16 %v568
      %v2172 = vunpack.c.l.b16 %v569
      %v2173 = vunpack.c.h.b16 %v569
      %v2174 = vunpack.c.l.b16 %v570
      %v2175 = vunpack.c.h.b16 %v570
      %v2176 = vunpack.c.l.b16 %v571
      %v2177 = vunpack.c.h.b16 %v571
      %v2178 = vunpack.c.l.b16 %v572
      %v2179 = vunpack.c.h.b16 %v572
      %v2180 = vunpack.c.l.b16 %v573
      %v2181 = vunpack.c.h.b16 %v573
      %v2182 = vunpack.c.l.b16 %v574
      %v2183 = vunpack.c.h.b16 %v574
      %v2184 = vunpack.c.l.b16 %v575
      %v2185 = vunpack.c.h.b16 %v575
      %v2186 = vunpack.c.l.b16 %v576
      %v2187 = vunpack.c.h.b16 %v576
      %v2188 = vunpack.c.l.b16 %v577
      %v2189 = vunpack.c.h.b16 %v577
      %v2190 = vunpack.c.l.b16 %v578
      %v2191 = vunpack.c.h.b16 %v578
      %v2192 = vunpack.c.l.b16 %v579
      %v2193 = vunpack.c.h.b16 %v579
      %v2194 = vunpack.c.l.b16 %v580
      %v2195 = vunpack.c.h.b16 %v580
      %v2196 = vunpack.c.l.b16 %v581
      %v2197 = vunpack.c.h.b16 %v581
      %v2198 = vunpack.c.l.b16 %v582
      %v2199 = vunpack.c.h.b16 %v582
      %v2200 = vunpack.c.l.b16 %v583
      %v2201 = vunpack.c.h.b16 %v583
      %v2202 = vunpack.c.l.b16 %v584
      %v2203 = vunpack.c.h.b16 %v584
      %v2204 = vunpack.c.l.b16 %v585
      %v2205 = vunpack.c.h.b16 %v585
      %v2206 = vunpack.c.l.b16 %v586
      %v2207 = vunpack.c.h.b16 %v586
      %v2208 = vunpack.c.l.b16 %v587
      %v2209 = vunpack.c.h.b16 %v587
      %v2210 = vunpack.c.l.b16 %v588
      %v2211 = vunpack.c.h.b16 %v588
      %v2212 = vunpack.c.l.b16 %v589
      %v2213 = vunpack.c.h.b16 %v589
      %v2214 = vunpack.c.l.b16 %v590
      %v2215 = vunpack.c.h.b16 %v590
      %v2216 = vunpack.c.l.b16 %v591
      %v2217 = vunpack.c.h.b16 %v591
      %v2218 = vunpack.c.l.b16 %v592
      %v2219 = vunpack.c.h.b16 %v592
      %v2220 = vunpack.c.l.b16 %v593
      %v2221 = vunpack.c.h.b16 %v593
      %v2222 = vunpack.c.l.b16 %v594
      %v2223 = vunpack.c.h.b16 %v594
      %v2224 = vunpack.c.l.b16 %v595
      %v2225 = vunpack.c.h.b16 %v595
      %v2226 = vunpack.c.l.b16 %v596
      %v2227 = vunpack.c.h.b16 %v596
      %v2228 = vunpack.c.l.b16 %v597
      %v2229 = vunpack.c.h.b16 %v597
      %v2230 = vunpack.c.l.b16 %v598
      %v2231 = vunpack.c.h.b16 %v598
      %v2232 = vunpack.c.l.b16 %v599
      %v2233 = vunpack.c.h.b16 %v599
      %v2234 = vunpack.c.l.b16 %v600
      %v2235 = vunpack.c.h.b16 %v600
      %v2236 = vunpack.c.l.b16 %v601
      %v2237 = vunpack.c.h.b16 %v601
      %v2238 = vunpack.c.l.b16 %v602
      %v2239 = vunpack.c.h.b16 %v602
      %v2240 = vunpack.c.l.b16 %v603
      %v2241 = vunpack.c.h.b16 %v603
      %v2242 = vunpack.c.l.b16 %v604
      %v2243 = vunpack.c.h.b16 %v604
      %v2244 = vunpack.c.l.b16 %v605
      %v2245 = vunpack.c.h.b16 %v605
      %v2246 = vunpack.c.l.b16 %v606
      %v2247 = vunpack.c.h.b16 %v606
      %v2248 = vunpack.c.l.b16 %v607
      %v2249 = vunpack.c.h.b16 %v607
      %v2250 = vunpack.c.l.b16 %v608
      %v2251 = vunpack.c.h.b16 %v608
      %v2252 = vunpack.c.l.b16 %v609
      %v2253 = vunpack.c.h.b16 %v609
      %v2254 = vunpack.c.l.b16 %v610
      %v2255 = vunpack.c.h.b16 %v610
      %v2256 = vunpack.c.l.b16 %v611
      %v2257 = vunpack.c.h.b16 %v611
      %v2258 = vunpack.c.l.b16 %v612
      %v2259 = vunpack.c.h.b16 %v612
      %v2260 = vunpack.c.l.b16 %v613
      %v2261 = vunpack.c.h.b16 %v613
      %v2262 = vunpack.c.l.b16 %v614
      %v2263 = vunpack.c.h.b16 %v614
      %v2264 = vunpack.c.l.b16 %v615
      %v2265 = vunpack.c.h.b16 %v615
      %v2266 = vunpack.c.l.b16 %v616
      %v2267 = vunpack.c.h.b16 %v616
      %v2268 = vunpack.c.l.b16 %v617
      %v2269 = vunpack.c.h.b16 %v617
      %v2270 = vunpack.c.l.b16 %v618
      %v2271 = vunpack.c.h.b16 %v618
      %v2272 = vunpack.c.l.b16 %v619
      %v2273 = vunpack.c.h.b16 %v619
      %v2274 = vunpack.c.l.b16 %v620
      %v2275 = vunpack.c.h.b16 %v620
      %v2276 = vunpack.c.l.b16 %v621
      %v2277 = vunpack.c.h.b16 %v621
      %v2278 = vunpack.c.l.b16 %v622
      %v2279 = vunpack.c.h.b16 %v622
      %v2280 = vunpack.c.l.b16 %v623
      %v2281 = vunpack.c.h.b16 %v623
      %v2282 = vunpack.c.l.b16 %v624
      %v2283 = vunpack.c.h.b16 %v624
      %v2284 = vunpack.c.l.b16 %v625
      %v2285 = vunpack.c.h.b16 %v625
      %v2286 = vunpack.c.l.b16 %v626
      %v2287 = vunpack.c.h.b16 %v626
      %v2288 = vunpack.c.l.b16 %v627
      %v2289 = vunpack.c.h.b16 %v627
      %v2290 = vunpack.c.l.b16 %v628
      %v2291 = vunpack.c.h.b16 %v628
      %v2292 = vunpack.c.l.b16 %v629
      %v2293 = vunpack.c.h.b16 %v629
      %v2294 = vunpack.c.l.b16 %v630
      %v2295 = vunpack.c.h.b16 %v630
      %v2296 = vunpack.c.l.b16 %v631
      %v2297 = vunpack.c.h.b16 %v631
      %v2298 = vunpack.c.l.b16 %v632
      %v2299 = vunpack.c.h.b16 %v632
      %v2300 = vunpack.c.l.b16 %v633
      %v2301 = vunpack.c.h.b16 %v633
      %v2302 = vunpack.c.l.b16 %v634
      %v2303 = vunpack.c.h.b16 %v634
      %v2304 = vunpack.c.l.b16 %v635
      %v2305 = vunpack.c.h.b16 %v635
      %v2306 = vunpack.c.l.b16 %v636
      %v2307 = vunpack.c.h.b16 %v636
      %v2308 = vunpack.c.l.b16 %v637
      %v2309 = vunpack.c.h.b16 %v637
      %v2310 = vunpack.c.l.b16 %v638
      %v2311 = vunpack.c.h.b16 %v638
      %v2312 = vunpack.c.l.b16 %v639
      %v2313 = vunpack.c.h.b16 %v639
      %v2314 = vunpack.c.l.b16 %v640
      %v2315 = vunpack.c.h.b16 %v640
      %v2316 = vunpack.c.l.b16 %v641
      %v2317 = vunpack.c.h.b16 %v641
      %v2318 = vunpack.c.l.b16 %v642
      %v2319 = vunpack.c.h.b16 %v642
      %v2320 = vunpack.c.l.b16 %v643
      %v2321 = vunpack.c.h.b16 %v643
      %v2322 = vunpack.c.l.b16 %v644
      %v2323 = vunpack.c.h.b16 %v644
      %v2324 = vunpack.c.l.b16 %v645
      %v2325 = vunpack.c.h.b16 %v645
      %v2326 = vunpack.c.l.b16 %v646
      %v2327 = vunpack.c.h.b16 %v646
      %v2328 = vunpack.c.l.b16 %v647
      %v2329 = vunpack.c.h.b16 %v647
      %v2330 = vunpack.c.l.b16 %v648
      %v2331 = vunpack.c.h.b16 %v648
      %v2332 = vunpack.c.l.b16 %v649
      %v2333 = vunpack.c.h.b16 %v649
      %v2334 = vunpack.c.l.b16 %v650
      %v2335 = vunpack.c.h.b16 %v650
      %v2336 = vunpack.c.l.b16 %v651
      %v2337 = vunpack.c.h.b16 %v651
      %v2338 = vunpack.c.l.b16 %v652
      %v2339 = vunpack.c.h.b16 %v652
      %v2340 = vunpack.c.l.b16 %v653
      %v2341 = vunpack.c.h.b16 %v653
      %v2342 = vunpack.c.l.b16 %v654
      %v2343 = vunpack.c.h.b16 %v654
      %v2344 = vunpack.c.l.b16 %v655
      %v2345 = vunpack.c.h.b16 %v655
      %v2346 = vunpack.c.l.b16 %v656
      %v2347 = vunpack.c.h.b16 %v656
      %v2348 = vunpack.c.l.b16 %v657
      %v2349 = vunpack.c.h.b16 %v657
      %v2350 = vunpack.c.l.b16 %v658
      %v2351 = vunpack.c.h.b16 %v658
      %v2352 = vunpack.c.l.b16 %v659
      %v2353 = vunpack.c.h.b16 %v659
      %v2354 = vunpack.c.l.b16 %v660
      %v2355 = vunpack.c.h.b16 %v660
      %v2356 = vunpack.c.l.b16 %v661
      %v2357 = vunpack.c.h.b16 %v661
      %v2358 = vunpack.c.l.b16 %v662
      %v2359 = vunpack.c.h.b16 %v662
      %v2360 = vunpack.c.l.b16 %v663
      %v2361 = vunpack.c.h.b16 %v663
      %v2362 = vunpack.c.l.b16 %v664
      %v2363 = vunpack.c.h.b16 %v664
      %v2364 = vunpack.c.l.b16 %v665
      %v2365 = vunpack.c.h.b16 %v665
      %v2366 = vunpack.c.l.b16 %v666
      %v2367 = vunpack.c.h.b16 %v666
      %v2368 = vunpack.c.l.b16 %v667
      %v2369 = vunpack.c.h.b16 %v667
      %v2370 = vunpack.c.l.b16 %v668
      %v2371 = vunpack.c.h.b16 %v668
      %v2372 = vunpack.c.l.b16 %v669
      %v2373 = vunpack.c.h.b16 %v669
      %v2374 = vunpack.c.l.b16 %v670
      %v2375 = vunpack.c.h.b16 %v670
      %v2376 = vunpack.c.l.b16 %v671
      %v2377 = vunpack.c.h.b16 %v671
      %v2378 = vunpack.c.l.b16 %v672
      %v2379 = vunpack.c.h.b16 %v672
      %v2380 = vunpack.c.l.b16 %v673
      %v2381 = vunpack.c.h.b16 %v673
      %v2382 = vunpack.c.l.b16 %v674
      %v2383 = vunpack.c.h.b16 %v674
      %v2384 = vunpack.c.l.b16 %v675
      %v2385 = vunpack.c.h.b16 %v675
      %v2386 = vunpack.c.l.b16 %v676
      %v2387 = vunpack.c.h.b16 %v676
      %v2388 = vunpack.c.l.b16 %v677
      %v2389 = vunpack.c.h.b16 %v677
      %v2390 = vunpack.c.l.b16 %v678
      %v2391 = vunpack.c.h.b16 %v678
      %v2392 = vunpack.c.l.b16 %v679
      %v2393 = vunpack.c.h.b16 %v679
      %v2394 = vunpack.c.l.b16 %v680
      %v2395 = vunpack.c.h.b16 %v680
      %v2396 = vunpack.c.l.b16 %v681
      %v2397 = vunpack.c.h.b16 %v681
      %v2398 = vunpack.c.l.b16 %v682
      %v2399 = vunpack.c.h.b16 %v682
      %v2400 = vunpack.c.l.b16 %v683
      %v2401 = vunpack.c.h.b16 %v683
      %v2402 = vunpack.c.l.b16 %v684
      %v2403 = vunpack.c.h.b16 %v684
      %v2404 = vunpack.c.l.b16 %v685
      %v2405 = vunpack.c.h.b16 %v685
      %v2406 = vunpack.c.l.b16 %v686
      %v2407 = vunpack.c.h.b16 %v686
      %v2408 = vunpack.c.l.b16 %v687
      %v2409 = vunpack.c.h.b16 %v687
      %v2410 = vunpack.c.l.b16 %v688
      %v2411 = vunpack.c.h.b16 %v688
      %v2412 = vunpack.c.l.b16 %v689
      %v2413 = vunpack.c.h.b16 %v689
      %v2414 = vunpack.c.l.b16 %v690
      %v2415 = vunpack.c.h.b16 %v690
      %v2416 = vunpack.c.l.b16 %v691
      %v2417 = vunpack.c.h.b16 %v691
      %v2418 = vunpack.c.l.b16 %v692
      %v2419 = vunpack.c.h.b16 %v692
      %v2420 = vunpack.c.l.b16 %v693
      %v2421 = vunpack.c.h.b16 %v693
      %v2422 = vunpack.c.l.b16 %v694
      %v2423 = vunpack.c.h.b16 %v694
      %v2424 = vunpack.c.l.b16 %v695
      %v2425 = vunpack.c.h.b16 %v695
      %v2426 = vunpack.c.l.b16 %v696
      %v2427 = vunpack.c.h.b16 %v696
      %v2428 = vunpack.c.l.b16 %v697
      %v2429 = vunpack.c.h.b16 %v697
      %v2430 = vunpack.c.l.b16 %v698
      %v2431 = vunpack.c.h.b16 %v698
      %v2432 = vunpack.c.l.b16 %v699
      %v2433 = vunpack.c.h.b16 %v699
      %v2434 = vunpack.c.l.b16 %v700
      %v2435 = vunpack.c.h.b16 %v700
      %v2436 = vunpack.c.l.b16 %v701
      %v2437 = vunpack.c.h.b16 %v701
      %v2438 = vunpack.c.l.b16 %v702
      %v2439 = vunpack.c.h.b16 %v702
      %v2440 = vunpack.c.l.b16 %v703
      %v2441 = vunpack.c.h.b16 %v703
      %v2442 = vunpack.c.l.b16 %v704
      %v2443 = vunpack.c.h.b16 %v704
      %v2444 = vunpack.c.l.b16 %v705
      %v2445 = vunpack.c.h.b16 %v705
      %v2446 = vunpack.c.l.b16 %v706
      %v2447 = vunpack.c.h.b16 %v706
      %v2448 = vunpack.c.l.b16 %v707
      %v2449 = vunpack.c.h.b16 %v707
      %v2450 = vunpack.c.l.b16 %v708
      %v2451 = vunpack.c.h.b16 %v708
      %v2452 = vunpack.c.l.b16 %v709
      %v2453 = vunpack.c.h.b16 %v709
      %v2454 = vunpack.c.l.b16 %v710
      %v2455 = vunpack.c.h.b16 %v710
      %v2456 = vunpack.c.l.b16 %v711
      %v2457 = vunpack.c.h.b16 %v711
      %v2458 = vunpack.c.l.b16 %v712
      %v2459 = vunpack.c.h.b16 %v712
      %v2460 = vunpack.c.l.b16 %v713
      %v2461 = vunpack.c.h.b16 %v713
      %v2462 = vunpack.c.l.b16 %v714
      %v2463 = vunpack.c.h.b16 %v714
      %v2464 = vunpack.c.l.b16 %v715
      %v2465 = vunpack.c.h.b16 %v715
      %v2466 = vunpack.c.l.b16 %v716
      %v2467 = vunpack.c.h.b16 %v716
      %v2468 = vunpack.c.l.b16 %v717
      %v2469 = vunpack.c.h.b16 %v717
      %v2470 = vunpack.c.l.b16 %v718
      %v2471 = vunpack.c.h.b16 %v718
      %v2472 = vunpack.c.l.b16 %v719
      %v2473 = vunpack.c.h.b16 %v719
      %v2474 = vunpack.c.l.b16 %v720
      %v2475 = vunpack.c.h.b16 %v720
      %v2476 = vunpack.c.l.b16 %v721
      %v2477 = vunpack.c.h.b16 %v721
      %v2478 = vunpack.c.l.b16 %v722
      %v2479 = vunpack.c.h.b16 %v722
      %v2480 = vunpack.c.l.b16 %v723
      %v2481 = vunpack.c.h.b16 %v723
      %v2482 = vunpack.c.l.b16 %v724
      %v2483 = vunpack.c.h.b16 %v724
      %v2484 = vunpack.c.l.b16 %v725
      %v2485 = vunpack.c.h.b16 %v725
      %v2486 = vunpack.c.l.b16 %v726
      %v2487 = vunpack.c.h.b16 %v726
      %v2488 = vunpack.c.l.b16 %v727
      %v2489 = vunpack.c.h.b16 %v727
      %v2490 = vunpack.c.l.b16 %v728
      %v2491 = vunpack.c.h.b16 %v728
      %v2492 = vunpack.c.l.b16 %v729
      %v2493 = vunpack.c.h.b16 %v729
      %v2494 = vunpack.c.l.b16 %v730
      %v2495 = vunpack.c.h.b16 %v730
      %v2496 = vunpack.c.l.b16 %v731
      %v2497 = vunpack.c.h.b16 %v731
      %v2498 = vunpack.c.l.b16 %v732
      %v2499 = vunpack.c.h.b16 %v732
      %v2500 = vunpack.c.l.b16 %v733
      %v2501 = vunpack.c.h.b16 %v733
      %v2502 = vunpack.c.l.b16 %v734
      %v2503 = vunpack.c.h.b16 %v734
      %v2504 = vunpack.c.l.b16 %v735
      %v2505 = vunpack.c.h.b16 %v735
      %v2506 = vunpack.c.l.b16 %v736
      %v2507 = vunpack.c.h.b16 %v736
      %v2508 = vunpack.c.l.b16 %v737
      %v2509 = vunpack.c.h.b16 %v737
      %v2510 = vunpack.c.l.b16 %v738
      %v2511 = vunpack.c.h.b16 %v738
      %v2512 = vunpack.c.l.b16 %v739
      %v2513 = vunpack.c.h.b16 %v739
      %v2514 = vunpack.c.l.b16 %v740
      %v2515 = vunpack.c.h.b16 %v740
      %v2516 = vunpack.c.l.b16 %v741
      %v2517 = vunpack.c.h.b16 %v741
      %v2518 = vunpack.c.l.b16 %v742
      %v2519 = vunpack.c.h.b16 %v742
      %v2520 = vunpack.c.l.b16 %v743
      %v2521 = vunpack.c.h.b16 %v743
      %v2522 = vunpack.c.l.b16 %v744
      %v2523 = vunpack.c.h.b16 %v744
      %v2524 = vunpack.c.l.b16 %v745
      %v2525 = vunpack.c.h.b16 %v745
      %v2526 = vunpack.c.l.b16 %v746
      %v2527 = vunpack.c.h.b16 %v746
      %v2528 = vunpack.c.l.b16 %v747
      %v2529 = vunpack.c.h.b16 %v747
      %v2530 = vunpack.c.l.b16 %v748
      %v2531 = vunpack.c.h.b16 %v748
      %v2532 = vunpack.c.l.b16 %v749
      %v2533 = vunpack.c.h.b16 %v749
      %v2534 = vunpack.c.l.b16 %v750
      %v2535 = vunpack.c.h.b16 %v750
      %v2536 = vunpack.c.l.b16 %v751
      %v2537 = vunpack.c.h.b16 %v751
      %v2538 = vunpack.c.l.b16 %v752
      %v2539 = vunpack.c.h.b16 %v752
      %v2540 = vunpack.c.l.b16 %v753
      %v2541 = vunpack.c.h.b16 %v753
      %v2542 = vunpack.c.l.b16 %v754
      %v2543 = vunpack.c.h.b16 %v754
      %v2544 = vunpack.c.l.b16 %v755
      %v2545 = vunpack.c.h.b16 %v755
      %v2546 = vunpack.c.l.b16 %v756
      %v2547 = vunpack.c.h.b16 %v756
      %v2548 = vunpack.c.l.b16 %v757
      %v2549 = vunpack.c.h.b16 %v757
      %v2550 = vunpack.c.l.b16 %v758
      %v2551 = vunpack.c.h.b16 %v758
      %v2552 = vunpack.c.l.b16 %v759
      %v2553 = vunpack.c.h.b16 %v759
      %v2554 = vunpack.c.l.b16 %v760
      %v2555 = vunpack.c.h.b16 %v760
      %v2556 = vunpack.c.l.b16 %v761
      %v2557 = vunpack.c.h.b16 %v761
      %v2558 = vunpack.c.l.b16 %v762
      %v2559 = vunpack.c.h.b16 %v762
      %v2560 = vunpack.c.l.b16 %v763
      %v2561 = vunpack.c.h.b16 %v763
      %v2562 = vunpack.c.l.b16 %v764
      %v2563 = vunpack.c.h.b16 %v764
      %v2564 = vunpack.c.l.b16 %v765
      %v2565 = vunpack.c.h.b16 %v765
      %v2566 = vunpack.c.l.b16 %v766
      %v2567 = vunpack.c.h.b16 %v766
      %v2568 = vunpack.c.l.b16 %v767
      %v2569 = vunpack.c.h.b16 %v767
      %v2570 = vunpack.c.l.b16 %v768
      %v2571 = vunpack.c.h.b16 %v768
      %v2572 = vunpack.c.l.b16 %v769
      %v2573 = vunpack.c.h.b16 %v769
      %v2574 = vunpack.c.l.b16 %v770
      %v2575 = vunpack.c.h.b16 %v770
      %v2576 = vunpack.c.l.b16 %v771
      %v2577 = vunpack.c.h.b16 %v771
      %v2578 = vunpack.c.l.b16 %v772
      %v2579 = vunpack.c.h.b16 %v772
      %v2580 = vunpack.c.l.b16 %v773
      %v2581 = vunpack.c.h.b16 %v773
      %v2582 = vunpack.c.l.b16 %v774
      %v2583 = vunpack.c.h.b16 %v774
      %v2584 = vunpack.c.l.b16 %v775
      %v2585 = vunpack.c.h.b16 %v775
      %v2586 = vunpack.c.l.b16 %v776
      %v2587 = vunpack.c.h.b16 %v776
      %v2588 = vunpack.c.l.b16 %v777
      %v2589 = vunpack.c.h.b16 %v777
      %v2590 = vunpack.c.l.b16 %v778
      %v2591 = vunpack.c.h.b16 %v778
      %v2592 = vunpack.c.l.b16 %v779
      %v2593 = vunpack.c.h.b16 %v779
      %v2594 = vunpack.c.l.b16 %v780
      %v2595 = vunpack.c.h.b16 %v780
      %v2596 = vunpack.c.l.b16 %v781
      %v2597 = vunpack.c.h.b16 %v781
      %v2598 = vunpack.c.l.b16 %v782
      %v2599 = vunpack.c.h.b16 %v782
      %v2600 = vunpack.c.l.b16 %v783
      %v2601 = vunpack.c.h.b16 %v783
      %v2602 = vunpack.c.l.b16 %v784
      %v2603 = vunpack.c.h.b16 %v784
      %v2604 = vunpack.c.l.b16 %v785
      %v2605 = vunpack.c.h.b16 %v785
      %v2606 = vunpack.c.l.b16 %v786
      %v2607 = vunpack.c.h.b16 %v786
      %v2608 = vunpack.c.l.b16 %v787
      %v2609 = vunpack.c.h.b16 %v787
      %v2610 = vunpack.c.l.b16 %v788
      %v2611 = vunpack.c.h.b16 %v788
      %v2612 = vunpack.c.l.b16 %v789
      %v2613 = vunpack.c.h.b16 %v789
      %v2614 = vunpack.c.l.b16 %v790
      %v2615 = vunpack.c.h.b16 %v790
      %v2616 = vunpack.c.l.b16 %v791
      %v2617 = vunpack.c.h.b16 %v791
      %v2618 = vunpack.c.l.b16 %v792
      %v2619 = vunpack.c.h.b16 %v792
      %v2620 = vunpack.c.l.b16 %v793
      %v2621 = vunpack.c.h.b16 %v793
      %v2622 = vunpack.c.l.b16 %v794
      %v2623 = vunpack.c.h.b16 %v794
      %v2624 = vunpack.c.l.b16 %v795
      %v2625 = vunpack.c.h.b16 %v795
      %v2626 = vunpack.c.l.b16 %v796
      %v2627 = vunpack.c.h.b16 %v796
      %v2628 = vunpack.c.l.b16 %v797
      %v2629 = vunpack.c.h.b16 %v797
      %v2630 = vunpack.c.l.b16 %v798
      %v2631 = vunpack.c.h.b16 %v798
      %v2632 = vunpack.c.l.b16 %v799
      %v2633 = vunpack.c.h.b16 %v799
      %v2634 = vunpack.c.l.b16 %v800
      %v2635 = vunpack.c.h.b16 %v800
      %v2636 = vunpack.c.l.b16 %v801
      %v2637 = vunpack.c.h.b16 %v801
      %v2638 = vunpack.c.l.b16 %v802
      %v2639 = vunpack.c.h.b16 %v802
      %v2640 = vunpack.c.l.b16 %v803
      %v2641 = vunpack.c.h.b16 %v803
      %v2642 = vunpack.c.l.b16 %v804
      %v2643 = vunpack.c.h.b16 %v804
      %v2644 = vunpack.c.l.b16 %v805
      %v2645 = vunpack.c.h.b16 %v805
      %v2646 = vunpack.c.l.b16 %v806
      %v2647 = vunpack.c.h.b16 %v806
      %v2648 = vunpack.c.l.b16 %v807
      %v2649 = vunpack.c.h.b16 %v807
      %v2650 = vunpack.c.l.b16 %v808
      %v2651 = vunpack.c.h.b16 %v808
      %v2652 = vunpack.c.l.b16 %v809
      %v2653 = vunpack.c.h.b16 %v809
      %v2654 = vunpack.c.l.b16 %v810
      %v2655 = vunpack.c.h.b16 %v810
      %v2656 = vunpack.c.l.b16 %v811
      %v2657 = vunpack.c.h.b16 %v811
      %v2658 = vunpack.c.l.b16 %v812
      %v2659 = vunpack.c.h.b16 %v812
      %v2660 = vunpack.c.l.b16 %v813
      %v2661 = vunpack.c.h.b16 %v813
      %v2662 = vunpack.c.l.b16 %v814
      %v2663 = vunpack.c.h.b16 %v814
      %v2664 = vunpack.c.l.b16 %v815
      %v2665 = vunpack.c.h.b16 %v815
      %v2666 = vunpack.c.l.b16 %v816
      %v2667 = vunpack.c.h.b16 %v816
      %v2668 = vunpack.c.l.b16 %v817
      %v2669 = vunpack.c.h.b16 %v817
      %v2670 = vunpack.c.l.b16 %v818
      %v2671 = vunpack.c.h.b16 %v818
      %v2672 = vunpack.c.l.b16 %v819
      %v2673 = vunpack.c.h.b16 %v819
      %v2674 = vunpack.c.l.b16 %v820
      %v2675 = vunpack.c.h.b16 %v820
      %v2676 = vunpack.c.l.b16 %v821
      %v2677 = vunpack.c.h.b16 %v821
      %v2678 = vunpack.c.l.b16 %v822
      %v2679 = vunpack.c.h.b16 %v822
      %v2680 = vunpack.c.l.b16 %v823
      %v2681 = vunpack.c.h.b16 %v823
      %v2682 = vunpack.c.l.b16 %v824
      %v2683 = vunpack.c.h.b16 %v824
      %v2684 = vunpack.c.l.b16 %v825
      %v2685 = vunpack.c.h.b16 %v825
      %v2686 = vunpack.c.l.b16 %v826
      %v2687 = vunpack.c.h.b16 %v826
      %v2688 = vunpack.c.l.b16 %v827
      %v2689 = vunpack.c.h.b16 %v827
      %v2690 = vunpack.c.l.b16 %v828
      %v2691 = vunpack.c.h.b16 %v828
      %v2692 = vunpack.c.l.b16 %v829
      %v2693 = vunpack.c.h.b16 %v829
      %v2694 = vunpack.c.l.b16 %v830
      %v2695 = vunpack.c.h.b16 %v830
      %v2696 = vunpack.c.l.b16 %v831
      %v2697 = vunpack.c.h.b16 %v831
      %v2698 = vunpack.c.l.b16 %v832
      %v2699 = vunpack.c.h.b16 %v832
      %v2700 = vunpack.c.l.b16 %v833
      %v2701 = vunpack.c.h.b16 %v833
      %v2702 = vunpack.c.l.b16 %v834
      %v2703 = vunpack.c.h.b16 %v834
      %v2704 = vunpack.c.l.b16 %v835
      %v2705 = vunpack.c.h.b16 %v835
      %v2706 = vunpack.c.l.b16 %v836
      %v2707 = vunpack.c.h.b16 %v836
      %v2708 = vunpack.c.l.b16 %v837
      %v2709 = vunpack.c.h.b16 %v837
      %v2710 = vunpack.c.l.b16 %v838
      %v2711 = vunpack.c.h.b16 %v838
      %v2712 = vunpack.c.l.b16 %v839
      %v2713 = vunpack.c.h.b16 %v839
      %v2714 = vunpack.c.l.b16 %v840
      %v2715 = vunpack.c.h.b16 %v840
      %v2716 = vunpack.c.l.b16 %v841
      %v2717 = vunpack.c.h.b16 %v841
      %v2718 = vunpack.c.l.b16 %v842
      %v2719 = vunpack.c.h.b16 %v842
      %v2720 = vunpack.c.l.b16 %v843
      %v2721 = vunpack.c.h.b16 %v843
      %v2722 = vunpack.c.l.b16 %v844
      %v2723 = vunpack.c.h.b16 %v844
      %v2724 = vunpack.c.l.b16 %v845
      %v2725 = vunpack.c.h.b16 %v845
      %v2726 = vunpack.c.l.b16 %v846
      %v2727 = vunpack.c.h.b16 %v846
      %v2728 = vunpack.c.l.b16 %v847
      %v2729 = vunpack.c.h.b16 %v847
      %v2730 = vunpack.c.l.b16 %v848
      %v2731 = vunpack.c.h.b16 %v848
      %v2732 = vunpack.c.l.b16 %v849
      %v2733 = vunpack.c.h.b16 %v849
      %v2734 = vunpack.c.l.b16 %v850
      %v2735 = vunpack.c.h.b16 %v850
      %v2736 = vunpack.c.l.b16 %v851
      %v2737 = vunpack.c.h.b16 %v851
      %v2738 = vunpack.c.l.b16 %v852
      %v2739 = vunpack.c.h.b16 %v852
      %v2740 = vunpack.c.l.b16 %v853
      %v2741 = vunpack.c.h.b16 %v853
      %v2742 = vunpack.c.l.b16 %v854
      %v2743 = vunpack.c.h.b16 %v854
      %v2744 = vunpack.c.l.b16 %v855
      %v2745 = vunpack.c.h.b16 %v855
      %v2746 = vunpack.c.l.b16 %v856
      %v2747 = vunpack.c.h.b16 %v856
      %v2748 = vunpack.c.l.b16 %v857
      %v2749 = vunpack.c.h.b16 %v857
      %v2750 = vunpack.c.l.b16 %v858
      %v2751 = vunpack.c.h.b16 %v858
      %v2752 = vunpack.c.l.b16 %v859
      %v2753 = vunpack.c.h.b16 %v859
      %v2754 = vunpack.c.l.b16 %v860
      %v2755 = vunpack.c.h.b16 %v860
      %v2756 = vunpack.c.l.b16 %v861
      %v2757 = vunpack.c.h.b16 %v861
      %v2758 = vunpack.c.l.b16 %v862
      %v2759 = vunpack.c.h.b16 %v862
      %v2760 = vunpack.c.l.b16 %v863
      %v2761 = vunpack.c.h.b16 %v863
      %v2762 = vunpack.c.l.b16 %v864
      %v2763 = vunpack.c.h.b16 %v864
      %v2764 = vunpack.c.l.b16 %v865
      %v2765 = vunpack.c.h.b16 %v865
      %v2766 = vunpack.c.l.b16 %v866
      %v2767 = vunpack.c.h.b16 %v866
      %v2768 = vunpack.c.l.b16 %v867
      %v2769 = vunpack.c.h.b16 %v867
      %v2770 = vunpack.c.l.b16 %v868
      %v2771 = vunpack.c.h.b16 %v868
      %v2772 = vunpack.c.l.b16 %v869
      %v2773 = vunpack.c.h.b16 %v869
      %v2774 = vunpack.c.l.b16 %v870
      %v2775 = vunpack.c.h.b16 %v870
      %v2776 = vunpack.c.l.b16 %v871
      %v2777 = vunpack.c.h.b16 %v871
      %v2778 = vunpack.c.l.b16 %v872
      %v2779 = vunpack.c.h.b16 %v872
      %v2780 = vunpack.c.l.b16 %v873
      %v2781 = vunpack.c.h.b16 %v873
      %v2782 = vunpack.c.l.b16 %v874
      %v2783 = vunpack.c.h.b16 %v874
      %v2784 = vunpack.c.l.b16 %v875
      %v2785 = vunpack.c.h.b16 %v875
      %v2786 = vunpack.c.l.b16 %v876
      %v2787 = vunpack.c.h.b16 %v876
      %v2788 = vunpack.c.l.b16 %v877
      %v2789 = vunpack.c.h.b16 %v877
      %v2790 = vunpack.c.l.b16 %v878
      %v2791 = vunpack.c.h.b16 %v878
      %v2792 = vunpack.c.l.b16 %v879
      %v2793 = vunpack.c.h.b16 %v879
      %v2794 = vunpack.c.l.b16 %v880
      %v2795 = vunpack.c.h.b16 %v880
      %v2796 = vunpack.c.l.b16 %v881
      %v2797 = vunpack.c.h.b16 %v881
      %v2798 = vunpack.c.l.b16 %v882
      %v2799 = vunpack.c.h.b16 %v882
      %v2800 = vunpack.c.l.b16 %v883
      %v2801 = vunpack.c.h.b16 %v883
      %v2802 = vunpack.c.l.b16 %v884
      %v2803 = vunpack.c.h.b16 %v884
      %v2804 = vunpack.c.l.b16 %v885
      %v2805 = vunpack.c.h.b16 %v885
      %v2806 = vunpack.c.l.b16 %v886
      %v2807 = vunpack.c.h.b16 %v886
      %v2808 = vunpack.c.l.b16 %v887
      %v2809 = vunpack.c.h.b16 %v887
      %v2810 = vunpack.c.l.b16 %v888
      %v2811 = vunpack.c.h.b16 %v888
      %v2812 = vunpack.c.l.b16 %v889
      %v2813 = vunpack.c.h.b16 %v889
      %v2814 = vunpack.c.l.b16 %v890
      %v2815 = vunpack.c.h.b16 %v890
      %v2816 = vunpack.c.l.b16 %v891
      %v2817 = vunpack.c.h.b16 %v891
      %v2818 = vunpack.c.l.b16 %v892
      %v2819 = vunpack.c.h.b16 %v892
      %v2820 = vunpack.c.l.b16 %v893
      %v2821 = vunpack.c.h.b16 %v893
      %v2822 = vunpack.c.l.b16 %v894
      %v2823 = vunpack.c.h.b16 %v894
      %v2824 = vunpack.c.l.b16 %v895
      %v2825 = vunpack.c.h.b16 %v895
      %v2826 = vunpack.c.l.b16 %v896
      %v2827 = vunpack.c.h.b16 %v896
      %v2828 = vunpack.c.l.b16 %v897
      %v2829 = vunpack.c.h.b16 %v897
      %v2830 = vunpack.c.l.b16 %v898
      %v2831 = vunpack.c.h.b16 %v898
      %v2832 = vunpack.c.l.b16 %v899
      %v2833 = vunpack.c.h.b16 %v899
      %v2834 = vunpack.c.l.b16 %v900
      %v2835 = vunpack.c.h.b16 %v900
      %v2836 = vunpack.c.l.b16 %v901
      %v2837 = vunpack.c.h.b16 %v901
      %v2838 = vunpack.c.l.b16 %v902
      %v2839 = vunpack.c.h.b16 %v902
      %v2840 = vunpack.c.l.b16 %v903
      %v2841 = vunpack.c.h.b16 %v903
      %v2842 = vunpack.c.l.b16 %v904
      %v2843 = vunpack.c.h.b16 %v904
      %v2844 = vunpack.c.l.b16 %v905
      %v2845 = vunpack.c.h.b16 %v905
      %v2846 = vunpack.c.l.b16 %v906
      %v2847 = vunpack.c.h.b16 %v906
      %v2848 = vunpack.c.l.b16 %v907
      %v2849 = vunpack.c.h.b16 %v907
      %v2850 = vunpack.c.l.b16 %v908
      %v2851 = vunpack.c.h.b16 %v908
      %v2852 = vunpack.c.l.b16 %v909
      %v2853 = vunpack.c.h.b16 %v909
      %v2854 = vunpack.c.l.b16 %v910
      %v2855 = vunpack.c.h.b16 %v910
      %v2856 = vunpack.c.l.b16 %v911
      %v2857 = vunpack.c.h.b16 %v911
      %v2858 = vunpack.c.l.b16 %v912
      %v2859 = vunpack.c.h.b16 %v912
      %v2860 = vunpack.c.l.b16 %v913
      %v2861 = vunpack.c.h.b16 %v913
      %v2862 = vunpack.c.l.b16 %v914
      %v2863 = vunpack.c.h.b16 %v914
      %v2864 = vunpack.c.l.b16 %v915
      %v2865 = vunpack.c.h.b16 %v915
      %v2866 = vunpack.c.l.b16 %v916
      %v2867 = vunpack.c.h.b16 %v916
      %v2868 = vunpack.c.l.b16 %v917
      %v2869 = vunpack.c.h.b16 %v917
      %v2870 = vunpack.c.l.b16 %v918
      %v2871 = vunpack.c.h.b16 %v918
      %v2872 = vunpack.c.l.b16 %v919
      %v2873 = vunpack.c.h.b16 %v919
      %v2874 = vunpack.c.l.b16 %v920
      %v2875 = vunpack.c.h.b16 %v920
      %v2876 = vunpack.c.l.b16 %v921
      %v2877 = vunpack.c.h.b16 %v921
      %v2878 = vunpack.c.l.b16 %v922
      %v2879 = vunpack.c.h.b16 %v922
      %v2880 = vunpack.c.l.b16 %v923
      %v2881 = vunpack.c.h.b16 %v923
      %v2882 = vunpack.c.l.b16 %v924
      %v2883 = vunpack.c.h.b16 %v924
      %v2884 = vunpack.c.l.b16 %v925
      %v2885 = vunpack.c.h.b16 %v925
      %v2886 = vunpack.c.l.b16 %v926
      %v2887 = vunpack.c.h.b16 %v926
      %v2888 = vunpack.c.l.b16 %v927
      %v2889 = vunpack.c.h.b16 %v927
      %v2890 = vunpack.c.l.b16 %v928
      %v2891 = vunpack.c.h.b16 %v928
      %v2892 = vunpack.c.l.b16 %v929
      %v2893 = vunpack.c.h.b16 %v929
      %v2894 = vunpack.c.l.b16 %v930
      %v2895 = vunpack.c.h.b16 %v930
      %v2896 = vunpack.c.l.b16 %v931
      %v2897 = vunpack.c.h.b16 %v931
      %v2898 = vunpack.c.l.b16 %v932
      %v2899 = vunpack.c.h.b16 %v932
      %v2900 = vunpack.c.l.b16 %v933
      %v2901 = vunpack.c.h.b16 %v933
      %v2902 = vunpack.c.l.b16 %v934
      %v2903 = vunpack.c.h.b16 %v934
      %v2904 = vunpack.c.l.b16 %v935
      %v2905 = vunpack.c.h.b16 %v935
      %v2906 = vunpack.c.l.b16 %v936
      %v2907 = vunpack.c.h.b16 %v936
      %v2908 = vunpack.c.l.b16 %v937
      %v2909 = vunpack.c.h.b16 %v937
      %v2910 = vunpack.c.l.b16 %v938
      %v2911 = vunpack.c.h.b16 %v938
      %v2912 = vunpack.c.l.b16 %v939
      %v2913 = vunpack.c.h.b16 %v939
      %v2914 = vunpack.c.l.b16 %v940
      %v2915 = vunpack.c.h.b16 %v940
      %v2916 = vunpack.c.l.b16 %v941
      %v2917 = vunpack.c.h.b16 %v941
      %v2918 = vunpack.c.l.b16 %v942
      %v2919 = vunpack.c.h.b16 %v942
      %v2920 = vunpack.c.l.b16 %v943
      %v2921 = vunpack.c.h.b16 %v943
      %v2922 = vunpack.c.l.b16 %v944
      %v2923 = vunpack.c.h.b16 %v944
      %v2924 = vunpack.c.l.b16 %v945
      %v2925 = vunpack.c.h.b16 %v945
      %v2926 = vunpack.c.l.b16 %v946
      %v2927 = vunpack.c.h.b16 %v946
      %v2928 = vunpack.c.l.b16 %v947
      %v2929 = vunpack.c.h.b16 %v947
      %v2930 = vunpack.c.l.b16 %v948
      %v2931 = vunpack.c.h.b16 %v948
      %v2932 = vunpack.c.l.b16 %v949
      %v2933 = vunpack.c.h.b16 %v949
      %v2934 = vunpack.c.l.b16 %v950
      %v2935 = vunpack.c.h.b16 %v950
      %v2936 = vunpack.c.l.b16 %v951
      %v2937 = vunpack.c.h.b16 %v951
      %v2938 = vunpack.c.l.b16 %v952
      %v2939 = vunpack.c.h.b16 %v952
      %v2940 = vunpack.c.l.b16 %v953
      %v2941 = vunpack.c.h.b16 %v953
      %v2942 = vunpack.c.l.b16 %v954
      %v2943 = vunpack.c.h.b16 %v954
      %v2944 = vpack.c.b16 %v1794, %v1792
      %v2945 = vpack.c.b16 %v1795, %v1793
      %v2946 = vpack.c.b16 %v1798, %v1796
      %v2947 = vpack.c.b16 %v1799, %v1797
      %v2948 = vpack.c.b16 %v1802, %v1800
      %v2949 = vpack.c.b16 %v1803, %v1801
      %v2950 = vpack.c.b16 %v1806, %v1804
      %v2951 = vpack.c.b16 %v1807, %v1805
      %v2952 = vpack.c.b16 %v1810, %v1808
      %v2953 = vpack.c.b16 %v1811, %v1809
      %v2954 = vpack.c.b16 %v1814, %v1812
      %v2955 = vpack.c.b16 %v1815, %v1813
      %v2956 = vpack.c.b16 %v1818, %v1816
      %v2957 = vpack.c.b16 %v1819, %v1817
      %v2958 = vpack.c.b16 %v1822, %v1820
      %v2959 = vpack.c.b16 %v1823, %v1821
      %v2960 = vpack.c.b16 %v1826, %v1824
      %v2961 = vpack.c.b16 %v1827, %v1825
      %v2962 = vpack.c.b16 %v1830, %v1828
      %v2963 = vpack.c.b16 %v1831, %v1829
      %v2964 = vpack.c.b16 %v1834, %v1832
      %v2965 = vpack.c.b16 %v1835, %v1833
      %v2966 = vpack.c.b16 %v1838, %v1836
      %v2967 = vpack.c.b16 %v1839, %v1837
      %v2968 = vpack.c.b16 %v1842, %v1840
      %v2969 = vpack.c.b16 %v1843, %v1841
      %v2970 = vpack.c.b16 %v1846, %v1844
      %v2971 = vpack.c.b16 %v1847, %v1845
      %v2972 = vpack.c.b16 %v1850, %v1848
      %v2973 = vpack.c.b16 %v1851, %v1849
      %v2974 = vpack.c.b16 %v1854, %v1852
      %v2975 = vpack.c.b16 %v1855, %v1853
      %v2976 = vpack.c.b16 %v1858, %v1856
      %v2977 = vpack.c.b16 %v1859, %v1857
      %v2978 = vpack.c.b16 %v1862, %v1860
      %v2979 = vpack.c.b16 %v1863, %v1861
      %v2980 = vpack.c.b16 %v1866, %v1864
      %v2981 = vpack.c.b16 %v1867, %v1865
      %v2982 = vpack.c.b16 %v1870, %v1868
      %v2983 = vpack.c.b16 %v1871, %v1869
      %v2984 = vpack.c.b16 %v1874, %v1872
      %v2985 = vpack.c.b16 %v1875, %v1873
      %v2986 = vpack.c.b16 %v1878, %v1876
      %v2987 = vpack.c.b16 %v1879, %v1877
      %v2988 = vpack.c.b16 %v1882, %v1880
      %v2989 = vpack.c.b16 %v1883, %v1881
      %v2990 = vpack.c.b16 %v1886, %v1884
      %v2991 = vpack.c.b16 %v1887, %v1885
      %v2992 = vpack.c.b16 %v1890, %v1888
      %v2993 = vpack.c.b16 %v1891, %v1889
      %v2994 = vpack.c.b16 %v1894, %v1892
      %v2995 = vpack.c.b16 %v1895, %v1893
      %v2996 = vpack.c.b16 %v1898, %v1896
      %v2997 = vpack.c.b16 %v1899, %v1897
      %v2998 = vpack.c.b16 %v1902, %v1900
      %v2999 = vpack.c.b16 %v1903, %v1901
      %v3000 = vpack.c.b16 %v1906, %v1904
      %v3001 = vpack.c.b16 %v1907, %v1905
      %v3002 = vpack.c.b16 %v1910, %v1908
      %v3003 = vpack.c.b16 %v1911, %v1909
      %v3004 = vpack.c.b16 %v1914, %v1912
      %v3005 = vpack.c.b16 %v1915, %v1913
      %v3006 = vpack.c.b16 %v1918, %v1916
      %v3007 = vpack.c.b16 %v1919, %v1917
      %v3008 = vpack.c.b16 %v1922, %v1920
      %v3009 = vpack.c.b16 %v1923, %v1921
      %v3010 = vpack.c.b16 %v1926, %v1924
      %v3011 = vpack.c.b16 %v1927, %v1925
      %v3012 = vpack.c.b16 %v1930, %v1928
      %v3013 = vpack.c.b16 %v1931, %v1929
      %v3014 = vpack.c.b16 %v1934, %v1932
      %v3015 = vpack.c.b16 %v1935, %v1933
      %v3016 = vpack.c.b16 %v1938, %v1936
      %v3017 = vpack.c.b16 %v1939, %v1937
      %v3018 = vpack.c.b16 %v1942, %v1940
      %v3019 = vpack.c.b16 %v1943, %v1941
      %v3020 = vpack.c.b16 %v1946, %v1944
      %v3021 = vpack.c.b16 %v1947, %v1945
      %v3022 = vpack.c.b16 %v1950, %v1948
      %v3023 = vpack.c.b16 %v1951, %v1949
      %v3024 = vpack.c.b16 %v1954, %v1952
      %v3025 = vpack.c.b16 %v1955, %v1953
      %v3026 = vpack.c.b16 %v1958, %v1956
      %v3027 = vpack.c.b16 %v1959, %v1957
      %v3028 = vpack.c.b16 %v1962, %v1960
      %v3029 = vpack.c.b16 %v1963, %v1961
      %v3030 = vpack.c.b16 %v1966, %v1964
      %v3031 = vpack.c.b16 %v1967, %v1965
      %v3032 = vpack.c.b16 %v1970, %v1968
      %v3033 = vpack.c.b16 %v1971, %v1969
      %v3034 = vpack.c.b16 %v1974, %v1972
      %v3035 = vpack.c.b16 %v1975, %v1973
      %v3036 = vpack.c.b16 %v1978, %v1976
      %v3037 = vpack.c.b16 %v1979, %v1977
      %v3038 = vpack.c.b16 %v1982, %v1980
      %v3039 = vpack.c.b16 %v1983, %v1981
      %v3040 = vpack.c.b16 %v1986, %v1984
      %v3041 = vpack.c.b16 %v1987, %v1985
      %v3042 = vpack.c.b16 %v1990, %v1988
      %v3043 = vpack.c.b16 %v1991, %v1989
      %v3044 = vpack.c.b16 %v1994, %v1992
      %v3045 = vpack.c.b16 %v1995, %v1993
      %v3046 = vpack.c.b16 %v1998, %v1996
      %v3047 = vpack.c.b16 %v1999, %v1997
      %v3048 = vpack.c.b16 %v2002, %v2000
      %v3049 = vpack.c.b16 %v2003, %v2001
      %v3050 = vpack.c.b16 %v2006, %v2004
      %v3051 = vpack.c.b16 %v2007, %v2005
      %v3052 = vpack.c.b16 %v2010, %v2008
      %v3053 = vpack.c.b16 %v2011, %v2009
      %v3054 = vpack.c.b16 %v2014, %v2012
      %v3055 = vpack.c.b16 %v2015, %v2013
      %v3056 = vpack.c.b16 %v2018, %v2016
      %v3057 = vpack.c.b16 %v2019, %v2017
      %v3058 = vpack.c.b16 %v2022, %v2020
      %v3059 = vpack.c.b16 %v2023, %v2021
      %v3060 = vpack.c.b16 %v2026, %v2024
      %v3061 = vpack.c.b16 %v2027, %v2025
      %v3062 = vpack.c.b16 %v2030, %v2028
      %v3063 = vpack.c.b16 %v2031, %v2029
      %v3064 = vpack.c.b16 %v2034, %v2032
      %v3065 = vpack.c.b16 %v2035, %v2033
      %v3066 = vpack.c.b16 %v2038, %v2036
      %v3067 = vpack.c.b16 %v2039, %v2037
      %v3068 = vpack.c.b16 %v2042, %v2040
      %v3069 = vpack.c.b16 %v2043, %v2041
      %v3070 = vpack.c.b16 %v2046, %v2044
      %v3071 = vpack.c.b16 %v2047, %v2045
      %v3072 = vpack.c.b16 %v2050, %v2048
      %v3073 = vpack.c.b16 %v2051, %v2049
      %v3074 = vpack.c.b16 %v2054, %v2052
      %v3075 = vpack.c.b16 %v2055, %v2053
      %v3076 = vpack.c.b16 %v2058, %v2056
      %v3077 = vpack.c.b16 %v2059, %v2057
      %v3078 = vpack.c.b16 %v2062, %v2060
      %v3079 = vpack.c.b16 %v2063, %v2061
      %v3080 = vpack.c.b16 %v2066, %v2064
      %v3081 = vpack.c.b16 %v2067, %v2065
      %v3082 = vpack.c.b16 %v2070, %v2068
      %v3083 = vpack.c.b16 %v2071, %v2069
      %v3084 = vpack.c.b16 %v2074, %v2072
      %v3085 = vpack.c.b16 %v2075, %v2073
      %v3086 = vpack.c.b16 %v2078, %v2076
      %v3087 = vpack.c.b16 %v2079, %v2077
      %v3088 = vpack.c.b16 %v2082, %v2080
      %v3089 = vpack.c.b16 %v2083, %v2081
      %v3090 = vpack.c.b16 %v2086, %v2084
      %v3091 = vpack.c.b16 %v2087, %v2085
      %v3092 = vpack.c.b16 %v2090, %v2088
      %v3093 = vpack.c.b16 %v2091, %v2089
      %v3094 = vpack.c.b16 %v2094, %v2092
      %v3095 = vpack.c.b16 %v2095, %v2093
      %v3096 = vpack.c.b16 %v2098, %v2096
      %v3097 = vpack.c.b16 %v2099, %v2097
      %v3098 = vpack.c.b16 %v2102, %v2100
      %v3099 = vpack.c.b16 %v2103, %v2101
      %v3100 = vpack.c.b16 %v2106, %v2104
      %v3101 = vpack.c.b16 %v2107, %v2105
      %v3102 = vpack.c.b16 %v2110, %v2108
      %v3103 = vpack.c.b16 %v2111, %v2109
      %v3104 = vpack.c.b16 %v2114, %v2112
      %v3105 = vpack.c.b16 %v2115, %v2113
      %v3106 = vpack.c.b16 %v2118, %v2116
      %v3107 = vpack.c.b16 %v2119, %v2117
      %v3108 = vpack.c.b16 %v2122, %v2120
      %v3109 = vpack.c.b16 %v2123, %v2121
      %v3110 = vpack.c.b16 %v2126, %v2124
      %v3111 = vpack.c.b16 %v2127, %v2125
      %v3112 = vpack.c.b16 %v2130, %v2128
      %v3113 = vpack.c.b16 %v2131, %v2129
      %v3114 = vpack.c.b16 %v2134, %v2132
      %v3115 = vpack.c.b16 %v2135, %v2133
      %v3116 = vpack.c.b16 %v2138, %v2136
      %v3117 = vpack.c.b16 %v2139, %v2137
      %v3118 = vpack.c.b16 %v2142, %v2140
      %v3119 = vpack.c.b16 %v2143, %v2141
      %v3120 = vpack.c.b16 %v2146, %v2144
      %v3121 = vpack.c.b16 %v2147, %v2145
      %v3122 = vpack.c.b16 %v2150, %v2148
      %v3123 = vpack.c.b16 %v2151, %v2149
      %v3124 = vpack.c.b16 %v2154, %v2152
      %v3125 = vpack.c.b16 %v2155, %v2153
      %v3126 = vpack.c.b16 %v2158, %v2156
      %v3127 = vpack.c.b16 %v2159, %v2157
      %v3128 = vpack.c.b16 %v2162, %v2160
      %v3129 = vpack.c.b16 %v2163, %v2161
      %v3130 = vpack.c.b16 %v2166, %v2164
      %v3131 = vpack.c.b16 %v2167, %v2165
      %v3132 = vpack.c.b16 %v2170, %v2168
      %v3133 = vpack.c.b16 %v2171, %v2169
      %v3134 = vpack.c.b16 %v2174, %v2172
      %v3135 = vpack.c.b16 %v2175, %v2173
      %v3136 = vpack.c.b16 %v2178, %v2176
      %v3137 = vpack.c.b16 %v2179, %v2177
      %v3138 = vpack.c.b16 %v2182, %v2180
      %v3139 = vpack.c.b16 %v2183, %v2181
      %v3140 = vpack.c.b16 %v2186, %v2184
      %v3141 = vpack.c.b16 %v2187, %v2185
      %v3142 = vpack.c.b16 %v2190, %v2188
      %v3143 = vpack.c.b16 %v2191, %v2189
      %v3144 = vpack.c.b16 %v2194, %v2192
      %v3145 = vpack.c.b16 %v2195, %v2193
      %v3146 = vpack.c.b16 %v2198, %v2196
      %v3147 = vpack.c.b16 %v2199, %v2197
      %v3148 = vpack.c.b16 %v2202, %v2200
      %v3149 = vpack.c.b16 %v2203, %v2201
      %v3150 = vpack.c.b16 %v2206, %v2204
      %v3151 = vpack.c.b16 %v2207, %v2205
      %v3152 = vpack.c.b16 %v2210, %v2208
      %v3153 = vpack.c.b16 %v2211, %v2209
      %v3154 = vpack.c.b16 %v2214, %v2212
      %v3155 = vpack.c.b16 %v2215, %v2213
      %v3156 = vpack.c.b16 %v2218, %v2216
      %v3157 = vpack.c.b16 %v2219, %v2217
      %v3158 = vpack.c.b16 %v2222, %v2220
      %v3159 = vpack.c.b16 %v2223, %v2221
      %v3160 = vpack.c.b16 %v2226, %v2224
      %v3161 = vpack.c.b16 %v2227, %v2225
      %v3162 = vpack.c.b16 %v2230, %v2228
      %v3163 = vpack.c.b16 %v2231, %v2229
      %v3164 = vpack.c.b16 %v2234, %v2232
      %v3165 = vpack.c.b16 %v2235, %v2233
      %v3166 = vpack.c.b16 %v2238, %v2236
      %v3167 = vpack.c.b16 %v2239, %v2237
      %v3168 = vpack.c.b16 %v2242, %v2240
      %v3169 = vpack.c.b16 %v2243, %v2241
      %v3170 = vpack.c.b16 %v2246, %v2244
      %v3171 = vpack.c.b16 %v2247, %v2245
      %v3172 = vpack.c.b16 %v2250, %v2248
      %v3173 = vpack.c.b16 %v2251, %v2249
      %v3174 = vpack.c.b16 %v2254, %v2252
      %v3175 = vpack.c.b16 %v2255, %v2253
      %v3176 = vpack.c.b16 %v2258, %v2256
      %v3177 = vpack.c.b16 %v2259, %v2257
      %v3178 = vpack.c.b16 %v2262, %v2260
      %v3179 = vpack.c.b16 %v2263, %v2261
      %v3180 = vpack.c.b16 %v2266, %v2264
      %v3181 = vpack.c.b16 %v2267, %v2265
      %v3182 = vpack.c.b16 %v2270, %v2268
      %v3183 = vpack.c.b16 %v2271, %v2269
      %v3184 = vpack.c.b16 %v2274, %v2272
      %v3185 = vpack.c.b16 %v2275, %v2273
      %v3186 = vpack.c.b16 %v2278, %v2276
      %v3187 = vpack.c.b16 %v2279, %v2277
      %v3188 = vpack.c.b16 %v2282, %v2280
      %v3189 = vpack.c.b16 %v2283, %v2281
      %v3190 = vpack.c.b16 %v2286, %v2284
      %v3191 = vpack.c.b16 %v2287, %v2285
      %v3192 = vpack.c.b16 %v2290, %v2288
      %v3193 = vpack.c.b16 %v2291, %v2289
      %v3194 = vpack.c.b16 %v2294, %v2292
      %v3195 = vpack.c.b16 %v2295, %v2293
      %v3196 = vpack.c.b16 %v2298, %v2296
      %v3197 = vpack.c.b16 %v2299, %v2297
      %v3198 = vpack.c.b16 %v2302, %v2300
      %v3199 = vpack.c.b16 %v2303, %v2301
      %v3200 = vpack.c.b16 %v2306, %v2304
      %v3201 = vpack.c.b16 %v2307, %v2305
      %v3202 = vpack.c.b16 %v2310, %v2308
      %v3203 = vpack.c.b16 %v2311, %v2309
      %v3204 = vpack.c.b16 %v2314, %v2312
      %v3205 = vpack.c.b16 %v2315, %v2313
      %v3206 = vpack.c.b16 %v2318, %v2316
      %v3207 = vpack.c.b16 %v2319, %v2317
      %v3208 = vpack.c.b16 %v2322, %v2320
      %v3209 = vpack.c.b16 %v2323, %v2321
      %v3210 = vpack.c.b16 %v2326, %v2324
      %v3211 = vpack.c.b16 %v2327, %v2325
      %v3212 = vpack.c.b16 %v2330, %v2328
      %v3213 = vpack.c.b16 %v2331, %v2329
      %v3214 = vpack.c.b16 %v2334, %v2332
      %v3215 = vpack.c.b16 %v2335, %v2333
      %v3216 = vpack.c.b16 %v2338, %v2336
      %v3217 = vpack.c.b16 %v2339, %v2337
      %v3218 = vpack.c.b16 %v2342, %v2340
      %v3219 = vpack.c.b16 %v2343, %v2341
      %v3220 = vpack.c.b16 %v2346, %v2344
      %v3221 = vpack.c.b16 %v2347, %v2345
      %v3222 = vpack.c.b16 %v2350, %v2348
      %v3223 = vpack.c.b16 %v2351, %v2349
      %v3224 = vpack.c.b16 %v2354, %v2352
      %v3225 = vpack.c.b16 %v2355, %v2353
      %v3226 = vpack.c.b16 %v2358, %v2356
      %v3227 = vpack.c.b16 %v2359, %v2357
      %v3228 = vpack.c.b16 %v2362, %v2360
      %v3229 = vpack.c.b16 %v2363, %v2361
      %v3230 = vpack.c.b16 %v2366, %v2364
      %v3231 = vpack.c.b16 %v2367, %v2365
      %v3232 = vpack.c.b16 %v2370, %v2368
      %v3233 = vpack.c.b16 %v2371, %v2369
      %v3234 = vpack.c.b16 %v2374, %v2372
      %v3235 = vpack.c.b16 %v2375, %v2373
      %v3236 = vpack.c.b16 %v2378, %v2376
      %v3237 = vpack.c.b16 %v2379, %v2377
      %v3238 = vpack.c.b16 %v2382, %v2380
      %v3239 = vpack.c.b16 %v2383, %v2381
      %v3240 = vpack.c.b16 %v2386, %v2384
      %v3241 = vpack.c.b16 %v2387, %v2385
      %v3242 = vpack.c.b16 %v2390, %v2388
      %v3243 = vpack.c.b16 %v2391, %v2389
      %v3244 = vpack.c.b16 %v2394, %v2392
      %v3245 = vpack.c.b16 %v2395, %v2393
      %v3246 = vpack.c.b16 %v2398, %v2396
      %v3247 = vpack.c.b16 %v2399, %v2397
      %v3248 = vpack.c.b16 %v2402, %v2400
      %v3249 = vpack.c.b16 %v2403, %v2401
      %v3250 = vpack.c.b16 %v2406, %v2404
      %v3251 = vpack.c.b16 %v2407, %v2405
      %v3252 = vpack.c.b16 %v2410, %v2408
      %v3253 = vpack.c.b16 %v2411, %v2409
      %v3254 = vpack.c.b16 %v2414, %v2412
      %v3255 = vpack.c.b16 %v2415, %v2413
      %v3256 = vpack.c.b16 %v2418, %v2416
      %v3257 = vpack.c.b16 %v2419, %v2417
      %v3258 = vpack.c.b16 %v2422, %v2420
      %v3259 = vpack.c.b16 %v2423, %v2421
      %v3260 = vpack.c.b16 %v2426, %v2424
      %v3261 = vpack.c.b16 %v2427, %v2425
      %v3262 = vpack.c.b16 %v2430, %v2428
      %v3263 = vpack.c.b16 %v2431, %v2429
      %v3264 = vpack.c.b16 %v2434, %v2432
      %v3265 = vpack.c.b16 %v2435, %v2433
      %v3266 = vpack.c.b16 %v2438, %v2436
      %v3267 = vpack.c.b16 %v2439, %v2437
      %v3268 = vpack.c.b16 %v2442, %v2440
      %v3269 = vpack.c.b16 %v2443, %v2441
      %v3270 = vpack.c.b16 %v2446, %v2444
      %v3271 = vpack.c.b16 %v2447, %v2445
      %v3272 = vpack.c.b16 %v2450, %v2448
      %v3273 = vpack.c.b16 %v2451, %v2449
      %v3274 = vpack.c.b16 %v2454, %v2452
      %v3275 = vpack.c.b16 %v2455, %v2453
      %v3276 = vpack.c.b16 %v2458, %v2456
      %v3277 = vpack.c.b16 %v2459, %v2457
      %v3278 = vpack.c.b16 %v2462, %v2460
      %v3279 = vpack.c.b16 %v2463, %v2461
      %v3280 = vpack.c.b16 %v2466, %v2464
      %v3281 = vpack.c.b16 %v2467, %v2465
      %v3282 = vpack.c.b16 %v2470, %v2468
      %v3283 = vpack.c.b16 %v2471, %v2469
      %v3284 = vpack.c.b16 %v2474, %v2472
      %v3285 = vpack.c.b16 %v2475, %v2473
      %v3286 = vpack.c.b16 %v2478, %v2476
      %v3287 = vpack.c.b16 %v2479, %v2477
      %v3288 = vpack.c.b16 %v2482, %v2480
      %v3289 = vpack.c.b16 %v2483, %v2481
      %v3290 = vpack.c.b16 %v2486, %v2484
      %v3291 = vpack.c.b16 %v2487, %v2485
      %v3292 = vpack.c.b16 %v2490, %v2488
      %v3293 = vpack.c.b16 %v2491, %v2489
      %v3294 = vpack.c.b16 %v2494, %v2492
      %v3295 = vpack.c.b16 %v2495, %v2493
      %v3296 = vpack.c.b16 %v2498, %v2496
      %v3297 = vpack.c.b16 %v2499, %v2497
      %v3298 = vpack.c.b16 %v2502, %v2500
      %v3299 = vpack.c.b16 %v2503, %v2501
      %v3300 = vpack.c.b16 %v2506, %v2504
      %v3301 = vpack.c.b16 %v2507, %v2505
      %v3302 = vpack.c.b16 %v2510, %v2508
      %v3303 = vpack.c.b16 %v2511, %v2509
      %v3304 = vpack.c.b16 %v2514, %v2512
      %v3305 = vpack.c.b16 %v2515, %v2513
      %v3306 = vpack.c.b16 %v2518, %v2516
      %v3307 = vpack.c.b16 %v2519, %v2517
      %v3308 = vpack.c.b16 %v2522, %v2520
      %v3309 = vpack.c.b16 %v2523, %v2521
      %v3310 = vpack.c.b16 %v2526, %v2524
      %v3311 = vpack.c.b16 %v2527, %v2525
      %v3312 = vpack.c.b16 %v2530, %v2528
      %v3313 = vpack.c.b16 %v2531, %v2529
      %v3314 = vpack.c.b16 %v2534, %v2532
      %v3315 = vpack.c.b16 %v2535, %v2533
      %v3316 = vpack.c.b16 %v2538, %v2536
      %v3317 = vpack.c.b16 %v2539, %v2537
      %v3318 = vpack.c.b16 %v2542, %v2540
      %v3319 = vpack.c.b16 %v2543, %v2541
      %v3320 = vpack.c.b16 %v2546, %v2544
      %v3321 = vpack.c.b16 %v2547, %v2545
      %v3322 = vpack.c.b16 %v2550, %v2548
      %v3323 = vpack.c.b16 %v2551, %v2549
      %v3324 = vpack.c.b16 %v2554, %v2552
      %v3325 = vpack.c.b16 %v2555, %v2553
      %v3326 = vpack.c.b16 %v2558, %v2556
      %v3327 = vpack.c.b16 %v2559, %v2557
      %v3328 = vpack.c.b16 %v2562, %v2560
      %v3329 = vpack.c.b16 %v2563, %v2561
      %v3330 = vpack.c.b16 %v2566, %v2564
      %v3331 = vpack.c.b16 %v2567, %v2565
      %v3332 = vpack.c.b16 %v2570, %v2568
      %v3333 = vpack.c.b16 %v2571, %v2569
      %v3334 = vpack.c.b16 %v2574, %v2572
      %v3335 = vpack.c.b16 %v2575, %v2573
      %v3336 = vpack.c.b16 %v2578, %v2576
      %v3337 = vpack.c.b16 %v2579, %v2577
      %v3338 = vpack.c.b16 %v2582, %v2580
      %v3339 = vpack.c.b16 %v2583, %v2581
      %v3340 = vpack.c.b16 %v2586, %v2584
      %v3341 = vpack.c.b16 %v2587, %v2585
      %v3342 = vpack.c.b16 %v2590, %v2588
      %v3343 = vpack.c.b16 %v2591, %v2589
      %v3344 = vpack.c.b16 %v2594, %v2592
      %v3345 = vpack.c.b16 %v2595, %v2593
      %v3346 = vpack.c.b16 %v2598, %v2596
      %v3347 = vpack.c.b16 %v2599, %v2597
      %v3348 = vpack.c.b16 %v2602, %v2600
      %v3349 = vpack.c.b16 %v2603, %v2601
      %v3350 = vpack.c.b16 %v2606, %v2604
      %v3351 = vpack.c.b16 %v2607, %v2605
      %v3352 = vpack.c.b16 %v2610, %v2608
      %v3353 = vpack.c.b16 %v2611, %v2609
      %v3354 = vpack.c.b16 %v2614, %v2612
      %v3355 = vpack.c.b16 %v2615, %v2613
      %v3356 = vpack.c.b16 %v2618, %v2616
      %v3357 = vpack.c.b16 %v2619, %v2617
      %v3358 = vpack.c.b16 %v2622, %v2620
      %v3359 = vpack.c.b16 %v2623, %v2621
      %v3360 = vpack.c.b16 %v2626, %v2624
      %v3361 = vpack.c.b16 %v2627, %v2625
      %v3362 = vpack.c.b16 %v2630, %v2628
      %v3363 = vpack.c.b16 %v2631, %v2629
      %v3364 = vpack.c.b16 %v2634, %v2632
      %v3365 = vpack.c.b16 %v2635, %v2633
      %v3366 = vpack.c.b16 %v2638, %v2636
      %v3367 = vpack.c.b16 %v2639, %v2637
      %v3368 = vpack.c.b16 %v2642, %v2640
      %v3369 = vpack.c.b16 %v2643, %v2641
      %v3370 = vpack.c.b16 %v2646, %v2644
      %v3371 = vpack.c.b16 %v2647, %v2645
      %v3372 = vpack.c.b16 %v2650, %v2648
      %v3373 = vpack.c.b16 %v2651, %v2649
      %v3374 = vpack.c.b16 %v2654, %v2652
      %v3375 = vpack.c.b16 %v2655, %v2653
      %v3376 = vpack.c.b16 %v2658, %v2656
      %v3377 = vpack.c.b16 %v2659, %v2657
      %v3378 = vpack.c.b16 %v2662, %v2660
      %v3379 = vpack.c.b16 %v2663, %v2661
      %v3380 = vpack.c.b16 %v2666, %v2664
      %v3381 = vpack.c.b16 %v2667, %v2665
      %v3382 = vpack.c.b16 %v2670, %v2668
      %v3383 = vpack.c.b16 %v2671, %v2669
      %v3384 = vpack.c.b16 %v2674, %v2672
      %v3385 = vpack.c.b16 %v2675, %v2673
      %v3386 = vpack.c.b16 %v2678, %v2676
      %v3387 = vpack.c.b16 %v2679, %v2677
      %v3388 = vpack.c.b16 %v2682, %v2680
      %v3389 = vpack.c.b16 %v2683, %v2681
      %v3390 = vpack.c.b16 %v2686, %v2684
      %v3391 = vpack.c.b16 %v2687, %v2685
      %v3392 = vpack.c.b16 %v2690, %v2688
      %v3393 = vpack.c.b16 %v2691, %v2689
      %v3394 = vpack.c.b16 %v2694, %v2692
      %v3395 = vpack.c.b16 %v2695, %v2693
      %v3396 = vpack.c.b16 %v2698, %v2696
      %v3397 = vpack.c.b16 %v2699, %v2697
      %v3398 = vpack.c.b16 %v2702, %v2700
      %v3399 = vpack.c.b16 %v2703, %v2701
      %v3400 = vpack.c.b16 %v2706, %v2704
      %v3401 = vpack.c.b16 %v2707, %v2705
      %v3402 = vpack.c.b16 %v2710, %v2708
      %v3403 = vpack.c.b16 %v2711, %v2709
      %v3404 = vpack.c.b16 %v2714, %v2712
      %v3405 = vpack.c.b16 %v2715, %v2713
      %v3406 = vpack.c.b16 %v2718, %v2716
      %v3407 = vpack.c.b16 %v2719, %v2717
      %v3408 = vpack.c.b16 %v2722, %v2720
      %v3409 = vpack.c.b16 %v2723, %v2721
      %v3410 = vpack.c.b16 %v2726, %v2724
      %v3411 = vpack.c.b16 %v2727, %v2725
      %v3412 = vpack.c.b16 %v2730, %v2728
      %v3413 = vpack.c.b16 %v2731, %v2729
      %v3414 = vpack.c.b16 %v2734, %v2732
      %v3415 = vpack.c.b16 %v2735, %v2733
      %v3416 = vpack.c.b16 %v2738, %v2736
      %v3417 = vpack.c.b16 %v2739, %v2737
      %v3418 = vpack.c.b16 %v2742, %v2740
      %v3419 = vpack.c.b16 %v2743, %v2741
      %v3420 = vpack.c.b16 %v2746, %v2744
      %v3421 = vpack.c.b16 %v2747, %v2745
      %v3422 = vpack.c.b16 %v2750, %v2748
      %v3423 = vpack.c.b16 %v2751, %v2749
      %v3424 = vpack.c.b16 %v2754, %v2752
      %v3425 = vpack.c.b16 %v2755, %v2753
      %v3426 = vpack.c.b16 %v2758, %v2756
      %v3427 = vpack.c.b16 %v2759, %v2757
      %v3428 = vpack.c.b16 %v2762, %v2760
      %v3429 = vpack.c.b16 %v2763, %v2761
      %v3430 = vpack.c.b16 %v2766, %v2764
      %v3431 = vpack.c.b16 %v2767, %v2765
      %v3432 = vpack.c.b16 %v2770, %v2768
      %v3433 = vpack.c.b16 %v2771, %v2769
      %v3434 = vpack.c.b16 %v2774, %v2772
      %v3435 = vpack.c.b16 %v2775, %v2773
      %v3436 = vpack.c.b16 %v2778, %v2776
      %v3437 = vpack.c.b16 %v2779, %v2777
      %v3438 = vpack.c.b16 %v2782, %v2780
      %v3439 = vpack.c.b16 %v2783, %v2781
      %v3440 = vpack.c.b16 %v2786, %v2784
      %v3441 = vpack.c.b16 %v2787, %v2785
      %v3442 = vpack.c.b16 %v2790, %v2788
      %v3443 = vpack.c.b16 %v2791, %v2789
      %v3444 = vpack.c.b16 %v2794, %v2792
      %v3445 = vpack.c.b16 %v2795, %v2793
      %v3446 = vpack.c.b16 %v2798, %v2796
      %v3447 = vpack.c.b16 %v2799, %v2797
      %v3448 = vpack.c.b16 %v2802, %v2800
      %v3449 = vpack.c.b16 %v2803, %v2801
      %v3450 = vpack.c.b16 %v2806, %v2804
      %v3451 = vpack.c.b16 %v2807, %v2805
      %v3452 = vpack.c.b16 %v2810, %v2808
      %v3453 = vpack.c.b16 %v2811, %v2809
      %v3454 = vpack.c.b16 %v2814, %v2812
      %v3455 = vpack.c.b16 %v2815, %v2813
      %v3456 = vpack.c.b16 %v2818, %v2816
      %v3457 = vpack.c.b16 %v2819, %v2817
      %v3458 = vpack.c.b16 %v2822, %v2820
      %v3459 = vpack.c.b16 %v2823, %v2821
      %v3460 = vpack.c.b16 %v2826, %v2824
      %v3461 = vpack.c.b16 %v2827, %v2825
      %v3462 = vpack.c.b16 %v2830, %v2828
      %v3463 = vpack.c.b16 %v2831, %v2829
      %v3464 = vpack.c.b16 %v2834, %v2832
      %v3465 = vpack.c.b16 %v2835, %v2833
      %v3466 = vpack.c.b16 %v2838, %v2836
      %v3467 = vpack.c.b16 %v2839, %v2837
      %v3468 = vpack.c.b16 %v2842, %v2840
      %v3469 = vpack.c.b16 %v2843, %v2841
      %v3470 = vpack.c.b16 %v2846, %v2844
      %v3471 = vpack.c.b16 %v2847, %v2845
      %v3472 = vpack.c.b16 %v2850, %v2848
      %v3473 = vpack.c.b16 %v2851, %v2849
      %v3474 = vpack.c.b16 %v2854, %v2852
      %v3475 = vpack.c.b16 %v2855, %v2853
      %v3476 = vpack.c.b16 %v2858, %v2856
      %v3477 = vpack.c.b16 %v2859, %v2857
      %v3478 = vpack.c.b16 %v2862, %v2860
      %v3479 = vpack.c.b16 %v2863, %v2861
      %v3480 = vpack.c.b16 %v2866, %v2864
      %v3481 = vpack.c.b16 %v2867, %v2865
      %v3482 = vpack.c.b16 %v2870, %v2868
      %v3483 = vpack.c.b16 %v2871, %v2869
      %v3484 = vpack.c.b16 %v2874, %v2872
      %v3485 = vpack.c.b16 %v2875, %v2873
      %v3486 = vpack.c.b16 %v2878, %v2876
      %v3487 = vpack.c.b16 %v2879, %v2877
      %v3488 = vpack.c.b16 %v2882, %v2880
      %v3489 = vpack.c.b16 %v2883, %v2881
      %v3490 = vpack.c.b16 %v2886, %v2884
      %v3491 = vpack.c.b16 %v2887, %v2885
      %v3492 = vpack.c.b16 %v2890, %v2888
      %v3493 = vpack.c.b16 %v2891, %v2889
      %v3494 = vpack.c.b16 %v2894, %v2892
      %v3495 = vpack.c.b16 %v2895, %v2893
      %v3496 = vpack.c.b16 %v2898, %v2896
      %v3497 = vpack.c.b16 %v2899, %v2897
      %v3498 = vpack.c.b16 %v2902, %v2900
      %v3499 = vpack.c.b16 %v2903, %v2901
      %v3500 = vpack.c.b16 %v2906, %v2904
      %v3501 = vpack.c.b16 %v2907, %v2905
      %v3502 = vpack.c.b16 %v2910, %v2908
      %v3503 = vpack.c.b16 %v2911, %v2909
      %v3504 = vpack.c.b16 %v2914, %v2912
      %v3505 = vpack.c.b16 %v2915, %v2913
      %v3506 = vpack.c.b16 %v2918, %v2916
      %v3507 = vpack.c.b16 %v2919, %v2917
      %v3508 = vpack.c.b16 %v2922, %v2920
      %v3509 = vpack.c.b16 %v2923, %v2921
      %v3510 = vpack.c.b16 %v2926, %v2924
      %v3511 = vpack.c.b16 %v2927, %v2925
      %v3512 = vpack.c.b16 %v2930, %v2928
      %v3513 = vpack.c.b16 %v2931, %v2929
      %v3514 = vpack.c.b16 %v2934, %v2932
      %v3515 = vpack.c.b16 %v2935, %v2933
      %v3516 = vpack.c.b16 %v2938, %v2936
      %v3517 = vpack.c.b16 %v2939, %v2937
      %v3518 = vpack.c.b16 %v2942, %v2940
      %v3519 = vpack.c.b16 %v2943, %v2941
      %4096 = vmatprep.subr.bf16.mxu0 %v2945
      %4097 = vmatpush1.bf16.msra.mxu0 %v2944
      %4098 = vmatprep.subr.bf16.mxu0 %v2947
      %4099 = vmatpush1.bf16.msra.mxu0 %v2946
      %4100 = vmatprep.subr.bf16.mxu0 %v2949
      %4101 = vmatpush1.bf16.msra.mxu0 %v2948
      %4102 = vmatprep.subr.bf16.mxu0 %v2951
      %4103 = vmatpush1.bf16.msra.mxu0 %v2950
      %4104 = vmatprep.subr.bf16.mxu0 %v2953
      %4105 = vmatpush1.bf16.msra.mxu0 %v2952
      %4106 = vmatprep.subr.bf16.mxu0 %v2955
      %4107 = vmatpush1.bf16.msra.mxu0 %v2954
      %4108 = vmatprep.subr.bf16.mxu0 %v2957
      %4109 = vmatpush1.bf16.msra.mxu0 %v2956
      %4110 = vmatprep.subr.bf16.mxu0 %v2959
      %4111 = vmatpush1.bf16.msra.mxu0 %v2958
      %4112 = vmatprep.subr.bf16.mxu0 %v2961
      %4113 = vmatpush1.bf16.msra.mxu0 %v2960
      %4114 = vmatprep.subr.bf16.mxu0 %v2963
      %4115 = vmatpush1.bf16.msra.mxu0 %v2962
      %4116 = vmatprep.subr.bf16.mxu0 %v2965
      %4117 = vmatpush1.bf16.msra.mxu0 %v2964
      %4118 = vmatprep.subr.bf16.mxu0 %v2967
      %4119 = vmatpush1.bf16.msra.mxu0 %v2966
      %4120 = vmatprep.subr.bf16.mxu0 %v2969
      %4121 = vmatpush1.bf16.msra.mxu0 %v2968
      %4122 = vmatprep.subr.bf16.mxu0 %v2971
      %4123 = vmatpush1.bf16.msra.mxu0 %v2970
      %4124 = vmatprep.subr.bf16.mxu0 %v2973
      %4125 = vmatpush1.bf16.msra.mxu0 %v2972
      %4126 = vmatprep.subr.bf16.mxu0 %v2975
      %4127 = vmatpush1.bf16.msra.mxu0 %v2974
      %4128 = vmatprep.mubr.bf16.mxu0 %v997
      %4129 = vmatmul.mubr.bf16.gmra.mrb[0].mxu0 %v983
      %v4130 = vpop.f32.mrb[0].mxu0
      %v4131 = vadd.f32 0.0, %v4130
      %v4132 = vpop.f32.mrb[0].mxu0
      %v4133 = vadd.f32 0.0, %v4132
      %v4134 = vpop.f32.mrb[0].mxu0
      %v4135 = vpop.f32.mrb[0].mxu0
      %4136 = vdwg.mxu0
      %4137 = vmatprep.subr.bf16.mxu0 %v2977
      %4138 = vmatpush1.bf16.msra.mxu0 %v2976
      %4139 = vmatprep.subr.bf16.mxu0 %v2979
      %4140 = vmatpush1.bf16.msra.mxu0 %v2978
      %4141 = vmatprep.subr.bf16.mxu0 %v2981
      %4142 = vmatpush1.bf16.msra.mxu0 %v2980
      %4143 = vmatprep.subr.bf16.mxu0 %v2983
      %4144 = vmatpush1.bf16.msra.mxu0 %v2982
      %4145 = vmatprep.subr.bf16.mxu0 %v2985
      %4146 = vmatpush1.bf16.msra.mxu0 %v2984
      %4147 = vmatprep.subr.bf16.mxu0 %v2987
      %4148 = vmatpush1.bf16.msra.mxu0 %v2986
      %4149 = vmatprep.subr.bf16.mxu0 %v2989
      %4150 = vmatpush1.bf16.msra.mxu0 %v2988
      %4151 = vmatprep.subr.bf16.mxu0 %v2991
      %4152 = vmatpush1.bf16.msra.mxu0 %v2990
      %4153 = vmatprep.subr.bf16.mxu0 %v2993
      %4154 = vmatpush1.bf16.msra.mxu0 %v2992
      %4155 = vmatprep.subr.bf16.mxu0 %v2995
      %4156 = vmatpush1.bf16.msra.mxu0 %v2994
      %4157 = vmatprep.subr.bf16.mxu0 %v2997
      %4158 = vmatpush1.bf16.msra.mxu0 %v2996
      %4159 = vmatprep.subr.bf16.mxu0 %v2999
      %4160 = vmatpush1.bf16.msra.mxu0 %v2998
      %4161 = vmatprep.subr.bf16.mxu0 %v3001
      %4162 = vmatpush1.bf16.msra.mxu0 %v3000
      %4163 = vmatprep.subr.bf16.mxu0 %v3003
      %4164 = vmatpush1.bf16.msra.mxu0 %v3002
      %4165 = vmatprep.subr.bf16.mxu0 %v3005
      %4166 = vmatpush1.bf16.msra.mxu0 %v3004
      %4167 = vmatprep.subr.bf16.mxu0 %v3007
      %4168 = vmatpush1.bf16.msra.mxu0 %v3006
      %4169 = vmatprep.mubr.bf16.mxu0 %v1007
      %4170 = vmatmul.mubr.bf16.gmra.mrb[0].mxu0 %v1005
      %v4171 = vpop.f32.mrb[0].mxu0
      %v4172 = vadd.f32 %v4131, %v4171
      %v4173 = vpop.f32.mrb[0].mxu0
      %v4174 = vadd.f32 %v4133, %v4173
      %v4175 = vpop.f32.mrb[0].mxu0
      %v4176 = vpop.f32.mrb[0].mxu0
      %4177 = vdwg.mxu0
      %4178 = vmatprep.subr.bf16.mxu0 %v3009
      %4179 = vmatpush1.bf16.msra.mxu0 %v3008
      %4180 = vmatprep.subr.bf16.mxu0 %v3011
      %4181 = vmatpush1.bf16.msra.mxu0 %v3010
      %4182 = vmatprep.subr.bf16.mxu0 %v3013
      %4183 = vmatpush1.bf16.msra.mxu0 %v3012
      %4184 = vmatprep.subr.bf16.mxu0 %v3015
      %4185 = vmatpush1.bf16.msra.mxu0 %v3014
      %4186 = vmatprep.subr.bf16.mxu0 %v3017
      %4187 = vmatpush1.bf16.msra.mxu0 %v3016
      %4188 = vmatprep.subr.bf16.mxu0 %v3019
      %4189 = vmatpush1.bf16.msra.mxu0 %v3018
      %4190 = vmatprep.subr.bf16.mxu0 %v3021
      %4191 = vmatpush1.bf16.msra.mxu0 %v3020
      %4192 = vmatprep.subr.bf16.mxu0 %v3023
      %4193 = vmatpush1.bf16.msra.mxu0 %v3022
      %4194 = vmatprep.subr.bf16.mxu0 %v3025
      %4195 = vmatpush1.bf16.msra.mxu0 %v3024
      %4196 = vmatprep.subr.bf16.mxu0 %v3027
      %4197 = vmatpush1.bf16.msra.mxu0 %v3026
      %4198 = vmatprep.subr.bf16.mxu0 %v3029
      %4199 = vmatpush1.bf16.msra.mxu0 %v3028
      %4200 = vmatprep.subr.bf16.mxu0 %v3031
      %4201 = vmatpush1.bf16.msra.mxu0 %v3030
      %4202 = vmatprep.subr.bf16.mxu0 %v3033
      %4203 = vmatpush1.bf16.msra.mxu0 %v3032
      %4204 = vmatprep.subr.bf16.mxu0 %v3035
      %4205 = vmatpush1.bf16.msra.mxu0 %v3034
      %4206 = vmatprep.subr.bf16.mxu0 %v3037
      %4207 = vmatpush1.bf16.msra.mxu0 %v3036
      %4208 = vmatprep.subr.bf16.mxu0 %v3039
      %4209 = vmatpush1.bf16.msra.mxu0 %v3038
      %4210 = vmatprep.mubr.bf16.mxu0 %v1004
      %4211 = vmatmul.mubr.bf16.gmra.mrb[0].mxu0 %v990
      %v4212 = vpop.f32.mrb[0].mxu0
      %v4213 = vadd.f32 %v4172, %v4212
      %v4214 = vpop.f32.mrb[0].mxu0
      %v4215 = vadd.f32 %v4174, %v4214
      %v4216 = vpop.f32.mrb[0].mxu0
      %v4217 = vpop.f32.mrb[0].mxu0
      %4218 = vdwg.mxu0
      %4219 = vmatprep.subr.bf16.mxu0 %v3041
      %4220 = vmatpush1.bf16.msra.mxu0 %v3040
      %4221 = vmatprep.subr.bf16.mxu0 %v3043
      %4222 = vmatpush1.bf16.msra.mxu0 %v3042
      %4223 = vmatprep.subr.bf16.mxu0 %v3045
      %4224 = vmatpush1.bf16.msra.mxu0 %v3044
      %4225 = vmatprep.subr.bf16.mxu0 %v3047
      %4226 = vmatpush1.bf16.msra.mxu0 %v3046
      %4227 = vmatprep.subr.bf16.mxu0 %v3049
      %4228 = vmatpush1.bf16.msra.mxu0 %v3048
      %4229 = vmatprep.subr.bf16.mxu0 %v3051
      %4230 = vmatpush1.bf16.msra.mxu0 %v3050
      %4231 = vmatprep.subr.bf16.mxu0 %v3053
      %4232 = vmatpush1.bf16.msra.mxu0 %v3052
      %4233 = vmatprep.subr.bf16.mxu0 %v3055
      %4234 = vmatpush1.bf16.msra.mxu0 %v3054
      %4235 = vmatprep.subr.bf16.mxu0 %v3057
      %4236 = vmatpush1.bf16.msra.mxu0 %v3056
      %4237 = vmatprep.subr.bf16.mxu0 %v3059
      %4238 = vmatpush1.bf16.msra.mxu0 %v3058
      %4239 = vmatprep.subr.bf16.mxu0 %v3061
      %4240 = vmatpush1.bf16.msra.mxu0 %v3060
      %4241 = vmatprep.subr.bf16.mxu0 %v3063
      %4242 = vmatpush1.bf16.msra.mxu0 %v3062
      %4243 = vmatprep.subr.bf16.mxu0 %v3065
      %4244 = vmatpush1.bf16.msra.mxu0 %v3064
      %4245 = vmatprep.subr.bf16.mxu0 %v3067
      %4246 = vmatpush1.bf16.msra.mxu0 %v3066
      %4247 = vmatprep.subr.bf16.mxu0 %v3069
      %4248 = vmatpush1.bf16.msra.mxu0 %v3068
      %4249 = vmatprep.subr.bf16.mxu0 %v3071
      %4250 = vmatpush1.bf16.msra.mxu0 %v3070
      %4251 = vmatprep.mubr.bf16.mxu0 %v1008
      %4252 = vmatmul.mubr.bf16.gmra.mrb[0].mxu0 %v1006
      %v4253 = vpop.f32.mrb[0].mxu0
      %v4254 = vadd.f32 %v4213, %v4253
      %v4255 = vpop.f32.mrb[0].mxu0
      %v4256 = vadd.f32 %v4215, %v4255
      %v4257 = vpop.f32.mrb[0].mxu0
      %v4258 = vpop.f32.mrb[0].mxu0
      %4259 = vdwg.mxu0
      %4260 = vmatprep.subr.bf16.mxu0 %v3073
      %4261 = vmatpush1.bf16.msra.mxu0 %v3072
      %4262 = vmatprep.subr.bf16.mxu0 %v3075
      %4263 = vmatpush1.bf16.msra.mxu0 %v3074
      %4264 = vmatprep.subr.bf16.mxu0 %v3077
      %4265 = vmatpush1.bf16.msra.mxu0 %v3076
      %4266 = vmatprep.subr.bf16.mxu0 %v3079
      %4267 = vmatpush1.bf16.msra.mxu0 %v3078
      %4268 = vmatprep.subr.bf16.mxu0 %v3081
      %4269 = vmatpush1.bf16.msra.mxu0 %v3080
      %4270 = vmatprep.subr.bf16.mxu0 %v3083
      %4271 = vmatpush1.bf16.msra.mxu0 %v3082
      %4272 = vmatprep.subr.bf16.mxu0 %v3085
      %4273 = vmatpush1.bf16.msra.mxu0 %v3084
      %4274 = vmatprep.subr.bf16.mxu0 %v3087
      %4275 = vmatpush1.bf16.msra.mxu0 %v3086
      %4276 = vmatprep.subr.bf16.mxu0 %v3089
      %4277 = vmatpush1.bf16.msra.mxu0 %v3088
      %4278 = vmatprep.subr.bf16.mxu0 %v3091
      %4279 = vmatpush1.bf16.msra.mxu0 %v3090
      %4280 = vmatprep.subr.bf16.mxu0 %v3093
      %4281 = vmatpush1.bf16.msra.mxu0 %v3092
      %4282 = vmatprep.subr.bf16.mxu0 %v3095
      %4283 = vmatpush1.bf16.msra.mxu0 %v3094
      %4284 = vmatprep.subr.bf16.mxu0 %v3097
      %4285 = vmatpush1.bf16.msra.mxu0 %v3096
      %4286 = vmatprep.subr.bf16.mxu0 %v3099
      %4287 = vmatpush1.bf16.msra.mxu0 %v3098
      %4288 = vmatprep.subr.bf16.mxu0 %v3101
      %4289 = vmatpush1.bf16.msra.mxu0 %v3100
      %4290 = vmatprep.subr.bf16.mxu0 %v3103
      %4291 = vmatpush1.bf16.msra.mxu0 %v3102
      %4292 = vmatprep.mubr.bf16.mxu0 %v1046
      %4293 = vmatmul.mubr.bf16.gmra.mrb[0].mxu0 %v1032
      %v4294 = vpop.f32.mrb[0].mxu0
      %v4295 = vadd.f32 %v4254, %v4294
      %v4296 = vpop.f32.mrb[0].mxu0
      %v4297 = vadd.f32 %v4256, %v4296
      %v4298 = vpop.f32.mrb[0].mxu0
      %v4299 = vpop.f32.mrb[0].mxu0
      %4300 = vdwg.mxu0
      %4301 = vmatprep.subr.bf16.mxu0 %v3105
      %4302 = vmatpush1.bf16.msra.mxu0 %v3104
      %4303 = vmatprep.subr.bf16.mxu0 %v3107
      %4304 = vmatpush1.bf16.msra.mxu0 %v3106
      %4305 = vmatprep.subr.bf16.mxu0 %v3109
      %4306 = vmatpush1.bf16.msra.mxu0 %v3108
      %4307 = vmatprep.subr.bf16.mxu0 %v3111
      %4308 = vmatpush1.bf16.msra.mxu0 %v3110
      %4309 = vmatprep.subr.bf16.mxu0 %v3113
      %4310 = vmatpush1.bf16.msra.mxu0 %v3112
      %4311 = vmatprep.subr.bf16.mxu0 %v3115
      %4312 = vmatpush1.bf16.msra.mxu0 %v3114
      %4313 = vmatprep.subr.bf16.mxu0 %v3117
      %4314 = vmatpush1.bf16.msra.mxu0 %v3116
      %4315 = vmatprep.subr.bf16.mxu0 %v3119
      %4316 = vmatpush1.bf16.msra.mxu0 %v3118
      %4317 = vmatprep.subr.bf16.mxu0 %v3121
      %4318 = vmatpush1.bf16.msra.mxu0 %v3120
      %4319 = vmatprep.subr.bf16.mxu0 %v3123
      %4320 = vmatpush1.bf16.msra.mxu0 %v3122
      %4321 = vmatprep.subr.bf16.mxu0 %v3125
      %4322 = vmatpush1.bf16.msra.mxu0 %v3124
      %4323 = vmatprep.subr.bf16.mxu0 %v3127
      %4324 = vmatpush1.bf16.msra.mxu0 %v3126
      %4325 = vmatprep.subr.bf16.mxu0 %v3129
      %4326 = vmatpush1.bf16.msra.mxu0 %v3128
      %4327 = vmatprep.subr.bf16.mxu0 %v3131
      %4328 = vmatpush1.bf16.msra.mxu0 %v3130
      %4329 = vmatprep.subr.bf16.mxu0 %v3133
      %4330 = vmatpush1.bf16.msra.mxu0 %v3132
      %4331 = vmatprep.subr.bf16.mxu0 %v3135
      %4332 = vmatpush1.bf16.msra.mxu0 %v3134
      %4333 = vmatprep.mubr.bf16.mxu0 %v1056
      %4334 = vmatmul.mubr.bf16.gmra.mrb[0].mxu0 %v1054
      %v4335 = vpop.f32.mrb[0].mxu0
      %v4336 = vadd.f32 %v4295, %v4335
      %v4337 = vpop.f32.mrb[0].mxu0
      %v4338 = vadd.f32 %v4297, %v4337
      %v4339 = vpop.f32.mrb[0].mxu0
      %v4340 = vpop.f32.mrb[0].mxu0
      %4341 = vdwg.mxu0
      %4342 = vmatprep.subr.bf16.mxu0 %v3137
      %4343 = vmatpush1.bf16.msra.mxu0 %v3136
      %4344 = vmatprep.subr.bf16.mxu0 %v3139
      %4345 = vmatpush1.bf16.msra.mxu0 %v3138
      %4346 = vmatprep.subr.bf16.mxu0 %v3141
      %4347 = vmatpush1.bf16.msra.mxu0 %v3140
      %4348 = vmatprep.subr.bf16.mxu0 %v3143
      %4349 = vmatpush1.bf16.msra.mxu0 %v3142
      %4350 = vmatprep.subr.bf16.mxu0 %v3145
      %4351 = vmatpush1.bf16.msra.mxu0 %v3144
      %4352 = vmatprep.subr.bf16.mxu0 %v3147
      %4353 = vmatpush1.bf16.msra.mxu0 %v3146
      %4354 = vmatprep.subr.bf16.mxu0 %v3149
      %4355 = vmatpush1.bf16.msra.mxu0 %v3148
      %4356 = vmatprep.subr.bf16.mxu0 %v3151
      %4357 = vmatpush1.bf16.msra.mxu0 %v3150
      %4358 = vmatprep.subr.bf16.mxu0 %v3153
      %4359 = vmatpush1.bf16.msra.mxu0 %v3152
      %4360 = vmatprep.subr.bf16.mxu0 %v3155
      %4361 = vmatpush1.bf16.msra.mxu0 %v3154
      %4362 = vmatprep.subr.bf16.mxu0 %v3157
      %4363 = vmatpush1.bf16.msra.mxu0 %v3156
      %4364 = vmatprep.subr.bf16.mxu0 %v3159
      %4365 = vmatpush1.bf16.msra.mxu0 %v3158
      %4366 = vmatprep.subr.bf16.mxu0 %v3161
      %4367 = vmatpush1.bf16.msra.mxu0 %v3160
      %4368 = vmatprep.subr.bf16.mxu0 %v3163
      %4369 = vmatpush1.bf16.msra.mxu0 %v3162
      %4370 = vmatprep.subr.bf16.mxu0 %v3165
      %4371 = vmatpush1.bf16.msra.mxu0 %v3164
      %4372 = vmatprep.subr.bf16.mxu0 %v3167
      %4373 = vmatpush1.bf16.msra.mxu0 %v3166
      %4374 = vmatprep.mubr.bf16.mxu0 %v1053
      %4375 = vmatmul.mubr.bf16.gmra.mrb[0].mxu0 %v1039
      %v4376 = vpop.f32.mrb[0].mxu0
      %v4377 = vadd.f32 %v4336, %v4376
      %v4378 = vpop.f32.mrb[0].mxu0
      %v4379 = vadd.f32 %v4338, %v4378
      %v4380 = vpop.f32.mrb[0].mxu0
      %v4381 = vpop.f32.mrb[0].mxu0
      %4382 = vdwg.mxu0
      %4383 = vmatprep.subr.bf16.mxu0 %v3169
      %4384 = vmatpush1.bf16.msra.mxu0 %v3168
      %4385 = vmatprep.subr.bf16.mxu0 %v3171
      %4386 = vmatpush1.bf16.msra.mxu0 %v3170
      %4387 = vmatprep.subr.bf16.mxu0 %v3173
      %4388 = vmatpush1.bf16.msra.mxu0 %v3172
      %4389 = vmatprep.subr.bf16.mxu0 %v3175
      %4390 = vmatpush1.bf16.msra.mxu0 %v3174
      %4391 = vmatprep.subr.bf16.mxu0 %v3177
      %4392 = vmatpush1.bf16.msra.mxu0 %v3176
      %4393 = vmatprep.subr.bf16.mxu0 %v3179
      %4394 = vmatpush1.bf16.msra.mxu0 %v3178
      %4395 = vmatprep.subr.bf16.mxu0 %v3181
      %4396 = vmatpush1.bf16.msra.mxu0 %v3180
      %4397 = vmatprep.subr.bf16.mxu0 %v3183
      %4398 = vmatpush1.bf16.msra.mxu0 %v3182
      %4399 = vmatprep.subr.bf16.mxu0 %v3185
      %4400 = vmatpush1.bf16.msra.mxu0 %v3184
      %4401 = vmatprep.subr.bf16.mxu0 %v3187
      %4402 = vmatpush1.bf16.msra.mxu0 %v3186
      %4403 = vmatprep.subr.bf16.mxu0 %v3189
      %4404 = vmatpush1.bf16.msra.mxu0 %v3188
      %4405 = vmatprep.subr.bf16.mxu0 %v3191
      %4406 = vmatpush1.bf16.msra.mxu0 %v3190
      %4407 = vmatprep.subr.bf16.mxu0 %v3193
      %4408 = vmatpush1.bf16.msra.mxu0 %v3192
      %4409 = vmatprep.subr.bf16.mxu0 %v3195
      %4410 = vmatpush1.bf16.msra.mxu0 %v3194
      %4411 = vmatprep.subr.bf16.mxu0 %v3197
      %4412 = vmatpush1.bf16.msra.mxu0 %v3196
      %4413 = vmatprep.subr.bf16.mxu0 %v3199
      %4414 = vmatpush1.bf16.msra.mxu0 %v3198
      %4415 = vmatprep.mubr.bf16.mxu0 %v1057
      %4416 = vmatmul.mubr.bf16.gmra.mrb[0].mxu0 %v1055
      %v4417 = vpop.f32.mrb[0].mxu0
      %v4418 = vadd.f32 %v4377, %v4417
      %v4419 = vpop.f32.mrb[0].mxu0
      %v4420 = vadd.f32 %v4379, %v4419
      %v4421 = vpop.f32.mrb[0].mxu0
      %v4422 = vpop.f32.mrb[0].mxu0
      %4423 = vdwg.mxu0
      %4424 = vmatprep.subr.bf16.mxu0 %v3201
      %4425 = vmatpush1.bf16.msra.mxu0 %v3200
      %4426 = vmatprep.subr.bf16.mxu0 %v3203
      %4427 = vmatpush1.bf16.msra.mxu0 %v3202
      %4428 = vmatprep.subr.bf16.mxu0 %v3205
      %4429 = vmatpush1.bf16.msra.mxu0 %v3204
      %4430 = vmatprep.subr.bf16.mxu0 %v3207
      %4431 = vmatpush1.bf16.msra.mxu0 %v3206
      %4432 = vmatprep.subr.bf16.mxu0 %v3209
      %4433 = vmatpush1.bf16.msra.mxu0 %v3208
      %4434 = vmatprep.subr.bf16.mxu0 %v3211
      %4435 = vmatpush1.bf16.msra.mxu0 %v3210
      %4436 = vmatprep.subr.bf16.mxu0 %v3213
      %4437 = vmatpush1.bf16.msra.mxu0 %v3212
      %4438 = vmatprep.subr.bf16.mxu0 %v3215
      %4439 = vmatpush1.bf16.msra.mxu0 %v3214
      %4440 = vmatprep.subr.bf16.mxu0 %v3217
      %4441 = vmatpush1.bf16.msra.mxu0 %v3216
      %4442 = vmatprep.subr.bf16.mxu0 %v3219
      %4443 = vmatpush1.bf16.msra.mxu0 %v3218
      %4444 = vmatprep.subr.bf16.mxu0 %v3221
      %4445 = vmatpush1.bf16.msra.mxu0 %v3220
      %4446 = vmatprep.subr.bf16.mxu0 %v3223
      %4447 = vmatpush1.bf16.msra.mxu0 %v3222
      %4448 = vmatprep.subr.bf16.mxu0 %v3225
      %4449 = vmatpush1.bf16.msra.mxu0 %v3224
      %4450 = vmatprep.subr.bf16.mxu0 %v3227
      %4451 = vmatpush1.bf16.msra.mxu0 %v3226
      %4452 = vmatprep.subr.bf16.mxu0 %v3229
      %4453 = vmatpush1.bf16.msra.mxu0 %v3228
      %4454 = vmatprep.subr.bf16.mxu0 %v3231
      %4455 = vmatpush1.bf16.msra.mxu0 %v3230
      %4456 = vmatprep.mubr.bf16.mxu0 %v1095
      %4457 = vmatmul.mubr.bf16.gmra.mrb[0].mxu0 %v1081
      %v4458 = vpop.f32.mrb[0].mxu0
      %v4459 = vadd.f32 %v4418, %v4458
      %v4460 = vpop.f32.mrb[0].mxu0
      %v4461 = vadd.f32 %v4420, %v4460
      %v4462 = vpop.f32.mrb[0].mxu0
      %v4463 = vpop.f32.mrb[0].mxu0
      %4464 = vdwg.mxu0
      %4465 = vmatprep.subr.bf16.mxu0 %v3233
      %4466 = vmatpush1.bf16.msra.mxu0 %v3232
      %4467 = vmatprep.subr.bf16.mxu0 %v3235
      %4468 = vmatpush1.bf16.msra.mxu0 %v3234
      %4469 = vmatprep.subr.bf16.mxu0 %v3237
      %4470 = vmatpush1.bf16.msra.mxu0 %v3236
      %4471 = vmatprep.subr.bf16.mxu0 %v3239
      %4472 = vmatpush1.bf16.msra.mxu0 %v3238
      %4473 = vmatprep.subr.bf16.mxu0 %v3241
      %4474 = vmatpush1.bf16.msra.mxu0 %v3240
      %4475 = vmatprep.subr.bf16.mxu0 %v3243
      %4476 = vmatpush1.bf16.msra.mxu0 %v3242
      %4477 = vmatprep.subr.bf16.mxu0 %v3245
      %4478 = vmatpush1.bf16.msra.mxu0 %v3244
      %4479 = vmatprep.subr.bf16.mxu0 %v3247
      %4480 = vmatpush1.bf16.msra.mxu0 %v3246
      %4481 = vmatprep.subr.bf16.mxu0 %v3249
      %4482 = vmatpush1.bf16.msra.mxu0 %v3248
      %4483 = vmatprep.subr.bf16.mxu0 %v3251
      %4484 = vmatpush1.bf16.msra.mxu0 %v3250
      %4485 = vmatprep.subr.bf16.mxu0 %v3253
      %4486 = vmatpush1.bf16.msra.mxu0 %v3252
      %4487 = vmatprep.subr.bf16.mxu0 %v3255
      %4488 = vmatpush1.bf16.msra.mxu0 %v3254
      %4489 = vmatprep.subr.bf16.mxu0 %v3257
      %4490 = vmatpush1.bf16.msra.mxu0 %v3256
      %4491 = vmatprep.subr.bf16.mxu0 %v3259
      %4492 = vmatpush1.bf16.msra.mxu0 %v3258
      %4493 = vmatprep.subr.bf16.mxu0 %v3261
      %4494 = vmatpush1.bf16.msra.mxu0 %v3260
      %4495 = vmatprep.subr.bf16.mxu0 %v3263
      %4496 = vmatpush1.bf16.msra.mxu0 %v3262
      %4497 = vmatprep.mubr.bf16.mxu0 %v1105
      %4498 = vmatmul.mubr.bf16.gmra.mrb[0].mxu0 %v1103
      %v4499 = vpop.f32.mrb[0].mxu0
      %v4500 = vadd.f32 %v4459, %v4499
      %v4501 = vpop.f32.mrb[0].mxu0
      %v4502 = vadd.f32 %v4461, %v4501
      %v4503 = vpop.f32.mrb[0].mxu0
      %v4504 = vpop.f32.mrb[0].mxu0
      %4505 = vdwg.mxu0
      %4506 = vmatprep.subr.bf16.mxu0 %v3265
      %4507 = vmatpush1.bf16.msra.mxu0 %v3264
      %4508 = vmatprep.subr.bf16.mxu0 %v3267
      %4509 = vmatpush1.bf16.msra.mxu0 %v3266
      %4510 = vmatprep.subr.bf16.mxu0 %v3269
      %4511 = vmatpush1.bf16.msra.mxu0 %v3268
      %4512 = vmatprep.subr.bf16.mxu0 %v3271
      %4513 = vmatpush1.bf16.msra.mxu0 %v3270
      %4514 = vmatprep.subr.bf16.mxu0 %v3273
      %4515 = vmatpush1.bf16.msra.mxu0 %v3272
      %4516 = vmatprep.subr.bf16.mxu0 %v3275
      %4517 = vmatpush1.bf16.msra.mxu0 %v3274
      %4518 = vmatprep.subr.bf16.mxu0 %v3277
      %4519 = vmatpush1.bf16.msra.mxu0 %v3276
      %4520 = vmatprep.subr.bf16.mxu0 %v3279
      %4521 = vmatpush1.bf16.msra.mxu0 %v3278
      %4522 = vmatprep.subr.bf16.mxu0 %v3281
      %4523 = vmatpush1.bf16.msra.mxu0 %v3280
      %4524 = vmatprep.subr.bf16.mxu0 %v3283
      %4525 = vmatpush1.bf16.msra.mxu0 %v3282
      %4526 = vmatprep.subr.bf16.mxu0 %v3285
      %4527 = vmatpush1.bf16.msra.mxu0 %v3284
      %4528 = vmatprep.subr.bf16.mxu0 %v3287
      %4529 = vmatpush1.bf16.msra.mxu0 %v3286
      %4530 = vmatprep.subr.bf16.mxu0 %v3289
      %4531 = vmatpush1.bf16.msra.mxu0 %v3288
      %4532 = vmatprep.subr.bf16.mxu0 %v3291
      %4533 = vmatpush1.bf16.msra.mxu0 %v3290
      %4534 = vmatprep.subr.bf16.mxu0 %v3293
      %4535 = vmatpush1.bf16.msra.mxu0 %v3292
      %4536 = vmatprep.subr.bf16.mxu0 %v3295
      %4537 = vmatpush1.bf16.msra.mxu0 %v3294
      %4538 = vmatprep.mubr.bf16.mxu0 %v1102
      %4539 = vmatmul.mubr.bf16.gmra.mrb[0].mxu0 %v1088
      %v4540 = vpop.f32.mrb[0].mxu0
      %v4541 = vadd.f32 %v4500, %v4540
      %v4542 = vpop.f32.mrb[0].mxu0
      %v4543 = vadd.f32 %v4502, %v4542
      %v4544 = vpop.f32.mrb[0].mxu0
      %v4545 = vpop.f32.mrb[0].mxu0
      %4546 = vdwg.mxu0
      %4547 = vmatprep.subr.bf16.mxu0 %v3297
      %4548 = vmatpush1.bf16.msra.mxu0 %v3296
      %4549 = vmatprep.subr.bf16.mxu0 %v3299
      %4550 = vmatpush1.bf16.msra.mxu0 %v3298
      %4551 = vmatprep.subr.bf16.mxu0 %v3301
      %4552 = vmatpush1.bf16.msra.mxu0 %v3300
      %4553 = vmatprep.subr.bf16.mxu0 %v3303
      %4554 = vmatpush1.bf16.msra.mxu0 %v3302
      %4555 = vmatprep.subr.bf16.mxu0 %v3305
      %4556 = vmatpush1.bf16.msra.mxu0 %v3304
      %4557 = vmatprep.subr.bf16.mxu0 %v3307
      %4558 = vmatpush1.bf16.msra.mxu0 %v3306
      %4559 = vmatprep.subr.bf16.mxu0 %v3309
      %4560 = vmatpush1.bf16.msra.mxu0 %v3308
      %4561 = vmatprep.subr.bf16.mxu0 %v3311
      %4562 = vmatpush1.bf16.msra.mxu0 %v3310
      %4563 = vmatprep.subr.bf16.mxu0 %v3313
      %4564 = vmatpush1.bf16.msra.mxu0 %v3312
      %4565 = vmatprep.subr.bf16.mxu0 %v3315
      %4566 = vmatpush1.bf16.msra.mxu0 %v3314
      %4567 = vmatprep.subr.bf16.mxu0 %v3317
      %4568 = vmatpush1.bf16.msra.mxu0 %v3316
      %4569 = vmatprep.subr.bf16.mxu0 %v3319
      %4570 = vmatpush1.bf16.msra.mxu0 %v3318
      %4571 = vmatprep.subr.bf16.mxu0 %v3321
      %4572 = vmatpush1.bf16.msra.mxu0 %v3320
      %4573 = vmatprep.subr.bf16.mxu0 %v3323
      %4574 = vmatpush1.bf16.msra.mxu0 %v3322
      %4575 = vmatprep.subr.bf16.mxu0 %v3325
      %4576 = vmatpush1.bf16.msra.mxu0 %v3324
      %4577 = vmatprep.subr.bf16.mxu0 %v3327
      %4578 = vmatpush1.bf16.msra.mxu0 %v3326
      %4579 = vmatprep.mubr.bf16.mxu0 %v1106
      %4580 = vmatmul.mubr.bf16.gmra.mrb[0].mxu0 %v1104
      %v4581 = vpop.f32.mrb[0].mxu0
      %v4582 = vadd.f32 %v4541, %v4581
      %v4583 = vpop.f32.mrb[0].mxu0
      %v4584 = vadd.f32 %v4543, %v4583
      %v4585 = vpop.f32.mrb[0].mxu0
      %v4586 = vpop.f32.mrb[0].mxu0
      %4587 = vdwg.mxu0
      %4588 = vmatprep.subr.bf16.mxu0 %v3329
      %4589 = vmatpush1.bf16.msra.mxu0 %v3328
      %4590 = vmatprep.subr.bf16.mxu0 %v3331
      %4591 = vmatpush1.bf16.msra.mxu0 %v3330
      %4592 = vmatprep.subr.bf16.mxu0 %v3333
      %4593 = vmatpush1.bf16.msra.mxu0 %v3332
      %4594 = vmatprep.subr.bf16.mxu0 %v3335
      %4595 = vmatpush1.bf16.msra.mxu0 %v3334
      %4596 = vmatprep.subr.bf16.mxu0 %v3337
      %4597 = vmatpush1.bf16.msra.mxu0 %v3336
      %4598 = vmatprep.subr.bf16.mxu0 %v3339
      %4599 = vmatpush1.bf16.msra.mxu0 %v3338
      %4600 = vmatprep.subr.bf16.mxu0 %v3341
      %4601 = vmatpush1.bf16.msra.mxu0 %v3340
      %4602 = vmatprep.subr.bf16.mxu0 %v3343
      %4603 = vmatpush1.bf16.msra.mxu0 %v3342
      %4604 = vmatprep.subr.bf16.mxu0 %v3345
      %4605 = vmatpush1.bf16.msra.mxu0 %v3344
      %4606 = vmatprep.subr.bf16.mxu0 %v3347
      %4607 = vmatpush1.bf16.msra.mxu0 %v3346
      %4608 = vmatprep.subr.bf16.mxu0 %v3349
      %4609 = vmatpush1.bf16.msra.mxu0 %v3348
      %4610 = vmatprep.subr.bf16.mxu0 %v3351
      %4611 = vmatpush1.bf16.msra.mxu0 %v3350
      %4612 = vmatprep.subr.bf16.mxu0 %v3353
      %4613 = vmatpush1.bf16.msra.mxu0 %v3352
      %4614 = vmatprep.subr.bf16.mxu0 %v3355
      %4615 = vmatpush1.bf16.msra.mxu0 %v3354
      %4616 = vmatprep.subr.bf16.mxu0 %v3357
      %4617 = vmatpush1.bf16.msra.mxu0 %v3356
      %4618 = vmatprep.subr.bf16.mxu0 %v3359
      %4619 = vmatpush1.bf16.msra.mxu0 %v3358
      %4620 = vmatprep.mubr.bf16.mxu0 %v1144
      %4621 = vmatmul.mubr.bf16.gmra.mrb[0].mxu0 %v1130
      %v4622 = vpop.f32.mrb[0].mxu0
      %v4623 = vadd.f32 %v4582, %v4622
      %v4624 = vpop.f32.mrb[0].mxu0
      %v4625 = vadd.f32 %v4584, %v4624
      %v4626 = vpop.f32.mrb[0].mxu0
      %v4627 = vpop.f32.mrb[0].mxu0
      %4628 = vdwg.mxu0
      %4629 = vmatprep.subr.bf16.mxu0 %v3361
      %4630 = vmatpush1.bf16.msra.mxu0 %v3360
      %4631 = vmatprep.subr.bf16.mxu0 %v3363
      %4632 = vmatpush1.bf16.msra.mxu0 %v3362
      %4633 = vmatprep.subr.bf16.mxu0 %v3365
      %4634 = vmatpush1.bf16.msra.mxu0 %v3364
      %4635 = vmatprep.subr.bf16.mxu0 %v3367
      %4636 = vmatpush1.bf16.msra.mxu0 %v3366
      %4637 = vmatprep.subr.bf16.mxu0 %v3369
      %4638 = vmatpush1.bf16.msra.mxu0 %v3368
      %4639 = vmatprep.subr.bf16.mxu0 %v3371
      %4640 = vmatpush1.bf16.msra.mxu0 %v3370
      %4641 = vmatprep.subr.bf16.mxu0 %v3373
      %4642 = vmatpush1.bf16.msra.mxu0 %v3372
      %4643 = vmatprep.subr.bf16.mxu0 %v3375
      %4644 = vmatpush1.bf16.msra.mxu0 %v3374
      %4645 = vmatprep.subr.bf16.mxu0 %v3377
      %4646 = vmatpush1.bf16.msra.mxu0 %v3376
      %4647 = vmatprep.subr.bf16.mxu0 %v3379
      %4648 = vmatpush1.bf16.msra.mxu0 %v3378
      %4649 = vmatprep.subr.bf16.mxu0 %v3381
      %4650 = vmatpush1.bf16.msra.mxu0 %v3380
      %4651 = vmatprep.subr.bf16.mxu0 %v3383
      %4652 = vmatpush1.bf16.msra.mxu0 %v3382
      %4653 = vmatprep.subr.bf16.mxu0 %v3385
      %4654 = vmatpush1.bf16.msra.mxu0 %v3384
      %4655 = vmatprep.subr.bf16.mxu0 %v3387
      %4656 = vmatpush1.bf16.msra.mxu0 %v3386
      %4657 = vmatprep.subr.bf16.mxu0 %v3389
      %4658 = vmatpush1.bf16.msra.mxu0 %v3388
      %4659 = vmatprep.subr.bf16.mxu0 %v3391
      %4660 = vmatpush1.bf16.msra.mxu0 %v3390
      %4661 = vmatprep.mubr.bf16.mxu0 %v1154
      %4662 = vmatmul.mubr.bf16.gmra.mrb[0].mxu0 %v1152
      %v4663 = vpop.f32.mrb[0].mxu0
      %v4664 = vadd.f32 %v4623, %v4663
      %v4665 = vpop.f32.mrb[0].mxu0
      %v4666 = vadd.f32 %v4625, %v4665
      %v4667 = vpop.f32.mrb[0].mxu0
      %v4668 = vpop.f32.mrb[0].mxu0
      %4669 = vdwg.mxu0
      %4670 = vmatprep.subr.bf16.mxu0 %v3393
      %4671 = vmatpush1.bf16.msra.mxu0 %v3392
      %4672 = vmatprep.subr.bf16.mxu0 %v3395
      %4673 = vmatpush1.bf16.msra.mxu0 %v3394
      %4674 = vmatprep.subr.bf16.mxu0 %v3397
      %4675 = vmatpush1.bf16.msra.mxu0 %v3396
      %4676 = vmatprep.subr.bf16.mxu0 %v3399
      %4677 = vmatpush1.bf16.msra.mxu0 %v3398
      %4678 = vmatprep.subr.bf16.mxu0 %v3401
      %4679 = vmatpush1.bf16.msra.mxu0 %v3400
      %4680 = vmatprep.subr.bf16.mxu0 %v3403
      %4681 = vmatpush1.bf16.msra.mxu0 %v3402
      %4682 = vmatprep.subr.bf16.mxu0 %v3405
      %4683 = vmatpush1.bf16.msra.mxu0 %v3404
      %4684 = vmatprep.subr.bf16.mxu0 %v3407
      %4685 = vmatpush1.bf16.msra.mxu0 %v3406
      %4686 = vmatprep.subr.bf16.mxu0 %v3409
      %4687 = vmatpush1.bf16.msra.mxu0 %v3408
      %4688 = vmatprep.subr.bf16.mxu0 %v3411
      %4689 = vmatpush1.bf16.msra.mxu0 %v3410
      %4690 = vmatprep.subr.bf16.mxu0 %v3413
      %4691 = vmatpush1.bf16.msra.mxu0 %v3412
      %4692 = vmatprep.subr.bf16.mxu0 %v3415
      %4693 = vmatpush1.bf16.msra.mxu0 %v3414
      %4694 = vmatprep.subr.bf16.mxu0 %v3417
      %4695 = vmatpush1.bf16.msra.mxu0 %v3416
      %4696 = vmatprep.subr.bf16.mxu0 %v3419
      %4697 = vmatpush1.bf16.msra.mxu0 %v3418
      %4698 = vmatprep.subr.bf16.mxu0 %v3421
      %4699 = vmatpush1.bf16.msra.mxu0 %v3420
      %4700 = vmatprep.subr.bf16.mxu0 %v3423
      %4701 = vmatpush1.bf16.msra.mxu0 %v3422
      %4702 = vmatprep.mubr.bf16.mxu0 %v1151
      %4703 = vmatmul.mubr.bf16.gmra.mrb[0].mxu0 %v1137
      %v4704 = vpop.f32.mrb[0].mxu0
      %v4705 = vadd.f32 %v4664, %v4704
      %v4706 = vpop.f32.mrb[0].mxu0
      %v4707 = vadd.f32 %v4666, %v4706
      %v4708 = vpop.f32.mrb[0].mxu0
      %v4709 = vpop.f32.mrb[0].mxu0
      %4710 = vdwg.mxu0
      %4711 = vmatprep.subr.bf16.mxu0 %v3425
      %4712 = vmatpush1.bf16.msra.mxu0 %v3424
      %4713 = vmatprep.subr.bf16.mxu0 %v3427
      %4714 = vmatpush1.bf16.msra.mxu0 %v3426
      %4715 = vmatprep.subr.bf16.mxu0 %v3429
      %4716 = vmatpush1.bf16.msra.mxu0 %v3428
      %4717 = vmatprep.subr.bf16.mxu0 %v3431
      %4718 = vmatpush1.bf16.msra.mxu0 %v3430
      %4719 = vmatprep.subr.bf16.mxu0 %v3433
      %4720 = vmatpush1.bf16.msra.mxu0 %v3432
      %4721 = vmatprep.subr.bf16.mxu0 %v3435
      %4722 = vmatpush1.bf16.msra.mxu0 %v3434
      %4723 = vmatprep.subr.bf16.mxu0 %v3437
      %4724 = vmatpush1.bf16.msra.mxu0 %v3436
      %4725 = vmatprep.subr.bf16.mxu0 %v3439
      %4726 = vmatpush1.bf16.msra.mxu0 %v3438
      %4727 = vmatprep.subr.bf16.mxu0 %v3441
      %4728 = vmatpush1.bf16.msra.mxu0 %v3440
      %4729 = vmatprep.subr.bf16.mxu0 %v3443
      %4730 = vmatpush1.bf16.msra.mxu0 %v3442
      %4731 = vmatprep.subr.bf16.mxu0 %v3445
      %4732 = vmatpush1.bf16.msra.mxu0 %v3444
      %4733 = vmatprep.subr.bf16.mxu0 %v3447
      %4734 = vmatpush1.bf16.msra.mxu0 %v3446
      %4735 = vmatprep.subr.bf16.mxu0 %v3449
      %4736 = vmatpush1.bf16.msra.mxu0 %v3448
      %4737 = vmatprep.subr.bf16.mxu0 %v3451
      %4738 = vmatpush1.bf16.msra.mxu0 %v3450
      %4739 = vmatprep.subr.bf16.mxu0 %v3453
      %4740 = vmatpush1.bf16.msra.mxu0 %v3452
      %4741 = vmatprep.subr.bf16.mxu0 %v3455
      %4742 = vmatpush1.bf16.msra.mxu0 %v3454
      %4743 = vmatprep.mubr.bf16.mxu0 %v1155
      %4744 = vmatmul.mubr.bf16.gmra.mrb[0].mxu0 %v1153
      %v4745 = vpop.f32.mrb[0].mxu0
      %v4746 = vadd.f32 %v4705, %v4745
      %v4747 = vpop.f32.mrb[0].mxu0
      %v4748 = vadd.f32 %v4707, %v4747
      %v4749 = vpop.f32.mrb[0].mxu0
      %v4750 = vpop.f32.mrb[0].mxu0
      %4751 = vdwg.mxu0
      %4752 = vmatprep.subr.bf16.mxu0 %v3457
      %4753 = vmatpush1.bf16.msra.mxu0 %v3456
      %4754 = vmatprep.subr.bf16.mxu0 %v3459
      %4755 = vmatpush1.bf16.msra.mxu0 %v3458
      %4756 = vmatprep.subr.bf16.mxu0 %v3461
      %4757 = vmatpush1.bf16.msra.mxu0 %v3460
      %4758 = vmatprep.subr.bf16.mxu0 %v3463
      %4759 = vmatpush1.bf16.msra.mxu0 %v3462
      %4760 = vmatprep.subr.bf16.mxu0 %v3465
      %4761 = vmatpush1.bf16.msra.mxu0 %v3464
      %4762 = vmatprep.subr.bf16.mxu0 %v3467
      %4763 = vmatpush1.bf16.msra.mxu0 %v3466
      %4764 = vmatprep.subr.bf16.mxu0 %v3469
      %4765 = vmatpush1.bf16.msra.mxu0 %v3468
      %4766 = vmatprep.subr.bf16.mxu0 %v3471
      %4767 = vmatpush1.bf16.msra.mxu0 %v3470
      %4768 = vmatprep.subr.bf16.mxu0 %v3473
      %4769 = vmatpush1.bf16.msra.mxu0 %v3472
      %4770 = vmatprep.subr.bf16.mxu0 %v3475
      %4771 = vmatpush1.bf16.msra.mxu0 %v3474
      %4772 = vmatprep.subr.bf16.mxu0 %v3477
      %4773 = vmatpush1.bf16.msra.mxu0 %v3476
      %4774 = vmatprep.subr.bf16.mxu0 %v3479
      %4775 = vmatpush1.bf16.msra.mxu0 %v3478
      %4776 = vmatprep.subr.bf16.mxu0 %v3481
      %4777 = vmatpush1.bf16.msra.mxu0 %v3480
      %4778 = vmatprep.subr.bf16.mxu0 %v3483
      %4779 = vmatpush1.bf16.msra.mxu0 %v3482
      %4780 = vmatprep.subr.bf16.mxu0 %v3485
      %4781 = vmatpush1.bf16.msra.mxu0 %v3484
      %4782 = vmatprep.subr.bf16.mxu0 %v3487
      %4783 = vmatpush1.bf16.msra.mxu0 %v3486
      %4784 = vmatprep.mubr.bf16.mxu0 %v1177
      %4785 = vmatmul.mubr.bf16.gmra.mrb[0].mxu0 %v1170
      %v4786 = vpop.f32.mrb[0].mxu0
      %v4787 = vadd.f32 %v4746, %v4786
      %v4788 = vpop.f32.mrb[0].mxu0
      %v4789 = vadd.f32 %v4748, %v4788
      %v4790 = vpop.f32.mrb[0].mxu0
      %v4791 = vpop.f32.mrb[0].mxu0
      %4792 = vdwg.mxu0
      %4793 = vmatprep.subr.bf16.mxu0 %v3489
      %4794 = vmatpush1.bf16.msra.mxu0 %v3488
      %4795 = vmatprep.subr.bf16.mxu0 %v3491
      %4796 = vmatpush1.bf16.msra.mxu0 %v3490
      %4797 = vmatprep.subr.bf16.mxu0 %v3493
      %4798 = vmatpush1.bf16.msra.mxu0 %v3492
      %4799 = vmatprep.subr.bf16.mxu0 %v3495
      %4800 = vmatpush1.bf16.msra.mxu0 %v3494
      %4801 = vmatprep.subr.bf16.mxu0 %v3497
      %4802 = vmatpush1.bf16.msra.mxu0 %v3496
      %4803 = vmatprep.subr.bf16.mxu0 %v3499
      %4804 = vmatpush1.bf16.msra.mxu0 %v3498
      %4805 = vmatprep.subr.bf16.mxu0 %v3501
      %4806 = vmatpush1.bf16.msra.mxu0 %v3500
      %4807 = vmatprep.subr.bf16.mxu0 %v3503
      %4808 = vmatpush1.bf16.msra.mxu0 %v3502
      %4809 = vmatprep.subr.bf16.mxu0 %v3505
      %4810 = vmatpush1.bf16.msra.mxu0 %v3504
      %4811 = vmatprep.subr.bf16.mxu0 %v3507
      %4812 = vmatpush1.bf16.msra.mxu0 %v3506
      %4813 = vmatprep.subr.bf16.mxu0 %v3509
      %4814 = vmatpush1.bf16.msra.mxu0 %v3508
      %4815 = vmatprep.subr.bf16.mxu0 %v3511
      %4816 = vmatpush1.bf16.msra.mxu0 %v3510
      %4817 = vmatprep.subr.bf16.mxu0 %v3513
      %4818 = vmatpush1.bf16.msra.mxu0 %v3512
      %4819 = vmatprep.subr.bf16.mxu0 %v3515
      %4820 = vmatpush1.bf16.msra.mxu0 %v3514
      %4821 = vmatprep.subr.bf16.mxu0 %v3517
      %4822 = vmatpush1.bf16.msra.mxu0 %v3516
      %4823 = vmatprep.subr.bf16.mxu0 %v3519
      %4824 = vmatpush1.bf16.msra.mxu0 %v3518
      %4825 = vmatprep.mubr.bf16.mxu0 %v1179
      %4826 = vmatmul.mubr.bf16.gmra.mrb[0].mxu0 %v1178
      %v4827 = vpop.f32.mrb[0].mxu0
      %v4828 = vadd.f32 %v4787, %v4827
      %v4829 = vpop.f32.mrb[0].mxu0
      %v4830 = vadd.f32 %v4789, %v4829
      %v4831 = vpop.f32.mrb[0].mxu0
      %v4832 = vpop.f32.mrb[0].mxu0
      %4833 = vdwg.mxu0
      %v4836 = vcombine.low %v4828, %v4830
      %v4838 = vunpack.c.l.s4 1983009808
      %v4839 = vunpack.c.0.s8 %v4838
      %v4840 = vlaneseq
      %v4841 = vshrl.u32 %v4840, 7
      %v4842 = vsub.s32 %v4839, %v4841
      %v4843 = vrot.slane %v4836, %v4842
      %v4845 = vadd.f32 %v373, %v4843
      %4846 = vst [vmem:[#allocation2] sm:$0xf] %v4845
      %p4847 = scmp.eq.s32.totalorder %s22, 1
      // Predicated region
      $region61: #{simsiam_forward.5} parent=55 // pred_check
        %p4848 = pneg %p4847
      $region62: #{simsiam_forward.5} parent=55 // pred_check_branch
        %4850 = sbr.rel (%p4848) target = $region64
      $region63: #{simsiam_forward.5} parent=55 // pred_region
        %v4851 = vld [vmem:[#allocation2] sm:$0xf]
        %v4852 = vld [vmem:[%s2] sm:$0x3]
        %v4854 = vlaneseq
        %v4855 = vshrl.u32 %v4854, 7
        %v4856 = vsub.s32 0, %v4855
        %v4857 = vrot.slane %v4852, %v4856
        %v4858 = vlaneseq
        %v4859 = vshrl.u32 %v4858, 7
        %v4860 = vsub.s32 1, %v4859
        %v4861 = vrot.slane %v4852, %v4860
        %v4862 = vcombine.low %v4857, %v4861
        %v4864 = vunpack.c.l.s4 1983009808
        %v4865 = vunpack.c.0.s8 %v4864
        %v4866 = vlaneseq
        %v4867 = vshrl.u32 %v4866, 7
        %v4868 = vsub.s32 %v4865, %v4867
        %v4869 = vrot.slane %v4862, %v4868
        %v4871 = vadd.f32 %v4851, %v4869
        %v4872 = vmax.f32 %v4871, 0.0
        %v4875 = vunpack.c.l.s4 1983009808
        %v4876 = vunpack.c.0.s8 %v4875
        %v4877 = vlaneseq
        %v4878 = vshrl.u32 %v4877, 7
        %v4879 = vsub.s32 %v4876, %v4878
        %v4880 = vrot.slane %v4872, %v4879
        %v4881 = vcombine.high %v4880, %v4880
        %v4884 = vpack.c.bf16 %v4880, %v4880
        %v4885 = vpack.c.bf16 %v4881, %v4881
        %v4886 = vld [vmem:[%s3] sm:$0xf]
        %v4887 = vld [vmem:[%s3 + $0x4] sm:$0xf]
        %v4888 = vld [vmem:[%s3 + $0x8] sm:$0xf]
        %v4889 = vld [vmem:[%s3 + $0xc] sm:$0xf]
        %v4890 = vld [vmem:[%s3 + $0x10] sm:$0xf]
        %v4891 = vld [vmem:[%s3 + $0x14] sm:$0xf]
        %v4892 = vld [vmem:[%s3 + $0x18] sm:$0xf]
        %v4893 = vld [vmem:[%s3 + $0x1c] sm:$0xf]
        %v4894 = vld [vmem:[%s3 + $0x20] sm:$0xf]
        %v4895 = vld [vmem:[%s3 + $0x24] sm:$0xf]
        %v4896 = vld [vmem:[%s3 + $0x28] sm:$0xf]
        %v4897 = vld [vmem:[%s3 + $0x2c] sm:$0xf]
        %v4898 = vld [vmem:[%s3 + $0x30] sm:$0xf]
        %v4899 = vld [vmem:[%s3 + $0x34] sm:$0xf]
        %v4900 = vld [vmem:[%s3 + $0x38] sm:$0xf]
        %v4901 = vld [vmem:[%s3 + $0x3c] sm:$0xf]
        %v4902 = vld [vmem:[%s3 + $0x40] sm:$0xf]
        %v4903 = vld [vmem:[%s3 + $0x44] sm:$0xf]
        %v4904 = vld [vmem:[%s3 + $0x48] sm:$0xf]
        %v4905 = vld [vmem:[%s3 + $0x4c] sm:$0xf]
        %v4906 = vld [vmem:[%s3 + $0x50] sm:$0xf]
        %v4907 = vld [vmem:[%s3 + $0x54] sm:$0xf]
        %v4908 = vld [vmem:[%s3 + $0x58] sm:$0xf]
        %v4909 = vld [vmem:[%s3 + $0x5c] sm:$0xf]
        %v4910 = vld [vmem:[%s3 + $0x60] sm:$0xf]
        %v4911 = vld [vmem:[%s3 + $0x64] sm:$0xf]
        %v4912 = vld [vmem:[%s3 + $0x68] sm:$0xf]
        %v4913 = vld [vmem:[%s3 + $0x6c] sm:$0xf]
        %v4914 = vld [vmem:[%s3 + $0x70] sm:$0xf]
        %v4915 = vld [vmem:[%s3 + $0x74] sm:$0xf]
        %v4916 = vld [vmem:[%s3 + $0x78] sm:$0xf]
        %v4917 = vld [vmem:[%s3 + $0x7c] sm:$0xf]
        %v4918 = vld [vmem:[%s4] sm:$0x1]
        %v4920 = vlaneseq
        %v4921 = vshrl.u32 %v4920, 7
        %v4922 = vsub.s32 0, %v4921
        %v4923 = vrot.slane %v4918, %v4922
        %v4957 = vunpack.c.l.b16 %v4886
        %v4958 = vunpack.c.l.b16 %v4887
        %v4959 = vunpack.c.l.b16 %v4888
        %v4960 = vunpack.c.l.b16 %v4889
        %v4961 = vunpack.c.l.b16 %v4890
        %v4962 = vunpack.c.l.b16 %v4891
        %v4963 = vunpack.c.l.b16 %v4892
        %v4964 = vunpack.c.l.b16 %v4893
        %v4965 = vunpack.c.l.b16 %v4894
        %v4966 = vunpack.c.l.b16 %v4895
        %v4967 = vunpack.c.l.b16 %v4896
        %v4968 = vunpack.c.l.b16 %v4897
        %v4969 = vunpack.c.l.b16 %v4898
        %v4970 = vunpack.c.l.b16 %v4899
        %v4971 = vunpack.c.l.b16 %v4900
        %v4972 = vunpack.c.l.b16 %v4901
        %v4973 = vunpack.c.l.b16 %v4902
        %v4974 = vunpack.c.l.b16 %v4903
        %v4975 = vunpack.c.l.b16 %v4904
        %v4976 = vunpack.c.l.b16 %v4905
        %v4977 = vunpack.c.l.b16 %v4906
        %v4978 = vunpack.c.l.b16 %v4907
        %v4979 = vunpack.c.l.b16 %v4908
        %v4980 = vunpack.c.l.b16 %v4909
        %v4981 = vunpack.c.l.b16 %v4910
        %v4982 = vunpack.c.l.b16 %v4911
        %v4983 = vunpack.c.l.b16 %v4912
        %v4984 = vunpack.c.l.b16 %v4913
        %v4985 = vunpack.c.l.b16 %v4914
        %v4986 = vunpack.c.l.b16 %v4915
        %v4987 = vunpack.c.l.b16 %v4916
        %v4988 = vunpack.c.l.b16 %v4917
        %v4989 = vpack.c.b16 %v4958, %v4957
        %v4990 = vpack.c.b16 %v4960, %v4959
        %v4991 = vpack.c.b16 %v4962, %v4961
        %v4992 = vpack.c.b16 %v4964, %v4963
        %v4993 = vpack.c.b16 %v4966, %v4965
        %v4994 = vpack.c.b16 %v4968, %v4967
        %v4995 = vpack.c.b16 %v4970, %v4969
        %v4996 = vpack.c.b16 %v4972, %v4971
        %v4997 = vpack.c.b16 %v4974, %v4973
        %v4998 = vpack.c.b16 %v4976, %v4975
        %v4999 = vpack.c.b16 %v4978, %v4977
        %v5000 = vpack.c.b16 %v4980, %v4979
        %v5001 = vpack.c.b16 %v4982, %v4981
        %v5002 = vpack.c.b16 %v4984, %v4983
        %v5003 = vpack.c.b16 %v4986, %v4985
        %v5004 = vpack.c.b16 %v4988, %v4987
        %5021 = vmatprep.subr.bf16.mxu0 0
        %5022 = vmatpush1.bf16.msra.mxu0 %v4989
        %5023 = vmatprep.subr.bf16.mxu0 0
        %5024 = vmatpush1.bf16.msra.mxu0 %v4990
        %5025 = vmatprep.subr.bf16.mxu0 0
        %5026 = vmatpush1.bf16.msra.mxu0 %v4991
        %5027 = vmatprep.subr.bf16.mxu0 0
        %5028 = vmatpush1.bf16.msra.mxu0 %v4992
        %5029 = vmatprep.subr.bf16.mxu0 0
        %5030 = vmatpush1.bf16.msra.mxu0 %v4993
        %5031 = vmatprep.subr.bf16.mxu0 0
        %5032 = vmatpush1.bf16.msra.mxu0 %v4994
        %5033 = vmatprep.subr.bf16.mxu0 0
        %5034 = vmatpush1.bf16.msra.mxu0 %v4995
        %5035 = vmatprep.subr.bf16.mxu0 0
        %5036 = vmatpush1.bf16.msra.mxu0 %v4996
        %5037 = vmatprep.subr.bf16.mxu0 0
        %5038 = vmatpush1.bf16.msra.mxu0 %v4997
        %5039 = vmatprep.subr.bf16.mxu0 0
        %5040 = vmatpush1.bf16.msra.mxu0 %v4998
        %5041 = vmatprep.subr.bf16.mxu0 0
        %5042 = vmatpush1.bf16.msra.mxu0 %v4999
        %5043 = vmatprep.subr.bf16.mxu0 0
        %5044 = vmatpush1.bf16.msra.mxu0 %v5000
        %5045 = vmatprep.subr.bf16.mxu0 0
        %5046 = vmatpush1.bf16.msra.mxu0 %v5001
        %5047 = vmatprep.subr.bf16.mxu0 0
        %5048 = vmatpush1.bf16.msra.mxu0 %v5002
        %5049 = vmatprep.subr.bf16.mxu0 0
        %5050 = vmatpush1.bf16.msra.mxu0 %v5003
        %5051 = vmatprep.subr.bf16.mxu0 0
        %5052 = vmatpush1.bf16.msra.mxu0 %v5004
        %5053 = vmatprep.mubr.bf16.mxu0 %v4885
        %5054 = vmatmul.mubr.bf16.gmra.mrb[0].mxu0 %v4884
        %v5055 = vpop.f32.mrb[0].mxu0
        %v5056 = vadd.f32 %v4923, %v5055
        %v5057 = vpop.f32.mrb[0].mxu0
        %v5058 = vpop.f32.mrb[0].mxu0
        %v5059 = vpop.f32.mrb[0].mxu0
        %5060 = vdwg.mxu0
        %5061 = vst [vmem:[%s9] sm:$0x3] %v5056
        %v5062 = vpack.c.bf16 %v5056, %v5056
        %v5063 = vld [vmem:[%s5] sm:$0xf]
        %v5064 = vld [vmem:[%s5 + $0x4] sm:$0xf]
        %v5065 = vld [vmem:[%s5 + $0x8] sm:$0xf]
        %v5066 = vld [vmem:[%s5 + $0xc] sm:$0xf]
        %v5067 = vld [vmem:[%s5 + $0x10] sm:$0xf]
        %v5068 = vld [vmem:[%s5 + $0x14] sm:$0xf]
        %v5069 = vld [vmem:[%s5 + $0x18] sm:$0xf]
        %v5070 = vld [vmem:[%s5 + $0x1c] sm:$0xf]
        %v5071 = vld [vmem:[%s5 + $0x20] sm:$0xf]
        %v5072 = vld [vmem:[%s5 + $0x24] sm:$0xf]
        %v5073 = vld [vmem:[%s5 + $0x28] sm:$0xf]
        %v5074 = vld [vmem:[%s5 + $0x2c] sm:$0xf]
        %v5075 = vld [vmem:[%s5 + $0x30] sm:$0xf]
        %v5076 = vld [vmem:[%s5 + $0x34] sm:$0xf]
        %v5077 = vld [vmem:[%s5 + $0x38] sm:$0xf]
        %v5078 = vld [vmem:[%s5 + $0x3c] sm:$0xf]
        %v5079 = vld [vmem:[%s6] sm:$0x1]
        %v5081 = vlaneseq
        %v5082 = vshrl.u32 %v5081, 7
        %v5083 = vsub.s32 0, %v5082
        %v5084 = vrot.slane %v5079, %v5083
        %v5102 = vunpack.c.l.b16 %v5063
        %v5103 = vunpack.c.l.b16 %v5064
        %v5104 = vunpack.c.l.b16 %v5065
        %v5105 = vunpack.c.l.b16 %v5066
        %v5106 = vunpack.c.l.b16 %v5067
        %v5107 = vunpack.c.l.b16 %v5068
        %v5108 = vunpack.c.l.b16 %v5069
        %v5109 = vunpack.c.l.b16 %v5070
        %v5110 = vunpack.c.l.b16 %v5071
        %v5111 = vunpack.c.l.b16 %v5072
        %v5112 = vunpack.c.l.b16 %v5073
        %v5113 = vunpack.c.l.b16 %v5074
        %v5114 = vunpack.c.l.b16 %v5075
        %v5115 = vunpack.c.l.b16 %v5076
        %v5116 = vunpack.c.l.b16 %v5077
        %v5117 = vunpack.c.l.b16 %v5078
        %v5118 = vpack.c.b16 %v5103, %v5102
        %v5119 = vpack.c.b16 %v5105, %v5104
        %v5120 = vpack.c.b16 %v5107, %v5106
        %v5121 = vpack.c.b16 %v5109, %v5108
        %v5122 = vpack.c.b16 %v5111, %v5110
        %v5123 = vpack.c.b16 %v5113, %v5112
        %v5124 = vpack.c.b16 %v5115, %v5114
        %v5125 = vpack.c.b16 %v5117, %v5116
        %5134 = vmatprep.subr.bf16.mxu0 0
        %5135 = vmatpush1.bf16.msra.mxu0 %v5118
        %5136 = vmatprep.subr.bf16.mxu0 0
        %5137 = vmatpush1.bf16.msra.mxu0 %v5119
        %5138 = vmatprep.subr.bf16.mxu0 0
        %5139 = vmatpush1.bf16.msra.mxu0 %v5120
        %5140 = vmatprep.subr.bf16.mxu0 0
        %5141 = vmatpush1.bf16.msra.mxu0 %v5121
        %5142 = vmatprep.subr.bf16.mxu0 0
        %5143 = vmatpush1.bf16.msra.mxu0 %v5122
        %5144 = vmatprep.subr.bf16.mxu0 0
        %5145 = vmatpush1.bf16.msra.mxu0 %v5123
        %5146 = vmatprep.subr.bf16.mxu0 0
        %5147 = vmatpush1.bf16.msra.mxu0 %v5124
        %5148 = vmatprep.subr.bf16.mxu0 0
        %5149 = vmatpush1.bf16.msra.mxu0 %v5125
        %5150 = vmatprep.subr.bf16.mxu0 0
        %5151 = vmatpush1.bf16.msra.mxu0 0
        %5152 = vmatprep.subr.bf16.mxu0 0
        %5153 = vmatpush1.bf16.msra.mxu0 0
        %5154 = vmatprep.subr.bf16.mxu0 0
        %5155 = vmatpush1.bf16.msra.mxu0 0
        %5156 = vmatprep.subr.bf16.mxu0 0
        %5157 = vmatpush1.bf16.msra.mxu0 0
        %5158 = vmatprep.subr.bf16.mxu0 0
        %5159 = vmatpush1.bf16.msra.mxu0 0
        %5160 = vmatprep.subr.bf16.mxu0 0
        %5161 = vmatpush1.bf16.msra.mxu0 0
        %5162 = vmatprep.subr.bf16.mxu0 0
        %5163 = vmatpush1.bf16.msra.mxu0 0
        %5164 = vmatprep.subr.bf16.mxu0 0
        %5165 = vmatpush1.bf16.msra.mxu0 0
        %5166 = vmatprep.mubr.bf16.mxu0 0
        %5167 = vmatmul.mubr.bf16.gmra.mrb[0].mxu0 %v5062
        %v5168 = vpop.f32.mrb[0].mxu0
        %v5169 = vadd.f32 %v5084, %v5168
        %v5170 = vpop.f32.mrb[0].mxu0
        %v5171 = vpop.f32.mrb[0].mxu0
        %v5172 = vpop.f32.mrb[0].mxu0
        %5173 = vdwg.mxu0
        %v5174 = vmax.f32 %v5169, 0.0
        %v5175 = vpack.c.bf16 %v5174, %v5174
        %v5176 = vld [vmem:[%s7] sm:$0xf]
        %v5177 = vld [vmem:[%s7 + $0x4] sm:$0xf]
        %v5178 = vld [vmem:[%s7 + $0x8] sm:$0xf]
        %v5179 = vld [vmem:[%s7 + $0xc] sm:$0xf]
        %v5180 = vld [vmem:[%s7 + $0x10] sm:$0xf]
        %v5181 = vld [vmem:[%s7 + $0x14] sm:$0xf]
        %v5182 = vld [vmem:[%s7 + $0x18] sm:$0xf]
        %v5183 = vld [vmem:[%s7 + $0x1c] sm:$0xf]
        %v5184 = vld [vmem:[%s7 + $0x20] sm:$0xf]
        %v5185 = vld [vmem:[%s7 + $0x24] sm:$0xf]
        %v5186 = vld [vmem:[%s7 + $0x28] sm:$0xf]
        %v5187 = vld [vmem:[%s7 + $0x2c] sm:$0xf]
        %v5188 = vld [vmem:[%s7 + $0x30] sm:$0xf]
        %v5189 = vld [vmem:[%s7 + $0x34] sm:$0xf]
        %v5190 = vld [vmem:[%s7 + $0x38] sm:$0xf]
        %v5191 = vld [vmem:[%s7 + $0x3c] sm:$0xf]
        %v5192 = vld [vmem:[%s8] sm:$0x1]
        %v5194 = vlaneseq
        %v5195 = vshrl.u32 %v5194, 7
        %v5196 = vsub.s32 0, %v5195
        %v5197 = vrot.slane %v5192, %v5196
        %v5215 = vunpack.c.l.b16 %v5176
        %v5216 = vunpack.c.l.b16 %v5177
        %v5217 = vunpack.c.l.b16 %v5178
        %v5218 = vunpack.c.l.b16 %v5179
        %v5219 = vunpack.c.l.b16 %v5180
        %v5220 = vunpack.c.l.b16 %v5181
        %v5221 = vunpack.c.l.b16 %v5182
        %v5222 = vunpack.c.l.b16 %v5183
        %v5223 = vunpack.c.l.b16 %v5184
        %v5224 = vunpack.c.l.b16 %v5185
        %v5225 = vunpack.c.l.b16 %v5186
        %v5226 = vunpack.c.l.b16 %v5187
        %v5227 = vunpack.c.l.b16 %v5188
        %v5228 = vunpack.c.l.b16 %v5189
        %v5229 = vunpack.c.l.b16 %v5190
        %v5230 = vunpack.c.l.b16 %v5191
        %v5231 = vpack.c.b16 %v5216, %v5215
        %v5232 = vpack.c.b16 %v5218, %v5217
        %v5233 = vpack.c.b16 %v5220, %v5219
        %v5234 = vpack.c.b16 %v5222, %v5221
        %v5235 = vpack.c.b16 %v5224, %v5223
        %v5236 = vpack.c.b16 %v5226, %v5225
        %v5237 = vpack.c.b16 %v5228, %v5227
        %v5238 = vpack.c.b16 %v5230, %v5229
        %5247 = vmatprep.subr.bf16.mxu0 0
        %5248 = vmatpush1.bf16.msra.mxu0 %v5231
        %5249 = vmatprep.subr.bf16.mxu0 0
        %5250 = vmatpush1.bf16.msra.mxu0 %v5232
        %5251 = vmatprep.subr.bf16.mxu0 0
        %5252 = vmatpush1.bf16.msra.mxu0 %v5233
        %5253 = vmatprep.subr.bf16.mxu0 0
        %5254 = vmatpush1.bf16.msra.mxu0 %v5234
        %5255 = vmatprep.subr.bf16.mxu0 0
        %5256 = vmatpush1.bf16.msra.mxu0 %v5235
        %5257 = vmatprep.subr.bf16.mxu0 0
        %5258 = vmatpush1.bf16.msra.mxu0 %v5236
        %5259 = vmatprep.subr.bf16.mxu0 0
        %5260 = vmatpush1.bf16.msra.mxu0 %v5237
        %5261 = vmatprep.subr.bf16.mxu0 0
        %5262 = vmatpush1.bf16.msra.mxu0 %v5238
        %5263 = vmatprep.subr.bf16.mxu0 0
        %5264 = vmatpush1.bf16.msra.mxu0 0
        %5265 = vmatprep.subr.bf16.mxu0 0
        %5266 = vmatpush1.bf16.msra.mxu0 0
        %5267 = vmatprep.subr.bf16.mxu0 0
        %5268 = vmatpush1.bf16.msra.mxu0 0
        %5269 = vmatprep.subr.bf16.mxu0 0
        %5270 = vmatpush1.bf16.msra.mxu0 0
        %5271 = vmatprep.subr.bf16.mxu0 0
        %5272 = vmatpush1.bf16.msra.mxu0 0
        %5273 = vmatprep.subr.bf16.mxu0 0
        %5274 = vmatpush1.bf16.msra.mxu0 0
        %5275 = vmatprep.subr.bf16.mxu0 0
        %5276 = vmatpush1.bf16.msra.mxu0 0
        %5277 = vmatprep.subr.bf16.mxu0 0
        %5278 = vmatpush1.bf16.msra.mxu0 0
        %5279 = vmatprep.mubr.bf16.mxu0 0
        %5280 = vmatmul.mubr.bf16.gmra.mrb[0].mxu0 %v5175
        %v5281 = vpop.f32.mrb[0].mxu0
        %v5282 = vadd.f32 %v5197, %v5281
        %v5283 = vpop.f32.mrb[0].mxu0
        %v5284 = vpop.f32.mrb[0].mxu0
        %v5285 = vpop.f32.mrb[0].mxu0
        %5286 = vdwg.mxu0
        %5287 = vst [vmem:[%s10] sm:$0x3] %v5282
      $region64: #{simsiam_forward.5} parent=55 // pred_fallthru
        _
      // Predicated region
      $region65: #{simsiam_forward.5} parent=55 // pred_check
        %p5288 = pneg %p234
      $region66: #{simsiam_forward.5} parent=55 // pred_check_branch
        %5290 = sbr.rel (%p5288) target = $region68
      $region67: #{simsiam_forward.5} parent=55 // pred_region
        _
      $region68: #{simsiam_forward.5} parent=55 // pred_fallthru
        _
      // Predicated region
      $region69: #{simsiam_forward.5} parent=55 // pred_check
        %p5291 = pneg %p255
      $region70: #{simsiam_forward.5} parent=55 // pred_check_branch
        %5293 = sbr.rel (%p5291) target = $region72
      $region71: #{simsiam_forward.5} parent=55 // pred_region
        _
      $region72: #{simsiam_forward.5} parent=55 // pred_fallthru
        _
      // Predicated region
      $region73: #{simsiam_forward.5} parent=55 // pred_check
        %p5294 = pneg %p234
      $region74: #{simsiam_forward.5} parent=55 // pred_check_branch
        %5296 = sbr.rel (%p5294) target = $region76
      $region75: #{simsiam_forward.5} parent=55 // pred_region
        _
      $region76: #{simsiam_forward.5} parent=55 // pred_fallthru
        _
      // Predicated region
      $region77: #{simsiam_forward.5} parent=55 // pred_check
        %p5297 = pneg %p255
      $region78: #{simsiam_forward.5} parent=55 // pred_check_branch
        %5299 = sbr.rel (%p5297) target = $region80
      $region79: #{simsiam_forward.5} parent=55 // pred_region
        _
      $region80: #{simsiam_forward.5} parent=55 // pred_fallthru
        _
    $region56: #{simsiam_forward.5} parent=5 // pred_fallthru
      _
    %p5300 = scmp.le.s32.totalorder 2, %s17
    // Predicated region
    $region81: #{simsiam_forward.5} parent=5 // pred_check
      %p5301 = pneg %p5300
    $region82: #{simsiam_forward.5} parent=5 // pred_check_branch
      %5303 = sbr.rel (%p5301) target = $region84
    $region83: #{simsiam_forward.5} parent=5 // pred_region
      %s5304 = ssub.s32 %s17, 2
    $region84: #{simsiam_forward.5} parent=5 // pred_fallthru
      _
  $region6: #{simsiam_forward.5} parent=0 // loop_footer
    %s21 = sadd.s32 1, %s17
  $region7: #{simsiam_forward.5} parent=0 // loop_footer_branch
    %16 = sbr.rel target = $region3
  $region8: #{simsiam_forward.5} parent=0 // loop_exit
    _

</llo_original>
